<compile_context>
chip_gen: v7x
topology: tpu7x:2x2x1
jax: 0.10.0
libtpu: 0.0.40
codegen_flags: <defaults>
</compile_context>

<pallas_src>
import jax
import jax.numpy as jnp
from jax.experimental import pallas as pl
from jax.experimental.pallas import tpu as pltpu


# Padded (lane-aligned) layer widths.
IN_F = 32 * 32 * 3          # 3072 (already a multiple of 128)
H1, H1P = 1000, 1024
H2, H2P = 600, 640
H3, H3P = 200, 256
OUT, OUTP = 1, 128

TK = 1024                   # layer-1 contraction tile -> grid of 3072/1024 = 3 steps


def fcnet_kernel(x_ref,
                 w1_ref, b1_ref,
                 w2_ref, b2_ref,
                 w3_ref, b3_ref,
                 w4_ref, b4_ref,
                 o_ref,
                 acc_ref):
    """Grid axis 0 tiles the layer-1 contraction (K) dimension."""
    k = pl.program_id(0)

    @pl.when(k == 0)
    def _():
        acc_ref[...] = jnp.zeros_like(acc_ref)

    # Layer-1 partial matmul on the current (Bp, TK) x (TK, H1P) bf16 tiles,
    # accumulated in f32 on the MXU.  This overlaps with the DMA of the
    # next w1 / x tile via the BlockSpec pipeline.
    acc_ref[...] += jnp.dot(x_ref[...], w1_ref[...],
                            preferred_element_type=jnp.float32)

    # Layers 2-4 + sigmoid epilogue run once, after the last K tile.
    @pl.when(k == pl.num_programs(0) - 1)
    def _():
        h = jnp.maximum(acc_ref[...] + b1_ref[...], 0.0).astype(jnp.bfloat16)

        h = jnp.dot(h, w2_ref[...], preferred_element_type=jnp.float32) + b2_ref[...]
        h = jnp.maximum(h, 0.0).astype(jnp.bfloat16)

        h = jnp.dot(h, w3_ref[...], preferred_element_type=jnp.float32) + b3_ref[...]
        h = jnp.maximum(h, 0.0).astype(jnp.bfloat16)

        h = jnp.dot(h, w4_ref[...], preferred_element_type=jnp.float32) + b4_ref[...]
        o_ref[...] = jax.nn.sigmoid(h)  # f32, lane-dense (Bp, 128) store


def _pad2d(a, shape):
    """Zero-pad a 2-D array up to `shape`."""
    pr = shape[0] - a.shape[0]
    pc = shape[1] - a.shape[1]
    if pr == 0 and pc == 0:
        return a
    return jnp.pad(a, ((0, pr), (0, pc)))


def prepare_params(params):
    """One-time packing: zero-pad to lane-aligned shapes; weights -> bf16, biases f32.

    Call this ONCE (e.g. after loading / each optimizer step), then reuse the
    result for every forward call so no per-call padding / casting happens.
    """
    (w1, b1), (w2, b2), (w3, b3), (w4, b4) = params
    return (
        _pad2d(w1, (IN_F, H1P)).astype(jnp.bfloat16),
        _pad2d(b1, (1, H1P)).astype(jnp.float32),
        _pad2d(w2, (H1P, H2P)).astype(jnp.bfloat16),   # extra input rows are zero
        _pad2d(b2, (1, H2P)).astype(jnp.float32),
        _pad2d(w3, (H2P, H3P)).astype(jnp.bfloat16),
        _pad2d(b3, (1, H3P)).astype(jnp.float32),
        _pad2d(w4, (H3P, OUTP)).astype(jnp.bfloat16),
        _pad2d(b4, (1, OUTP)).astype(jnp.float32),
    )


@jax.jit
def fcnet_forward(x, prepared_params):
    """x: (B, 3072) f32.  prepared_params: output of prepare_params()."""
    w1p, b1p, w2p, b2p, w3p, b3p, w4p, b4p = prepared_params

    B = x.shape[0]
    Bp = max(16, pl.cdiv(B, 16) * 16)          # bf16 packs 16 rows per sublane tile
    x_p = _pad2d(x, (Bp, IN_F)).astype(jnp.bfloat16)

    n_k = IN_F // TK
    const = lambda k: (0, 0)                   # VMEM-resident across all K steps

    out_padded = pl.pallas_call(
        fcnet_kernel,
        out_shape=jax.ShapeDtypeStruct((Bp, OUTP), jnp.float32),
        grid_spec=pltpu.PrefetchScalarGridSpec(
            num_scalar_prefetch=0,
            grid=(n_k,),
            in_specs=[
                pl.BlockSpec((Bp, TK), lambda k: (0, k)),    # x   : streamed over K
                pl.BlockSpec((TK, H1P), lambda k: (k, 0)),   # w1  : streamed over K
                pl.BlockSpec((1, H1P), const),               # b1
                pl.BlockSpec((H1P, H2P), const),             # w2
                pl.BlockSpec((1, H2P), const),               # b2
                pl.BlockSpec((H2P, H3P), const),             # w3
                pl.BlockSpec((1, H3P), const),               # b3
                pl.BlockSpec((H3P, OUTP), const),            # w4
                pl.BlockSpec((1, OUTP), const),              # b4
            ],
            out_specs=pl.BlockSpec((Bp, OUTP), const),
            scratch_shapes=[pltpu.VMEM((Bp, H1P), jnp.float32)],   # layer-1 f32 acc
        ),
        compiler_params=pltpu.CompilerParams(
            dimension_semantics=("arbitrary",),   # reduction axis; keep single-core
            vmem_limit_bytes=32 << 20,            # actual footprint ~7-8 MiB; v7x-safe
        ),
    )(x_p, w1p, b1p, w2p, b2p, w3p, b3p, w4p, b4p)

    # Slice away batch + lane padding (padded lanes hold sigmoid(0)=0.5).
    return out_padded[:B, :OUT]


def init_linear(key, in_f, out_f):
    """Deterministic init mimicking nn.Linear's U(-1/sqrt(in), 1/sqrt(in))."""
    kw, kb = jax.random.split(key)
    bound = 1.0 / jnp.sqrt(jnp.float32(in_f))
    # Stored already transposed: (in_features, out_features).
    w = jax.random.uniform(kw, (in_f, out_f), jnp.float32, -bound, bound)
    # Bias stored as (1, out_features) for clean 2-D broadcasting on TPU.
    b = jax.random.uniform(kb, (1, out_f), jnp.float32, -bound, bound)
    return w, b


def reference_forward(x, params):
    (w1, b1), (w2, b2), (w3, b3), (w4, b4) = params
    h = jnp.maximum(x @ w1 + b1, 0.0)
    h = jnp.maximum(h @ w2 + b2, 0.0)
    h = jnp.maximum(h @ w3 + b3, 0.0)
    return jax.nn.sigmoid(h @ w4 + b4)


if __name__ == "__main__":
    key = jax.random.PRNGKey(0)
    k_x, k1, k2, k3, k4 = jax.random.split(key, 5)

    B = 8  # small batch
    x = jax.random.normal(k_x, (B, IN_F), jnp.float32)

    params = (
        init_linear(k1, IN_F, H1),
        init_linear(k2, H1, H2),
        init_linear(k3, H2, H3),
        init_linear(k4, H3, OUT),
    )

    # One-time packing (hoisted out of the forward path).
    prepared = prepare_params(params)
    prepared = tuple(jax.block_until_ready(p) for p in prepared)

    out = fcnet_forward(x, prepared)
    out = jax.block_until_ready(out)

    ref = reference_forward(x, params)  # f32 reference
    assert out.shape == (B, OUT), out.shape
    # bf16 matmul inputs (f32 accumulation): loosened tolerance vs f32 reference.
    assert jnp.allclose(out, ref, atol=2e-2, rtol=2e-2), "mismatch vs JAX reference"

    print("KERNEL_OK")
</pallas_src>

<mosaic_0001>
module attributes {stable_mosaic.version = 11 : i64} {
  func.func @fcnet_kernel(%arg0: i32, %arg1: memref<16x1024xbf16, #tpu.memory_space<vmem>>, %arg2: memref<1024x1024xbf16, #tpu.memory_space<vmem>>, %arg3: memref<1x1024xf32, #tpu.memory_space<vmem>>, %arg4: memref<1024x640xbf16, #tpu.memory_space<vmem>>, %arg5: memref<1x640xf32, #tpu.memory_space<vmem>>, %arg6: memref<640x256xbf16, #tpu.memory_space<vmem>>, %arg7: memref<1x256xf32, #tpu.memory_space<vmem>>, %arg8: memref<256x128xbf16, #tpu.memory_space<vmem>>, %arg9: memref<1x128xf32, #tpu.memory_space<vmem>>, %arg10: memref<16x128xf32, #tpu.memory_space<vmem>>, %arg11: memref<16x1024xf32, #tpu.memory_space<vmem>>) attributes {dimension_semantics = [#tpu.dimension_semantics<arbitrary>], iteration_bounds = array<i64: 3>, scalar_prefetch = 0 : i64, scratch_operands = 1 : i64, tpu.core_type = #tpu.core_type<tc>, window_params = [{transform_indices = @transform_0, window_bounds = array<i64: 16, 1024>}, {transform_indices = @transform_1, window_bounds = array<i64: 1024, 1024>}, {pipeline_mode = #tpu.pipeline_mode<synchronous>, transform_indices = @transform_2, window_bounds = array<i64: 1, 1024>}, {pipeline_mode = #tpu.pipeline_mode<synchronous>, transform_indices = @transform_3, window_bounds = array<i64: 1024, 640>}, {pipeline_mode = #tpu.pipeline_mode<synchronous>, transform_indices = @transform_4, window_bounds = array<i64: 1, 640>}, {pipeline_mode = #tpu.pipeline_mode<synchronous>, transform_indices = @transform_5, window_bounds = array<i64: 640, 256>}, {pipeline_mode = #tpu.pipeline_mode<synchronous>, transform_indices = @transform_6, window_bounds = array<i64: 1, 256>}, {pipeline_mode = #tpu.pipeline_mode<synchronous>, transform_indices = @transform_7, window_bounds = array<i64: 256, 128>}, {pipeline_mode = #tpu.pipeline_mode<synchronous>, transform_indices = @transform_8, window_bounds = array<i64: 1, 128>}, {pipeline_mode = #tpu.pipeline_mode<synchronous>, transform_indices = @transform_9, window_bounds = array<i64: 16, 128>}]} {
    %c0_i32 = arith.constant 0 : i32
    %0 = arith.cmpi eq, %arg0, %c0_i32 : i32
    %1 = arith.extui %0 : i1 to i32
    %c0_i32_0 = arith.constant 0 : i32
    %2 = arith.cmpi ne, %1, %c0_i32_0 : i32
    scf.if %2 {
      %cst_9 = arith.constant 0.000000e+00 : f32
      %12 = vector.broadcast %cst_9 : f32 to vector<16x1024xf32>
      %c0_10 = arith.constant 0 : index
      %c0_11 = arith.constant 0 : index
      %13 = vector.load %arg11[%c0_10, %c0_11] : memref<16x1024xf32, #tpu.memory_space<vmem>>, vector<16x1024xf32>
      tpu.vector_store %arg11[%c0_10, %c0_11], %12 {strides = array<i32>} : memref<16x1024xf32, #tpu.memory_space<vmem>>, vector<16x1024xf32>,
    } else {
    }
    %c0 = arith.constant 0 : index
    %c0_1 = arith.constant 0 : index
    %3 = vector.load %arg11[%c0, %c0_1] : memref<16x1024xf32, #tpu.memory_space<vmem>>, vector<16x1024xf32>
    %c0_2 = arith.constant 0 : index
    %c0_3 = arith.constant 0 : index
    %4 = vector.load %arg1[%c0_2, %c0_3] : memref<16x1024xbf16, #tpu.memory_space<vmem>>, vector<16x1024xbf16>
    %c0_4 = arith.constant 0 : index
    %c0_5 = arith.constant 0 : index
    %5 = vector.load %arg2[%c0_4, %c0_5] : memref<1024x1024xbf16, #tpu.memory_space<vmem>>, vector<1024x1024xbf16>
    %cst = arith.constant dense<0.000000e+00> : vector<16x1024xf32>
    %6 = tpu.matmul %4, %5, %cst {dimension_numbers = #tpu.dot_dimension_numbers<[1], [0], [0], [1], [0, 0, 1, 1], [], []>} : vector<16x1024xbf16>, vector<1024x1024xbf16>, vector<16x1024xf32> -> vector<16x1024xf32>
    %7 = arith.addf %3, %6 : vector<16x1024xf32>
    %c0_6 = arith.constant 0 : index
    %c0_7 = arith.constant 0 : index
    %8 = vector.load %arg11[%c0_6, %c0_7] : memref<16x1024xf32, #tpu.memory_space<vmem>>, vector<16x1024xf32>
    tpu.vector_store %arg11[%c0_6, %c0_7], %7 {strides = array<i32>} : memref<16x1024xf32, #tpu.memory_space<vmem>>, vector<16x1024xf32>,
    %c2_i32 = arith.constant 2 : i32
    %9 = arith.cmpi eq, %arg0, %c2_i32 : i32
    %10 = arith.extui %9 : i1 to i32
    %c0_i32_8 = arith.constant 0 : i32
    %11 = arith.cmpi ne, %10, %c0_i32_8 : i32
    scf.if %11 {
      %c0_9 = arith.constant 0 : index
      %c0_10 = arith.constant 0 : index
      %12 = vector.load %arg11[%c0_9, %c0_10] : memref<16x1024xf32, #tpu.memory_space<vmem>>, vector<16x1024xf32>
      %c0_11 = arith.constant 0 : index
      %c0_12 = arith.constant 0 : index
      %13 = vector.load %arg3[%c0_11, %c0_12] : memref<1x1024xf32, #tpu.memory_space<vmem>>, vector<1x1024xf32>
      %14 = vector.broadcast %13 : vector<1x1024xf32> to vector<16x1024xf32>
      %15 = arith.addf %12, %14 : vector<16x1024xf32>
      %cst_13 = arith.constant 0.000000e+00 : f32
      %16 = vector.broadcast %cst_13 : f32 to vector<16x1024xf32>
      %17 = arith.maximumf %15, %16 : vector<16x1024xf32>
      %18 = arith.truncf %17 : vector<16x1024xf32> to vector<16x1024xbf16>
      %c0_14 = arith.constant 0 : index
      %c0_15 = arith.constant 0 : index
      %19 = vector.load %arg4[%c0_14, %c0_15] : memref<1024x640xbf16, #tpu.memory_space<vmem>>, vector<1024x640xbf16>
      %cst_16 = arith.constant dense<0.000000e+00> : vector<16x640xf32>
      %20 = tpu.matmul %18, %19, %cst_16 {dimension_numbers = #tpu.dot_dimension_numbers<[1], [0], [0], [1], [0, 0, 1, 1], [], []>} : vector<16x1024xbf16>, vector<1024x640xbf16>, vector<16x640xf32> -> vector<16x640xf32>
      %c0_17 = arith.constant 0 : index
      %c0_18 = arith.constant 0 : index
      %21 = vector.load %arg5[%c0_17, %c0_18] : memref<1x640xf32, #tpu.memory_space<vmem>>, vector<1x640xf32>
      %22 = vector.broadcast %21 : vector<1x640xf32> to vector<16x640xf32>
      %23 = arith.addf %20, %22 : vector<16x640xf32>
      %cst_19 = arith.constant 0.000000e+00 : f32
      %24 = vector.broadcast %cst_19 : f32 to vector<16x640xf32>
      %25 = arith.maximumf %23, %24 : vector<16x640xf32>
      %26 = arith.truncf %25 : vector<16x640xf32> to vector<16x640xbf16>
      %c0_20 = arith.constant 0 : index
      %c0_21 = arith.constant 0 : index
      %27 = vector.load %arg6[%c0_20, %c0_21] : memref<640x256xbf16, #tpu.memory_space<vmem>>, vector<640x256xbf16>
      %cst_22 = arith.constant dense<0.000000e+00> : vector<16x256xf32>
      %28 = tpu.matmul %26, %27, %cst_22 {dimension_numbers = #tpu.dot_dimension_numbers<[1], [0], [0], [1], [0, 0, 1, 1], [], []>} : vector<16x640xbf16>, vector<640x256xbf16>, vector<16x256xf32> -> vector<16x256xf32>
      %c0_23 = arith.constant 0 : index
      %c0_24 = arith.constant 0 : index
      %29 = vector.load %arg7[%c0_23, %c0_24] : memref<1x256xf32, #tpu.memory_space<vmem>>, vector<1x256xf32>
      %30 = vector.broadcast %29 : vector<1x256xf32> to vector<16x256xf32>
      %31 = arith.addf %28, %30 : vector<16x256xf32>
      %cst_25 = arith.constant 0.000000e+00 : f32
      %32 = vector.broadcast %cst_25 : f32 to vector<16x256xf32>
      %33 = arith.maximumf %31, %32 : vector<16x256xf32>
      %34 = arith.truncf %33 : vector<16x256xf32> to vector<16x256xbf16>
      %c0_26 = arith.constant 0 : index
      %c0_27 = arith.constant 0 : index
      %35 = vector.load %arg8[%c0_26, %c0_27] : memref<256x128xbf16, #tpu.memory_space<vmem>>, vector<256x128xbf16>
      %cst_28 = arith.constant dense<0.000000e+00> : vector<16x128xf32>
      %36 = tpu.matmul %34, %35, %cst_28 {dimension_numbers = #tpu.dot_dimension_numbers<[1], [0], [0], [1], [0, 0, 1, 1], [], []>} : vector<16x256xbf16>, vector<256x128xbf16>, vector<16x128xf32> -> vector<16x128xf32>
      %c0_29 = arith.constant 0 : index
      %c0_30 = arith.constant 0 : index
      %37 = vector.load %arg9[%c0_29, %c0_30] : memref<1x128xf32, #tpu.memory_space<vmem>>, vector<1x128xf32>
      %38 = vector.broadcast %37 : vector<1x128xf32> to vector<16x128xf32>
      %39 = arith.addf %36, %38 : vector<16x128xf32>
      %40 = arith.negf %39 : vector<16x128xf32>
      %41 = math.exp %40 : vector<16x128xf32>
      %cst_31 = arith.constant 1.000000e+00 : f32
      %42 = vector.broadcast %cst_31 : f32 to vector<16x128xf32>
      %43 = arith.addf %42, %41 : vector<16x128xf32>
      %44 = arith.divf %42, %43 : vector<16x128xf32>
      %c0_32 = arith.constant 0 : index
      %c0_33 = arith.constant 0 : index
      %45 = vector.load %arg10[%c0_32, %c0_33] : memref<16x128xf32, #tpu.memory_space<vmem>>, vector<16x128xf32>
      tpu.vector_store %arg10[%c0_32, %c0_33], %44 {strides = array<i32>} : memref<16x128xf32, #tpu.memory_space<vmem>>, vector<16x128xf32>,
    } else {
    }
    return
  }
  func.func @transform_0(%arg0: i32) -> (i32, i32) {
    %c0_i32 = arith.constant 0 : i32
    %c0_i32_0 = arith.constant 0 : i32
    return %c0_i32, %arg0 : i32, i32
  }
  func.func @transform_1(%arg0: i32) -> (i32, i32) {
    %c0_i32 = arith.constant 0 : i32
    %c0_i32_0 = arith.constant 0 : i32
    return %arg0, %c0_i32 : i32, i32
  }
  func.func @transform_2(%arg0: i32) -> (i32, i32) {
    %c0_i32 = arith.constant 0 : i32
    %c0_i32_0 = arith.constant 0 : i32
    %c0_i32_1 = arith.constant 0 : i32
    return %c0_i32, %c0_i32_0 : i32, i32
  }
  func.func @transform_3(%arg0: i32) -> (i32, i32) {
    %c0_i32 = arith.constant 0 : i32
    %c0_i32_0 = arith.constant 0 : i32
    %c0_i32_1 = arith.constant 0 : i32
    return %c0_i32, %c0_i32_0 : i32, i32
  }
  func.func @transform_4(%arg0: i32) -> (i32, i32) {
    %c0_i32 = arith.constant 0 : i32
    %c0_i32_0 = arith.constant 0 : i32
    %c0_i32_1 = arith.constant 0 : i32
    return %c0_i32, %c0_i32_0 : i32, i32
  }
  func.func @transform_5(%arg0: i32) -> (i32, i32) {
    %c0_i32 = arith.constant 0 : i32
    %c0_i32_0 = arith.constant 0 : i32
    %c0_i32_1 = arith.constant 0 : i32
    return %c0_i32, %c0_i32_0 : i32, i32
  }
  func.func @transform_6(%arg0: i32) -> (i32, i32) {
    %c0_i32 = arith.constant 0 : i32
    %c0_i32_0 = arith.constant 0 : i32
    %c0_i32_1 = arith.constant 0 : i32
    return %c0_i32, %c0_i32_0 : i32, i32
  }
  func.func @transform_7(%arg0: i32) -> (i32, i32) {
    %c0_i32 = arith.constant 0 : i32
    %c0_i32_0 = arith.constant 0 : i32
    %c0_i32_1 = arith.constant 0 : i32
    return %c0_i32, %c0_i32_0 : i32, i32
  }
  func.func @transform_8(%arg0: i32) -> (i32, i32) {
    %c0_i32 = arith.constant 0 : i32
    %c0_i32_0 = arith.constant 0 : i32
    %c0_i32_1 = arith.constant 0 : i32
    return %c0_i32, %c0_i32_0 : i32, i32
  }
  func.func @transform_9(%arg0: i32) -> (i32, i32) {
    %c0_i32 = arith.constant 0 : i32
    %c0_i32_0 = arith.constant 0 : i32
    %c0_i32_1 = arith.constant 0 : i32
    return %c0_i32, %c0_i32_0 : i32, i32
  }
}

</mosaic_0001>

<llo_original>
// kernel: fcnet_forward.1
$region0: #{fcnet_forward.1}
  #allocation0 [shape = 'u32[]', space=smem, size = 0x4, offset = 0x4, fixed_abs, tag = 'smem constant byte address 0x4 - core index']
  #allocation1 [shape = 'u32[144,128]{1,0:T(1,128)}', space=vmem, size = 0x12000, scoped, tag = 'internal scratch']
  #allocation2 [shape = 'f32[16,1024]{1,0:T(8,128)}', space=vmem, size = 0x10000, scoped, tag = 'scratch operand']
  %s0 = inlined_call_operand.vmem [shape: bf16[16,3072], index: 0, kind: input, shape index: {}]
  %s1 = inlined_call_operand.hbm [shape: bf16[3072,1024], index: 1, kind: input, shape index: {}]
  %s2 = inlined_call_operand.hbm [shape: f32[1,1024], index: 2, kind: input, shape index: {}]
  %s3 = inlined_call_operand.hbm [shape: bf16[1024,640], index: 3, kind: input, shape index: {}]
  %s4 = inlined_call_operand.hbm [shape: f32[1,640], index: 4, kind: input, shape index: {}]
  %s5 = inlined_call_operand.hbm [shape: bf16[640,256], index: 5, kind: input, shape index: {}]
  %s6 = inlined_call_operand.hbm [shape: f32[1,256], index: 6, kind: input, shape index: {}]
  %s7 = inlined_call_operand.hbm [shape: bf16[256,128], index: 7, kind: input, shape index: {}]
  %s8 = inlined_call_operand.hbm [shape: f32[1,128], index: 8, kind: input, shape index: {}]
  %s9 = inlined_call_operand.vmem [shape: f32[16,128], index: 9, kind: output, shape index: {}]
  %s10 = sld [smem:[#allocation0]]
  $region132: #{fcnet_forward.1} parent=0
    _
  %s12 = ssub.s32 1, %s10
  %s13 = scalar_select 0, %s12, %s10
  $region1: #{fcnet_forward.1} parent=0
    #allocation3 [shape = 'u8[65536]{0}', space=vmem, size = 0x10000, scoped, tag = 'input window, operand 0']
    #allocation4 [shape = 'u8[4194304]{0}', space=vmem, size = 0x400000, scoped, tag = 'input window, operand 1']
    #allocation5 [shape = 's32[2]{0}', space=sflag, size = 0x8, scoped, tag = 'scoped memory for fcnet_forward.1']
    #allocation6 [shape = 'u8[4096]{0}', space=vmem, size = 0x1000, scoped, tag = 'input window, operand 2, single buffered']
    #allocation7 [shape = 's32[1]{0}', space=sflag, size = 0x4, scoped, tag = 'scoped memory for fcnet_forward.1']
    #allocation8 [shape = 'u8[1310720]{0}', space=vmem, size = 0x140000, scoped, tag = 'input window, operand 3, single buffered']
    #allocation9 [shape = 'u8[2560]{0}', space=vmem, size = 0xc00, scoped, tag = 'input window, operand 4, single buffered']
    #allocation10 [shape = 's32[1]{0}', space=sflag, size = 0x4, scoped, tag = 'scoped memory for fcnet_forward.1']
    #allocation11 [shape = 'u8[327680]{0}', space=vmem, size = 0x50000, scoped, tag = 'input window, operand 5, single buffered']
    #allocation12 [shape = 'u8[1024]{0}', space=vmem, size = 0x400, scoped, tag = 'input window, operand 6, single buffered']
    #allocation13 [shape = 's32[1]{0}', space=sflag, size = 0x4, scoped, tag = 'scoped memory for fcnet_forward.1']
    #allocation14 [shape = 'u8[65536]{0}', space=vmem, size = 0x10000, scoped, tag = 'input window, operand 7, single buffered']
    #allocation15 [shape = 'u8[512]{0}', space=vmem, size = 0x400, scoped, tag = 'input window, operand 8, single buffered']
    #allocation16 [shape = 's32[1]{0}', space=sflag, size = 0x4, scoped, tag = 'scoped memory for fcnet_forward.1']
    %14 = vsyncpa [#allocation5], 0
    %s15 = scalar_lea.sflag [#allocation5], 1
    %16 = vsyncpa %s15, 0
    %17 = vsyncpa [#allocation7], 0
    %18 = vsyncpa [#allocation10], 0
    %19 = vsyncpa [#allocation13], 0
    %20 = vsyncpa [#allocation16], 0
    loop: start=0, step=1, limit=5
    $region2: #{fcnet_forward.1} parent=1 // loop_pre_header
      _
    $region3: #{fcnet_forward.1} parent=1 // loop_header
      %s22 = sphi 0, %s26
      %p23 = scmp.ge.s32.totalorder %s22, 5
      %s32 = sphi 0, %s34
      %s35 = sphi 0, %s32
      %s36 = sphi 0, %s35
      %s52 = sphi 0, %s36
      %s58 = sphi 0, %s60
      %s61 = sphi 0, %s58
      %s62 = sphi 0, %s61
      %s78 = sphi 0, %s62
      %s82 = sphi 0, %s82
      %s84 = sphi 0, %s82
      %s85 = sphi 0, %s84
      %s99 = sphi 0, %s85
      %s103 = sphi 0, %s103
      %s105 = sphi 0, %s103
      %s106 = sphi 0, %s105
      %s120 = sphi 0, %s106
      %s124 = sphi 0, %s124
      %s126 = sphi 0, %s124
      %s127 = sphi 0, %s126
      %s141 = sphi 0, %s127
      %s145 = sphi 0, %s145
      %s147 = sphi 0, %s145
      %s148 = sphi 0, %s147
      %s162 = sphi 0, %s148
      %s166 = sphi 0, %s166
      %s168 = sphi 0, %s166
      %s169 = sphi 0, %s168
      %s183 = sphi 0, %s169
      %s187 = sphi 0, %s187
      %s189 = sphi 0, %s187
      %s190 = sphi 0, %s189
      %s204 = sphi 0, %s190
      %s208 = sphi 0, %s208
      %s210 = sphi 0, %s208
      %s211 = sphi 0, %s210
      %s225 = sphi 0, %s211
      %s229 = sphi 0, %s229
      %s231 = sphi 0, %s229
      %s232 = sphi 0, %s231
      %s246 = sphi 0, %s232
    $region4: #{fcnet_forward.1} parent=1 // loop_header_branch
      %25 = sbr.rel (%p23) target = $region8
    $region5: #{fcnet_forward.1} parent=1 // loop_body
      %s27 = ssub.s32 %s22, 1
      %s28 = ssub.s32 %s22, 2
      %s29 = sadd.s32 %s22, 1
      %s30 = ssub.s32 %s22, %s29
      %p31 = scmp.eq.s32.totalorder %s30, 0
      %s33 = sadd.s32 %s32, 1
      %s34 = scalar_select %p31, %s32, %s33
      %p37 = pneg %p31
      %p38 = scmp.eq.s32.totalorder %s22, 2
      %p39 = por %p37, %p38
      %p40 = scmp.ne.s32.totalorder %s32, %s35
      %p41 = scmp.eq.s32.totalorder %s22, 0
      %p42 = por %p40, %p41
      %p43 = scmp.ne.s32.totalorder %s32, %s35
      %p44 = scmp.eq.s32.totalorder %s27, 2
      %p45 = por %p43, %p44
      %p46 = scmp.ne.s32.totalorder %s35, %s36
      %p47 = scmp.eq.s32.totalorder %s27, 0
      %p48 = por %p46, %p47
      %p49 = scmp.ne.s32.totalorder %s35, %s36
      %p50 = scmp.eq.s32.totalorder %s28, 2
      %p51 = por %p49, %p50
      %p53 = scmp.ne.s32.totalorder %s36, %s52
      %p54 = scmp.eq.s32.totalorder %s28, 0
      %p55 = por %p53, %p54
      %s56 = ssub.s32 %s22, %s29
      %p57 = scmp.eq.s32.totalorder %s56, 0
      %s59 = sadd.s32 %s58, 1
      %s60 = scalar_select %p57, %s58, %s59
      %p63 = pneg %p57
      %p64 = scmp.eq.s32.totalorder %s22, 2
      %p65 = por %p63, %p64
      %p66 = scmp.ne.s32.totalorder %s58, %s61
      %p67 = scmp.eq.s32.totalorder %s22, 0
      %p68 = por %p66, %p67
      %p69 = scmp.ne.s32.totalorder %s58, %s61
      %p70 = scmp.eq.s32.totalorder %s27, 2
      %p71 = por %p69, %p70
      %p72 = scmp.ne.s32.totalorder %s61, %s62
      %p73 = scmp.eq.s32.totalorder %s27, 0
      %p74 = por %p72, %p73
      %p75 = scmp.ne.s32.totalorder %s61, %s62
      %p76 = scmp.eq.s32.totalorder %s28, 2
      %p77 = por %p75, %p76
      %p79 = scmp.ne.s32.totalorder %s62, %s78
      %p80 = scmp.eq.s32.totalorder %s28, 0
      %p81 = por %p79, %p80
      %s83 = sadd.s32 %s82, 1
      %p86 = scmp.eq.s32.totalorder %s22, 2
      %p87 = scmp.ne.s32.totalorder %s82, %s84
      %p88 = scmp.eq.s32.totalorder %s22, 0
      %p89 = por %p87, %p88
      %p90 = scmp.ne.s32.totalorder %s82, %s84
      %p91 = scmp.eq.s32.totalorder %s27, 2
      %p92 = por %p90, %p91
      %p93 = scmp.ne.s32.totalorder %s84, %s85
      %p94 = scmp.eq.s32.totalorder %s27, 0
      %p95 = por %p93, %p94
      %p96 = scmp.ne.s32.totalorder %s84, %s85
      %p97 = scmp.eq.s32.totalorder %s28, 2
      %p98 = por %p96, %p97
      %p100 = scmp.ne.s32.totalorder %s85, %s99
      %p101 = scmp.eq.s32.totalorder %s28, 0
      %p102 = por %p100, %p101
      %s104 = sadd.s32 %s103, 1
      %p107 = scmp.eq.s32.totalorder %s22, 2
      %p108 = scmp.ne.s32.totalorder %s103, %s105
      %p109 = scmp.eq.s32.totalorder %s22, 0
      %p110 = por %p108, %p109
      %p111 = scmp.ne.s32.totalorder %s103, %s105
      %p112 = scmp.eq.s32.totalorder %s27, 2
      %p113 = por %p111, %p112
      %p114 = scmp.ne.s32.totalorder %s105, %s106
      %p115 = scmp.eq.s32.totalorder %s27, 0
      %p116 = por %p114, %p115
      %p117 = scmp.ne.s32.totalorder %s105, %s106
      %p118 = scmp.eq.s32.totalorder %s28, 2
      %p119 = por %p117, %p118
      %p121 = scmp.ne.s32.totalorder %s106, %s120
      %p122 = scmp.eq.s32.totalorder %s28, 0
      %p123 = por %p121, %p122
      %s125 = sadd.s32 %s124, 1
      %p128 = scmp.eq.s32.totalorder %s22, 2
      %p129 = scmp.ne.s32.totalorder %s124, %s126
      %p130 = scmp.eq.s32.totalorder %s22, 0
      %p131 = por %p129, %p130
      %p132 = scmp.ne.s32.totalorder %s124, %s126
      %p133 = scmp.eq.s32.totalorder %s27, 2
      %p134 = por %p132, %p133
      %p135 = scmp.ne.s32.totalorder %s126, %s127
      %p136 = scmp.eq.s32.totalorder %s27, 0
      %p137 = por %p135, %p136
      %p138 = scmp.ne.s32.totalorder %s126, %s127
      %p139 = scmp.eq.s32.totalorder %s28, 2
      %p140 = por %p138, %p139
      %p142 = scmp.ne.s32.totalorder %s127, %s141
      %p143 = scmp.eq.s32.totalorder %s28, 0
      %p144 = por %p142, %p143
      %s146 = sadd.s32 %s145, 1
      %p149 = scmp.eq.s32.totalorder %s22, 2
      %p150 = scmp.ne.s32.totalorder %s145, %s147
      %p151 = scmp.eq.s32.totalorder %s22, 0
      %p152 = por %p150, %p151
      %p153 = scmp.ne.s32.totalorder %s145, %s147
      %p154 = scmp.eq.s32.totalorder %s27, 2
      %p155 = por %p153, %p154
      %p156 = scmp.ne.s32.totalorder %s147, %s148
      %p157 = scmp.eq.s32.totalorder %s27, 0
      %p158 = por %p156, %p157
      %p159 = scmp.ne.s32.totalorder %s147, %s148
      %p160 = scmp.eq.s32.totalorder %s28, 2
      %p161 = por %p159, %p160
      %p163 = scmp.ne.s32.totalorder %s148, %s162
      %p164 = scmp.eq.s32.totalorder %s28, 0
      %p165 = por %p163, %p164
      %s167 = sadd.s32 %s166, 1
      %p170 = scmp.eq.s32.totalorder %s22, 2
      %p171 = scmp.ne.s32.totalorder %s166, %s168
      %p172 = scmp.eq.s32.totalorder %s22, 0
      %p173 = por %p171, %p172
      %p174 = scmp.ne.s32.totalorder %s166, %s168
      %p175 = scmp.eq.s32.totalorder %s27, 2
      %p176 = por %p174, %p175
      %p177 = scmp.ne.s32.totalorder %s168, %s169
      %p178 = scmp.eq.s32.totalorder %s27, 0
      %p179 = por %p177, %p178
      %p180 = scmp.ne.s32.totalorder %s168, %s169
      %p181 = scmp.eq.s32.totalorder %s28, 2
      %p182 = por %p180, %p181
      %p184 = scmp.ne.s32.totalorder %s169, %s183
      %p185 = scmp.eq.s32.totalorder %s28, 0
      %p186 = por %p184, %p185
      %s188 = sadd.s32 %s187, 1
      %p191 = scmp.eq.s32.totalorder %s22, 2
      %p192 = scmp.ne.s32.totalorder %s187, %s189
      %p193 = scmp.eq.s32.totalorder %s22, 0
      %p194 = por %p192, %p193
      %p195 = scmp.ne.s32.totalorder %s187, %s189
      %p196 = scmp.eq.s32.totalorder %s27, 2
      %p197 = por %p195, %p196
      %p198 = scmp.ne.s32.totalorder %s189, %s190
      %p199 = scmp.eq.s32.totalorder %s27, 0
      %p200 = por %p198, %p199
      %p201 = scmp.ne.s32.totalorder %s189, %s190
      %p202 = scmp.eq.s32.totalorder %s28, 2
      %p203 = por %p201, %p202
      %p205 = scmp.ne.s32.totalorder %s190, %s204
      %p206 = scmp.eq.s32.totalorder %s28, 0
      %p207 = por %p205, %p206
      %s209 = sadd.s32 %s208, 1
      %p212 = scmp.eq.s32.totalorder %s22, 2
      %p213 = scmp.ne.s32.totalorder %s208, %s210
      %p214 = scmp.eq.s32.totalorder %s22, 0
      %p215 = por %p213, %p214
      %p216 = scmp.ne.s32.totalorder %s208, %s210
      %p217 = scmp.eq.s32.totalorder %s27, 2
      %p218 = por %p216, %p217
      %p219 = scmp.ne.s32.totalorder %s210, %s211
      %p220 = scmp.eq.s32.totalorder %s27, 0
      %p221 = por %p219, %p220
      %p222 = scmp.ne.s32.totalorder %s210, %s211
      %p223 = scmp.eq.s32.totalorder %s28, 2
      %p224 = por %p222, %p223
      %p226 = scmp.ne.s32.totalorder %s211, %s225
      %p227 = scmp.eq.s32.totalorder %s28, 0
      %p228 = por %p226, %p227
      %s230 = sadd.s32 %s229, 1
      %p233 = scmp.eq.s32.totalorder %s22, 2
      %p234 = scmp.ne.s32.totalorder %s229, %s231
      %p235 = scmp.eq.s32.totalorder %s22, 0
      %p236 = por %p234, %p235
      %p237 = scmp.ne.s32.totalorder %s229, %s231
      %p238 = scmp.eq.s32.totalorder %s27, 2
      %p239 = por %p237, %p238
      %p240 = scmp.ne.s32.totalorder %s231, %s232
      %p241 = scmp.eq.s32.totalorder %s27, 0
      %p242 = por %p240, %p241
      %p243 = scmp.ne.s32.totalorder %s231, %s232
      %p244 = scmp.eq.s32.totalorder %s28, 2
      %p245 = por %p243, %p244
      %p247 = scmp.ne.s32.totalorder %s232, %s246
      %p248 = scmp.eq.s32.totalorder %s28, 0
      %p249 = por %p247, %p248
      %p250 = scmp.le.s32.totalorder 1, %s22
      %p251 = scmp.lt.s32.totalorder %s22, 4
      %p252 = pnand %p250, %p251
      %p253 = pneg %p252
      // Predicated region
      $region9: #{fcnet_forward.1} parent=5 // pred_check
        _
      $region10: #{fcnet_forward.1} parent=5 // pred_check_branch
        %255 = sbr.rel (%p252) target = $region12
      $region11: #{fcnet_forward.1} parent=5 // pred_region
        %s256 = ssub.s32 %s22, 1
        // Predicated region
        $region13: #{fcnet_forward.1} parent=11 // pred_check
          %p257 = pneg %p95
        $region14: #{fcnet_forward.1} parent=11 // pred_check_branch
          %259 = sbr.rel (%p257) target = $region16
        $region15: #{fcnet_forward.1} parent=11 // pred_region
          %s261 = ssub.s32 128, 128
          %262 = vsyncadd [#allocation7], %s261
          %s264 = sshll.u32 [#allocation6], 4
          %s265 = int_to_ptr.vmem [resolvable:$true] %s264
          %267 = dma.hbm_to_vmem [thread:$0]  %s2, 128, %s265, [#allocation7]
        $region16: #{fcnet_forward.1} parent=11 // pred_fallthru
          _
        // Predicated region
        $region17: #{fcnet_forward.1} parent=11 // pred_check
          %p268 = pneg %p116
        $region18: #{fcnet_forward.1} parent=11 // pred_check_branch
          %270 = sbr.rel (%p268) target = $region20
        $region19: #{fcnet_forward.1} parent=11 // pred_region
          %s272 = ssub.s32 40960, 40960
          %273 = vsyncadd [#allocation7], %s272
          %s274 = sshll.u32 [#allocation8], 4
          %s275 = int_to_ptr.vmem [resolvable:$true] %s274
          %280 = dma.hbm_to_vmem [thread:$0]  %s3, 40960, %s275, [#allocation7], 320, 320, 20
        $region20: #{fcnet_forward.1} parent=11 // pred_fallthru
          _
        // Predicated region
        $region21: #{fcnet_forward.1} parent=11 // pred_check
          %p281 = pneg %p137
        $region22: #{fcnet_forward.1} parent=11 // pred_check_branch
          %283 = sbr.rel (%p281) target = $region24
        $region23: #{fcnet_forward.1} parent=11 // pred_region
          %s285 = ssub.s32 80, 80
          %286 = vsyncadd [#allocation10], %s285
          %s288 = sshll.u32 [#allocation9], 4
          %s289 = int_to_ptr.vmem [resolvable:$true] %s288
          %291 = dma.hbm_to_vmem [thread:$0]  %s4, 80, %s289, [#allocation10]
        $region24: #{fcnet_forward.1} parent=11 // pred_fallthru
          _
        // Predicated region
        $region25: #{fcnet_forward.1} parent=11 // pred_check
          %p292 = pneg %p158
        $region26: #{fcnet_forward.1} parent=11 // pred_check_branch
          %294 = sbr.rel (%p292) target = $region28
        $region27: #{fcnet_forward.1} parent=11 // pred_region
          %s296 = ssub.s32 10240, 10240
          %297 = vsyncadd [#allocation10], %s296
          %s298 = sshll.u32 [#allocation11], 4
          %s299 = int_to_ptr.vmem [resolvable:$true] %s298
          %304 = dma.hbm_to_vmem [thread:$0]  %s5, 10240, %s299, [#allocation10], 128, 128, 8
        $region28: #{fcnet_forward.1} parent=11 // pred_fallthru
          _
        // Predicated region
        $region29: #{fcnet_forward.1} parent=11 // pred_check
          %p305 = pneg %p179
        $region30: #{fcnet_forward.1} parent=11 // pred_check_branch
          %307 = sbr.rel (%p305) target = $region32
        $region31: #{fcnet_forward.1} parent=11 // pred_region
          %s309 = ssub.s32 32, 32
          %310 = vsyncadd [#allocation13], %s309
          %s312 = sshll.u32 [#allocation12], 4
          %s313 = int_to_ptr.vmem [resolvable:$true] %s312
          %315 = dma.hbm_to_vmem [thread:$0]  %s6, 32, %s313, [#allocation13]
        $region32: #{fcnet_forward.1} parent=11 // pred_fallthru
          _
        // Predicated region
        $region33: #{fcnet_forward.1} parent=11 // pred_check
          %p316 = pneg %p200
        $region34: #{fcnet_forward.1} parent=11 // pred_check_branch
          %318 = sbr.rel (%p316) target = $region36
        $region35: #{fcnet_forward.1} parent=11 // pred_region
          %s320 = ssub.s32 2048, 2048
          %321 = vsyncadd [#allocation13], %s320
          %s322 = sshll.u32 [#allocation14], 4
          %s323 = int_to_ptr.vmem [resolvable:$true] %s322
          %328 = dma.hbm_to_vmem [thread:$0]  %s7, 2048, %s323, [#allocation13], 64, 64, 4
        $region36: #{fcnet_forward.1} parent=11 // pred_fallthru
          _
        // Predicated region
        $region37: #{fcnet_forward.1} parent=11 // pred_check
          %p329 = pneg %p221
        $region38: #{fcnet_forward.1} parent=11 // pred_check_branch
          %331 = sbr.rel (%p329) target = $region40
        $region39: #{fcnet_forward.1} parent=11 // pred_region
          %s333 = ssub.s32 16, 16
          %334 = vsyncadd [#allocation16], %s333
          %s336 = sshll.u32 [#allocation15], 4
          %s337 = int_to_ptr.vmem [resolvable:$true] %s336
          %339 = dma.hbm_to_vmem [thread:$0]  %s8, 16, %s337, [#allocation16]
        $region40: #{fcnet_forward.1} parent=11 // pred_fallthru
          _
      $region12: #{fcnet_forward.1} parent=5 // pred_fallthru
        _
      %p340 = scmp.lt.s32.totalorder %s22, 3
      // Predicated region
      $region41: #{fcnet_forward.1} parent=5 // pred_check
        %p341 = pneg %p340
      $region42: #{fcnet_forward.1} parent=5 // pred_check_branch
        %343 = sbr.rel (%p341) target = $region44
      $region43: #{fcnet_forward.1} parent=5 // pred_region
        // Predicated region
        $region45: #{fcnet_forward.1} parent=43 // pred_check
          %p344 = pneg %p42
        $region46: #{fcnet_forward.1} parent=43 // pred_check_branch
          %346 = sbr.rel (%p344) target = $region48
        $region47: #{fcnet_forward.1} parent=43 // pred_region
          %s347 = sand.u32 %s32, 1
          %s348 = sand.u32 %s32, 1
          %s349 = smul.addr %s348, 64
          %s350 = scalar_lea.vmem [#allocation3], %s349
          %s351 = smul.u32 8, %s22
          %s352 = smul.addr %s351, 4
          %s353 = scalar_lea.vmem %s0, %s352
          // Predicated region
          $region49: #{fcnet_forward.1} parent=47 // pred_check
            _
          $region50: #{fcnet_forward.1} parent=47 // pred_check_branch
            %355 = sbr.rel (0) target = $region52
          $region51: #{fcnet_forward.1} parent=47 // pred_region
            // Predicated region
            $region53: #{fcnet_forward.1} parent=51 // pred_check
              _
            $region54: #{fcnet_forward.1} parent=51 // pred_check_branch
              %357 = sbr.rel (0) target = $region56
            $region55: #{fcnet_forward.1} parent=51 // pred_region
              loop: start=0, step=1, limit=1
              $region57: #{fcnet_forward.1} parent=55 // loop_pre_header
                _
              $region58: #{fcnet_forward.1} parent=55 // loop_header
                %s359 = sphi 0, %s363
                %p360 = scmp.ge.s32.totalorder %s359, 1
                %s364 = sphi %s353, %s353
                %s365 = sphi %s350, %s350
              $region59: #{fcnet_forward.1} parent=55 // loop_header_branch
                %362 = sbr.rel (%p360) target = $region63
              $region60: #{fcnet_forward.1} parent=55 // loop_body
                %v366 = vld [vmem:[%s364] sm:$0xff]
                %367 = vst [vmem:[%s365] sm:$0xff] %v366
                %v368 = vld [vmem:[%s364 + $0x8] sm:$0xff]
                %369 = vst [vmem:[%s365 + $0x8] sm:$0xff] %v368
                %v370 = vld [vmem:[%s364 + $0x10] sm:$0xff]
                %371 = vst [vmem:[%s365 + $0x10] sm:$0xff] %v370
                %v372 = vld [vmem:[%s364 + $0x18] sm:$0xff]
                %373 = vst [vmem:[%s365 + $0x18] sm:$0xff] %v372
                %v374 = vld [vmem:[%s364 + $0x60] sm:$0xff]
                %375 = vst [vmem:[%s365 + $0x20] sm:$0xff] %v374
                %v376 = vld [vmem:[%s364 + $0x68] sm:$0xff]
                %377 = vst [vmem:[%s365 + $0x28] sm:$0xff] %v376
                %v378 = vld [vmem:[%s364 + $0x70] sm:$0xff]
                %379 = vst [vmem:[%s365 + $0x30] sm:$0xff] %v378
                %v380 = vld [vmem:[%s364 + $0x78] sm:$0xff]
                %381 = vst [vmem:[%s365 + $0x38] sm:$0xff] %v380
              $region61: #{fcnet_forward.1} parent=55 // loop_footer
                %s363 = sadd.s32 1, %s359
              $region62: #{fcnet_forward.1} parent=55 // loop_footer_branch
                %358 = sbr.rel target = $region58
              $region63: #{fcnet_forward.1} parent=55 // loop_exit
                _
            $region56: #{fcnet_forward.1} parent=51 // pred_fallthru
              _
            // Predicated region
            $region64: #{fcnet_forward.1} parent=51 // pred_check
              _
            $region65: #{fcnet_forward.1} parent=51 // pred_check_branch
              %383 = sbr.rel target = $region67
            $region66: #{fcnet_forward.1} parent=51 // pred_region
              _
            $region67: #{fcnet_forward.1} parent=51 // pred_fallthru
              _
          $region52: #{fcnet_forward.1} parent=47 // pred_fallthru
            _
          %384 = vnop
        $region48: #{fcnet_forward.1} parent=43 // pred_fallthru
          _
        // Predicated region
        $region68: #{fcnet_forward.1} parent=43 // pred_check
          %p385 = pneg %p68
        $region69: #{fcnet_forward.1} parent=43 // pred_check_branch
          %387 = sbr.rel (%p385) target = $region71
        $region70: #{fcnet_forward.1} parent=43 // pred_region
          %s388 = sand.u32 %s58, 1
          %s389 = scalar_lea.sflag [#allocation5], %s388
          %s390 = sand.u32 %s58, 1
          %s391 = smul.addr %s390, 4096
          %s392 = scalar_lea.vmem [#allocation4], %s391
          %s393 = smul.u32 128, %s22
          %s395 = ssub.s32 65536, 65536
          %396 = vsyncadd %s389, %s395
          %s397 = smul.addr %s393, 8
          %s398 = smul.addr %s397, 64
          %s399 = scalar_lea.hbm %s1, %s398
          %s400 = sshll.u32 %s392, 4
          %s401 = int_to_ptr.vmem [resolvable:$true] %s400
          %406 = dma.hbm_to_vmem [thread:$0]  %s399, 65536, %s401, %s389, 512, 512, 32
        $region71: #{fcnet_forward.1} parent=43 // pred_fallthru
          _
      $region44: #{fcnet_forward.1} parent=5 // pred_fallthru
        _
      %p407 = scmp.le.s32.totalorder 1, %s22
      %p408 = scmp.lt.s32.totalorder %s22, 4
      %p409 = pnand %p407, %p408
      %p410 = pneg %p409
      // Predicated region
      $region72: #{fcnet_forward.1} parent=5 // pred_check
        _
      $region73: #{fcnet_forward.1} parent=5 // pred_check_branch
        %412 = sbr.rel (%p409) target = $region75
      $region74: #{fcnet_forward.1} parent=5 // pred_region
        %s413 = ssub.s32 %s22, 1
        %s414 = sand.u32 %s35, 1
        %s415 = sand.u32 %s35, 1
        %s416 = smul.addr %s415, 64
        %s417 = scalar_lea.vmem [#allocation3], %s416
        // Predicated region
        $region76: #{fcnet_forward.1} parent=74 // pred_check
          %p418 = pneg %p48
        $region77: #{fcnet_forward.1} parent=74 // pred_check_branch
          %420 = sbr.rel (%p418) target = $region79
        $region78: #{fcnet_forward.1} parent=74 // pred_region
          _
        $region79: #{fcnet_forward.1} parent=74 // pred_fallthru
          _
        %s421 = sand.u32 %s61, 1
        %s422 = scalar_lea.sflag [#allocation5], %s421
        %s423 = sand.u32 %s61, 1
        %s424 = smul.addr %s423, 4096
        %s425 = scalar_lea.vmem [#allocation4], %s424
        // Predicated region
        $region80: #{fcnet_forward.1} parent=74 // pred_check
          %p426 = pneg %p74
        $region81: #{fcnet_forward.1} parent=74 // pred_check_branch
          %428 = sbr.rel (%p426) target = $region83
        $region82: #{fcnet_forward.1} parent=74 // pred_region
          %429 = dma.done %s422, 65536
        $region83: #{fcnet_forward.1} parent=74 // pred_fallthru
          _
        // Predicated region
        $region84: #{fcnet_forward.1} parent=74 // pred_check
          %p430 = pneg %p95
        $region85: #{fcnet_forward.1} parent=74 // pred_check_branch
          %432 = sbr.rel (%p430) target = $region87
        $region86: #{fcnet_forward.1} parent=74 // pred_region
          %433 = dma.done [#allocation7], 128
        $region87: #{fcnet_forward.1} parent=74 // pred_fallthru
          _
        // Predicated region
        $region88: #{fcnet_forward.1} parent=74 // pred_check
          %p434 = pneg %p116
        $region89: #{fcnet_forward.1} parent=74 // pred_check_branch
          %436 = sbr.rel (%p434) target = $region91
        $region90: #{fcnet_forward.1} parent=74 // pred_region
          %437 = dma.done [#allocation7], 40960
        $region91: #{fcnet_forward.1} parent=74 // pred_fallthru
          _
        // Predicated region
        $region92: #{fcnet_forward.1} parent=74 // pred_check
          %p438 = pneg %p137
        $region93: #{fcnet_forward.1} parent=74 // pred_check_branch
          %440 = sbr.rel (%p438) target = $region95
        $region94: #{fcnet_forward.1} parent=74 // pred_region
          %441 = dma.done [#allocation10], 80
        $region95: #{fcnet_forward.1} parent=74 // pred_fallthru
          _
        // Predicated region
        $region96: #{fcnet_forward.1} parent=74 // pred_check
          %p442 = pneg %p158
        $region97: #{fcnet_forward.1} parent=74 // pred_check_branch
          %444 = sbr.rel (%p442) target = $region99
        $region98: #{fcnet_forward.1} parent=74 // pred_region
          %445 = dma.done [#allocation10], 10240
        $region99: #{fcnet_forward.1} parent=74 // pred_fallthru
          _
        // Predicated region
        $region100: #{fcnet_forward.1} parent=74 // pred_check
          %p446 = pneg %p179
        $region101: #{fcnet_forward.1} parent=74 // pred_check_branch
          %448 = sbr.rel (%p446) target = $region103
        $region102: #{fcnet_forward.1} parent=74 // pred_region
          %449 = dma.done [#allocation13], 32
        $region103: #{fcnet_forward.1} parent=74 // pred_fallthru
          _
        // Predicated region
        $region104: #{fcnet_forward.1} parent=74 // pred_check
          %p450 = pneg %p200
        $region105: #{fcnet_forward.1} parent=74 // pred_check_branch
          %452 = sbr.rel (%p450) target = $region107
        $region106: #{fcnet_forward.1} parent=74 // pred_region
          %453 = dma.done [#allocation13], 2048
        $region107: #{fcnet_forward.1} parent=74 // pred_fallthru
          _
        // Predicated region
        $region108: #{fcnet_forward.1} parent=74 // pred_check
          %p454 = pneg %p221
        $region109: #{fcnet_forward.1} parent=74 // pred_check_branch
          %456 = sbr.rel (%p454) target = $region111
        $region110: #{fcnet_forward.1} parent=74 // pred_region
          %457 = dma.done [#allocation16], 16
        $region111: #{fcnet_forward.1} parent=74 // pred_fallthru
          _
        %s458 = sand.u32 %s35, 1
        %s459 = sand.u32 %s35, 1
        %s460 = smul.addr %s459, 64
        %s461 = scalar_lea.vmem [#allocation3], %s460
        %p462 = pneg %p48
        %p463 = pneg %p45
        %s464 = sand.u32 %s61, 1
        %s465 = scalar_lea.sflag [#allocation5], %s464
        %s466 = sand.u32 %s61, 1
        %s467 = smul.addr %s466, 4096
        %s468 = scalar_lea.vmem [#allocation4], %s467
        %p469 = pneg %p74
        %p470 = pneg %p71
        %p471 = pneg %p95
        %p472 = pneg %p92
        %p473 = pneg %p116
        %p474 = pneg %p113
        %p475 = pneg %p137
        %p476 = pneg %p134
        %p477 = pneg %p158
        %p478 = pneg %p155
        %p479 = pneg %p179
        %p480 = pneg %p176
        %p481 = pneg %p200
        %p482 = pneg %p197
        %p483 = pneg %p221
        %p484 = pneg %p218
        %p485 = pneg %p242
        %p486 = pneg %p239
        %s487 = smul.u32 8, %s27
        %s488 = smul.u32 128, %s27
        %p490 = scmp.eq.s32.totalorder %s27, 0
        // Predicated region
        $region112: #{fcnet_forward.1} parent=74 // pred_check
          %p491 = pneg %p490
        $region113: #{fcnet_forward.1} parent=74 // pred_check_branch
          %493 = sbr.rel (%p491) target = $region115
        $region114: #{fcnet_forward.1} parent=74 // pred_region
          %494 = vst [vmem:[#allocation2] sm:$0xff] 0.0
          %495 = vst [vmem:[#allocation2 + $0x8] sm:$0xff] 0.0
          %496 = vst [vmem:[#allocation2 + $0x10] sm:$0xff] 0.0
          %497 = vst [vmem:[#allocation2 + $0x18] sm:$0xff] 0.0
          %498 = vst [vmem:[#allocation2 + $0x20] sm:$0xff] 0.0
          %499 = vst [vmem:[#allocation2 + $0x28] sm:$0xff] 0.0
          %500 = vst [vmem:[#allocation2 + $0x30] sm:$0xff] 0.0
          %501 = vst [vmem:[#allocation2 + $0x38] sm:$0xff] 0.0
          %502 = vst [vmem:[#allocation2 + $0x40] sm:$0xff] 0.0
          %503 = vst [vmem:[#allocation2 + $0x48] sm:$0xff] 0.0
          %504 = vst [vmem:[#allocation2 + $0x50] sm:$0xff] 0.0
          %505 = vst [vmem:[#allocation2 + $0x58] sm:$0xff] 0.0
          %506 = vst [vmem:[#allocation2 + $0x60] sm:$0xff] 0.0
          %507 = vst [vmem:[#allocation2 + $0x68] sm:$0xff] 0.0
          %508 = vst [vmem:[#allocation2 + $0x70] sm:$0xff] 0.0
          %509 = vst [vmem:[#allocation2 + $0x78] sm:$0xff] 0.0
        $region115: #{fcnet_forward.1} parent=74 // pred_fallthru
          _
        %v510 = vld [vmem:[#allocation2] sm:$0xff]
        %v511 = vld [vmem:[#allocation2 + $0x8] sm:$0xff]
        %v512 = vld [vmem:[#allocation2 + $0x10] sm:$0xff]
        %v513 = vld [vmem:[#allocation2 + $0x18] sm:$0xff]
        %v514 = vld [vmem:[#allocation2 + $0x20] sm:$0xff]
        %v515 = vld [vmem:[#allocation2 + $0x28] sm:$0xff]
        %v516 = vld [vmem:[#allocation2 + $0x30] sm:$0xff]
        %v517 = vld [vmem:[#allocation2 + $0x38] sm:$0xff]
        %v518 = vld [vmem:[#allocation2 + $0x40] sm:$0xff]
        %v519 = vld [vmem:[#allocation2 + $0x48] sm:$0xff]
        %v520 = vld [vmem:[#allocation2 + $0x50] sm:$0xff]
        %v521 = vld [vmem:[#allocation2 + $0x58] sm:$0xff]
        %v522 = vld [vmem:[#allocation2 + $0x60] sm:$0xff]
        %v523 = vld [vmem:[#allocation2 + $0x68] sm:$0xff]
        %v524 = vld [vmem:[#allocation2 + $0x70] sm:$0xff]
        %v525 = vld [vmem:[#allocation2 + $0x78] sm:$0xff]
        %v526 = vld [vmem:[%s417] sm:$0xff]
        %v527 = vld [vmem:[%s417 + $0x8] sm:$0xff]
        %v528 = vld [vmem:[%s417 + $0x10] sm:$0xff]
        %v529 = vld [vmem:[%s417 + $0x18] sm:$0xff]
        %v530 = vld [vmem:[%s417 + $0x20] sm:$0xff]
        %v531 = vld [vmem:[%s417 + $0x28] sm:$0xff]
        %v532 = vld [vmem:[%s417 + $0x30] sm:$0xff]
        %v533 = vld [vmem:[%s417 + $0x38] sm:$0xff]
        %v534 = vld [vmem:[%s425] sm:$0xff]
        %v535 = vld [vmem:[%s425 + $0x8] sm:$0xff]
        %v536 = vld [vmem:[%s425 + $0x10] sm:$0xff]
        %v537 = vld [vmem:[%s425 + $0x18] sm:$0xff]
        %v538 = vld [vmem:[%s425 + $0x20] sm:$0xff]
        %v539 = vld [vmem:[%s425 + $0x28] sm:$0xff]
        %v540 = vld [vmem:[%s425 + $0x30] sm:$0xff]
        %v541 = vld [vmem:[%s425 + $0x38] sm:$0xff]
        %v542 = vld [vmem:[%s425 + $0x40] sm:$0xff]
        %v543 = vld [vmem:[%s425 + $0x48] sm:$0xff]
        %v544 = vld [vmem:[%s425 + $0x50] sm:$0xff]
        %v545 = vld [vmem:[%s425 + $0x58] sm:$0xff]
        %v546 = vld [vmem:[%s425 + $0x60] sm:$0xff]
        %v547 = vld [vmem:[%s425 + $0x68] sm:$0xff]
        %v548 = vld [vmem:[%s425 + $0x70] sm:$0xff]
        %v549 = vld [vmem:[%s425 + $0x78] sm:$0xff]
        %v550 = vld [vmem:[%s425 + $0x80] sm:$0xff]
        %v551 = vld [vmem:[%s425 + $0x88] sm:$0xff]
        %v552 = vld [vmem:[%s425 + $0x90] sm:$0xff]
        %v553 = vld [vmem:[%s425 + $0x98] sm:$0xff]
        %v554 = vld [vmem:[%s425 + $0xa0] sm:$0xff]
        %v555 = vld [vmem:[%s425 + $0xa8] sm:$0xff]
        %v556 = vld [vmem:[%s425 + $0xb0] sm:$0xff]
        %v557 = vld [vmem:[%s425 + $0xb8] sm:$0xff]
        %v558 = vld [vmem:[%s425 + $0xc0] sm:$0xff]
        %v559 = vld [vmem:[%s425 + $0xc8] sm:$0xff]
        %v560 = vld [vmem:[%s425 + $0xd0] sm:$0xff]
        %v561 = vld [vmem:[%s425 + $0xd8] sm:$0xff]
        %v562 = vld [vmem:[%s425 + $0xe0] sm:$0xff]
        %v563 = vld [vmem:[%s425 + $0xe8] sm:$0xff]
        %v564 = vld [vmem:[%s425 + $0xf0] sm:$0xff]
        %v565 = vld [vmem:[%s425 + $0xf8] sm:$0xff]
        %v566 = vld [vmem:[%s425 + $0x100] sm:$0xff]
        %v567 = vld [vmem:[%s425 + $0x108] sm:$0xff]
        %v568 = vld [vmem:[%s425 + $0x110] sm:$0xff]
        %v569 = vld [vmem:[%s425 + $0x118] sm:$0xff]
        %v570 = vld [vmem:[%s425 + $0x120] sm:$0xff]
        %v571 = vld [vmem:[%s425 + $0x128] sm:$0xff]
        %v572 = vld [vmem:[%s425 + $0x130] sm:$0xff]
        %v573 = vld [vmem:[%s425 + $0x138] sm:$0xff]
        %v574 = vld [vmem:[%s425 + $0x140] sm:$0xff]
        %v575 = vld [vmem:[%s425 + $0x148] sm:$0xff]
        %v576 = vld [vmem:[%s425 + $0x150] sm:$0xff]
        %v577 = vld [vmem:[%s425 + $0x158] sm:$0xff]
        %v578 = vld [vmem:[%s425 + $0x160] sm:$0xff]
        %v579 = vld [vmem:[%s425 + $0x168] sm:$0xff]
        %v580 = vld [vmem:[%s425 + $0x170] sm:$0xff]
        %v581 = vld [vmem:[%s425 + $0x178] sm:$0xff]
        %v582 = vld [vmem:[%s425 + $0x180] sm:$0xff]
        %v583 = vld [vmem:[%s425 + $0x188] sm:$0xff]
        %v584 = vld [vmem:[%s425 + $0x190] sm:$0xff]
        %v585 = vld [vmem:[%s425 + $0x198] sm:$0xff]
        %v586 = vld [vmem:[%s425 + $0x1a0] sm:$0xff]
        %v587 = vld [vmem:[%s425 + $0x1a8] sm:$0xff]
        %v588 = vld [vmem:[%s425 + $0x1b0] sm:$0xff]
        %v589 = vld [vmem:[%s425 + $0x1b8] sm:$0xff]
        %v590 = vld [vmem:[%s425 + $0x1c0] sm:$0xff]
        %v591 = vld [vmem:[%s425 + $0x1c8] sm:$0xff]
        %v592 = vld [vmem:[%s425 + $0x1d0] sm:$0xff]
        %v593 = vld [vmem:[%s425 + $0x1d8] sm:$0xff]
        %v594 = vld [vmem:[%s425 + $0x1e0] sm:$0xff]
        %v595 = vld [vmem:[%s425 + $0x1e8] sm:$0xff]
        %v596 = vld [vmem:[%s425 + $0x1f0] sm:$0xff]
        %v597 = vld [vmem:[%s425 + $0x1f8] sm:$0xff]
        %v598 = vld [vmem:[%s425 + $0x200] sm:$0xff]
        %v599 = vld [vmem:[%s425 + $0x208] sm:$0xff]
        %v600 = vld [vmem:[%s425 + $0x210] sm:$0xff]
        %v601 = vld [vmem:[%s425 + $0x218] sm:$0xff]
        %v602 = vld [vmem:[%s425 + $0x220] sm:$0xff]
        %v603 = vld [vmem:[%s425 + $0x228] sm:$0xff]
        %v604 = vld [vmem:[%s425 + $0x230] sm:$0xff]
        %v605 = vld [vmem:[%s425 + $0x238] sm:$0xff]
        %v606 = vld [vmem:[%s425 + $0x240] sm:$0xff]
        %v607 = vld [vmem:[%s425 + $0x248] sm:$0xff]
        %v608 = vld [vmem:[%s425 + $0x250] sm:$0xff]
        %v609 = vld [vmem:[%s425 + $0x258] sm:$0xff]
        %v610 = vld [vmem:[%s425 + $0x260] sm:$0xff]
        %v611 = vld [vmem:[%s425 + $0x268] sm:$0xff]
        %v612 = vld [vmem:[%s425 + $0x270] sm:$0xff]
        %v613 = vld [vmem:[%s425 + $0x278] sm:$0xff]
        %v614 = vld [vmem:[%s425 + $0x280] sm:$0xff]
        %v615 = vld [vmem:[%s425 + $0x288] sm:$0xff]
        %v616 = vld [vmem:[%s425 + $0x290] sm:$0xff]
        %v617 = vld [vmem:[%s425 + $0x298] sm:$0xff]
        %v618 = vld [vmem:[%s425 + $0x2a0] sm:$0xff]
        %v619 = vld [vmem:[%s425 + $0x2a8] sm:$0xff]
        %v620 = vld [vmem:[%s425 + $0x2b0] sm:$0xff]
        %v621 = vld [vmem:[%s425 + $0x2b8] sm:$0xff]
        %v622 = vld [vmem:[%s425 + $0x2c0] sm:$0xff]
        %v623 = vld [vmem:[%s425 + $0x2c8] sm:$0xff]
        %v624 = vld [vmem:[%s425 + $0x2d0] sm:$0xff]
        %v625 = vld [vmem:[%s425 + $0x2d8] sm:$0xff]
        %v626 = vld [vmem:[%s425 + $0x2e0] sm:$0xff]
        %v627 = vld [vmem:[%s425 + $0x2e8] sm:$0xff]
        %v628 = vld [vmem:[%s425 + $0x2f0] sm:$0xff]
        %v629 = vld [vmem:[%s425 + $0x2f8] sm:$0xff]
        %v630 = vld [vmem:[%s425 + $0x300] sm:$0xff]
        %v631 = vld [vmem:[%s425 + $0x308] sm:$0xff]
        %v632 = vld [vmem:[%s425 + $0x310] sm:$0xff]
        %v633 = vld [vmem:[%s425 + $0x318] sm:$0xff]
        %v634 = vld [vmem:[%s425 + $0x320] sm:$0xff]
        %v635 = vld [vmem:[%s425 + $0x328] sm:$0xff]
        %v636 = vld [vmem:[%s425 + $0x330] sm:$0xff]
        %v637 = vld [vmem:[%s425 + $0x338] sm:$0xff]
        %v638 = vld [vmem:[%s425 + $0x340] sm:$0xff]
        %v639 = vld [vmem:[%s425 + $0x348] sm:$0xff]
        %v640 = vld [vmem:[%s425 + $0x350] sm:$0xff]
        %v641 = vld [vmem:[%s425 + $0x358] sm:$0xff]
        %v642 = vld [vmem:[%s425 + $0x360] sm:$0xff]
        %v643 = vld [vmem:[%s425 + $0x368] sm:$0xff]
        %v644 = vld [vmem:[%s425 + $0x370] sm:$0xff]
        %v645 = vld [vmem:[%s425 + $0x378] sm:$0xff]
        %v646 = vld [vmem:[%s425 + $0x380] sm:$0xff]
        %v647 = vld [vmem:[%s425 + $0x388] sm:$0xff]
        %v648 = vld [vmem:[%s425 + $0x390] sm:$0xff]
        %v649 = vld [vmem:[%s425 + $0x398] sm:$0xff]
        %v650 = vld [vmem:[%s425 + $0x3a0] sm:$0xff]
        %v651 = vld [vmem:[%s425 + $0x3a8] sm:$0xff]
        %v652 = vld [vmem:[%s425 + $0x3b0] sm:$0xff]
        %v653 = vld [vmem:[%s425 + $0x3b8] sm:$0xff]
        %v654 = vld [vmem:[%s425 + $0x3c0] sm:$0xff]
        %v655 = vld [vmem:[%s425 + $0x3c8] sm:$0xff]
        %v656 = vld [vmem:[%s425 + $0x3d0] sm:$0xff]
        %v657 = vld [vmem:[%s425 + $0x3d8] sm:$0xff]
        %v658 = vld [vmem:[%s425 + $0x3e0] sm:$0xff]
        %v659 = vld [vmem:[%s425 + $0x3e8] sm:$0xff]
        %v660 = vld [vmem:[%s425 + $0x3f0] sm:$0xff]
        %v661 = vld [vmem:[%s425 + $0x3f8] sm:$0xff]
        %v662 = vld [vmem:[%s425 + $0x400] sm:$0xff]
        %v663 = vld [vmem:[%s425 + $0x408] sm:$0xff]
        %v664 = vld [vmem:[%s425 + $0x410] sm:$0xff]
        %v665 = vld [vmem:[%s425 + $0x418] sm:$0xff]
        %v666 = vld [vmem:[%s425 + $0x420] sm:$0xff]
        %v667 = vld [vmem:[%s425 + $0x428] sm:$0xff]
        %v668 = vld [vmem:[%s425 + $0x430] sm:$0xff]
        %v669 = vld [vmem:[%s425 + $0x438] sm:$0xff]
        %v670 = vld [vmem:[%s425 + $0x440] sm:$0xff]
        %v671 = vld [vmem:[%s425 + $0x448] sm:$0xff]
        %v672 = vld [vmem:[%s425 + $0x450] sm:$0xff]
        %v673 = vld [vmem:[%s425 + $0x458] sm:$0xff]
        %v674 = vld [vmem:[%s425 + $0x460] sm:$0xff]
        %v675 = vld [vmem:[%s425 + $0x468] sm:$0xff]
        %v676 = vld [vmem:[%s425 + $0x470] sm:$0xff]
        %v677 = vld [vmem:[%s425 + $0x478] sm:$0xff]
        %v678 = vld [vmem:[%s425 + $0x480] sm:$0xff]
        %v679 = vld [vmem:[%s425 + $0x488] sm:$0xff]
        %v680 = vld [vmem:[%s425 + $0x490] sm:$0xff]
        %v681 = vld [vmem:[%s425 + $0x498] sm:$0xff]
        %v682 = vld [vmem:[%s425 + $0x4a0] sm:$0xff]
        %v683 = vld [vmem:[%s425 + $0x4a8] sm:$0xff]
        %v684 = vld [vmem:[%s425 + $0x4b0] sm:$0xff]
        %v685 = vld [vmem:[%s425 + $0x4b8] sm:$0xff]
        %v686 = vld [vmem:[%s425 + $0x4c0] sm:$0xff]
        %v687 = vld [vmem:[%s425 + $0x4c8] sm:$0xff]
        %v688 = vld [vmem:[%s425 + $0x4d0] sm:$0xff]
        %v689 = vld [vmem:[%s425 + $0x4d8] sm:$0xff]
        %v690 = vld [vmem:[%s425 + $0x4e0] sm:$0xff]
        %v691 = vld [vmem:[%s425 + $0x4e8] sm:$0xff]
        %v692 = vld [vmem:[%s425 + $0x4f0] sm:$0xff]
        %v693 = vld [vmem:[%s425 + $0x4f8] sm:$0xff]
        %v694 = vld [vmem:[%s425 + $0x500] sm:$0xff]
        %v695 = vld [vmem:[%s425 + $0x508] sm:$0xff]
        %v696 = vld [vmem:[%s425 + $0x510] sm:$0xff]
        %v697 = vld [vmem:[%s425 + $0x518] sm:$0xff]
        %v698 = vld [vmem:[%s425 + $0x520] sm:$0xff]
        %v699 = vld [vmem:[%s425 + $0x528] sm:$0xff]
        %v700 = vld [vmem:[%s425 + $0x530] sm:$0xff]
        %v701 = vld [vmem:[%s425 + $0x538] sm:$0xff]
        %v702 = vld [vmem:[%s425 + $0x540] sm:$0xff]
        %v703 = vld [vmem:[%s425 + $0x548] sm:$0xff]
        %v704 = vld [vmem:[%s425 + $0x550] sm:$0xff]
        %v705 = vld [vmem:[%s425 + $0x558] sm:$0xff]
        %v706 = vld [vmem:[%s425 + $0x560] sm:$0xff]
        %v707 = vld [vmem:[%s425 + $0x568] sm:$0xff]
        %v708 = vld [vmem:[%s425 + $0x570] sm:$0xff]
        %v709 = vld [vmem:[%s425 + $0x578] sm:$0xff]
        %v710 = vld [vmem:[%s425 + $0x580] sm:$0xff]
        %v711 = vld [vmem:[%s425 + $0x588] sm:$0xff]
        %v712 = vld [vmem:[%s425 + $0x590] sm:$0xff]
        %v713 = vld [vmem:[%s425 + $0x598] sm:$0xff]
        %v714 = vld [vmem:[%s425 + $0x5a0] sm:$0xff]
        %v715 = vld [vmem:[%s425 + $0x5a8] sm:$0xff]
        %v716 = vld [vmem:[%s425 + $0x5b0] sm:$0xff]
        %v717 = vld [vmem:[%s425 + $0x5b8] sm:$0xff]
        %v718 = vld [vmem:[%s425 + $0x5c0] sm:$0xff]
        %v719 = vld [vmem:[%s425 + $0x5c8] sm:$0xff]
        %v720 = vld [vmem:[%s425 + $0x5d0] sm:$0xff]
        %v721 = vld [vmem:[%s425 + $0x5d8] sm:$0xff]
        %v722 = vld [vmem:[%s425 + $0x5e0] sm:$0xff]
        %v723 = vld [vmem:[%s425 + $0x5e8] sm:$0xff]
        %v724 = vld [vmem:[%s425 + $0x5f0] sm:$0xff]
        %v725 = vld [vmem:[%s425 + $0x5f8] sm:$0xff]
        %v726 = vld [vmem:[%s425 + $0x600] sm:$0xff]
        %v727 = vld [vmem:[%s425 + $0x608] sm:$0xff]
        %v728 = vld [vmem:[%s425 + $0x610] sm:$0xff]
        %v729 = vld [vmem:[%s425 + $0x618] sm:$0xff]
        %v730 = vld [vmem:[%s425 + $0x620] sm:$0xff]
        %v731 = vld [vmem:[%s425 + $0x628] sm:$0xff]
        %v732 = vld [vmem:[%s425 + $0x630] sm:$0xff]
        %v733 = vld [vmem:[%s425 + $0x638] sm:$0xff]
        %v734 = vld [vmem:[%s425 + $0x640] sm:$0xff]
        %v735 = vld [vmem:[%s425 + $0x648] sm:$0xff]
        %v736 = vld [vmem:[%s425 + $0x650] sm:$0xff]
        %v737 = vld [vmem:[%s425 + $0x658] sm:$0xff]
        %v738 = vld [vmem:[%s425 + $0x660] sm:$0xff]
        %v739 = vld [vmem:[%s425 + $0x668] sm:$0xff]
        %v740 = vld [vmem:[%s425 + $0x670] sm:$0xff]
        %v741 = vld [vmem:[%s425 + $0x678] sm:$0xff]
        %v742 = vld [vmem:[%s425 + $0x680] sm:$0xff]
        %v743 = vld [vmem:[%s425 + $0x688] sm:$0xff]
        %v744 = vld [vmem:[%s425 + $0x690] sm:$0xff]
        %v745 = vld [vmem:[%s425 + $0x698] sm:$0xff]
        %v746 = vld [vmem:[%s425 + $0x6a0] sm:$0xff]
        %v747 = vld [vmem:[%s425 + $0x6a8] sm:$0xff]
        %v748 = vld [vmem:[%s425 + $0x6b0] sm:$0xff]
        %v749 = vld [vmem:[%s425 + $0x6b8] sm:$0xff]
        %v750 = vld [vmem:[%s425 + $0x6c0] sm:$0xff]
        %v751 = vld [vmem:[%s425 + $0x6c8] sm:$0xff]
        %v752 = vld [vmem:[%s425 + $0x6d0] sm:$0xff]
        %v753 = vld [vmem:[%s425 + $0x6d8] sm:$0xff]
        %v754 = vld [vmem:[%s425 + $0x6e0] sm:$0xff]
        %v755 = vld [vmem:[%s425 + $0x6e8] sm:$0xff]
        %v756 = vld [vmem:[%s425 + $0x6f0] sm:$0xff]
        %v757 = vld [vmem:[%s425 + $0x6f8] sm:$0xff]
        %v758 = vld [vmem:[%s425 + $0x700] sm:$0xff]
        %v759 = vld [vmem:[%s425 + $0x708] sm:$0xff]
        %v760 = vld [vmem:[%s425 + $0x710] sm:$0xff]
        %v761 = vld [vmem:[%s425 + $0x718] sm:$0xff]
        %v762 = vld [vmem:[%s425 + $0x720] sm:$0xff]
        %v763 = vld [vmem:[%s425 + $0x728] sm:$0xff]
        %v764 = vld [vmem:[%s425 + $0x730] sm:$0xff]
        %v765 = vld [vmem:[%s425 + $0x738] sm:$0xff]
        %v766 = vld [vmem:[%s425 + $0x740] sm:$0xff]
        %v767 = vld [vmem:[%s425 + $0x748] sm:$0xff]
        %v768 = vld [vmem:[%s425 + $0x750] sm:$0xff]
        %v769 = vld [vmem:[%s425 + $0x758] sm:$0xff]
        %v770 = vld [vmem:[%s425 + $0x760] sm:$0xff]
        %v771 = vld [vmem:[%s425 + $0x768] sm:$0xff]
        %v772 = vld [vmem:[%s425 + $0x770] sm:$0xff]
        %v773 = vld [vmem:[%s425 + $0x778] sm:$0xff]
        %v774 = vld [vmem:[%s425 + $0x780] sm:$0xff]
        %v775 = vld [vmem:[%s425 + $0x788] sm:$0xff]
        %v776 = vld [vmem:[%s425 + $0x790] sm:$0xff]
        %v777 = vld [vmem:[%s425 + $0x798] sm:$0xff]
        %v778 = vld [vmem:[%s425 + $0x7a0] sm:$0xff]
        %v779 = vld [vmem:[%s425 + $0x7a8] sm:$0xff]
        %v780 = vld [vmem:[%s425 + $0x7b0] sm:$0xff]
        %v781 = vld [vmem:[%s425 + $0x7b8] sm:$0xff]
        %v782 = vld [vmem:[%s425 + $0x7c0] sm:$0xff]
        %v783 = vld [vmem:[%s425 + $0x7c8] sm:$0xff]
        %v784 = vld [vmem:[%s425 + $0x7d0] sm:$0xff]
        %v785 = vld [vmem:[%s425 + $0x7d8] sm:$0xff]
        %v786 = vld [vmem:[%s425 + $0x7e0] sm:$0xff]
        %v787 = vld [vmem:[%s425 + $0x7e8] sm:$0xff]
        %v788 = vld [vmem:[%s425 + $0x7f0] sm:$0xff]
        %v789 = vld [vmem:[%s425 + $0x7f8] sm:$0xff]
        %v790 = vld [vmem:[%s425 + $0x800] sm:$0xff]
        %v791 = vld [vmem:[%s425 + $0x808] sm:$0xff]
        %v792 = vld [vmem:[%s425 + $0x810] sm:$0xff]
        %v793 = vld [vmem:[%s425 + $0x818] sm:$0xff]
        %v794 = vld [vmem:[%s425 + $0x820] sm:$0xff]
        %v795 = vld [vmem:[%s425 + $0x828] sm:$0xff]
        %v796 = vld [vmem:[%s425 + $0x830] sm:$0xff]
        %v797 = vld [vmem:[%s425 + $0x838] sm:$0xff]
        %v798 = vld [vmem:[%s425 + $0x840] sm:$0xff]
        %v799 = vld [vmem:[%s425 + $0x848] sm:$0xff]
        %v800 = vld [vmem:[%s425 + $0x850] sm:$0xff]
        %v801 = vld [vmem:[%s425 + $0x858] sm:$0xff]
        %v802 = vld [vmem:[%s425 + $0x860] sm:$0xff]
        %v803 = vld [vmem:[%s425 + $0x868] sm:$0xff]
        %v804 = vld [vmem:[%s425 + $0x870] sm:$0xff]
        %v805 = vld [vmem:[%s425 + $0x878] sm:$0xff]
        %v806 = vld [vmem:[%s425 + $0x880] sm:$0xff]
        %v807 = vld [vmem:[%s425 + $0x888] sm:$0xff]
        %v808 = vld [vmem:[%s425 + $0x890] sm:$0xff]
        %v809 = vld [vmem:[%s425 + $0x898] sm:$0xff]
        %v810 = vld [vmem:[%s425 + $0x8a0] sm:$0xff]
        %v811 = vld [vmem:[%s425 + $0x8a8] sm:$0xff]
        %v812 = vld [vmem:[%s425 + $0x8b0] sm:$0xff]
        %v813 = vld [vmem:[%s425 + $0x8b8] sm:$0xff]
        %v814 = vld [vmem:[%s425 + $0x8c0] sm:$0xff]
        %v815 = vld [vmem:[%s425 + $0x8c8] sm:$0xff]
        %v816 = vld [vmem:[%s425 + $0x8d0] sm:$0xff]
        %v817 = vld [vmem:[%s425 + $0x8d8] sm:$0xff]
        %v818 = vld [vmem:[%s425 + $0x8e0] sm:$0xff]
        %v819 = vld [vmem:[%s425 + $0x8e8] sm:$0xff]
        %v820 = vld [vmem:[%s425 + $0x8f0] sm:$0xff]
        %v821 = vld [vmem:[%s425 + $0x8f8] sm:$0xff]
        %v822 = vld [vmem:[%s425 + $0x900] sm:$0xff]
        %v823 = vld [vmem:[%s425 + $0x908] sm:$0xff]
        %v824 = vld [vmem:[%s425 + $0x910] sm:$0xff]
        %v825 = vld [vmem:[%s425 + $0x918] sm:$0xff]
        %v826 = vld [vmem:[%s425 + $0x920] sm:$0xff]
        %v827 = vld [vmem:[%s425 + $0x928] sm:$0xff]
        %v828 = vld [vmem:[%s425 + $0x930] sm:$0xff]
        %v829 = vld [vmem:[%s425 + $0x938] sm:$0xff]
        %v830 = vld [vmem:[%s425 + $0x940] sm:$0xff]
        %v831 = vld [vmem:[%s425 + $0x948] sm:$0xff]
        %v832 = vld [vmem:[%s425 + $0x950] sm:$0xff]
        %v833 = vld [vmem:[%s425 + $0x958] sm:$0xff]
        %v834 = vld [vmem:[%s425 + $0x960] sm:$0xff]
        %v835 = vld [vmem:[%s425 + $0x968] sm:$0xff]
        %v836 = vld [vmem:[%s425 + $0x970] sm:$0xff]
        %v837 = vld [vmem:[%s425 + $0x978] sm:$0xff]
        %v838 = vld [vmem:[%s425 + $0x980] sm:$0xff]
        %v839 = vld [vmem:[%s425 + $0x988] sm:$0xff]
        %v840 = vld [vmem:[%s425 + $0x990] sm:$0xff]
        %v841 = vld [vmem:[%s425 + $0x998] sm:$0xff]
        %v842 = vld [vmem:[%s425 + $0x9a0] sm:$0xff]
        %v843 = vld [vmem:[%s425 + $0x9a8] sm:$0xff]
        %v844 = vld [vmem:[%s425 + $0x9b0] sm:$0xff]
        %v845 = vld [vmem:[%s425 + $0x9b8] sm:$0xff]
        %v846 = vld [vmem:[%s425 + $0x9c0] sm:$0xff]
        %v847 = vld [vmem:[%s425 + $0x9c8] sm:$0xff]
        %v848 = vld [vmem:[%s425 + $0x9d0] sm:$0xff]
        %v849 = vld [vmem:[%s425 + $0x9d8] sm:$0xff]
        %v850 = vld [vmem:[%s425 + $0x9e0] sm:$0xff]
        %v851 = vld [vmem:[%s425 + $0x9e8] sm:$0xff]
        %v852 = vld [vmem:[%s425 + $0x9f0] sm:$0xff]
        %v853 = vld [vmem:[%s425 + $0x9f8] sm:$0xff]
        %v854 = vld [vmem:[%s425 + $0xa00] sm:$0xff]
        %v855 = vld [vmem:[%s425 + $0xa08] sm:$0xff]
        %v856 = vld [vmem:[%s425 + $0xa10] sm:$0xff]
        %v857 = vld [vmem:[%s425 + $0xa18] sm:$0xff]
        %v858 = vld [vmem:[%s425 + $0xa20] sm:$0xff]
        %v859 = vld [vmem:[%s425 + $0xa28] sm:$0xff]
        %v860 = vld [vmem:[%s425 + $0xa30] sm:$0xff]
        %v861 = vld [vmem:[%s425 + $0xa38] sm:$0xff]
        %v862 = vld [vmem:[%s425 + $0xa40] sm:$0xff]
        %v863 = vld [vmem:[%s425 + $0xa48] sm:$0xff]
        %v864 = vld [vmem:[%s425 + $0xa50] sm:$0xff]
        %v865 = vld [vmem:[%s425 + $0xa58] sm:$0xff]
        %v866 = vld [vmem:[%s425 + $0xa60] sm:$0xff]
        %v867 = vld [vmem:[%s425 + $0xa68] sm:$0xff]
        %v868 = vld [vmem:[%s425 + $0xa70] sm:$0xff]
        %v869 = vld [vmem:[%s425 + $0xa78] sm:$0xff]
        %v870 = vld [vmem:[%s425 + $0xa80] sm:$0xff]
        %v871 = vld [vmem:[%s425 + $0xa88] sm:$0xff]
        %v872 = vld [vmem:[%s425 + $0xa90] sm:$0xff]
        %v873 = vld [vmem:[%s425 + $0xa98] sm:$0xff]
        %v874 = vld [vmem:[%s425 + $0xaa0] sm:$0xff]
        %v875 = vld [vmem:[%s425 + $0xaa8] sm:$0xff]
        %v876 = vld [vmem:[%s425 + $0xab0] sm:$0xff]
        %v877 = vld [vmem:[%s425 + $0xab8] sm:$0xff]
        %v878 = vld [vmem:[%s425 + $0xac0] sm:$0xff]
        %v879 = vld [vmem:[%s425 + $0xac8] sm:$0xff]
        %v880 = vld [vmem:[%s425 + $0xad0] sm:$0xff]
        %v881 = vld [vmem:[%s425 + $0xad8] sm:$0xff]
        %v882 = vld [vmem:[%s425 + $0xae0] sm:$0xff]
        %v883 = vld [vmem:[%s425 + $0xae8] sm:$0xff]
        %v884 = vld [vmem:[%s425 + $0xaf0] sm:$0xff]
        %v885 = vld [vmem:[%s425 + $0xaf8] sm:$0xff]
        %v886 = vld [vmem:[%s425 + $0xb00] sm:$0xff]
        %v887 = vld [vmem:[%s425 + $0xb08] sm:$0xff]
        %v888 = vld [vmem:[%s425 + $0xb10] sm:$0xff]
        %v889 = vld [vmem:[%s425 + $0xb18] sm:$0xff]
        %v890 = vld [vmem:[%s425 + $0xb20] sm:$0xff]
        %v891 = vld [vmem:[%s425 + $0xb28] sm:$0xff]
        %v892 = vld [vmem:[%s425 + $0xb30] sm:$0xff]
        %v893 = vld [vmem:[%s425 + $0xb38] sm:$0xff]
        %v894 = vld [vmem:[%s425 + $0xb40] sm:$0xff]
        %v895 = vld [vmem:[%s425 + $0xb48] sm:$0xff]
        %v896 = vld [vmem:[%s425 + $0xb50] sm:$0xff]
        %v897 = vld [vmem:[%s425 + $0xb58] sm:$0xff]
        %v898 = vld [vmem:[%s425 + $0xb60] sm:$0xff]
        %v899 = vld [vmem:[%s425 + $0xb68] sm:$0xff]
        %v900 = vld [vmem:[%s425 + $0xb70] sm:$0xff]
        %v901 = vld [vmem:[%s425 + $0xb78] sm:$0xff]
        %v902 = vld [vmem:[%s425 + $0xb80] sm:$0xff]
        %v903 = vld [vmem:[%s425 + $0xb88] sm:$0xff]
        %v904 = vld [vmem:[%s425 + $0xb90] sm:$0xff]
        %v905 = vld [vmem:[%s425 + $0xb98] sm:$0xff]
        %v906 = vld [vmem:[%s425 + $0xba0] sm:$0xff]
        %v907 = vld [vmem:[%s425 + $0xba8] sm:$0xff]
        %v908 = vld [vmem:[%s425 + $0xbb0] sm:$0xff]
        %v909 = vld [vmem:[%s425 + $0xbb8] sm:$0xff]
        %v910 = vld [vmem:[%s425 + $0xbc0] sm:$0xff]
        %v911 = vld [vmem:[%s425 + $0xbc8] sm:$0xff]
        %v912 = vld [vmem:[%s425 + $0xbd0] sm:$0xff]
        %v913 = vld [vmem:[%s425 + $0xbd8] sm:$0xff]
        %v914 = vld [vmem:[%s425 + $0xbe0] sm:$0xff]
        %v915 = vld [vmem:[%s425 + $0xbe8] sm:$0xff]
        %v916 = vld [vmem:[%s425 + $0xbf0] sm:$0xff]
        %v917 = vld [vmem:[%s425 + $0xbf8] sm:$0xff]
        %v918 = vld [vmem:[%s425 + $0xc00] sm:$0xff]
        %v919 = vld [vmem:[%s425 + $0xc08] sm:$0xff]
        %v920 = vld [vmem:[%s425 + $0xc10] sm:$0xff]
        %v921 = vld [vmem:[%s425 + $0xc18] sm:$0xff]
        %v922 = vld [vmem:[%s425 + $0xc20] sm:$0xff]
        %v923 = vld [vmem:[%s425 + $0xc28] sm:$0xff]
        %v924 = vld [vmem:[%s425 + $0xc30] sm:$0xff]
        %v925 = vld [vmem:[%s425 + $0xc38] sm:$0xff]
        %v926 = vld [vmem:[%s425 + $0xc40] sm:$0xff]
        %v927 = vld [vmem:[%s425 + $0xc48] sm:$0xff]
        %v928 = vld [vmem:[%s425 + $0xc50] sm:$0xff]
        %v929 = vld [vmem:[%s425 + $0xc58] sm:$0xff]
        %v930 = vld [vmem:[%s425 + $0xc60] sm:$0xff]
        %v931 = vld [vmem:[%s425 + $0xc68] sm:$0xff]
        %v932 = vld [vmem:[%s425 + $0xc70] sm:$0xff]
        %v933 = vld [vmem:[%s425 + $0xc78] sm:$0xff]
        %v934 = vld [vmem:[%s425 + $0xc80] sm:$0xff]
        %v935 = vld [vmem:[%s425 + $0xc88] sm:$0xff]
        %v936 = vld [vmem:[%s425 + $0xc90] sm:$0xff]
        %v937 = vld [vmem:[%s425 + $0xc98] sm:$0xff]
        %v938 = vld [vmem:[%s425 + $0xca0] sm:$0xff]
        %v939 = vld [vmem:[%s425 + $0xca8] sm:$0xff]
        %v940 = vld [vmem:[%s425 + $0xcb0] sm:$0xff]
        %v941 = vld [vmem:[%s425 + $0xcb8] sm:$0xff]
        %v942 = vld [vmem:[%s425 + $0xcc0] sm:$0xff]
        %v943 = vld [vmem:[%s425 + $0xcc8] sm:$0xff]
        %v944 = vld [vmem:[%s425 + $0xcd0] sm:$0xff]
        %v945 = vld [vmem:[%s425 + $0xcd8] sm:$0xff]
        %v946 = vld [vmem:[%s425 + $0xce0] sm:$0xff]
        %v947 = vld [vmem:[%s425 + $0xce8] sm:$0xff]
        %v948 = vld [vmem:[%s425 + $0xcf0] sm:$0xff]
        %v949 = vld [vmem:[%s425 + $0xcf8] sm:$0xff]
        %v950 = vld [vmem:[%s425 + $0xd00] sm:$0xff]
        %v951 = vld [vmem:[%s425 + $0xd08] sm:$0xff]
        %v952 = vld [vmem:[%s425 + $0xd10] sm:$0xff]
        %v953 = vld [vmem:[%s425 + $0xd18] sm:$0xff]
        %v954 = vld [vmem:[%s425 + $0xd20] sm:$0xff]
        %v955 = vld [vmem:[%s425 + $0xd28] sm:$0xff]
        %v956 = vld [vmem:[%s425 + $0xd30] sm:$0xff]
        %v957 = vld [vmem:[%s425 + $0xd38] sm:$0xff]
        %v958 = vld [vmem:[%s425 + $0xd40] sm:$0xff]
        %v959 = vld [vmem:[%s425 + $0xd48] sm:$0xff]
        %v960 = vld [vmem:[%s425 + $0xd50] sm:$0xff]
        %v961 = vld [vmem:[%s425 + $0xd58] sm:$0xff]
        %v962 = vld [vmem:[%s425 + $0xd60] sm:$0xff]
        %v963 = vld [vmem:[%s425 + $0xd68] sm:$0xff]
        %v964 = vld [vmem:[%s425 + $0xd70] sm:$0xff]
        %v965 = vld [vmem:[%s425 + $0xd78] sm:$0xff]
        %v966 = vld [vmem:[%s425 + $0xd80] sm:$0xff]
        %v967 = vld [vmem:[%s425 + $0xd88] sm:$0xff]
        %v968 = vld [vmem:[%s425 + $0xd90] sm:$0xff]
        %v969 = vld [vmem:[%s425 + $0xd98] sm:$0xff]
        %v970 = vld [vmem:[%s425 + $0xda0] sm:$0xff]
        %v971 = vld [vmem:[%s425 + $0xda8] sm:$0xff]
        %v972 = vld [vmem:[%s425 + $0xdb0] sm:$0xff]
        %v973 = vld [vmem:[%s425 + $0xdb8] sm:$0xff]
        %v974 = vld [vmem:[%s425 + $0xdc0] sm:$0xff]
        %v975 = vld [vmem:[%s425 + $0xdc8] sm:$0xff]
        %v976 = vld [vmem:[%s425 + $0xdd0] sm:$0xff]
        %v977 = vld [vmem:[%s425 + $0xdd8] sm:$0xff]
        %v978 = vld [vmem:[%s425 + $0xde0] sm:$0xff]
        %v979 = vld [vmem:[%s425 + $0xde8] sm:$0xff]
        %v980 = vld [vmem:[%s425 + $0xdf0] sm:$0xff]
        %v981 = vld [vmem:[%s425 + $0xdf8] sm:$0xff]
        %v982 = vld [vmem:[%s425 + $0xe00] sm:$0xff]
        %v983 = vld [vmem:[%s425 + $0xe08] sm:$0xff]
        %v984 = vld [vmem:[%s425 + $0xe10] sm:$0xff]
        %v985 = vld [vmem:[%s425 + $0xe18] sm:$0xff]
        %v986 = vld [vmem:[%s425 + $0xe20] sm:$0xff]
        %v987 = vld [vmem:[%s425 + $0xe28] sm:$0xff]
        %v988 = vld [vmem:[%s425 + $0xe30] sm:$0xff]
        %v989 = vld [vmem:[%s425 + $0xe38] sm:$0xff]
        %v990 = vld [vmem:[%s425 + $0xe40] sm:$0xff]
        %v991 = vld [vmem:[%s425 + $0xe48] sm:$0xff]
        %v992 = vld [vmem:[%s425 + $0xe50] sm:$0xff]
        %v993 = vld [vmem:[%s425 + $0xe58] sm:$0xff]
        %v994 = vld [vmem:[%s425 + $0xe60] sm:$0xff]
        %v995 = vld [vmem:[%s425 + $0xe68] sm:$0xff]
        %v996 = vld [vmem:[%s425 + $0xe70] sm:$0xff]
        %v997 = vld [vmem:[%s425 + $0xe78] sm:$0xff]
        %v998 = vld [vmem:[%s425 + $0xe80] sm:$0xff]
        %v999 = vld [vmem:[%s425 + $0xe88] sm:$0xff]
        %v1000 = vld [vmem:[%s425 + $0xe90] sm:$0xff]
        %v1001 = vld [vmem:[%s425 + $0xe98] sm:$0xff]
        %v1002 = vld [vmem:[%s425 + $0xea0] sm:$0xff]
        %v1003 = vld [vmem:[%s425 + $0xea8] sm:$0xff]
        %v1004 = vld [vmem:[%s425 + $0xeb0] sm:$0xff]
        %v1005 = vld [vmem:[%s425 + $0xeb8] sm:$0xff]
        %v1006 = vld [vmem:[%s425 + $0xec0] sm:$0xff]
        %v1007 = vld [vmem:[%s425 + $0xec8] sm:$0xff]
        %v1008 = vld [vmem:[%s425 + $0xed0] sm:$0xff]
        %v1009 = vld [vmem:[%s425 + $0xed8] sm:$0xff]
        %v1010 = vld [vmem:[%s425 + $0xee0] sm:$0xff]
        %v1011 = vld [vmem:[%s425 + $0xee8] sm:$0xff]
        %v1012 = vld [vmem:[%s425 + $0xef0] sm:$0xff]
        %v1013 = vld [vmem:[%s425 + $0xef8] sm:$0xff]
        %v1014 = vld [vmem:[%s425 + $0xf00] sm:$0xff]
        %v1015 = vld [vmem:[%s425 + $0xf08] sm:$0xff]
        %v1016 = vld [vmem:[%s425 + $0xf10] sm:$0xff]
        %v1017 = vld [vmem:[%s425 + $0xf18] sm:$0xff]
        %v1018 = vld [vmem:[%s425 + $0xf20] sm:$0xff]
        %v1019 = vld [vmem:[%s425 + $0xf28] sm:$0xff]
        %v1020 = vld [vmem:[%s425 + $0xf30] sm:$0xff]
        %v1021 = vld [vmem:[%s425 + $0xf38] sm:$0xff]
        %v1022 = vld [vmem:[%s425 + $0xf40] sm:$0xff]
        %v1023 = vld [vmem:[%s425 + $0xf48] sm:$0xff]
        %v1024 = vld [vmem:[%s425 + $0xf50] sm:$0xff]
        %v1025 = vld [vmem:[%s425 + $0xf58] sm:$0xff]
        %v1026 = vld [vmem:[%s425 + $0xf60] sm:$0xff]
        %v1027 = vld [vmem:[%s425 + $0xf68] sm:$0xff]
        %v1028 = vld [vmem:[%s425 + $0xf70] sm:$0xff]
        %v1029 = vld [vmem:[%s425 + $0xf78] sm:$0xff]
        %v1030 = vld [vmem:[%s425 + $0xf80] sm:$0xff]
        %v1031 = vld [vmem:[%s425 + $0xf88] sm:$0xff]
        %v1032 = vld [vmem:[%s425 + $0xf90] sm:$0xff]
        %v1033 = vld [vmem:[%s425 + $0xf98] sm:$0xff]
        %v1034 = vld [vmem:[%s425 + $0xfa0] sm:$0xff]
        %v1035 = vld [vmem:[%s425 + $0xfa8] sm:$0xff]
        %v1036 = vld [vmem:[%s425 + $0xfb0] sm:$0xff]
        %v1037 = vld [vmem:[%s425 + $0xfb8] sm:$0xff]
        %v1038 = vld [vmem:[%s425 + $0xfc0] sm:$0xff]
        %v1039 = vld [vmem:[%s425 + $0xfc8] sm:$0xff]
        %v1040 = vld [vmem:[%s425 + $0xfd0] sm:$0xff]
        %v1041 = vld [vmem:[%s425 + $0xfd8] sm:$0xff]
        %v1042 = vld [vmem:[%s425 + $0xfe0] sm:$0xff]
        %v1043 = vld [vmem:[%s425 + $0xfe8] sm:$0xff]
        %v1044 = vld [vmem:[%s425 + $0xff0] sm:$0xff]
        %v1045 = vld [vmem:[%s425 + $0xff8] sm:$0xff]
        %v1054 = vunpack.c.l.b16 %v526
        %v1055 = vunpack.c.h.b16 %v526
        %v1056 = vunpack.c.l.b16 %v527
        %v1057 = vunpack.c.h.b16 %v527
        %v1058 = vunpack.c.l.b16 %v528
        %v1059 = vunpack.c.h.b16 %v528
        %v1060 = vunpack.c.l.b16 %v529
        %v1061 = vunpack.c.h.b16 %v529
        %v1062 = vunpack.c.l.b16 %v530
        %v1063 = vunpack.c.h.b16 %v530
        %v1064 = vunpack.c.l.b16 %v531
        %v1065 = vunpack.c.h.b16 %v531
        %v1066 = vunpack.c.l.b16 %v532
        %v1067 = vunpack.c.h.b16 %v532
        %v1068 = vunpack.c.l.b16 %v533
        %v1069 = vunpack.c.h.b16 %v533
        %v1070 = vpack.c.b16 %v1062, %v1054
        %v1071 = vpack.c.b16 %v1063, %v1055
        %v1072 = vpack.c.b16 %v1064, %v1056
        %v1073 = vpack.c.b16 %v1065, %v1057
        %v1074 = vpack.c.b16 %v1066, %v1058
        %v1075 = vpack.c.b16 %v1067, %v1059
        %v1076 = vpack.c.b16 %v1068, %v1060
        %v1077 = vpack.c.b16 %v1069, %v1061
        %v1598 = vunpack.c.l.b16 %v534
        %v1599 = vunpack.c.h.b16 %v534
        %v1600 = vunpack.c.l.b16 %v535
        %v1601 = vunpack.c.h.b16 %v535
        %v1602 = vunpack.c.l.b16 %v536
        %v1603 = vunpack.c.h.b16 %v536
        %v1604 = vunpack.c.l.b16 %v537
        %v1605 = vunpack.c.h.b16 %v537
        %v1606 = vunpack.c.l.b16 %v538
        %v1607 = vunpack.c.h.b16 %v538
        %v1608 = vunpack.c.l.b16 %v539
        %v1609 = vunpack.c.h.b16 %v539
        %v1610 = vunpack.c.l.b16 %v540
        %v1611 = vunpack.c.h.b16 %v540
        %v1612 = vunpack.c.l.b16 %v541
        %v1613 = vunpack.c.h.b16 %v541
        %v1614 = vunpack.c.l.b16 %v542
        %v1615 = vunpack.c.h.b16 %v542
        %v1616 = vunpack.c.l.b16 %v543
        %v1617 = vunpack.c.h.b16 %v543
        %v1618 = vunpack.c.l.b16 %v544
        %v1619 = vunpack.c.h.b16 %v544
        %v1620 = vunpack.c.l.b16 %v545
        %v1621 = vunpack.c.h.b16 %v545
        %v1622 = vunpack.c.l.b16 %v546
        %v1623 = vunpack.c.h.b16 %v546
        %v1624 = vunpack.c.l.b16 %v547
        %v1625 = vunpack.c.h.b16 %v547
        %v1626 = vunpack.c.l.b16 %v548
        %v1627 = vunpack.c.h.b16 %v548
        %v1628 = vunpack.c.l.b16 %v549
        %v1629 = vunpack.c.h.b16 %v549
        %v1630 = vunpack.c.l.b16 %v550
        %v1631 = vunpack.c.h.b16 %v550
        %v1632 = vunpack.c.l.b16 %v551
        %v1633 = vunpack.c.h.b16 %v551
        %v1634 = vunpack.c.l.b16 %v552
        %v1635 = vunpack.c.h.b16 %v552
        %v1636 = vunpack.c.l.b16 %v553
        %v1637 = vunpack.c.h.b16 %v553
        %v1638 = vunpack.c.l.b16 %v554
        %v1639 = vunpack.c.h.b16 %v554
        %v1640 = vunpack.c.l.b16 %v555
        %v1641 = vunpack.c.h.b16 %v555
        %v1642 = vunpack.c.l.b16 %v556
        %v1643 = vunpack.c.h.b16 %v556
        %v1644 = vunpack.c.l.b16 %v557
        %v1645 = vunpack.c.h.b16 %v557
        %v1646 = vunpack.c.l.b16 %v558
        %v1647 = vunpack.c.h.b16 %v558
        %v1648 = vunpack.c.l.b16 %v559
        %v1649 = vunpack.c.h.b16 %v559
        %v1650 = vunpack.c.l.b16 %v560
        %v1651 = vunpack.c.h.b16 %v560
        %v1652 = vunpack.c.l.b16 %v561
        %v1653 = vunpack.c.h.b16 %v561
        %v1654 = vunpack.c.l.b16 %v562
        %v1655 = vunpack.c.h.b16 %v562
        %v1656 = vunpack.c.l.b16 %v563
        %v1657 = vunpack.c.h.b16 %v563
        %v1658 = vunpack.c.l.b16 %v564
        %v1659 = vunpack.c.h.b16 %v564
        %v1660 = vunpack.c.l.b16 %v565
        %v1661 = vunpack.c.h.b16 %v565
        %v1662 = vunpack.c.l.b16 %v566
        %v1663 = vunpack.c.h.b16 %v566
        %v1664 = vunpack.c.l.b16 %v567
        %v1665 = vunpack.c.h.b16 %v567
        %v1666 = vunpack.c.l.b16 %v568
        %v1667 = vunpack.c.h.b16 %v568
        %v1668 = vunpack.c.l.b16 %v569
        %v1669 = vunpack.c.h.b16 %v569
        %v1670 = vunpack.c.l.b16 %v570
        %v1671 = vunpack.c.h.b16 %v570
        %v1672 = vunpack.c.l.b16 %v571
        %v1673 = vunpack.c.h.b16 %v571
        %v1674 = vunpack.c.l.b16 %v572
        %v1675 = vunpack.c.h.b16 %v572
        %v1676 = vunpack.c.l.b16 %v573
        %v1677 = vunpack.c.h.b16 %v573
        %v1678 = vunpack.c.l.b16 %v574
        %v1679 = vunpack.c.h.b16 %v574
        %v1680 = vunpack.c.l.b16 %v575
        %v1681 = vunpack.c.h.b16 %v575
        %v1682 = vunpack.c.l.b16 %v576
        %v1683 = vunpack.c.h.b16 %v576
        %v1684 = vunpack.c.l.b16 %v577
        %v1685 = vunpack.c.h.b16 %v577
        %v1686 = vunpack.c.l.b16 %v578
        %v1687 = vunpack.c.h.b16 %v578
        %v1688 = vunpack.c.l.b16 %v579
        %v1689 = vunpack.c.h.b16 %v579
        %v1690 = vunpack.c.l.b16 %v580
        %v1691 = vunpack.c.h.b16 %v580
        %v1692 = vunpack.c.l.b16 %v581
        %v1693 = vunpack.c.h.b16 %v581
        %v1694 = vunpack.c.l.b16 %v582
        %v1695 = vunpack.c.h.b16 %v582
        %v1696 = vunpack.c.l.b16 %v583
        %v1697 = vunpack.c.h.b16 %v583
        %v1698 = vunpack.c.l.b16 %v584
        %v1699 = vunpack.c.h.b16 %v584
        %v1700 = vunpack.c.l.b16 %v585
        %v1701 = vunpack.c.h.b16 %v585
        %v1702 = vunpack.c.l.b16 %v586
        %v1703 = vunpack.c.h.b16 %v586
        %v1704 = vunpack.c.l.b16 %v587
        %v1705 = vunpack.c.h.b16 %v587
        %v1706 = vunpack.c.l.b16 %v588
        %v1707 = vunpack.c.h.b16 %v588
        %v1708 = vunpack.c.l.b16 %v589
        %v1709 = vunpack.c.h.b16 %v589
        %v1710 = vunpack.c.l.b16 %v590
        %v1711 = vunpack.c.h.b16 %v590
        %v1712 = vunpack.c.l.b16 %v591
        %v1713 = vunpack.c.h.b16 %v591
        %v1714 = vunpack.c.l.b16 %v592
        %v1715 = vunpack.c.h.b16 %v592
        %v1716 = vunpack.c.l.b16 %v593
        %v1717 = vunpack.c.h.b16 %v593
        %v1718 = vunpack.c.l.b16 %v594
        %v1719 = vunpack.c.h.b16 %v594
        %v1720 = vunpack.c.l.b16 %v595
        %v1721 = vunpack.c.h.b16 %v595
        %v1722 = vunpack.c.l.b16 %v596
        %v1723 = vunpack.c.h.b16 %v596
        %v1724 = vunpack.c.l.b16 %v597
        %v1725 = vunpack.c.h.b16 %v597
        %v1726 = vunpack.c.l.b16 %v598
        %v1727 = vunpack.c.h.b16 %v598
        %v1728 = vunpack.c.l.b16 %v599
        %v1729 = vunpack.c.h.b16 %v599
        %v1730 = vunpack.c.l.b16 %v600
        %v1731 = vunpack.c.h.b16 %v600
        %v1732 = vunpack.c.l.b16 %v601
        %v1733 = vunpack.c.h.b16 %v601
        %v1734 = vunpack.c.l.b16 %v602
        %v1735 = vunpack.c.h.b16 %v602
        %v1736 = vunpack.c.l.b16 %v603
        %v1737 = vunpack.c.h.b16 %v603
        %v1738 = vunpack.c.l.b16 %v604
        %v1739 = vunpack.c.h.b16 %v604
        %v1740 = vunpack.c.l.b16 %v605
        %v1741 = vunpack.c.h.b16 %v605
        %v1742 = vunpack.c.l.b16 %v606
        %v1743 = vunpack.c.h.b16 %v606
        %v1744 = vunpack.c.l.b16 %v607
        %v1745 = vunpack.c.h.b16 %v607
        %v1746 = vunpack.c.l.b16 %v608
        %v1747 = vunpack.c.h.b16 %v608
        %v1748 = vunpack.c.l.b16 %v609
        %v1749 = vunpack.c.h.b16 %v609
        %v1750 = vunpack.c.l.b16 %v610
        %v1751 = vunpack.c.h.b16 %v610
        %v1752 = vunpack.c.l.b16 %v611
        %v1753 = vunpack.c.h.b16 %v611
        %v1754 = vunpack.c.l.b16 %v612
        %v1755 = vunpack.c.h.b16 %v612
        %v1756 = vunpack.c.l.b16 %v613
        %v1757 = vunpack.c.h.b16 %v613
        %v1758 = vunpack.c.l.b16 %v614
        %v1759 = vunpack.c.h.b16 %v614
        %v1760 = vunpack.c.l.b16 %v615
        %v1761 = vunpack.c.h.b16 %v615
        %v1762 = vunpack.c.l.b16 %v616
        %v1763 = vunpack.c.h.b16 %v616
        %v1764 = vunpack.c.l.b16 %v617
        %v1765 = vunpack.c.h.b16 %v617
        %v1766 = vunpack.c.l.b16 %v618
        %v1767 = vunpack.c.h.b16 %v618
        %v1768 = vunpack.c.l.b16 %v619
        %v1769 = vunpack.c.h.b16 %v619
        %v1770 = vunpack.c.l.b16 %v620
        %v1771 = vunpack.c.h.b16 %v620
        %v1772 = vunpack.c.l.b16 %v621
        %v1773 = vunpack.c.h.b16 %v621
        %v1774 = vunpack.c.l.b16 %v622
        %v1775 = vunpack.c.h.b16 %v622
        %v1776 = vunpack.c.l.b16 %v623
        %v1777 = vunpack.c.h.b16 %v623
        %v1778 = vunpack.c.l.b16 %v624
        %v1779 = vunpack.c.h.b16 %v624
        %v1780 = vunpack.c.l.b16 %v625
        %v1781 = vunpack.c.h.b16 %v625
        %v1782 = vunpack.c.l.b16 %v626
        %v1783 = vunpack.c.h.b16 %v626
        %v1784 = vunpack.c.l.b16 %v627
        %v1785 = vunpack.c.h.b16 %v627
        %v1786 = vunpack.c.l.b16 %v628
        %v1787 = vunpack.c.h.b16 %v628
        %v1788 = vunpack.c.l.b16 %v629
        %v1789 = vunpack.c.h.b16 %v629
        %v1790 = vunpack.c.l.b16 %v630
        %v1791 = vunpack.c.h.b16 %v630
        %v1792 = vunpack.c.l.b16 %v631
        %v1793 = vunpack.c.h.b16 %v631
        %v1794 = vunpack.c.l.b16 %v632
        %v1795 = vunpack.c.h.b16 %v632
        %v1796 = vunpack.c.l.b16 %v633
        %v1797 = vunpack.c.h.b16 %v633
        %v1798 = vunpack.c.l.b16 %v634
        %v1799 = vunpack.c.h.b16 %v634
        %v1800 = vunpack.c.l.b16 %v635
        %v1801 = vunpack.c.h.b16 %v635
        %v1802 = vunpack.c.l.b16 %v636
        %v1803 = vunpack.c.h.b16 %v636
        %v1804 = vunpack.c.l.b16 %v637
        %v1805 = vunpack.c.h.b16 %v637
        %v1806 = vunpack.c.l.b16 %v638
        %v1807 = vunpack.c.h.b16 %v638
        %v1808 = vunpack.c.l.b16 %v639
        %v1809 = vunpack.c.h.b16 %v639
        %v1810 = vunpack.c.l.b16 %v640
        %v1811 = vunpack.c.h.b16 %v640
        %v1812 = vunpack.c.l.b16 %v641
        %v1813 = vunpack.c.h.b16 %v641
        %v1814 = vunpack.c.l.b16 %v642
        %v1815 = vunpack.c.h.b16 %v642
        %v1816 = vunpack.c.l.b16 %v643
        %v1817 = vunpack.c.h.b16 %v643
        %v1818 = vunpack.c.l.b16 %v644
        %v1819 = vunpack.c.h.b16 %v644
        %v1820 = vunpack.c.l.b16 %v645
        %v1821 = vunpack.c.h.b16 %v645
        %v1822 = vunpack.c.l.b16 %v646
        %v1823 = vunpack.c.h.b16 %v646
        %v1824 = vunpack.c.l.b16 %v647
        %v1825 = vunpack.c.h.b16 %v647
        %v1826 = vunpack.c.l.b16 %v648
        %v1827 = vunpack.c.h.b16 %v648
        %v1828 = vunpack.c.l.b16 %v649
        %v1829 = vunpack.c.h.b16 %v649
        %v1830 = vunpack.c.l.b16 %v650
        %v1831 = vunpack.c.h.b16 %v650
        %v1832 = vunpack.c.l.b16 %v651
        %v1833 = vunpack.c.h.b16 %v651
        %v1834 = vunpack.c.l.b16 %v652
        %v1835 = vunpack.c.h.b16 %v652
        %v1836 = vunpack.c.l.b16 %v653
        %v1837 = vunpack.c.h.b16 %v653
        %v1838 = vunpack.c.l.b16 %v654
        %v1839 = vunpack.c.h.b16 %v654
        %v1840 = vunpack.c.l.b16 %v655
        %v1841 = vunpack.c.h.b16 %v655
        %v1842 = vunpack.c.l.b16 %v656
        %v1843 = vunpack.c.h.b16 %v656
        %v1844 = vunpack.c.l.b16 %v657
        %v1845 = vunpack.c.h.b16 %v657
        %v1846 = vunpack.c.l.b16 %v658
        %v1847 = vunpack.c.h.b16 %v658
        %v1848 = vunpack.c.l.b16 %v659
        %v1849 = vunpack.c.h.b16 %v659
        %v1850 = vunpack.c.l.b16 %v660
        %v1851 = vunpack.c.h.b16 %v660
        %v1852 = vunpack.c.l.b16 %v661
        %v1853 = vunpack.c.h.b16 %v661
        %v1854 = vunpack.c.l.b16 %v662
        %v1855 = vunpack.c.h.b16 %v662
        %v1856 = vunpack.c.l.b16 %v663
        %v1857 = vunpack.c.h.b16 %v663
        %v1858 = vunpack.c.l.b16 %v664
        %v1859 = vunpack.c.h.b16 %v664
        %v1860 = vunpack.c.l.b16 %v665
        %v1861 = vunpack.c.h.b16 %v665
        %v1862 = vunpack.c.l.b16 %v666
        %v1863 = vunpack.c.h.b16 %v666
        %v1864 = vunpack.c.l.b16 %v667
        %v1865 = vunpack.c.h.b16 %v667
        %v1866 = vunpack.c.l.b16 %v668
        %v1867 = vunpack.c.h.b16 %v668
        %v1868 = vunpack.c.l.b16 %v669
        %v1869 = vunpack.c.h.b16 %v669
        %v1870 = vunpack.c.l.b16 %v670
        %v1871 = vunpack.c.h.b16 %v670
        %v1872 = vunpack.c.l.b16 %v671
        %v1873 = vunpack.c.h.b16 %v671
        %v1874 = vunpack.c.l.b16 %v672
        %v1875 = vunpack.c.h.b16 %v672
        %v1876 = vunpack.c.l.b16 %v673
        %v1877 = vunpack.c.h.b16 %v673
        %v1878 = vunpack.c.l.b16 %v674
        %v1879 = vunpack.c.h.b16 %v674
        %v1880 = vunpack.c.l.b16 %v675
        %v1881 = vunpack.c.h.b16 %v675
        %v1882 = vunpack.c.l.b16 %v676
        %v1883 = vunpack.c.h.b16 %v676
        %v1884 = vunpack.c.l.b16 %v677
        %v1885 = vunpack.c.h.b16 %v677
        %v1886 = vunpack.c.l.b16 %v678
        %v1887 = vunpack.c.h.b16 %v678
        %v1888 = vunpack.c.l.b16 %v679
        %v1889 = vunpack.c.h.b16 %v679
        %v1890 = vunpack.c.l.b16 %v680
        %v1891 = vunpack.c.h.b16 %v680
        %v1892 = vunpack.c.l.b16 %v681
        %v1893 = vunpack.c.h.b16 %v681
        %v1894 = vunpack.c.l.b16 %v682
        %v1895 = vunpack.c.h.b16 %v682
        %v1896 = vunpack.c.l.b16 %v683
        %v1897 = vunpack.c.h.b16 %v683
        %v1898 = vunpack.c.l.b16 %v684
        %v1899 = vunpack.c.h.b16 %v684
        %v1900 = vunpack.c.l.b16 %v685
        %v1901 = vunpack.c.h.b16 %v685
        %v1902 = vunpack.c.l.b16 %v686
        %v1903 = vunpack.c.h.b16 %v686
        %v1904 = vunpack.c.l.b16 %v687
        %v1905 = vunpack.c.h.b16 %v687
        %v1906 = vunpack.c.l.b16 %v688
        %v1907 = vunpack.c.h.b16 %v688
        %v1908 = vunpack.c.l.b16 %v689
        %v1909 = vunpack.c.h.b16 %v689
        %v1910 = vunpack.c.l.b16 %v690
        %v1911 = vunpack.c.h.b16 %v690
        %v1912 = vunpack.c.l.b16 %v691
        %v1913 = vunpack.c.h.b16 %v691
        %v1914 = vunpack.c.l.b16 %v692
        %v1915 = vunpack.c.h.b16 %v692
        %v1916 = vunpack.c.l.b16 %v693
        %v1917 = vunpack.c.h.b16 %v693
        %v1918 = vunpack.c.l.b16 %v694
        %v1919 = vunpack.c.h.b16 %v694
        %v1920 = vunpack.c.l.b16 %v695
        %v1921 = vunpack.c.h.b16 %v695
        %v1922 = vunpack.c.l.b16 %v696
        %v1923 = vunpack.c.h.b16 %v696
        %v1924 = vunpack.c.l.b16 %v697
        %v1925 = vunpack.c.h.b16 %v697
        %v1926 = vunpack.c.l.b16 %v698
        %v1927 = vunpack.c.h.b16 %v698
        %v1928 = vunpack.c.l.b16 %v699
        %v1929 = vunpack.c.h.b16 %v699
        %v1930 = vunpack.c.l.b16 %v700
        %v1931 = vunpack.c.h.b16 %v700
        %v1932 = vunpack.c.l.b16 %v701
        %v1933 = vunpack.c.h.b16 %v701
        %v1934 = vunpack.c.l.b16 %v702
        %v1935 = vunpack.c.h.b16 %v702
        %v1936 = vunpack.c.l.b16 %v703
        %v1937 = vunpack.c.h.b16 %v703
        %v1938 = vunpack.c.l.b16 %v704
        %v1939 = vunpack.c.h.b16 %v704
        %v1940 = vunpack.c.l.b16 %v705
        %v1941 = vunpack.c.h.b16 %v705
        %v1942 = vunpack.c.l.b16 %v706
        %v1943 = vunpack.c.h.b16 %v706
        %v1944 = vunpack.c.l.b16 %v707
        %v1945 = vunpack.c.h.b16 %v707
        %v1946 = vunpack.c.l.b16 %v708
        %v1947 = vunpack.c.h.b16 %v708
        %v1948 = vunpack.c.l.b16 %v709
        %v1949 = vunpack.c.h.b16 %v709
        %v1950 = vunpack.c.l.b16 %v710
        %v1951 = vunpack.c.h.b16 %v710
        %v1952 = vunpack.c.l.b16 %v711
        %v1953 = vunpack.c.h.b16 %v711
        %v1954 = vunpack.c.l.b16 %v712
        %v1955 = vunpack.c.h.b16 %v712
        %v1956 = vunpack.c.l.b16 %v713
        %v1957 = vunpack.c.h.b16 %v713
        %v1958 = vunpack.c.l.b16 %v714
        %v1959 = vunpack.c.h.b16 %v714
        %v1960 = vunpack.c.l.b16 %v715
        %v1961 = vunpack.c.h.b16 %v715
        %v1962 = vunpack.c.l.b16 %v716
        %v1963 = vunpack.c.h.b16 %v716
        %v1964 = vunpack.c.l.b16 %v717
        %v1965 = vunpack.c.h.b16 %v717
        %v1966 = vunpack.c.l.b16 %v718
        %v1967 = vunpack.c.h.b16 %v718
        %v1968 = vunpack.c.l.b16 %v719
        %v1969 = vunpack.c.h.b16 %v719
        %v1970 = vunpack.c.l.b16 %v720
        %v1971 = vunpack.c.h.b16 %v720
        %v1972 = vunpack.c.l.b16 %v721
        %v1973 = vunpack.c.h.b16 %v721
        %v1974 = vunpack.c.l.b16 %v722
        %v1975 = vunpack.c.h.b16 %v722
        %v1976 = vunpack.c.l.b16 %v723
        %v1977 = vunpack.c.h.b16 %v723
        %v1978 = vunpack.c.l.b16 %v724
        %v1979 = vunpack.c.h.b16 %v724
        %v1980 = vunpack.c.l.b16 %v725
        %v1981 = vunpack.c.h.b16 %v725
        %v1982 = vunpack.c.l.b16 %v726
        %v1983 = vunpack.c.h.b16 %v726
        %v1984 = vunpack.c.l.b16 %v727
        %v1985 = vunpack.c.h.b16 %v727
        %v1986 = vunpack.c.l.b16 %v728
        %v1987 = vunpack.c.h.b16 %v728
        %v1988 = vunpack.c.l.b16 %v729
        %v1989 = vunpack.c.h.b16 %v729
        %v1990 = vunpack.c.l.b16 %v730
        %v1991 = vunpack.c.h.b16 %v730
        %v1992 = vunpack.c.l.b16 %v731
        %v1993 = vunpack.c.h.b16 %v731
        %v1994 = vunpack.c.l.b16 %v732
        %v1995 = vunpack.c.h.b16 %v732
        %v1996 = vunpack.c.l.b16 %v733
        %v1997 = vunpack.c.h.b16 %v733
        %v1998 = vunpack.c.l.b16 %v734
        %v1999 = vunpack.c.h.b16 %v734
        %v2000 = vunpack.c.l.b16 %v735
        %v2001 = vunpack.c.h.b16 %v735
        %v2002 = vunpack.c.l.b16 %v736
        %v2003 = vunpack.c.h.b16 %v736
        %v2004 = vunpack.c.l.b16 %v737
        %v2005 = vunpack.c.h.b16 %v737
        %v2006 = vunpack.c.l.b16 %v738
        %v2007 = vunpack.c.h.b16 %v738
        %v2008 = vunpack.c.l.b16 %v739
        %v2009 = vunpack.c.h.b16 %v739
        %v2010 = vunpack.c.l.b16 %v740
        %v2011 = vunpack.c.h.b16 %v740
        %v2012 = vunpack.c.l.b16 %v741
        %v2013 = vunpack.c.h.b16 %v741
        %v2014 = vunpack.c.l.b16 %v742
        %v2015 = vunpack.c.h.b16 %v742
        %v2016 = vunpack.c.l.b16 %v743
        %v2017 = vunpack.c.h.b16 %v743
        %v2018 = vunpack.c.l.b16 %v744
        %v2019 = vunpack.c.h.b16 %v744
        %v2020 = vunpack.c.l.b16 %v745
        %v2021 = vunpack.c.h.b16 %v745
        %v2022 = vunpack.c.l.b16 %v746
        %v2023 = vunpack.c.h.b16 %v746
        %v2024 = vunpack.c.l.b16 %v747
        %v2025 = vunpack.c.h.b16 %v747
        %v2026 = vunpack.c.l.b16 %v748
        %v2027 = vunpack.c.h.b16 %v748
        %v2028 = vunpack.c.l.b16 %v749
        %v2029 = vunpack.c.h.b16 %v749
        %v2030 = vunpack.c.l.b16 %v750
        %v2031 = vunpack.c.h.b16 %v750
        %v2032 = vunpack.c.l.b16 %v751
        %v2033 = vunpack.c.h.b16 %v751
        %v2034 = vunpack.c.l.b16 %v752
        %v2035 = vunpack.c.h.b16 %v752
        %v2036 = vunpack.c.l.b16 %v753
        %v2037 = vunpack.c.h.b16 %v753
        %v2038 = vunpack.c.l.b16 %v754
        %v2039 = vunpack.c.h.b16 %v754
        %v2040 = vunpack.c.l.b16 %v755
        %v2041 = vunpack.c.h.b16 %v755
        %v2042 = vunpack.c.l.b16 %v756
        %v2043 = vunpack.c.h.b16 %v756
        %v2044 = vunpack.c.l.b16 %v757
        %v2045 = vunpack.c.h.b16 %v757
        %v2046 = vunpack.c.l.b16 %v758
        %v2047 = vunpack.c.h.b16 %v758
        %v2048 = vunpack.c.l.b16 %v759
        %v2049 = vunpack.c.h.b16 %v759
        %v2050 = vunpack.c.l.b16 %v760
        %v2051 = vunpack.c.h.b16 %v760
        %v2052 = vunpack.c.l.b16 %v761
        %v2053 = vunpack.c.h.b16 %v761
        %v2054 = vunpack.c.l.b16 %v762
        %v2055 = vunpack.c.h.b16 %v762
        %v2056 = vunpack.c.l.b16 %v763
        %v2057 = vunpack.c.h.b16 %v763
        %v2058 = vunpack.c.l.b16 %v764
        %v2059 = vunpack.c.h.b16 %v764
        %v2060 = vunpack.c.l.b16 %v765
        %v2061 = vunpack.c.h.b16 %v765
        %v2062 = vunpack.c.l.b16 %v766
        %v2063 = vunpack.c.h.b16 %v766
        %v2064 = vunpack.c.l.b16 %v767
        %v2065 = vunpack.c.h.b16 %v767
        %v2066 = vunpack.c.l.b16 %v768
        %v2067 = vunpack.c.h.b16 %v768
        %v2068 = vunpack.c.l.b16 %v769
        %v2069 = vunpack.c.h.b16 %v769
        %v2070 = vunpack.c.l.b16 %v770
        %v2071 = vunpack.c.h.b16 %v770
        %v2072 = vunpack.c.l.b16 %v771
        %v2073 = vunpack.c.h.b16 %v771
        %v2074 = vunpack.c.l.b16 %v772
        %v2075 = vunpack.c.h.b16 %v772
        %v2076 = vunpack.c.l.b16 %v773
        %v2077 = vunpack.c.h.b16 %v773
        %v2078 = vunpack.c.l.b16 %v774
        %v2079 = vunpack.c.h.b16 %v774
        %v2080 = vunpack.c.l.b16 %v775
        %v2081 = vunpack.c.h.b16 %v775
        %v2082 = vunpack.c.l.b16 %v776
        %v2083 = vunpack.c.h.b16 %v776
        %v2084 = vunpack.c.l.b16 %v777
        %v2085 = vunpack.c.h.b16 %v777
        %v2086 = vunpack.c.l.b16 %v778
        %v2087 = vunpack.c.h.b16 %v778
        %v2088 = vunpack.c.l.b16 %v779
        %v2089 = vunpack.c.h.b16 %v779
        %v2090 = vunpack.c.l.b16 %v780
        %v2091 = vunpack.c.h.b16 %v780
        %v2092 = vunpack.c.l.b16 %v781
        %v2093 = vunpack.c.h.b16 %v781
        %v2094 = vunpack.c.l.b16 %v782
        %v2095 = vunpack.c.h.b16 %v782
        %v2096 = vunpack.c.l.b16 %v783
        %v2097 = vunpack.c.h.b16 %v783
        %v2098 = vunpack.c.l.b16 %v784
        %v2099 = vunpack.c.h.b16 %v784
        %v2100 = vunpack.c.l.b16 %v785
        %v2101 = vunpack.c.h.b16 %v785
        %v2102 = vunpack.c.l.b16 %v786
        %v2103 = vunpack.c.h.b16 %v786
        %v2104 = vunpack.c.l.b16 %v787
        %v2105 = vunpack.c.h.b16 %v787
        %v2106 = vunpack.c.l.b16 %v788
        %v2107 = vunpack.c.h.b16 %v788
        %v2108 = vunpack.c.l.b16 %v789
        %v2109 = vunpack.c.h.b16 %v789
        %v2110 = vunpack.c.l.b16 %v790
        %v2111 = vunpack.c.h.b16 %v790
        %v2112 = vunpack.c.l.b16 %v791
        %v2113 = vunpack.c.h.b16 %v791
        %v2114 = vunpack.c.l.b16 %v792
        %v2115 = vunpack.c.h.b16 %v792
        %v2116 = vunpack.c.l.b16 %v793
        %v2117 = vunpack.c.h.b16 %v793
        %v2118 = vunpack.c.l.b16 %v794
        %v2119 = vunpack.c.h.b16 %v794
        %v2120 = vunpack.c.l.b16 %v795
        %v2121 = vunpack.c.h.b16 %v795
        %v2122 = vunpack.c.l.b16 %v796
        %v2123 = vunpack.c.h.b16 %v796
        %v2124 = vunpack.c.l.b16 %v797
        %v2125 = vunpack.c.h.b16 %v797
        %v2126 = vunpack.c.l.b16 %v798
        %v2127 = vunpack.c.h.b16 %v798
        %v2128 = vunpack.c.l.b16 %v799
        %v2129 = vunpack.c.h.b16 %v799
        %v2130 = vunpack.c.l.b16 %v800
        %v2131 = vunpack.c.h.b16 %v800
        %v2132 = vunpack.c.l.b16 %v801
        %v2133 = vunpack.c.h.b16 %v801
        %v2134 = vunpack.c.l.b16 %v802
        %v2135 = vunpack.c.h.b16 %v802
        %v2136 = vunpack.c.l.b16 %v803
        %v2137 = vunpack.c.h.b16 %v803
        %v2138 = vunpack.c.l.b16 %v804
        %v2139 = vunpack.c.h.b16 %v804
        %v2140 = vunpack.c.l.b16 %v805
        %v2141 = vunpack.c.h.b16 %v805
        %v2142 = vunpack.c.l.b16 %v806
        %v2143 = vunpack.c.h.b16 %v806
        %v2144 = vunpack.c.l.b16 %v807
        %v2145 = vunpack.c.h.b16 %v807
        %v2146 = vunpack.c.l.b16 %v808
        %v2147 = vunpack.c.h.b16 %v808
        %v2148 = vunpack.c.l.b16 %v809
        %v2149 = vunpack.c.h.b16 %v809
        %v2150 = vunpack.c.l.b16 %v810
        %v2151 = vunpack.c.h.b16 %v810
        %v2152 = vunpack.c.l.b16 %v811
        %v2153 = vunpack.c.h.b16 %v811
        %v2154 = vunpack.c.l.b16 %v812
        %v2155 = vunpack.c.h.b16 %v812
        %v2156 = vunpack.c.l.b16 %v813
        %v2157 = vunpack.c.h.b16 %v813
        %v2158 = vunpack.c.l.b16 %v814
        %v2159 = vunpack.c.h.b16 %v814
        %v2160 = vunpack.c.l.b16 %v815
        %v2161 = vunpack.c.h.b16 %v815
        %v2162 = vunpack.c.l.b16 %v816
        %v2163 = vunpack.c.h.b16 %v816
        %v2164 = vunpack.c.l.b16 %v817
        %v2165 = vunpack.c.h.b16 %v817
        %v2166 = vunpack.c.l.b16 %v818
        %v2167 = vunpack.c.h.b16 %v818
        %v2168 = vunpack.c.l.b16 %v819
        %v2169 = vunpack.c.h.b16 %v819
        %v2170 = vunpack.c.l.b16 %v820
        %v2171 = vunpack.c.h.b16 %v820
        %v2172 = vunpack.c.l.b16 %v821
        %v2173 = vunpack.c.h.b16 %v821
        %v2174 = vunpack.c.l.b16 %v822
        %v2175 = vunpack.c.h.b16 %v822
        %v2176 = vunpack.c.l.b16 %v823
        %v2177 = vunpack.c.h.b16 %v823
        %v2178 = vunpack.c.l.b16 %v824
        %v2179 = vunpack.c.h.b16 %v824
        %v2180 = vunpack.c.l.b16 %v825
        %v2181 = vunpack.c.h.b16 %v825
        %v2182 = vunpack.c.l.b16 %v826
        %v2183 = vunpack.c.h.b16 %v826
        %v2184 = vunpack.c.l.b16 %v827
        %v2185 = vunpack.c.h.b16 %v827
        %v2186 = vunpack.c.l.b16 %v828
        %v2187 = vunpack.c.h.b16 %v828
        %v2188 = vunpack.c.l.b16 %v829
        %v2189 = vunpack.c.h.b16 %v829
        %v2190 = vunpack.c.l.b16 %v830
        %v2191 = vunpack.c.h.b16 %v830
        %v2192 = vunpack.c.l.b16 %v831
        %v2193 = vunpack.c.h.b16 %v831
        %v2194 = vunpack.c.l.b16 %v832
        %v2195 = vunpack.c.h.b16 %v832
        %v2196 = vunpack.c.l.b16 %v833
        %v2197 = vunpack.c.h.b16 %v833
        %v2198 = vunpack.c.l.b16 %v834
        %v2199 = vunpack.c.h.b16 %v834
        %v2200 = vunpack.c.l.b16 %v835
        %v2201 = vunpack.c.h.b16 %v835
        %v2202 = vunpack.c.l.b16 %v836
        %v2203 = vunpack.c.h.b16 %v836
        %v2204 = vunpack.c.l.b16 %v837
        %v2205 = vunpack.c.h.b16 %v837
        %v2206 = vunpack.c.l.b16 %v838
        %v2207 = vunpack.c.h.b16 %v838
        %v2208 = vunpack.c.l.b16 %v839
        %v2209 = vunpack.c.h.b16 %v839
        %v2210 = vunpack.c.l.b16 %v840
        %v2211 = vunpack.c.h.b16 %v840
        %v2212 = vunpack.c.l.b16 %v841
        %v2213 = vunpack.c.h.b16 %v841
        %v2214 = vunpack.c.l.b16 %v842
        %v2215 = vunpack.c.h.b16 %v842
        %v2216 = vunpack.c.l.b16 %v843
        %v2217 = vunpack.c.h.b16 %v843
        %v2218 = vunpack.c.l.b16 %v844
        %v2219 = vunpack.c.h.b16 %v844
        %v2220 = vunpack.c.l.b16 %v845
        %v2221 = vunpack.c.h.b16 %v845
        %v2222 = vunpack.c.l.b16 %v846
        %v2223 = vunpack.c.h.b16 %v846
        %v2224 = vunpack.c.l.b16 %v847
        %v2225 = vunpack.c.h.b16 %v847
        %v2226 = vunpack.c.l.b16 %v848
        %v2227 = vunpack.c.h.b16 %v848
        %v2228 = vunpack.c.l.b16 %v849
        %v2229 = vunpack.c.h.b16 %v849
        %v2230 = vunpack.c.l.b16 %v850
        %v2231 = vunpack.c.h.b16 %v850
        %v2232 = vunpack.c.l.b16 %v851
        %v2233 = vunpack.c.h.b16 %v851
        %v2234 = vunpack.c.l.b16 %v852
        %v2235 = vunpack.c.h.b16 %v852
        %v2236 = vunpack.c.l.b16 %v853
        %v2237 = vunpack.c.h.b16 %v853
        %v2238 = vunpack.c.l.b16 %v854
        %v2239 = vunpack.c.h.b16 %v854
        %v2240 = vunpack.c.l.b16 %v855
        %v2241 = vunpack.c.h.b16 %v855
        %v2242 = vunpack.c.l.b16 %v856
        %v2243 = vunpack.c.h.b16 %v856
        %v2244 = vunpack.c.l.b16 %v857
        %v2245 = vunpack.c.h.b16 %v857
        %v2246 = vunpack.c.l.b16 %v858
        %v2247 = vunpack.c.h.b16 %v858
        %v2248 = vunpack.c.l.b16 %v859
        %v2249 = vunpack.c.h.b16 %v859
        %v2250 = vunpack.c.l.b16 %v860
        %v2251 = vunpack.c.h.b16 %v860
        %v2252 = vunpack.c.l.b16 %v861
        %v2253 = vunpack.c.h.b16 %v861
        %v2254 = vunpack.c.l.b16 %v862
        %v2255 = vunpack.c.h.b16 %v862
        %v2256 = vunpack.c.l.b16 %v863
        %v2257 = vunpack.c.h.b16 %v863
        %v2258 = vunpack.c.l.b16 %v864
        %v2259 = vunpack.c.h.b16 %v864
        %v2260 = vunpack.c.l.b16 %v865
        %v2261 = vunpack.c.h.b16 %v865
        %v2262 = vunpack.c.l.b16 %v866
        %v2263 = vunpack.c.h.b16 %v866
        %v2264 = vunpack.c.l.b16 %v867
        %v2265 = vunpack.c.h.b16 %v867
        %v2266 = vunpack.c.l.b16 %v868
        %v2267 = vunpack.c.h.b16 %v868
        %v2268 = vunpack.c.l.b16 %v869
        %v2269 = vunpack.c.h.b16 %v869
        %v2270 = vunpack.c.l.b16 %v870
        %v2271 = vunpack.c.h.b16 %v870
        %v2272 = vunpack.c.l.b16 %v871
        %v2273 = vunpack.c.h.b16 %v871
        %v2274 = vunpack.c.l.b16 %v872
        %v2275 = vunpack.c.h.b16 %v872
        %v2276 = vunpack.c.l.b16 %v873
        %v2277 = vunpack.c.h.b16 %v873
        %v2278 = vunpack.c.l.b16 %v874
        %v2279 = vunpack.c.h.b16 %v874
        %v2280 = vunpack.c.l.b16 %v875
        %v2281 = vunpack.c.h.b16 %v875
        %v2282 = vunpack.c.l.b16 %v876
        %v2283 = vunpack.c.h.b16 %v876
        %v2284 = vunpack.c.l.b16 %v877
        %v2285 = vunpack.c.h.b16 %v877
        %v2286 = vunpack.c.l.b16 %v878
        %v2287 = vunpack.c.h.b16 %v878
        %v2288 = vunpack.c.l.b16 %v879
        %v2289 = vunpack.c.h.b16 %v879
        %v2290 = vunpack.c.l.b16 %v880
        %v2291 = vunpack.c.h.b16 %v880
        %v2292 = vunpack.c.l.b16 %v881
        %v2293 = vunpack.c.h.b16 %v881
        %v2294 = vunpack.c.l.b16 %v882
        %v2295 = vunpack.c.h.b16 %v882
        %v2296 = vunpack.c.l.b16 %v883
        %v2297 = vunpack.c.h.b16 %v883
        %v2298 = vunpack.c.l.b16 %v884
        %v2299 = vunpack.c.h.b16 %v884
        %v2300 = vunpack.c.l.b16 %v885
        %v2301 = vunpack.c.h.b16 %v885
        %v2302 = vunpack.c.l.b16 %v886
        %v2303 = vunpack.c.h.b16 %v886
        %v2304 = vunpack.c.l.b16 %v887
        %v2305 = vunpack.c.h.b16 %v887
        %v2306 = vunpack.c.l.b16 %v888
        %v2307 = vunpack.c.h.b16 %v888
        %v2308 = vunpack.c.l.b16 %v889
        %v2309 = vunpack.c.h.b16 %v889
        %v2310 = vunpack.c.l.b16 %v890
        %v2311 = vunpack.c.h.b16 %v890
        %v2312 = vunpack.c.l.b16 %v891
        %v2313 = vunpack.c.h.b16 %v891
        %v2314 = vunpack.c.l.b16 %v892
        %v2315 = vunpack.c.h.b16 %v892
        %v2316 = vunpack.c.l.b16 %v893
        %v2317 = vunpack.c.h.b16 %v893
        %v2318 = vunpack.c.l.b16 %v894
        %v2319 = vunpack.c.h.b16 %v894
        %v2320 = vunpack.c.l.b16 %v895
        %v2321 = vunpack.c.h.b16 %v895
        %v2322 = vunpack.c.l.b16 %v896
        %v2323 = vunpack.c.h.b16 %v896
        %v2324 = vunpack.c.l.b16 %v897
        %v2325 = vunpack.c.h.b16 %v897
        %v2326 = vunpack.c.l.b16 %v898
        %v2327 = vunpack.c.h.b16 %v898
        %v2328 = vunpack.c.l.b16 %v899
        %v2329 = vunpack.c.h.b16 %v899
        %v2330 = vunpack.c.l.b16 %v900
        %v2331 = vunpack.c.h.b16 %v900
        %v2332 = vunpack.c.l.b16 %v901
        %v2333 = vunpack.c.h.b16 %v901
        %v2334 = vunpack.c.l.b16 %v902
        %v2335 = vunpack.c.h.b16 %v902
        %v2336 = vunpack.c.l.b16 %v903
        %v2337 = vunpack.c.h.b16 %v903
        %v2338 = vunpack.c.l.b16 %v904
        %v2339 = vunpack.c.h.b16 %v904
        %v2340 = vunpack.c.l.b16 %v905
        %v2341 = vunpack.c.h.b16 %v905
        %v2342 = vunpack.c.l.b16 %v906
        %v2343 = vunpack.c.h.b16 %v906
        %v2344 = vunpack.c.l.b16 %v907
        %v2345 = vunpack.c.h.b16 %v907
        %v2346 = vunpack.c.l.b16 %v908
        %v2347 = vunpack.c.h.b16 %v908
        %v2348 = vunpack.c.l.b16 %v909
        %v2349 = vunpack.c.h.b16 %v909
        %v2350 = vunpack.c.l.b16 %v910
        %v2351 = vunpack.c.h.b16 %v910
        %v2352 = vunpack.c.l.b16 %v911
        %v2353 = vunpack.c.h.b16 %v911
        %v2354 = vunpack.c.l.b16 %v912
        %v2355 = vunpack.c.h.b16 %v912
        %v2356 = vunpack.c.l.b16 %v913
        %v2357 = vunpack.c.h.b16 %v913
        %v2358 = vunpack.c.l.b16 %v914
        %v2359 = vunpack.c.h.b16 %v914
        %v2360 = vunpack.c.l.b16 %v915
        %v2361 = vunpack.c.h.b16 %v915
        %v2362 = vunpack.c.l.b16 %v916
        %v2363 = vunpack.c.h.b16 %v916
        %v2364 = vunpack.c.l.b16 %v917
        %v2365 = vunpack.c.h.b16 %v917
        %v2366 = vunpack.c.l.b16 %v918
        %v2367 = vunpack.c.h.b16 %v918
        %v2368 = vunpack.c.l.b16 %v919
        %v2369 = vunpack.c.h.b16 %v919
        %v2370 = vunpack.c.l.b16 %v920
        %v2371 = vunpack.c.h.b16 %v920
        %v2372 = vunpack.c.l.b16 %v921
        %v2373 = vunpack.c.h.b16 %v921
        %v2374 = vunpack.c.l.b16 %v922
        %v2375 = vunpack.c.h.b16 %v922
        %v2376 = vunpack.c.l.b16 %v923
        %v2377 = vunpack.c.h.b16 %v923
        %v2378 = vunpack.c.l.b16 %v924
        %v2379 = vunpack.c.h.b16 %v924
        %v2380 = vunpack.c.l.b16 %v925
        %v2381 = vunpack.c.h.b16 %v925
        %v2382 = vunpack.c.l.b16 %v926
        %v2383 = vunpack.c.h.b16 %v926
        %v2384 = vunpack.c.l.b16 %v927
        %v2385 = vunpack.c.h.b16 %v927
        %v2386 = vunpack.c.l.b16 %v928
        %v2387 = vunpack.c.h.b16 %v928
        %v2388 = vunpack.c.l.b16 %v929
        %v2389 = vunpack.c.h.b16 %v929
        %v2390 = vunpack.c.l.b16 %v930
        %v2391 = vunpack.c.h.b16 %v930
        %v2392 = vunpack.c.l.b16 %v931
        %v2393 = vunpack.c.h.b16 %v931
        %v2394 = vunpack.c.l.b16 %v932
        %v2395 = vunpack.c.h.b16 %v932
        %v2396 = vunpack.c.l.b16 %v933
        %v2397 = vunpack.c.h.b16 %v933
        %v2398 = vunpack.c.l.b16 %v934
        %v2399 = vunpack.c.h.b16 %v934
        %v2400 = vunpack.c.l.b16 %v935
        %v2401 = vunpack.c.h.b16 %v935
        %v2402 = vunpack.c.l.b16 %v936
        %v2403 = vunpack.c.h.b16 %v936
        %v2404 = vunpack.c.l.b16 %v937
        %v2405 = vunpack.c.h.b16 %v937
        %v2406 = vunpack.c.l.b16 %v938
        %v2407 = vunpack.c.h.b16 %v938
        %v2408 = vunpack.c.l.b16 %v939
        %v2409 = vunpack.c.h.b16 %v939
        %v2410 = vunpack.c.l.b16 %v940
        %v2411 = vunpack.c.h.b16 %v940
        %v2412 = vunpack.c.l.b16 %v941
        %v2413 = vunpack.c.h.b16 %v941
        %v2414 = vunpack.c.l.b16 %v942
        %v2415 = vunpack.c.h.b16 %v942
        %v2416 = vunpack.c.l.b16 %v943
        %v2417 = vunpack.c.h.b16 %v943
        %v2418 = vunpack.c.l.b16 %v944
        %v2419 = vunpack.c.h.b16 %v944
        %v2420 = vunpack.c.l.b16 %v945
        %v2421 = vunpack.c.h.b16 %v945
        %v2422 = vunpack.c.l.b16 %v946
        %v2423 = vunpack.c.h.b16 %v946
        %v2424 = vunpack.c.l.b16 %v947
        %v2425 = vunpack.c.h.b16 %v947
        %v2426 = vunpack.c.l.b16 %v948
        %v2427 = vunpack.c.h.b16 %v948
        %v2428 = vunpack.c.l.b16 %v949
        %v2429 = vunpack.c.h.b16 %v949
        %v2430 = vunpack.c.l.b16 %v950
        %v2431 = vunpack.c.h.b16 %v950
        %v2432 = vunpack.c.l.b16 %v951
        %v2433 = vunpack.c.h.b16 %v951
        %v2434 = vunpack.c.l.b16 %v952
        %v2435 = vunpack.c.h.b16 %v952
        %v2436 = vunpack.c.l.b16 %v953
        %v2437 = vunpack.c.h.b16 %v953
        %v2438 = vunpack.c.l.b16 %v954
        %v2439 = vunpack.c.h.b16 %v954
        %v2440 = vunpack.c.l.b16 %v955
        %v2441 = vunpack.c.h.b16 %v955
        %v2442 = vunpack.c.l.b16 %v956
        %v2443 = vunpack.c.h.b16 %v956
        %v2444 = vunpack.c.l.b16 %v957
        %v2445 = vunpack.c.h.b16 %v957
        %v2446 = vunpack.c.l.b16 %v958
        %v2447 = vunpack.c.h.b16 %v958
        %v2448 = vunpack.c.l.b16 %v959
        %v2449 = vunpack.c.h.b16 %v959
        %v2450 = vunpack.c.l.b16 %v960
        %v2451 = vunpack.c.h.b16 %v960
        %v2452 = vunpack.c.l.b16 %v961
        %v2453 = vunpack.c.h.b16 %v961
        %v2454 = vunpack.c.l.b16 %v962
        %v2455 = vunpack.c.h.b16 %v962
        %v2456 = vunpack.c.l.b16 %v963
        %v2457 = vunpack.c.h.b16 %v963
        %v2458 = vunpack.c.l.b16 %v964
        %v2459 = vunpack.c.h.b16 %v964
        %v2460 = vunpack.c.l.b16 %v965
        %v2461 = vunpack.c.h.b16 %v965
        %v2462 = vunpack.c.l.b16 %v966
        %v2463 = vunpack.c.h.b16 %v966
        %v2464 = vunpack.c.l.b16 %v967
        %v2465 = vunpack.c.h.b16 %v967
        %v2466 = vunpack.c.l.b16 %v968
        %v2467 = vunpack.c.h.b16 %v968
        %v2468 = vunpack.c.l.b16 %v969
        %v2469 = vunpack.c.h.b16 %v969
        %v2470 = vunpack.c.l.b16 %v970
        %v2471 = vunpack.c.h.b16 %v970
        %v2472 = vunpack.c.l.b16 %v971
        %v2473 = vunpack.c.h.b16 %v971
        %v2474 = vunpack.c.l.b16 %v972
        %v2475 = vunpack.c.h.b16 %v972
        %v2476 = vunpack.c.l.b16 %v973
        %v2477 = vunpack.c.h.b16 %v973
        %v2478 = vunpack.c.l.b16 %v974
        %v2479 = vunpack.c.h.b16 %v974
        %v2480 = vunpack.c.l.b16 %v975
        %v2481 = vunpack.c.h.b16 %v975
        %v2482 = vunpack.c.l.b16 %v976
        %v2483 = vunpack.c.h.b16 %v976
        %v2484 = vunpack.c.l.b16 %v977
        %v2485 = vunpack.c.h.b16 %v977
        %v2486 = vunpack.c.l.b16 %v978
        %v2487 = vunpack.c.h.b16 %v978
        %v2488 = vunpack.c.l.b16 %v979
        %v2489 = vunpack.c.h.b16 %v979
        %v2490 = vunpack.c.l.b16 %v980
        %v2491 = vunpack.c.h.b16 %v980
        %v2492 = vunpack.c.l.b16 %v981
        %v2493 = vunpack.c.h.b16 %v981
        %v2494 = vunpack.c.l.b16 %v982
        %v2495 = vunpack.c.h.b16 %v982
        %v2496 = vunpack.c.l.b16 %v983
        %v2497 = vunpack.c.h.b16 %v983
        %v2498 = vunpack.c.l.b16 %v984
        %v2499 = vunpack.c.h.b16 %v984
        %v2500 = vunpack.c.l.b16 %v985
        %v2501 = vunpack.c.h.b16 %v985
        %v2502 = vunpack.c.l.b16 %v986
        %v2503 = vunpack.c.h.b16 %v986
        %v2504 = vunpack.c.l.b16 %v987
        %v2505 = vunpack.c.h.b16 %v987
        %v2506 = vunpack.c.l.b16 %v988
        %v2507 = vunpack.c.h.b16 %v988
        %v2508 = vunpack.c.l.b16 %v989
        %v2509 = vunpack.c.h.b16 %v989
        %v2510 = vunpack.c.l.b16 %v990
        %v2511 = vunpack.c.h.b16 %v990
        %v2512 = vunpack.c.l.b16 %v991
        %v2513 = vunpack.c.h.b16 %v991
        %v2514 = vunpack.c.l.b16 %v992
        %v2515 = vunpack.c.h.b16 %v992
        %v2516 = vunpack.c.l.b16 %v993
        %v2517 = vunpack.c.h.b16 %v993
        %v2518 = vunpack.c.l.b16 %v994
        %v2519 = vunpack.c.h.b16 %v994
        %v2520 = vunpack.c.l.b16 %v995
        %v2521 = vunpack.c.h.b16 %v995
        %v2522 = vunpack.c.l.b16 %v996
        %v2523 = vunpack.c.h.b16 %v996
        %v2524 = vunpack.c.l.b16 %v997
        %v2525 = vunpack.c.h.b16 %v997
        %v2526 = vunpack.c.l.b16 %v998
        %v2527 = vunpack.c.h.b16 %v998
        %v2528 = vunpack.c.l.b16 %v999
        %v2529 = vunpack.c.h.b16 %v999
        %v2530 = vunpack.c.l.b16 %v1000
        %v2531 = vunpack.c.h.b16 %v1000
        %v2532 = vunpack.c.l.b16 %v1001
        %v2533 = vunpack.c.h.b16 %v1001
        %v2534 = vunpack.c.l.b16 %v1002
        %v2535 = vunpack.c.h.b16 %v1002
        %v2536 = vunpack.c.l.b16 %v1003
        %v2537 = vunpack.c.h.b16 %v1003
        %v2538 = vunpack.c.l.b16 %v1004
        %v2539 = vunpack.c.h.b16 %v1004
        %v2540 = vunpack.c.l.b16 %v1005
        %v2541 = vunpack.c.h.b16 %v1005
        %v2542 = vunpack.c.l.b16 %v1006
        %v2543 = vunpack.c.h.b16 %v1006
        %v2544 = vunpack.c.l.b16 %v1007
        %v2545 = vunpack.c.h.b16 %v1007
        %v2546 = vunpack.c.l.b16 %v1008
        %v2547 = vunpack.c.h.b16 %v1008
        %v2548 = vunpack.c.l.b16 %v1009
        %v2549 = vunpack.c.h.b16 %v1009
        %v2550 = vunpack.c.l.b16 %v1010
        %v2551 = vunpack.c.h.b16 %v1010
        %v2552 = vunpack.c.l.b16 %v1011
        %v2553 = vunpack.c.h.b16 %v1011
        %v2554 = vunpack.c.l.b16 %v1012
        %v2555 = vunpack.c.h.b16 %v1012
        %v2556 = vunpack.c.l.b16 %v1013
        %v2557 = vunpack.c.h.b16 %v1013
        %v2558 = vunpack.c.l.b16 %v1014
        %v2559 = vunpack.c.h.b16 %v1014
        %v2560 = vunpack.c.l.b16 %v1015
        %v2561 = vunpack.c.h.b16 %v1015
        %v2562 = vunpack.c.l.b16 %v1016
        %v2563 = vunpack.c.h.b16 %v1016
        %v2564 = vunpack.c.l.b16 %v1017
        %v2565 = vunpack.c.h.b16 %v1017
        %v2566 = vunpack.c.l.b16 %v1018
        %v2567 = vunpack.c.h.b16 %v1018
        %v2568 = vunpack.c.l.b16 %v1019
        %v2569 = vunpack.c.h.b16 %v1019
        %v2570 = vunpack.c.l.b16 %v1020
        %v2571 = vunpack.c.h.b16 %v1020
        %v2572 = vunpack.c.l.b16 %v1021
        %v2573 = vunpack.c.h.b16 %v1021
        %v2574 = vunpack.c.l.b16 %v1022
        %v2575 = vunpack.c.h.b16 %v1022
        %v2576 = vunpack.c.l.b16 %v1023
        %v2577 = vunpack.c.h.b16 %v1023
        %v2578 = vunpack.c.l.b16 %v1024
        %v2579 = vunpack.c.h.b16 %v1024
        %v2580 = vunpack.c.l.b16 %v1025
        %v2581 = vunpack.c.h.b16 %v1025
        %v2582 = vunpack.c.l.b16 %v1026
        %v2583 = vunpack.c.h.b16 %v1026
        %v2584 = vunpack.c.l.b16 %v1027
        %v2585 = vunpack.c.h.b16 %v1027
        %v2586 = vunpack.c.l.b16 %v1028
        %v2587 = vunpack.c.h.b16 %v1028
        %v2588 = vunpack.c.l.b16 %v1029
        %v2589 = vunpack.c.h.b16 %v1029
        %v2590 = vunpack.c.l.b16 %v1030
        %v2591 = vunpack.c.h.b16 %v1030
        %v2592 = vunpack.c.l.b16 %v1031
        %v2593 = vunpack.c.h.b16 %v1031
        %v2594 = vunpack.c.l.b16 %v1032
        %v2595 = vunpack.c.h.b16 %v1032
        %v2596 = vunpack.c.l.b16 %v1033
        %v2597 = vunpack.c.h.b16 %v1033
        %v2598 = vunpack.c.l.b16 %v1034
        %v2599 = vunpack.c.h.b16 %v1034
        %v2600 = vunpack.c.l.b16 %v1035
        %v2601 = vunpack.c.h.b16 %v1035
        %v2602 = vunpack.c.l.b16 %v1036
        %v2603 = vunpack.c.h.b16 %v1036
        %v2604 = vunpack.c.l.b16 %v1037
        %v2605 = vunpack.c.h.b16 %v1037
        %v2606 = vunpack.c.l.b16 %v1038
        %v2607 = vunpack.c.h.b16 %v1038
        %v2608 = vunpack.c.l.b16 %v1039
        %v2609 = vunpack.c.h.b16 %v1039
        %v2610 = vunpack.c.l.b16 %v1040
        %v2611 = vunpack.c.h.b16 %v1040
        %v2612 = vunpack.c.l.b16 %v1041
        %v2613 = vunpack.c.h.b16 %v1041
        %v2614 = vunpack.c.l.b16 %v1042
        %v2615 = vunpack.c.h.b16 %v1042
        %v2616 = vunpack.c.l.b16 %v1043
        %v2617 = vunpack.c.h.b16 %v1043
        %v2618 = vunpack.c.l.b16 %v1044
        %v2619 = vunpack.c.h.b16 %v1044
        %v2620 = vunpack.c.l.b16 %v1045
        %v2621 = vunpack.c.h.b16 %v1045
        %v2622 = vpack.c.b16 %v1606, %v1598
        %v2623 = vpack.c.b16 %v1607, %v1599
        %v2624 = vpack.c.b16 %v1608, %v1600
        %v2625 = vpack.c.b16 %v1609, %v1601
        %v2626 = vpack.c.b16 %v1610, %v1602
        %v2627 = vpack.c.b16 %v1611, %v1603
        %v2628 = vpack.c.b16 %v1612, %v1604
        %v2629 = vpack.c.b16 %v1613, %v1605
        %v2630 = vpack.c.b16 %v1622, %v1614
        %v2631 = vpack.c.b16 %v1623, %v1615
        %v2632 = vpack.c.b16 %v1624, %v1616
        %v2633 = vpack.c.b16 %v1625, %v1617
        %v2634 = vpack.c.b16 %v1626, %v1618
        %v2635 = vpack.c.b16 %v1627, %v1619
        %v2636 = vpack.c.b16 %v1628, %v1620
        %v2637 = vpack.c.b16 %v1629, %v1621
        %v2638 = vpack.c.b16 %v1638, %v1630
        %v2639 = vpack.c.b16 %v1639, %v1631
        %v2640 = vpack.c.b16 %v1640, %v1632
        %v2641 = vpack.c.b16 %v1641, %v1633
        %v2642 = vpack.c.b16 %v1642, %v1634
        %v2643 = vpack.c.b16 %v1643, %v1635
        %v2644 = vpack.c.b16 %v1644, %v1636
        %v2645 = vpack.c.b16 %v1645, %v1637
        %v2646 = vpack.c.b16 %v1654, %v1646
        %v2647 = vpack.c.b16 %v1655, %v1647
        %v2648 = vpack.c.b16 %v1656, %v1648
        %v2649 = vpack.c.b16 %v1657, %v1649
        %v2650 = vpack.c.b16 %v1658, %v1650
        %v2651 = vpack.c.b16 %v1659, %v1651
        %v2652 = vpack.c.b16 %v1660, %v1652
        %v2653 = vpack.c.b16 %v1661, %v1653
        %v2654 = vpack.c.b16 %v1670, %v1662
        %v2655 = vpack.c.b16 %v1671, %v1663
        %v2656 = vpack.c.b16 %v1672, %v1664
        %v2657 = vpack.c.b16 %v1673, %v1665
        %v2658 = vpack.c.b16 %v1674, %v1666
        %v2659 = vpack.c.b16 %v1675, %v1667
        %v2660 = vpack.c.b16 %v1676, %v1668
        %v2661 = vpack.c.b16 %v1677, %v1669
        %v2662 = vpack.c.b16 %v1686, %v1678
        %v2663 = vpack.c.b16 %v1687, %v1679
        %v2664 = vpack.c.b16 %v1688, %v1680
        %v2665 = vpack.c.b16 %v1689, %v1681
        %v2666 = vpack.c.b16 %v1690, %v1682
        %v2667 = vpack.c.b16 %v1691, %v1683
        %v2668 = vpack.c.b16 %v1692, %v1684
        %v2669 = vpack.c.b16 %v1693, %v1685
        %v2670 = vpack.c.b16 %v1702, %v1694
        %v2671 = vpack.c.b16 %v1703, %v1695
        %v2672 = vpack.c.b16 %v1704, %v1696
        %v2673 = vpack.c.b16 %v1705, %v1697
        %v2674 = vpack.c.b16 %v1706, %v1698
        %v2675 = vpack.c.b16 %v1707, %v1699
        %v2676 = vpack.c.b16 %v1708, %v1700
        %v2677 = vpack.c.b16 %v1709, %v1701
        %v2678 = vpack.c.b16 %v1718, %v1710
        %v2679 = vpack.c.b16 %v1719, %v1711
        %v2680 = vpack.c.b16 %v1720, %v1712
        %v2681 = vpack.c.b16 %v1721, %v1713
        %v2682 = vpack.c.b16 %v1722, %v1714
        %v2683 = vpack.c.b16 %v1723, %v1715
        %v2684 = vpack.c.b16 %v1724, %v1716
        %v2685 = vpack.c.b16 %v1725, %v1717
        %v2686 = vpack.c.b16 %v1734, %v1726
        %v2687 = vpack.c.b16 %v1735, %v1727
        %v2688 = vpack.c.b16 %v1736, %v1728
        %v2689 = vpack.c.b16 %v1737, %v1729
        %v2690 = vpack.c.b16 %v1738, %v1730
        %v2691 = vpack.c.b16 %v1739, %v1731
        %v2692 = vpack.c.b16 %v1740, %v1732
        %v2693 = vpack.c.b16 %v1741, %v1733
        %v2694 = vpack.c.b16 %v1750, %v1742
        %v2695 = vpack.c.b16 %v1751, %v1743
        %v2696 = vpack.c.b16 %v1752, %v1744
        %v2697 = vpack.c.b16 %v1753, %v1745
        %v2698 = vpack.c.b16 %v1754, %v1746
        %v2699 = vpack.c.b16 %v1755, %v1747
        %v2700 = vpack.c.b16 %v1756, %v1748
        %v2701 = vpack.c.b16 %v1757, %v1749
        %v2702 = vpack.c.b16 %v1766, %v1758
        %v2703 = vpack.c.b16 %v1767, %v1759
        %v2704 = vpack.c.b16 %v1768, %v1760
        %v2705 = vpack.c.b16 %v1769, %v1761
        %v2706 = vpack.c.b16 %v1770, %v1762
        %v2707 = vpack.c.b16 %v1771, %v1763
        %v2708 = vpack.c.b16 %v1772, %v1764
        %v2709 = vpack.c.b16 %v1773, %v1765
        %v2710 = vpack.c.b16 %v1782, %v1774
        %v2711 = vpack.c.b16 %v1783, %v1775
        %v2712 = vpack.c.b16 %v1784, %v1776
        %v2713 = vpack.c.b16 %v1785, %v1777
        %v2714 = vpack.c.b16 %v1786, %v1778
        %v2715 = vpack.c.b16 %v1787, %v1779
        %v2716 = vpack.c.b16 %v1788, %v1780
        %v2717 = vpack.c.b16 %v1789, %v1781
        %v2718 = vpack.c.b16 %v1798, %v1790
        %v2719 = vpack.c.b16 %v1799, %v1791
        %v2720 = vpack.c.b16 %v1800, %v1792
        %v2721 = vpack.c.b16 %v1801, %v1793
        %v2722 = vpack.c.b16 %v1802, %v1794
        %v2723 = vpack.c.b16 %v1803, %v1795
        %v2724 = vpack.c.b16 %v1804, %v1796
        %v2725 = vpack.c.b16 %v1805, %v1797
        %v2726 = vpack.c.b16 %v1814, %v1806
        %v2727 = vpack.c.b16 %v1815, %v1807
        %v2728 = vpack.c.b16 %v1816, %v1808
        %v2729 = vpack.c.b16 %v1817, %v1809
        %v2730 = vpack.c.b16 %v1818, %v1810
        %v2731 = vpack.c.b16 %v1819, %v1811
        %v2732 = vpack.c.b16 %v1820, %v1812
        %v2733 = vpack.c.b16 %v1821, %v1813
        %v2734 = vpack.c.b16 %v1830, %v1822
        %v2735 = vpack.c.b16 %v1831, %v1823
        %v2736 = vpack.c.b16 %v1832, %v1824
        %v2737 = vpack.c.b16 %v1833, %v1825
        %v2738 = vpack.c.b16 %v1834, %v1826
        %v2739 = vpack.c.b16 %v1835, %v1827
        %v2740 = vpack.c.b16 %v1836, %v1828
        %v2741 = vpack.c.b16 %v1837, %v1829
        %v2742 = vpack.c.b16 %v1846, %v1838
        %v2743 = vpack.c.b16 %v1847, %v1839
        %v2744 = vpack.c.b16 %v1848, %v1840
        %v2745 = vpack.c.b16 %v1849, %v1841
        %v2746 = vpack.c.b16 %v1850, %v1842
        %v2747 = vpack.c.b16 %v1851, %v1843
        %v2748 = vpack.c.b16 %v1852, %v1844
        %v2749 = vpack.c.b16 %v1853, %v1845
        %v2750 = vpack.c.b16 %v1862, %v1854
        %v2751 = vpack.c.b16 %v1863, %v1855
        %v2752 = vpack.c.b16 %v1864, %v1856
        %v2753 = vpack.c.b16 %v1865, %v1857
        %v2754 = vpack.c.b16 %v1866, %v1858
        %v2755 = vpack.c.b16 %v1867, %v1859
        %v2756 = vpack.c.b16 %v1868, %v1860
        %v2757 = vpack.c.b16 %v1869, %v1861
        %v2758 = vpack.c.b16 %v1878, %v1870
        %v2759 = vpack.c.b16 %v1879, %v1871
        %v2760 = vpack.c.b16 %v1880, %v1872
        %v2761 = vpack.c.b16 %v1881, %v1873
        %v2762 = vpack.c.b16 %v1882, %v1874
        %v2763 = vpack.c.b16 %v1883, %v1875
        %v2764 = vpack.c.b16 %v1884, %v1876
        %v2765 = vpack.c.b16 %v1885, %v1877
        %v2766 = vpack.c.b16 %v1894, %v1886
        %v2767 = vpack.c.b16 %v1895, %v1887
        %v2768 = vpack.c.b16 %v1896, %v1888
        %v2769 = vpack.c.b16 %v1897, %v1889
        %v2770 = vpack.c.b16 %v1898, %v1890
        %v2771 = vpack.c.b16 %v1899, %v1891
        %v2772 = vpack.c.b16 %v1900, %v1892
        %v2773 = vpack.c.b16 %v1901, %v1893
        %v2774 = vpack.c.b16 %v1910, %v1902
        %v2775 = vpack.c.b16 %v1911, %v1903
        %v2776 = vpack.c.b16 %v1912, %v1904
        %v2777 = vpack.c.b16 %v1913, %v1905
        %v2778 = vpack.c.b16 %v1914, %v1906
        %v2779 = vpack.c.b16 %v1915, %v1907
        %v2780 = vpack.c.b16 %v1916, %v1908
        %v2781 = vpack.c.b16 %v1917, %v1909
        %v2782 = vpack.c.b16 %v1926, %v1918
        %v2783 = vpack.c.b16 %v1927, %v1919
        %v2784 = vpack.c.b16 %v1928, %v1920
        %v2785 = vpack.c.b16 %v1929, %v1921
        %v2786 = vpack.c.b16 %v1930, %v1922
        %v2787 = vpack.c.b16 %v1931, %v1923
        %v2788 = vpack.c.b16 %v1932, %v1924
        %v2789 = vpack.c.b16 %v1933, %v1925
        %v2790 = vpack.c.b16 %v1942, %v1934
        %v2791 = vpack.c.b16 %v1943, %v1935
        %v2792 = vpack.c.b16 %v1944, %v1936
        %v2793 = vpack.c.b16 %v1945, %v1937
        %v2794 = vpack.c.b16 %v1946, %v1938
        %v2795 = vpack.c.b16 %v1947, %v1939
        %v2796 = vpack.c.b16 %v1948, %v1940
        %v2797 = vpack.c.b16 %v1949, %v1941
        %v2798 = vpack.c.b16 %v1958, %v1950
        %v2799 = vpack.c.b16 %v1959, %v1951
        %v2800 = vpack.c.b16 %v1960, %v1952
        %v2801 = vpack.c.b16 %v1961, %v1953
        %v2802 = vpack.c.b16 %v1962, %v1954
        %v2803 = vpack.c.b16 %v1963, %v1955
        %v2804 = vpack.c.b16 %v1964, %v1956
        %v2805 = vpack.c.b16 %v1965, %v1957
        %v2806 = vpack.c.b16 %v1974, %v1966
        %v2807 = vpack.c.b16 %v1975, %v1967
        %v2808 = vpack.c.b16 %v1976, %v1968
        %v2809 = vpack.c.b16 %v1977, %v1969
        %v2810 = vpack.c.b16 %v1978, %v1970
        %v2811 = vpack.c.b16 %v1979, %v1971
        %v2812 = vpack.c.b16 %v1980, %v1972
        %v2813 = vpack.c.b16 %v1981, %v1973
        %v2814 = vpack.c.b16 %v1990, %v1982
        %v2815 = vpack.c.b16 %v1991, %v1983
        %v2816 = vpack.c.b16 %v1992, %v1984
        %v2817 = vpack.c.b16 %v1993, %v1985
        %v2818 = vpack.c.b16 %v1994, %v1986
        %v2819 = vpack.c.b16 %v1995, %v1987
        %v2820 = vpack.c.b16 %v1996, %v1988
        %v2821 = vpack.c.b16 %v1997, %v1989
        %v2822 = vpack.c.b16 %v2006, %v1998
        %v2823 = vpack.c.b16 %v2007, %v1999
        %v2824 = vpack.c.b16 %v2008, %v2000
        %v2825 = vpack.c.b16 %v2009, %v2001
        %v2826 = vpack.c.b16 %v2010, %v2002
        %v2827 = vpack.c.b16 %v2011, %v2003
        %v2828 = vpack.c.b16 %v2012, %v2004
        %v2829 = vpack.c.b16 %v2013, %v2005
        %v2830 = vpack.c.b16 %v2022, %v2014
        %v2831 = vpack.c.b16 %v2023, %v2015
        %v2832 = vpack.c.b16 %v2024, %v2016
        %v2833 = vpack.c.b16 %v2025, %v2017
        %v2834 = vpack.c.b16 %v2026, %v2018
        %v2835 = vpack.c.b16 %v2027, %v2019
        %v2836 = vpack.c.b16 %v2028, %v2020
        %v2837 = vpack.c.b16 %v2029, %v2021
        %v2838 = vpack.c.b16 %v2038, %v2030
        %v2839 = vpack.c.b16 %v2039, %v2031
        %v2840 = vpack.c.b16 %v2040, %v2032
        %v2841 = vpack.c.b16 %v2041, %v2033
        %v2842 = vpack.c.b16 %v2042, %v2034
        %v2843 = vpack.c.b16 %v2043, %v2035
        %v2844 = vpack.c.b16 %v2044, %v2036
        %v2845 = vpack.c.b16 %v2045, %v2037
        %v2846 = vpack.c.b16 %v2054, %v2046
        %v2847 = vpack.c.b16 %v2055, %v2047
        %v2848 = vpack.c.b16 %v2056, %v2048
        %v2849 = vpack.c.b16 %v2057, %v2049
        %v2850 = vpack.c.b16 %v2058, %v2050
        %v2851 = vpack.c.b16 %v2059, %v2051
        %v2852 = vpack.c.b16 %v2060, %v2052
        %v2853 = vpack.c.b16 %v2061, %v2053
        %v2854 = vpack.c.b16 %v2070, %v2062
        %v2855 = vpack.c.b16 %v2071, %v2063
        %v2856 = vpack.c.b16 %v2072, %v2064
        %v2857 = vpack.c.b16 %v2073, %v2065
        %v2858 = vpack.c.b16 %v2074, %v2066
        %v2859 = vpack.c.b16 %v2075, %v2067
        %v2860 = vpack.c.b16 %v2076, %v2068
        %v2861 = vpack.c.b16 %v2077, %v2069
        %v2862 = vpack.c.b16 %v2086, %v2078
        %v2863 = vpack.c.b16 %v2087, %v2079
        %v2864 = vpack.c.b16 %v2088, %v2080
        %v2865 = vpack.c.b16 %v2089, %v2081
        %v2866 = vpack.c.b16 %v2090, %v2082
        %v2867 = vpack.c.b16 %v2091, %v2083
        %v2868 = vpack.c.b16 %v2092, %v2084
        %v2869 = vpack.c.b16 %v2093, %v2085
        %v2870 = vpack.c.b16 %v2102, %v2094
        %v2871 = vpack.c.b16 %v2103, %v2095
        %v2872 = vpack.c.b16 %v2104, %v2096
        %v2873 = vpack.c.b16 %v2105, %v2097
        %v2874 = vpack.c.b16 %v2106, %v2098
        %v2875 = vpack.c.b16 %v2107, %v2099
        %v2876 = vpack.c.b16 %v2108, %v2100
        %v2877 = vpack.c.b16 %v2109, %v2101
        %v2878 = vpack.c.b16 %v2118, %v2110
        %v2879 = vpack.c.b16 %v2119, %v2111
        %v2880 = vpack.c.b16 %v2120, %v2112
        %v2881 = vpack.c.b16 %v2121, %v2113
        %v2882 = vpack.c.b16 %v2122, %v2114
        %v2883 = vpack.c.b16 %v2123, %v2115
        %v2884 = vpack.c.b16 %v2124, %v2116
        %v2885 = vpack.c.b16 %v2125, %v2117
        %v2886 = vpack.c.b16 %v2134, %v2126
        %v2887 = vpack.c.b16 %v2135, %v2127
        %v2888 = vpack.c.b16 %v2136, %v2128
        %v2889 = vpack.c.b16 %v2137, %v2129
        %v2890 = vpack.c.b16 %v2138, %v2130
        %v2891 = vpack.c.b16 %v2139, %v2131
        %v2892 = vpack.c.b16 %v2140, %v2132
        %v2893 = vpack.c.b16 %v2141, %v2133
        %v2894 = vpack.c.b16 %v2150, %v2142
        %v2895 = vpack.c.b16 %v2151, %v2143
        %v2896 = vpack.c.b16 %v2152, %v2144
        %v2897 = vpack.c.b16 %v2153, %v2145
        %v2898 = vpack.c.b16 %v2154, %v2146
        %v2899 = vpack.c.b16 %v2155, %v2147
        %v2900 = vpack.c.b16 %v2156, %v2148
        %v2901 = vpack.c.b16 %v2157, %v2149
        %v2902 = vpack.c.b16 %v2166, %v2158
        %v2903 = vpack.c.b16 %v2167, %v2159
        %v2904 = vpack.c.b16 %v2168, %v2160
        %v2905 = vpack.c.b16 %v2169, %v2161
        %v2906 = vpack.c.b16 %v2170, %v2162
        %v2907 = vpack.c.b16 %v2171, %v2163
        %v2908 = vpack.c.b16 %v2172, %v2164
        %v2909 = vpack.c.b16 %v2173, %v2165
        %v2910 = vpack.c.b16 %v2182, %v2174
        %v2911 = vpack.c.b16 %v2183, %v2175
        %v2912 = vpack.c.b16 %v2184, %v2176
        %v2913 = vpack.c.b16 %v2185, %v2177
        %v2914 = vpack.c.b16 %v2186, %v2178
        %v2915 = vpack.c.b16 %v2187, %v2179
        %v2916 = vpack.c.b16 %v2188, %v2180
        %v2917 = vpack.c.b16 %v2189, %v2181
        %v2918 = vpack.c.b16 %v2198, %v2190
        %v2919 = vpack.c.b16 %v2199, %v2191
        %v2920 = vpack.c.b16 %v2200, %v2192
        %v2921 = vpack.c.b16 %v2201, %v2193
        %v2922 = vpack.c.b16 %v2202, %v2194
        %v2923 = vpack.c.b16 %v2203, %v2195
        %v2924 = vpack.c.b16 %v2204, %v2196
        %v2925 = vpack.c.b16 %v2205, %v2197
        %v2926 = vpack.c.b16 %v2214, %v2206
        %v2927 = vpack.c.b16 %v2215, %v2207
        %v2928 = vpack.c.b16 %v2216, %v2208
        %v2929 = vpack.c.b16 %v2217, %v2209
        %v2930 = vpack.c.b16 %v2218, %v2210
        %v2931 = vpack.c.b16 %v2219, %v2211
        %v2932 = vpack.c.b16 %v2220, %v2212
        %v2933 = vpack.c.b16 %v2221, %v2213
        %v2934 = vpack.c.b16 %v2230, %v2222
        %v2935 = vpack.c.b16 %v2231, %v2223
        %v2936 = vpack.c.b16 %v2232, %v2224
        %v2937 = vpack.c.b16 %v2233, %v2225
        %v2938 = vpack.c.b16 %v2234, %v2226
        %v2939 = vpack.c.b16 %v2235, %v2227
        %v2940 = vpack.c.b16 %v2236, %v2228
        %v2941 = vpack.c.b16 %v2237, %v2229
        %v2942 = vpack.c.b16 %v2246, %v2238
        %v2943 = vpack.c.b16 %v2247, %v2239
        %v2944 = vpack.c.b16 %v2248, %v2240
        %v2945 = vpack.c.b16 %v2249, %v2241
        %v2946 = vpack.c.b16 %v2250, %v2242
        %v2947 = vpack.c.b16 %v2251, %v2243
        %v2948 = vpack.c.b16 %v2252, %v2244
        %v2949 = vpack.c.b16 %v2253, %v2245
        %v2950 = vpack.c.b16 %v2262, %v2254
        %v2951 = vpack.c.b16 %v2263, %v2255
        %v2952 = vpack.c.b16 %v2264, %v2256
        %v2953 = vpack.c.b16 %v2265, %v2257
        %v2954 = vpack.c.b16 %v2266, %v2258
        %v2955 = vpack.c.b16 %v2267, %v2259
        %v2956 = vpack.c.b16 %v2268, %v2260
        %v2957 = vpack.c.b16 %v2269, %v2261
        %v2958 = vpack.c.b16 %v2278, %v2270
        %v2959 = vpack.c.b16 %v2279, %v2271
        %v2960 = vpack.c.b16 %v2280, %v2272
        %v2961 = vpack.c.b16 %v2281, %v2273
        %v2962 = vpack.c.b16 %v2282, %v2274
        %v2963 = vpack.c.b16 %v2283, %v2275
        %v2964 = vpack.c.b16 %v2284, %v2276
        %v2965 = vpack.c.b16 %v2285, %v2277
        %v2966 = vpack.c.b16 %v2294, %v2286
        %v2967 = vpack.c.b16 %v2295, %v2287
        %v2968 = vpack.c.b16 %v2296, %v2288
        %v2969 = vpack.c.b16 %v2297, %v2289
        %v2970 = vpack.c.b16 %v2298, %v2290
        %v2971 = vpack.c.b16 %v2299, %v2291
        %v2972 = vpack.c.b16 %v2300, %v2292
        %v2973 = vpack.c.b16 %v2301, %v2293
        %v2974 = vpack.c.b16 %v2310, %v2302
        %v2975 = vpack.c.b16 %v2311, %v2303
        %v2976 = vpack.c.b16 %v2312, %v2304
        %v2977 = vpack.c.b16 %v2313, %v2305
        %v2978 = vpack.c.b16 %v2314, %v2306
        %v2979 = vpack.c.b16 %v2315, %v2307
        %v2980 = vpack.c.b16 %v2316, %v2308
        %v2981 = vpack.c.b16 %v2317, %v2309
        %v2982 = vpack.c.b16 %v2326, %v2318
        %v2983 = vpack.c.b16 %v2327, %v2319
        %v2984 = vpack.c.b16 %v2328, %v2320
        %v2985 = vpack.c.b16 %v2329, %v2321
        %v2986 = vpack.c.b16 %v2330, %v2322
        %v2987 = vpack.c.b16 %v2331, %v2323
        %v2988 = vpack.c.b16 %v2332, %v2324
        %v2989 = vpack.c.b16 %v2333, %v2325
        %v2990 = vpack.c.b16 %v2342, %v2334
        %v2991 = vpack.c.b16 %v2343, %v2335
        %v2992 = vpack.c.b16 %v2344, %v2336
        %v2993 = vpack.c.b16 %v2345, %v2337
        %v2994 = vpack.c.b16 %v2346, %v2338
        %v2995 = vpack.c.b16 %v2347, %v2339
        %v2996 = vpack.c.b16 %v2348, %v2340
        %v2997 = vpack.c.b16 %v2349, %v2341
        %v2998 = vpack.c.b16 %v2358, %v2350
        %v2999 = vpack.c.b16 %v2359, %v2351
        %v3000 = vpack.c.b16 %v2360, %v2352
        %v3001 = vpack.c.b16 %v2361, %v2353
        %v3002 = vpack.c.b16 %v2362, %v2354
        %v3003 = vpack.c.b16 %v2363, %v2355
        %v3004 = vpack.c.b16 %v2364, %v2356
        %v3005 = vpack.c.b16 %v2365, %v2357
        %v3006 = vpack.c.b16 %v2374, %v2366
        %v3007 = vpack.c.b16 %v2375, %v2367
        %v3008 = vpack.c.b16 %v2376, %v2368
        %v3009 = vpack.c.b16 %v2377, %v2369
        %v3010 = vpack.c.b16 %v2378, %v2370
        %v3011 = vpack.c.b16 %v2379, %v2371
        %v3012 = vpack.c.b16 %v2380, %v2372
        %v3013 = vpack.c.b16 %v2381, %v2373
        %v3014 = vpack.c.b16 %v2390, %v2382
        %v3015 = vpack.c.b16 %v2391, %v2383
        %v3016 = vpack.c.b16 %v2392, %v2384
        %v3017 = vpack.c.b16 %v2393, %v2385
        %v3018 = vpack.c.b16 %v2394, %v2386
        %v3019 = vpack.c.b16 %v2395, %v2387
        %v3020 = vpack.c.b16 %v2396, %v2388
        %v3021 = vpack.c.b16 %v2397, %v2389
        %v3022 = vpack.c.b16 %v2406, %v2398
        %v3023 = vpack.c.b16 %v2407, %v2399
        %v3024 = vpack.c.b16 %v2408, %v2400
        %v3025 = vpack.c.b16 %v2409, %v2401
        %v3026 = vpack.c.b16 %v2410, %v2402
        %v3027 = vpack.c.b16 %v2411, %v2403
        %v3028 = vpack.c.b16 %v2412, %v2404
        %v3029 = vpack.c.b16 %v2413, %v2405
        %v3030 = vpack.c.b16 %v2422, %v2414
        %v3031 = vpack.c.b16 %v2423, %v2415
        %v3032 = vpack.c.b16 %v2424, %v2416
        %v3033 = vpack.c.b16 %v2425, %v2417
        %v3034 = vpack.c.b16 %v2426, %v2418
        %v3035 = vpack.c.b16 %v2427, %v2419
        %v3036 = vpack.c.b16 %v2428, %v2420
        %v3037 = vpack.c.b16 %v2429, %v2421
        %v3038 = vpack.c.b16 %v2438, %v2430
        %v3039 = vpack.c.b16 %v2439, %v2431
        %v3040 = vpack.c.b16 %v2440, %v2432
        %v3041 = vpack.c.b16 %v2441, %v2433
        %v3042 = vpack.c.b16 %v2442, %v2434
        %v3043 = vpack.c.b16 %v2443, %v2435
        %v3044 = vpack.c.b16 %v2444, %v2436
        %v3045 = vpack.c.b16 %v2445, %v2437
        %v3046 = vpack.c.b16 %v2454, %v2446
        %v3047 = vpack.c.b16 %v2455, %v2447
        %v3048 = vpack.c.b16 %v2456, %v2448
        %v3049 = vpack.c.b16 %v2457, %v2449
        %v3050 = vpack.c.b16 %v2458, %v2450
        %v3051 = vpack.c.b16 %v2459, %v2451
        %v3052 = vpack.c.b16 %v2460, %v2452
        %v3053 = vpack.c.b16 %v2461, %v2453
        %v3054 = vpack.c.b16 %v2470, %v2462
        %v3055 = vpack.c.b16 %v2471, %v2463
        %v3056 = vpack.c.b16 %v2472, %v2464
        %v3057 = vpack.c.b16 %v2473, %v2465
        %v3058 = vpack.c.b16 %v2474, %v2466
        %v3059 = vpack.c.b16 %v2475, %v2467
        %v3060 = vpack.c.b16 %v2476, %v2468
        %v3061 = vpack.c.b16 %v2477, %v2469
        %v3062 = vpack.c.b16 %v2486, %v2478
        %v3063 = vpack.c.b16 %v2487, %v2479
        %v3064 = vpack.c.b16 %v2488, %v2480
        %v3065 = vpack.c.b16 %v2489, %v2481
        %v3066 = vpack.c.b16 %v2490, %v2482
        %v3067 = vpack.c.b16 %v2491, %v2483
        %v3068 = vpack.c.b16 %v2492, %v2484
        %v3069 = vpack.c.b16 %v2493, %v2485
        %v3070 = vpack.c.b16 %v2502, %v2494
        %v3071 = vpack.c.b16 %v2503, %v2495
        %v3072 = vpack.c.b16 %v2504, %v2496
        %v3073 = vpack.c.b16 %v2505, %v2497
        %v3074 = vpack.c.b16 %v2506, %v2498
        %v3075 = vpack.c.b16 %v2507, %v2499
        %v3076 = vpack.c.b16 %v2508, %v2500
        %v3077 = vpack.c.b16 %v2509, %v2501
        %v3078 = vpack.c.b16 %v2518, %v2510
        %v3079 = vpack.c.b16 %v2519, %v2511
        %v3080 = vpack.c.b16 %v2520, %v2512
        %v3081 = vpack.c.b16 %v2521, %v2513
        %v3082 = vpack.c.b16 %v2522, %v2514
        %v3083 = vpack.c.b16 %v2523, %v2515
        %v3084 = vpack.c.b16 %v2524, %v2516
        %v3085 = vpack.c.b16 %v2525, %v2517
        %v3086 = vpack.c.b16 %v2534, %v2526
        %v3087 = vpack.c.b16 %v2535, %v2527
        %v3088 = vpack.c.b16 %v2536, %v2528
        %v3089 = vpack.c.b16 %v2537, %v2529
        %v3090 = vpack.c.b16 %v2538, %v2530
        %v3091 = vpack.c.b16 %v2539, %v2531
        %v3092 = vpack.c.b16 %v2540, %v2532
        %v3093 = vpack.c.b16 %v2541, %v2533
        %v3094 = vpack.c.b16 %v2550, %v2542
        %v3095 = vpack.c.b16 %v2551, %v2543
        %v3096 = vpack.c.b16 %v2552, %v2544
        %v3097 = vpack.c.b16 %v2553, %v2545
        %v3098 = vpack.c.b16 %v2554, %v2546
        %v3099 = vpack.c.b16 %v2555, %v2547
        %v3100 = vpack.c.b16 %v2556, %v2548
        %v3101 = vpack.c.b16 %v2557, %v2549
        %v3102 = vpack.c.b16 %v2566, %v2558
        %v3103 = vpack.c.b16 %v2567, %v2559
        %v3104 = vpack.c.b16 %v2568, %v2560
        %v3105 = vpack.c.b16 %v2569, %v2561
        %v3106 = vpack.c.b16 %v2570, %v2562
        %v3107 = vpack.c.b16 %v2571, %v2563
        %v3108 = vpack.c.b16 %v2572, %v2564
        %v3109 = vpack.c.b16 %v2573, %v2565
        %v3110 = vpack.c.b16 %v2582, %v2574
        %v3111 = vpack.c.b16 %v2583, %v2575
        %v3112 = vpack.c.b16 %v2584, %v2576
        %v3113 = vpack.c.b16 %v2585, %v2577
        %v3114 = vpack.c.b16 %v2586, %v2578
        %v3115 = vpack.c.b16 %v2587, %v2579
        %v3116 = vpack.c.b16 %v2588, %v2580
        %v3117 = vpack.c.b16 %v2589, %v2581
        %v3118 = vpack.c.b16 %v2598, %v2590
        %v3119 = vpack.c.b16 %v2599, %v2591
        %v3120 = vpack.c.b16 %v2600, %v2592
        %v3121 = vpack.c.b16 %v2601, %v2593
        %v3122 = vpack.c.b16 %v2602, %v2594
        %v3123 = vpack.c.b16 %v2603, %v2595
        %v3124 = vpack.c.b16 %v2604, %v2596
        %v3125 = vpack.c.b16 %v2605, %v2597
        %v3126 = vpack.c.b16 %v2614, %v2606
        %v3127 = vpack.c.b16 %v2615, %v2607
        %v3128 = vpack.c.b16 %v2616, %v2608
        %v3129 = vpack.c.b16 %v2617, %v2609
        %v3130 = vpack.c.b16 %v2618, %v2610
        %v3131 = vpack.c.b16 %v2619, %v2611
        %v3132 = vpack.c.b16 %v2620, %v2612
        %v3133 = vpack.c.b16 %v2621, %v2613
        %3646 = vmatprep.subr.bf16.mxu0 %v2623
        %3647 = vmatpush1.bf16.msra.mxu0 %v2622
        %3648 = vmatprep.subr.bf16.mxu0 %v2631
        %3649 = vmatpush1.bf16.msra.mxu0 %v2630
        %3650 = vmatprep.subr.bf16.mxu0 %v2639
        %3651 = vmatpush1.bf16.msra.mxu0 %v2638
        %3652 = vmatprep.subr.bf16.mxu0 %v2647
        %3653 = vmatpush1.bf16.msra.mxu0 %v2646
        %3654 = vmatprep.subr.bf16.mxu0 %v2655
        %3655 = vmatpush1.bf16.msra.mxu0 %v2654
        %3656 = vmatprep.subr.bf16.mxu0 %v2663
        %3657 = vmatpush1.bf16.msra.mxu0 %v2662
        %3658 = vmatprep.subr.bf16.mxu0 %v2671
        %3659 = vmatpush1.bf16.msra.mxu0 %v2670
        %3660 = vmatprep.subr.bf16.mxu0 %v2679
        %3661 = vmatpush1.bf16.msra.mxu0 %v2678
        %3662 = vmatprep.subr.bf16.mxu0 %v2687
        %3663 = vmatpush1.bf16.msra.mxu0 %v2686
        %3664 = vmatprep.subr.bf16.mxu0 %v2695
        %3665 = vmatpush1.bf16.msra.mxu0 %v2694
        %3666 = vmatprep.subr.bf16.mxu0 %v2703
        %3667 = vmatpush1.bf16.msra.mxu0 %v2702
        %3668 = vmatprep.subr.bf16.mxu0 %v2711
        %3669 = vmatpush1.bf16.msra.mxu0 %v2710
        %3670 = vmatprep.subr.bf16.mxu0 %v2719
        %3671 = vmatpush1.bf16.msra.mxu0 %v2718
        %3672 = vmatprep.subr.bf16.mxu0 %v2727
        %3673 = vmatpush1.bf16.msra.mxu0 %v2726
        %3674 = vmatprep.subr.bf16.mxu0 %v2735
        %3675 = vmatpush1.bf16.msra.mxu0 %v2734
        %3676 = vmatprep.subr.bf16.mxu0 %v2743
        %3677 = vmatpush1.bf16.msra.mxu0 %v2742
        %3678 = vmatprep.mubr.bf16.mxu0 %v1071
        %3679 = vmatmul.mubr.bf16.gmra.mrb[0].mxu0 %v1070
        %v3680 = vpop.f32.mrb[0].mxu0
        %v3681 = vadd.f32 0.0, %v3680
        %v3682 = vpop.f32.mrb[0].mxu0
        %v3683 = vadd.f32 0.0, %v3682
        %v3684 = vpop.f32.mrb[0].mxu0
        %v3685 = vadd.f32 0.0, %v3684
        %v3686 = vpop.f32.mrb[0].mxu0
        %v3687 = vadd.f32 0.0, %v3686
        %3688 = vdwg.mxu0
        %3689 = vmatprep.subr.bf16.mxu0 %v2751
        %3690 = vmatpush1.bf16.msra.mxu0 %v2750
        %3691 = vmatprep.subr.bf16.mxu0 %v2759
        %3692 = vmatpush1.bf16.msra.mxu0 %v2758
        %3693 = vmatprep.subr.bf16.mxu0 %v2767
        %3694 = vmatpush1.bf16.msra.mxu0 %v2766
        %3695 = vmatprep.subr.bf16.mxu0 %v2775
        %3696 = vmatpush1.bf16.msra.mxu0 %v2774
        %3697 = vmatprep.subr.bf16.mxu0 %v2783
        %3698 = vmatpush1.bf16.msra.mxu0 %v2782
        %3699 = vmatprep.subr.bf16.mxu0 %v2791
        %3700 = vmatpush1.bf16.msra.mxu0 %v2790
        %3701 = vmatprep.subr.bf16.mxu0 %v2799
        %3702 = vmatpush1.bf16.msra.mxu0 %v2798
        %3703 = vmatprep.subr.bf16.mxu0 %v2807
        %3704 = vmatpush1.bf16.msra.mxu0 %v2806
        %3705 = vmatprep.subr.bf16.mxu0 %v2815
        %3706 = vmatpush1.bf16.msra.mxu0 %v2814
        %3707 = vmatprep.subr.bf16.mxu0 %v2823
        %3708 = vmatpush1.bf16.msra.mxu0 %v2822
        %3709 = vmatprep.subr.bf16.mxu0 %v2831
        %3710 = vmatpush1.bf16.msra.mxu0 %v2830
        %3711 = vmatprep.subr.bf16.mxu0 %v2839
        %3712 = vmatpush1.bf16.msra.mxu0 %v2838
        %3713 = vmatprep.subr.bf16.mxu0 %v2847
        %3714 = vmatpush1.bf16.msra.mxu0 %v2846
        %3715 = vmatprep.subr.bf16.mxu0 %v2855
        %3716 = vmatpush1.bf16.msra.mxu0 %v2854
        %3717 = vmatprep.subr.bf16.mxu0 %v2863
        %3718 = vmatpush1.bf16.msra.mxu0 %v2862
        %3719 = vmatprep.subr.bf16.mxu0 %v2871
        %3720 = vmatpush1.bf16.msra.mxu0 %v2870
        %3721 = vmatprep.mubr.bf16.mxu0 %v1073
        %3722 = vmatmul.mubr.bf16.gmra.mrb[0].mxu0 %v1072
        %v3723 = vpop.f32.mrb[0].mxu0
        %v3724 = vadd.f32 %v3681, %v3723
        %v3725 = vpop.f32.mrb[0].mxu0
        %v3726 = vadd.f32 %v3683, %v3725
        %v3727 = vpop.f32.mrb[0].mxu0
        %v3728 = vadd.f32 %v3685, %v3727
        %v3729 = vpop.f32.mrb[0].mxu0
        %v3730 = vadd.f32 %v3687, %v3729
        %3731 = vdwg.mxu0
        %3732 = vmatprep.subr.bf16.mxu0 %v2879
        %3733 = vmatpush1.bf16.msra.mxu0 %v2878
        %3734 = vmatprep.subr.bf16.mxu0 %v2887
        %3735 = vmatpush1.bf16.msra.mxu0 %v2886
        %3736 = vmatprep.subr.bf16.mxu0 %v2895
        %3737 = vmatpush1.bf16.msra.mxu0 %v2894
        %3738 = vmatprep.subr.bf16.mxu0 %v2903
        %3739 = vmatpush1.bf16.msra.mxu0 %v2902
        %3740 = vmatprep.subr.bf16.mxu0 %v2911
        %3741 = vmatpush1.bf16.msra.mxu0 %v2910
        %3742 = vmatprep.subr.bf16.mxu0 %v2919
        %3743 = vmatpush1.bf16.msra.mxu0 %v2918
        %3744 = vmatprep.subr.bf16.mxu0 %v2927
        %3745 = vmatpush1.bf16.msra.mxu0 %v2926
        %3746 = vmatprep.subr.bf16.mxu0 %v2935
        %3747 = vmatpush1.bf16.msra.mxu0 %v2934
        %3748 = vmatprep.subr.bf16.mxu0 %v2943
        %3749 = vmatpush1.bf16.msra.mxu0 %v2942
        %3750 = vmatprep.subr.bf16.mxu0 %v2951
        %3751 = vmatpush1.bf16.msra.mxu0 %v2950
        %3752 = vmatprep.subr.bf16.mxu0 %v2959
        %3753 = vmatpush1.bf16.msra.mxu0 %v2958
        %3754 = vmatprep.subr.bf16.mxu0 %v2967
        %3755 = vmatpush1.bf16.msra.mxu0 %v2966
        %3756 = vmatprep.subr.bf16.mxu0 %v2975
        %3757 = vmatpush1.bf16.msra.mxu0 %v2974
        %3758 = vmatprep.subr.bf16.mxu0 %v2983
        %3759 = vmatpush1.bf16.msra.mxu0 %v2982
        %3760 = vmatprep.subr.bf16.mxu0 %v2991
        %3761 = vmatpush1.bf16.msra.mxu0 %v2990
        %3762 = vmatprep.subr.bf16.mxu0 %v2999
        %3763 = vmatpush1.bf16.msra.mxu0 %v2998
        %3764 = vmatprep.mubr.bf16.mxu0 %v1075
        %3765 = vmatmul.mubr.bf16.gmra.mrb[0].mxu0 %v1074
        %v3766 = vpop.f32.mrb[0].mxu0
        %v3767 = vadd.f32 %v3724, %v3766
        %v3768 = vpop.f32.mrb[0].mxu0
        %v3769 = vadd.f32 %v3726, %v3768
        %v3770 = vpop.f32.mrb[0].mxu0
        %v3771 = vadd.f32 %v3728, %v3770
        %v3772 = vpop.f32.mrb[0].mxu0
        %v3773 = vadd.f32 %v3730, %v3772
        %3774 = vdwg.mxu0
        %3775 = vmatprep.subr.bf16.mxu0 %v3007
        %3776 = vmatpush1.bf16.msra.mxu0 %v3006
        %3777 = vmatprep.subr.bf16.mxu0 %v3015
        %3778 = vmatpush1.bf16.msra.mxu0 %v3014
        %3779 = vmatprep.subr.bf16.mxu0 %v3023
        %3780 = vmatpush1.bf16.msra.mxu0 %v3022
        %3781 = vmatprep.subr.bf16.mxu0 %v3031
        %3782 = vmatpush1.bf16.msra.mxu0 %v3030
        %3783 = vmatprep.subr.bf16.mxu0 %v3039
        %3784 = vmatpush1.bf16.msra.mxu0 %v3038
        %3785 = vmatprep.subr.bf16.mxu0 %v3047
        %3786 = vmatpush1.bf16.msra.mxu0 %v3046
        %3787 = vmatprep.subr.bf16.mxu0 %v3055
        %3788 = vmatpush1.bf16.msra.mxu0 %v3054
        %3789 = vmatprep.subr.bf16.mxu0 %v3063
        %3790 = vmatpush1.bf16.msra.mxu0 %v3062
        %3791 = vmatprep.subr.bf16.mxu0 %v3071
        %3792 = vmatpush1.bf16.msra.mxu0 %v3070
        %3793 = vmatprep.subr.bf16.mxu0 %v3079
        %3794 = vmatpush1.bf16.msra.mxu0 %v3078
        %3795 = vmatprep.subr.bf16.mxu0 %v3087
        %3796 = vmatpush1.bf16.msra.mxu0 %v3086
        %3797 = vmatprep.subr.bf16.mxu0 %v3095
        %3798 = vmatpush1.bf16.msra.mxu0 %v3094
        %3799 = vmatprep.subr.bf16.mxu0 %v3103
        %3800 = vmatpush1.bf16.msra.mxu0 %v3102
        %3801 = vmatprep.subr.bf16.mxu0 %v3111
        %3802 = vmatpush1.bf16.msra.mxu0 %v3110
        %3803 = vmatprep.subr.bf16.mxu0 %v3119
        %3804 = vmatpush1.bf16.msra.mxu0 %v3118
        %3805 = vmatprep.subr.bf16.mxu0 %v3127
        %3806 = vmatpush1.bf16.msra.mxu0 %v3126
        %3807 = vmatprep.mubr.bf16.mxu0 %v1077
        %3808 = vmatmul.mubr.bf16.gmra.mrb[0].mxu0 %v1076
        %v3809 = vpop.f32.mrb[0].mxu0
        %v3810 = vadd.f32 %v3767, %v3809
        %v3811 = vpop.f32.mrb[0].mxu0
        %v3812 = vadd.f32 %v3769, %v3811
        %v3813 = vpop.f32.mrb[0].mxu0
        %v3814 = vadd.f32 %v3771, %v3813
        %v3815 = vpop.f32.mrb[0].mxu0
        %v3816 = vadd.f32 %v3773, %v3815
        %3817 = vdwg.mxu0
        %3818 = vmatprep.subr.bf16.mxu0 %v2625
        %3819 = vmatpush1.bf16.msra.mxu0 %v2624
        %3820 = vmatprep.subr.bf16.mxu0 %v2633
        %3821 = vmatpush1.bf16.msra.mxu0 %v2632
        %3822 = vmatprep.subr.bf16.mxu0 %v2641
        %3823 = vmatpush1.bf16.msra.mxu0 %v2640
        %3824 = vmatprep.subr.bf16.mxu0 %v2649
        %3825 = vmatpush1.bf16.msra.mxu0 %v2648
        %3826 = vmatprep.subr.bf16.mxu0 %v2657
        %3827 = vmatpush1.bf16.msra.mxu0 %v2656
        %3828 = vmatprep.subr.bf16.mxu0 %v2665
        %3829 = vmatpush1.bf16.msra.mxu0 %v2664
        %3830 = vmatprep.subr.bf16.mxu0 %v2673
        %3831 = vmatpush1.bf16.msra.mxu0 %v2672
        %3832 = vmatprep.subr.bf16.mxu0 %v2681
        %3833 = vmatpush1.bf16.msra.mxu0 %v2680
        %3834 = vmatprep.subr.bf16.mxu0 %v2689
        %3835 = vmatpush1.bf16.msra.mxu0 %v2688
        %3836 = vmatprep.subr.bf16.mxu0 %v2697
        %3837 = vmatpush1.bf16.msra.mxu0 %v2696
        %3838 = vmatprep.subr.bf16.mxu0 %v2705
        %3839 = vmatpush1.bf16.msra.mxu0 %v2704
        %3840 = vmatprep.subr.bf16.mxu0 %v2713
        %3841 = vmatpush1.bf16.msra.mxu0 %v2712
        %3842 = vmatprep.subr.bf16.mxu0 %v2721
        %3843 = vmatpush1.bf16.msra.mxu0 %v2720
        %3844 = vmatprep.subr.bf16.mxu0 %v2729
        %3845 = vmatpush1.bf16.msra.mxu0 %v2728
        %3846 = vmatprep.subr.bf16.mxu0 %v2737
        %3847 = vmatpush1.bf16.msra.mxu0 %v2736
        %3848 = vmatprep.subr.bf16.mxu0 %v2745
        %3849 = vmatpush1.bf16.msra.mxu0 %v2744
        %3850 = vmatprep.mubr.bf16.mxu0 %v1071
        %3851 = vmatmul.mubr.bf16.gmra.mrb[0].mxu0 %v1070
        %v3852 = vpop.f32.mrb[0].mxu0
        %v3853 = vadd.f32 0.0, %v3852
        %v3854 = vpop.f32.mrb[0].mxu0
        %v3855 = vadd.f32 0.0, %v3854
        %v3856 = vpop.f32.mrb[0].mxu0
        %v3857 = vadd.f32 0.0, %v3856
        %v3858 = vpop.f32.mrb[0].mxu0
        %v3859 = vadd.f32 0.0, %v3858
        %3860 = vdwg.mxu0
        %3861 = vmatprep.subr.bf16.mxu0 %v2753
        %3862 = vmatpush1.bf16.msra.mxu0 %v2752
        %3863 = vmatprep.subr.bf16.mxu0 %v2761
        %3864 = vmatpush1.bf16.msra.mxu0 %v2760
        %3865 = vmatprep.subr.bf16.mxu0 %v2769
        %3866 = vmatpush1.bf16.msra.mxu0 %v2768
        %3867 = vmatprep.subr.bf16.mxu0 %v2777
        %3868 = vmatpush1.bf16.msra.mxu0 %v2776
        %3869 = vmatprep.subr.bf16.mxu0 %v2785
        %3870 = vmatpush1.bf16.msra.mxu0 %v2784
        %3871 = vmatprep.subr.bf16.mxu0 %v2793
        %3872 = vmatpush1.bf16.msra.mxu0 %v2792
        %3873 = vmatprep.subr.bf16.mxu0 %v2801
        %3874 = vmatpush1.bf16.msra.mxu0 %v2800
        %3875 = vmatprep.subr.bf16.mxu0 %v2809
        %3876 = vmatpush1.bf16.msra.mxu0 %v2808
        %3877 = vmatprep.subr.bf16.mxu0 %v2817
        %3878 = vmatpush1.bf16.msra.mxu0 %v2816
        %3879 = vmatprep.subr.bf16.mxu0 %v2825
        %3880 = vmatpush1.bf16.msra.mxu0 %v2824
        %3881 = vmatprep.subr.bf16.mxu0 %v2833
        %3882 = vmatpush1.bf16.msra.mxu0 %v2832
        %3883 = vmatprep.subr.bf16.mxu0 %v2841
        %3884 = vmatpush1.bf16.msra.mxu0 %v2840
        %3885 = vmatprep.subr.bf16.mxu0 %v2849
        %3886 = vmatpush1.bf16.msra.mxu0 %v2848
        %3887 = vmatprep.subr.bf16.mxu0 %v2857
        %3888 = vmatpush1.bf16.msra.mxu0 %v2856
        %3889 = vmatprep.subr.bf16.mxu0 %v2865
        %3890 = vmatpush1.bf16.msra.mxu0 %v2864
        %3891 = vmatprep.subr.bf16.mxu0 %v2873
        %3892 = vmatpush1.bf16.msra.mxu0 %v2872
        %3893 = vmatprep.mubr.bf16.mxu0 %v1073
        %3894 = vmatmul.mubr.bf16.gmra.mrb[0].mxu0 %v1072
        %v3895 = vpop.f32.mrb[0].mxu0
        %v3896 = vadd.f32 %v3853, %v3895
        %v3897 = vpop.f32.mrb[0].mxu0
        %v3898 = vadd.f32 %v3855, %v3897
        %v3899 = vpop.f32.mrb[0].mxu0
        %v3900 = vadd.f32 %v3857, %v3899
        %v3901 = vpop.f32.mrb[0].mxu0
        %v3902 = vadd.f32 %v3859, %v3901
        %3903 = vdwg.mxu0
        %3904 = vmatprep.subr.bf16.mxu0 %v2881
        %3905 = vmatpush1.bf16.msra.mxu0 %v2880
        %3906 = vmatprep.subr.bf16.mxu0 %v2889
        %3907 = vmatpush1.bf16.msra.mxu0 %v2888
        %3908 = vmatprep.subr.bf16.mxu0 %v2897
        %3909 = vmatpush1.bf16.msra.mxu0 %v2896
        %3910 = vmatprep.subr.bf16.mxu0 %v2905
        %3911 = vmatpush1.bf16.msra.mxu0 %v2904
        %3912 = vmatprep.subr.bf16.mxu0 %v2913
        %3913 = vmatpush1.bf16.msra.mxu0 %v2912
        %3914 = vmatprep.subr.bf16.mxu0 %v2921
        %3915 = vmatpush1.bf16.msra.mxu0 %v2920
        %3916 = vmatprep.subr.bf16.mxu0 %v2929
        %3917 = vmatpush1.bf16.msra.mxu0 %v2928
        %3918 = vmatprep.subr.bf16.mxu0 %v2937
        %3919 = vmatpush1.bf16.msra.mxu0 %v2936
        %3920 = vmatprep.subr.bf16.mxu0 %v2945
        %3921 = vmatpush1.bf16.msra.mxu0 %v2944
        %3922 = vmatprep.subr.bf16.mxu0 %v2953
        %3923 = vmatpush1.bf16.msra.mxu0 %v2952
        %3924 = vmatprep.subr.bf16.mxu0 %v2961
        %3925 = vmatpush1.bf16.msra.mxu0 %v2960
        %3926 = vmatprep.subr.bf16.mxu0 %v2969
        %3927 = vmatpush1.bf16.msra.mxu0 %v2968
        %3928 = vmatprep.subr.bf16.mxu0 %v2977
        %3929 = vmatpush1.bf16.msra.mxu0 %v2976
        %3930 = vmatprep.subr.bf16.mxu0 %v2985
        %3931 = vmatpush1.bf16.msra.mxu0 %v2984
        %3932 = vmatprep.subr.bf16.mxu0 %v2993
        %3933 = vmatpush1.bf16.msra.mxu0 %v2992
        %3934 = vmatprep.subr.bf16.mxu0 %v3001
        %3935 = vmatpush1.bf16.msra.mxu0 %v3000
        %3936 = vmatprep.mubr.bf16.mxu0 %v1075
        %3937 = vmatmul.mubr.bf16.gmra.mrb[0].mxu0 %v1074
        %v3938 = vpop.f32.mrb[0].mxu0
        %v3939 = vadd.f32 %v3896, %v3938
        %v3940 = vpop.f32.mrb[0].mxu0
        %v3941 = vadd.f32 %v3898, %v3940
        %v3942 = vpop.f32.mrb[0].mxu0
        %v3943 = vadd.f32 %v3900, %v3942
        %v3944 = vpop.f32.mrb[0].mxu0
        %v3945 = vadd.f32 %v3902, %v3944
        %3946 = vdwg.mxu0
        %3947 = vmatprep.subr.bf16.mxu0 %v3009
        %3948 = vmatpush1.bf16.msra.mxu0 %v3008
        %3949 = vmatprep.subr.bf16.mxu0 %v3017
        %3950 = vmatpush1.bf16.msra.mxu0 %v3016
        %3951 = vmatprep.subr.bf16.mxu0 %v3025
        %3952 = vmatpush1.bf16.msra.mxu0 %v3024
        %3953 = vmatprep.subr.bf16.mxu0 %v3033
        %3954 = vmatpush1.bf16.msra.mxu0 %v3032
        %3955 = vmatprep.subr.bf16.mxu0 %v3041
        %3956 = vmatpush1.bf16.msra.mxu0 %v3040
        %3957 = vmatprep.subr.bf16.mxu0 %v3049
        %3958 = vmatpush1.bf16.msra.mxu0 %v3048
        %3959 = vmatprep.subr.bf16.mxu0 %v3057
        %3960 = vmatpush1.bf16.msra.mxu0 %v3056
        %3961 = vmatprep.subr.bf16.mxu0 %v3065
        %3962 = vmatpush1.bf16.msra.mxu0 %v3064
        %3963 = vmatprep.subr.bf16.mxu0 %v3073
        %3964 = vmatpush1.bf16.msra.mxu0 %v3072
        %3965 = vmatprep.subr.bf16.mxu0 %v3081
        %3966 = vmatpush1.bf16.msra.mxu0 %v3080
        %3967 = vmatprep.subr.bf16.mxu0 %v3089
        %3968 = vmatpush1.bf16.msra.mxu0 %v3088
        %3969 = vmatprep.subr.bf16.mxu0 %v3097
        %3970 = vmatpush1.bf16.msra.mxu0 %v3096
        %3971 = vmatprep.subr.bf16.mxu0 %v3105
        %3972 = vmatpush1.bf16.msra.mxu0 %v3104
        %3973 = vmatprep.subr.bf16.mxu0 %v3113
        %3974 = vmatpush1.bf16.msra.mxu0 %v3112
        %3975 = vmatprep.subr.bf16.mxu0 %v3121
        %3976 = vmatpush1.bf16.msra.mxu0 %v3120
        %3977 = vmatprep.subr.bf16.mxu0 %v3129
        %3978 = vmatpush1.bf16.msra.mxu0 %v3128
        %3979 = vmatprep.mubr.bf16.mxu0 %v1077
        %3980 = vmatmul.mubr.bf16.gmra.mrb[0].mxu0 %v1076
        %v3981 = vpop.f32.mrb[0].mxu0
        %v3982 = vadd.f32 %v3939, %v3981
        %v3983 = vpop.f32.mrb[0].mxu0
        %v3984 = vadd.f32 %v3941, %v3983
        %v3985 = vpop.f32.mrb[0].mxu0
        %v3986 = vadd.f32 %v3943, %v3985
        %v3987 = vpop.f32.mrb[0].mxu0
        %v3988 = vadd.f32 %v3945, %v3987
        %3989 = vdwg.mxu0
        %3990 = vmatprep.subr.bf16.mxu0 %v2627
        %3991 = vmatpush1.bf16.msra.mxu0 %v2626
        %3992 = vmatprep.subr.bf16.mxu0 %v2635
        %3993 = vmatpush1.bf16.msra.mxu0 %v2634
        %3994 = vmatprep.subr.bf16.mxu0 %v2643
        %3995 = vmatpush1.bf16.msra.mxu0 %v2642
        %3996 = vmatprep.subr.bf16.mxu0 %v2651
        %3997 = vmatpush1.bf16.msra.mxu0 %v2650
        %3998 = vmatprep.subr.bf16.mxu0 %v2659
        %3999 = vmatpush1.bf16.msra.mxu0 %v2658
        %4000 = vmatprep.subr.bf16.mxu0 %v2667
        %4001 = vmatpush1.bf16.msra.mxu0 %v2666
        %4002 = vmatprep.subr.bf16.mxu0 %v2675
        %4003 = vmatpush1.bf16.msra.mxu0 %v2674
        %4004 = vmatprep.subr.bf16.mxu0 %v2683
        %4005 = vmatpush1.bf16.msra.mxu0 %v2682
        %4006 = vmatprep.subr.bf16.mxu0 %v2691
        %4007 = vmatpush1.bf16.msra.mxu0 %v2690
        %4008 = vmatprep.subr.bf16.mxu0 %v2699
        %4009 = vmatpush1.bf16.msra.mxu0 %v2698
        %4010 = vmatprep.subr.bf16.mxu0 %v2707
        %4011 = vmatpush1.bf16.msra.mxu0 %v2706
        %4012 = vmatprep.subr.bf16.mxu0 %v2715
        %4013 = vmatpush1.bf16.msra.mxu0 %v2714
        %4014 = vmatprep.subr.bf16.mxu0 %v2723
        %4015 = vmatpush1.bf16.msra.mxu0 %v2722
        %4016 = vmatprep.subr.bf16.mxu0 %v2731
        %4017 = vmatpush1.bf16.msra.mxu0 %v2730
        %4018 = vmatprep.subr.bf16.mxu0 %v2739
        %4019 = vmatpush1.bf16.msra.mxu0 %v2738
        %4020 = vmatprep.subr.bf16.mxu0 %v2747
        %4021 = vmatpush1.bf16.msra.mxu0 %v2746
        %4022 = vmatprep.mubr.bf16.mxu0 %v1071
        %4023 = vmatmul.mubr.bf16.gmra.mrb[0].mxu0 %v1070
        %v4024 = vpop.f32.mrb[0].mxu0
        %v4025 = vadd.f32 0.0, %v4024
        %v4026 = vpop.f32.mrb[0].mxu0
        %v4027 = vadd.f32 0.0, %v4026
        %v4028 = vpop.f32.mrb[0].mxu0
        %v4029 = vadd.f32 0.0, %v4028
        %v4030 = vpop.f32.mrb[0].mxu0
        %v4031 = vadd.f32 0.0, %v4030
        %4032 = vdwg.mxu0
        %4033 = vmatprep.subr.bf16.mxu0 %v2755
        %4034 = vmatpush1.bf16.msra.mxu0 %v2754
        %4035 = vmatprep.subr.bf16.mxu0 %v2763
        %4036 = vmatpush1.bf16.msra.mxu0 %v2762
        %4037 = vmatprep.subr.bf16.mxu0 %v2771
        %4038 = vmatpush1.bf16.msra.mxu0 %v2770
        %4039 = vmatprep.subr.bf16.mxu0 %v2779
        %4040 = vmatpush1.bf16.msra.mxu0 %v2778
        %4041 = vmatprep.subr.bf16.mxu0 %v2787
        %4042 = vmatpush1.bf16.msra.mxu0 %v2786
        %4043 = vmatprep.subr.bf16.mxu0 %v2795
        %4044 = vmatpush1.bf16.msra.mxu0 %v2794
        %4045 = vmatprep.subr.bf16.mxu0 %v2803
        %4046 = vmatpush1.bf16.msra.mxu0 %v2802
        %4047 = vmatprep.subr.bf16.mxu0 %v2811
        %4048 = vmatpush1.bf16.msra.mxu0 %v2810
        %4049 = vmatprep.subr.bf16.mxu0 %v2819
        %4050 = vmatpush1.bf16.msra.mxu0 %v2818
        %4051 = vmatprep.subr.bf16.mxu0 %v2827
        %4052 = vmatpush1.bf16.msra.mxu0 %v2826
        %4053 = vmatprep.subr.bf16.mxu0 %v2835
        %4054 = vmatpush1.bf16.msra.mxu0 %v2834
        %4055 = vmatprep.subr.bf16.mxu0 %v2843
        %4056 = vmatpush1.bf16.msra.mxu0 %v2842
        %4057 = vmatprep.subr.bf16.mxu0 %v2851
        %4058 = vmatpush1.bf16.msra.mxu0 %v2850
        %4059 = vmatprep.subr.bf16.mxu0 %v2859
        %4060 = vmatpush1.bf16.msra.mxu0 %v2858
        %4061 = vmatprep.subr.bf16.mxu0 %v2867
        %4062 = vmatpush1.bf16.msra.mxu0 %v2866
        %4063 = vmatprep.subr.bf16.mxu0 %v2875
        %4064 = vmatpush1.bf16.msra.mxu0 %v2874
        %4065 = vmatprep.mubr.bf16.mxu0 %v1073
        %4066 = vmatmul.mubr.bf16.gmra.mrb[0].mxu0 %v1072
        %v4067 = vpop.f32.mrb[0].mxu0
        %v4068 = vadd.f32 %v4025, %v4067
        %v4069 = vpop.f32.mrb[0].mxu0
        %v4070 = vadd.f32 %v4027, %v4069
        %v4071 = vpop.f32.mrb[0].mxu0
        %v4072 = vadd.f32 %v4029, %v4071
        %v4073 = vpop.f32.mrb[0].mxu0
        %v4074 = vadd.f32 %v4031, %v4073
        %4075 = vdwg.mxu0
        %4076 = vmatprep.subr.bf16.mxu0 %v2883
        %4077 = vmatpush1.bf16.msra.mxu0 %v2882
        %4078 = vmatprep.subr.bf16.mxu0 %v2891
        %4079 = vmatpush1.bf16.msra.mxu0 %v2890
        %4080 = vmatprep.subr.bf16.mxu0 %v2899
        %4081 = vmatpush1.bf16.msra.mxu0 %v2898
        %4082 = vmatprep.subr.bf16.mxu0 %v2907
        %4083 = vmatpush1.bf16.msra.mxu0 %v2906
        %4084 = vmatprep.subr.bf16.mxu0 %v2915
        %4085 = vmatpush1.bf16.msra.mxu0 %v2914
        %4086 = vmatprep.subr.bf16.mxu0 %v2923
        %4087 = vmatpush1.bf16.msra.mxu0 %v2922
        %4088 = vmatprep.subr.bf16.mxu0 %v2931
        %4089 = vmatpush1.bf16.msra.mxu0 %v2930
        %4090 = vmatprep.subr.bf16.mxu0 %v2939
        %4091 = vmatpush1.bf16.msra.mxu0 %v2938
        %4092 = vmatprep.subr.bf16.mxu0 %v2947
        %4093 = vmatpush1.bf16.msra.mxu0 %v2946
        %4094 = vmatprep.subr.bf16.mxu0 %v2955
        %4095 = vmatpush1.bf16.msra.mxu0 %v2954
        %4096 = vmatprep.subr.bf16.mxu0 %v2963
        %4097 = vmatpush1.bf16.msra.mxu0 %v2962
        %4098 = vmatprep.subr.bf16.mxu0 %v2971
        %4099 = vmatpush1.bf16.msra.mxu0 %v2970
        %4100 = vmatprep.subr.bf16.mxu0 %v2979
        %4101 = vmatpush1.bf16.msra.mxu0 %v2978
        %4102 = vmatprep.subr.bf16.mxu0 %v2987
        %4103 = vmatpush1.bf16.msra.mxu0 %v2986
        %4104 = vmatprep.subr.bf16.mxu0 %v2995
        %4105 = vmatpush1.bf16.msra.mxu0 %v2994
        %4106 = vmatprep.subr.bf16.mxu0 %v3003
        %4107 = vmatpush1.bf16.msra.mxu0 %v3002
        %4108 = vmatprep.mubr.bf16.mxu0 %v1075
        %4109 = vmatmul.mubr.bf16.gmra.mrb[0].mxu0 %v1074
        %v4110 = vpop.f32.mrb[0].mxu0
        %v4111 = vadd.f32 %v4068, %v4110
        %v4112 = vpop.f32.mrb[0].mxu0
        %v4113 = vadd.f32 %v4070, %v4112
        %v4114 = vpop.f32.mrb[0].mxu0
        %v4115 = vadd.f32 %v4072, %v4114
        %v4116 = vpop.f32.mrb[0].mxu0
        %v4117 = vadd.f32 %v4074, %v4116
        %4118 = vdwg.mxu0
        %4119 = vmatprep.subr.bf16.mxu0 %v3011
        %4120 = vmatpush1.bf16.msra.mxu0 %v3010
        %4121 = vmatprep.subr.bf16.mxu0 %v3019
        %4122 = vmatpush1.bf16.msra.mxu0 %v3018
        %4123 = vmatprep.subr.bf16.mxu0 %v3027
        %4124 = vmatpush1.bf16.msra.mxu0 %v3026
        %4125 = vmatprep.subr.bf16.mxu0 %v3035
        %4126 = vmatpush1.bf16.msra.mxu0 %v3034
        %4127 = vmatprep.subr.bf16.mxu0 %v3043
        %4128 = vmatpush1.bf16.msra.mxu0 %v3042
        %4129 = vmatprep.subr.bf16.mxu0 %v3051
        %4130 = vmatpush1.bf16.msra.mxu0 %v3050
        %4131 = vmatprep.subr.bf16.mxu0 %v3059
        %4132 = vmatpush1.bf16.msra.mxu0 %v3058
        %4133 = vmatprep.subr.bf16.mxu0 %v3067
        %4134 = vmatpush1.bf16.msra.mxu0 %v3066
        %4135 = vmatprep.subr.bf16.mxu0 %v3075
        %4136 = vmatpush1.bf16.msra.mxu0 %v3074
        %4137 = vmatprep.subr.bf16.mxu0 %v3083
        %4138 = vmatpush1.bf16.msra.mxu0 %v3082
        %4139 = vmatprep.subr.bf16.mxu0 %v3091
        %4140 = vmatpush1.bf16.msra.mxu0 %v3090
        %4141 = vmatprep.subr.bf16.mxu0 %v3099
        %4142 = vmatpush1.bf16.msra.mxu0 %v3098
        %4143 = vmatprep.subr.bf16.mxu0 %v3107
        %4144 = vmatpush1.bf16.msra.mxu0 %v3106
        %4145 = vmatprep.subr.bf16.mxu0 %v3115
        %4146 = vmatpush1.bf16.msra.mxu0 %v3114
        %4147 = vmatprep.subr.bf16.mxu0 %v3123
        %4148 = vmatpush1.bf16.msra.mxu0 %v3122
        %4149 = vmatprep.subr.bf16.mxu0 %v3131
        %4150 = vmatpush1.bf16.msra.mxu0 %v3130
        %4151 = vmatprep.mubr.bf16.mxu0 %v1077
        %4152 = vmatmul.mubr.bf16.gmra.mrb[0].mxu0 %v1076
        %v4153 = vpop.f32.mrb[0].mxu0
        %v4154 = vadd.f32 %v4111, %v4153
        %v4155 = vpop.f32.mrb[0].mxu0
        %v4156 = vadd.f32 %v4113, %v4155
        %v4157 = vpop.f32.mrb[0].mxu0
        %v4158 = vadd.f32 %v4115, %v4157
        %v4159 = vpop.f32.mrb[0].mxu0
        %v4160 = vadd.f32 %v4117, %v4159
        %4161 = vdwg.mxu0
        %4162 = vmatprep.subr.bf16.mxu0 %v2629
        %4163 = vmatpush1.bf16.msra.mxu0 %v2628
        %4164 = vmatprep.subr.bf16.mxu0 %v2637
        %4165 = vmatpush1.bf16.msra.mxu0 %v2636
        %4166 = vmatprep.subr.bf16.mxu0 %v2645
        %4167 = vmatpush1.bf16.msra.mxu0 %v2644
        %4168 = vmatprep.subr.bf16.mxu0 %v2653
        %4169 = vmatpush1.bf16.msra.mxu0 %v2652
        %4170 = vmatprep.subr.bf16.mxu0 %v2661
        %4171 = vmatpush1.bf16.msra.mxu0 %v2660
        %4172 = vmatprep.subr.bf16.mxu0 %v2669
        %4173 = vmatpush1.bf16.msra.mxu0 %v2668
        %4174 = vmatprep.subr.bf16.mxu0 %v2677
        %4175 = vmatpush1.bf16.msra.mxu0 %v2676
        %4176 = vmatprep.subr.bf16.mxu0 %v2685
        %4177 = vmatpush1.bf16.msra.mxu0 %v2684
        %4178 = vmatprep.subr.bf16.mxu0 %v2693
        %4179 = vmatpush1.bf16.msra.mxu0 %v2692
        %4180 = vmatprep.subr.bf16.mxu0 %v2701
        %4181 = vmatpush1.bf16.msra.mxu0 %v2700
        %4182 = vmatprep.subr.bf16.mxu0 %v2709
        %4183 = vmatpush1.bf16.msra.mxu0 %v2708
        %4184 = vmatprep.subr.bf16.mxu0 %v2717
        %4185 = vmatpush1.bf16.msra.mxu0 %v2716
        %4186 = vmatprep.subr.bf16.mxu0 %v2725
        %4187 = vmatpush1.bf16.msra.mxu0 %v2724
        %4188 = vmatprep.subr.bf16.mxu0 %v2733
        %4189 = vmatpush1.bf16.msra.mxu0 %v2732
        %4190 = vmatprep.subr.bf16.mxu0 %v2741
        %4191 = vmatpush1.bf16.msra.mxu0 %v2740
        %4192 = vmatprep.subr.bf16.mxu0 %v2749
        %4193 = vmatpush1.bf16.msra.mxu0 %v2748
        %4194 = vmatprep.mubr.bf16.mxu0 %v1071
        %4195 = vmatmul.mubr.bf16.gmra.mrb[0].mxu0 %v1070
        %v4196 = vpop.f32.mrb[0].mxu0
        %v4197 = vadd.f32 0.0, %v4196
        %v4198 = vpop.f32.mrb[0].mxu0
        %v4199 = vadd.f32 0.0, %v4198
        %v4200 = vpop.f32.mrb[0].mxu0
        %v4201 = vadd.f32 0.0, %v4200
        %v4202 = vpop.f32.mrb[0].mxu0
        %v4203 = vadd.f32 0.0, %v4202
        %4204 = vdwg.mxu0
        %4205 = vmatprep.subr.bf16.mxu0 %v2757
        %4206 = vmatpush1.bf16.msra.mxu0 %v2756
        %4207 = vmatprep.subr.bf16.mxu0 %v2765
        %4208 = vmatpush1.bf16.msra.mxu0 %v2764
        %4209 = vmatprep.subr.bf16.mxu0 %v2773
        %4210 = vmatpush1.bf16.msra.mxu0 %v2772
        %4211 = vmatprep.subr.bf16.mxu0 %v2781
        %4212 = vmatpush1.bf16.msra.mxu0 %v2780
        %4213 = vmatprep.subr.bf16.mxu0 %v2789
        %4214 = vmatpush1.bf16.msra.mxu0 %v2788
        %4215 = vmatprep.subr.bf16.mxu0 %v2797
        %4216 = vmatpush1.bf16.msra.mxu0 %v2796
        %4217 = vmatprep.subr.bf16.mxu0 %v2805
        %4218 = vmatpush1.bf16.msra.mxu0 %v2804
        %4219 = vmatprep.subr.bf16.mxu0 %v2813
        %4220 = vmatpush1.bf16.msra.mxu0 %v2812
        %4221 = vmatprep.subr.bf16.mxu0 %v2821
        %4222 = vmatpush1.bf16.msra.mxu0 %v2820
        %4223 = vmatprep.subr.bf16.mxu0 %v2829
        %4224 = vmatpush1.bf16.msra.mxu0 %v2828
        %4225 = vmatprep.subr.bf16.mxu0 %v2837
        %4226 = vmatpush1.bf16.msra.mxu0 %v2836
        %4227 = vmatprep.subr.bf16.mxu0 %v2845
        %4228 = vmatpush1.bf16.msra.mxu0 %v2844
        %4229 = vmatprep.subr.bf16.mxu0 %v2853
        %4230 = vmatpush1.bf16.msra.mxu0 %v2852
        %4231 = vmatprep.subr.bf16.mxu0 %v2861
        %4232 = vmatpush1.bf16.msra.mxu0 %v2860
        %4233 = vmatprep.subr.bf16.mxu0 %v2869
        %4234 = vmatpush1.bf16.msra.mxu0 %v2868
        %4235 = vmatprep.subr.bf16.mxu0 %v2877
        %4236 = vmatpush1.bf16.msra.mxu0 %v2876
        %4237 = vmatprep.mubr.bf16.mxu0 %v1073
        %4238 = vmatmul.mubr.bf16.gmra.mrb[0].mxu0 %v1072
        %v4239 = vpop.f32.mrb[0].mxu0
        %v4240 = vadd.f32 %v4197, %v4239
        %v4241 = vpop.f32.mrb[0].mxu0
        %v4242 = vadd.f32 %v4199, %v4241
        %v4243 = vpop.f32.mrb[0].mxu0
        %v4244 = vadd.f32 %v4201, %v4243
        %v4245 = vpop.f32.mrb[0].mxu0
        %v4246 = vadd.f32 %v4203, %v4245
        %4247 = vdwg.mxu0
        %4248 = vmatprep.subr.bf16.mxu0 %v2885
        %4249 = vmatpush1.bf16.msra.mxu0 %v2884
        %4250 = vmatprep.subr.bf16.mxu0 %v2893
        %4251 = vmatpush1.bf16.msra.mxu0 %v2892
        %4252 = vmatprep.subr.bf16.mxu0 %v2901
        %4253 = vmatpush1.bf16.msra.mxu0 %v2900
        %4254 = vmatprep.subr.bf16.mxu0 %v2909
        %4255 = vmatpush1.bf16.msra.mxu0 %v2908
        %4256 = vmatprep.subr.bf16.mxu0 %v2917
        %4257 = vmatpush1.bf16.msra.mxu0 %v2916
        %4258 = vmatprep.subr.bf16.mxu0 %v2925
        %4259 = vmatpush1.bf16.msra.mxu0 %v2924
        %4260 = vmatprep.subr.bf16.mxu0 %v2933
        %4261 = vmatpush1.bf16.msra.mxu0 %v2932
        %4262 = vmatprep.subr.bf16.mxu0 %v2941
        %4263 = vmatpush1.bf16.msra.mxu0 %v2940
        %4264 = vmatprep.subr.bf16.mxu0 %v2949
        %4265 = vmatpush1.bf16.msra.mxu0 %v2948
        %4266 = vmatprep.subr.bf16.mxu0 %v2957
        %4267 = vmatpush1.bf16.msra.mxu0 %v2956
        %4268 = vmatprep.subr.bf16.mxu0 %v2965
        %4269 = vmatpush1.bf16.msra.mxu0 %v2964
        %4270 = vmatprep.subr.bf16.mxu0 %v2973
        %4271 = vmatpush1.bf16.msra.mxu0 %v2972
        %4272 = vmatprep.subr.bf16.mxu0 %v2981
        %4273 = vmatpush1.bf16.msra.mxu0 %v2980
        %4274 = vmatprep.subr.bf16.mxu0 %v2989
        %4275 = vmatpush1.bf16.msra.mxu0 %v2988
        %4276 = vmatprep.subr.bf16.mxu0 %v2997
        %4277 = vmatpush1.bf16.msra.mxu0 %v2996
        %4278 = vmatprep.subr.bf16.mxu0 %v3005
        %4279 = vmatpush1.bf16.msra.mxu0 %v3004
        %4280 = vmatprep.mubr.bf16.mxu0 %v1075
        %4281 = vmatmul.mubr.bf16.gmra.mrb[0].mxu0 %v1074
        %v4282 = vpop.f32.mrb[0].mxu0
        %v4283 = vadd.f32 %v4240, %v4282
        %v4284 = vpop.f32.mrb[0].mxu0
        %v4285 = vadd.f32 %v4242, %v4284
        %v4286 = vpop.f32.mrb[0].mxu0
        %v4287 = vadd.f32 %v4244, %v4286
        %v4288 = vpop.f32.mrb[0].mxu0
        %v4289 = vadd.f32 %v4246, %v4288
        %4290 = vdwg.mxu0
        %4291 = vmatprep.subr.bf16.mxu0 %v3013
        %4292 = vmatpush1.bf16.msra.mxu0 %v3012
        %4293 = vmatprep.subr.bf16.mxu0 %v3021
        %4294 = vmatpush1.bf16.msra.mxu0 %v3020
        %4295 = vmatprep.subr.bf16.mxu0 %v3029
        %4296 = vmatpush1.bf16.msra.mxu0 %v3028
        %4297 = vmatprep.subr.bf16.mxu0 %v3037
        %4298 = vmatpush1.bf16.msra.mxu0 %v3036
        %4299 = vmatprep.subr.bf16.mxu0 %v3045
        %4300 = vmatpush1.bf16.msra.mxu0 %v3044
        %4301 = vmatprep.subr.bf16.mxu0 %v3053
        %4302 = vmatpush1.bf16.msra.mxu0 %v3052
        %4303 = vmatprep.subr.bf16.mxu0 %v3061
        %4304 = vmatpush1.bf16.msra.mxu0 %v3060
        %4305 = vmatprep.subr.bf16.mxu0 %v3069
        %4306 = vmatpush1.bf16.msra.mxu0 %v3068
        %4307 = vmatprep.subr.bf16.mxu0 %v3077
        %4308 = vmatpush1.bf16.msra.mxu0 %v3076
        %4309 = vmatprep.subr.bf16.mxu0 %v3085
        %4310 = vmatpush1.bf16.msra.mxu0 %v3084
        %4311 = vmatprep.subr.bf16.mxu0 %v3093
        %4312 = vmatpush1.bf16.msra.mxu0 %v3092
        %4313 = vmatprep.subr.bf16.mxu0 %v3101
        %4314 = vmatpush1.bf16.msra.mxu0 %v3100
        %4315 = vmatprep.subr.bf16.mxu0 %v3109
        %4316 = vmatpush1.bf16.msra.mxu0 %v3108
        %4317 = vmatprep.subr.bf16.mxu0 %v3117
        %4318 = vmatpush1.bf16.msra.mxu0 %v3116
        %4319 = vmatprep.subr.bf16.mxu0 %v3125
        %4320 = vmatpush1.bf16.msra.mxu0 %v3124
        %4321 = vmatprep.subr.bf16.mxu0 %v3133
        %4322 = vmatpush1.bf16.msra.mxu0 %v3132
        %4323 = vmatprep.mubr.bf16.mxu0 %v1077
        %4324 = vmatmul.mubr.bf16.gmra.mrb[0].mxu0 %v1076
        %v4325 = vpop.f32.mrb[0].mxu0
        %v4326 = vadd.f32 %v4283, %v4325
        %v4327 = vpop.f32.mrb[0].mxu0
        %v4328 = vadd.f32 %v4285, %v4327
        %v4329 = vpop.f32.mrb[0].mxu0
        %v4330 = vadd.f32 %v4287, %v4329
        %v4331 = vpop.f32.mrb[0].mxu0
        %v4332 = vadd.f32 %v4289, %v4331
        %4333 = vdwg.mxu0
        %v4334 = vadd.f32 %v510, %v3810
        %v4335 = vadd.f32 %v511, %v3812
        %v4336 = vadd.f32 %v512, %v3982
        %v4337 = vadd.f32 %v513, %v3984
        %v4338 = vadd.f32 %v514, %v4154
        %v4339 = vadd.f32 %v515, %v4156
        %v4340 = vadd.f32 %v516, %v4326
        %v4341 = vadd.f32 %v517, %v4328
        %v4342 = vadd.f32 %v518, %v3814
        %v4343 = vadd.f32 %v519, %v3816
        %v4344 = vadd.f32 %v520, %v3986
        %v4345 = vadd.f32 %v521, %v3988
        %v4346 = vadd.f32 %v522, %v4158
        %v4347 = vadd.f32 %v523, %v4160
        %v4348 = vadd.f32 %v524, %v4330
        %v4349 = vadd.f32 %v525, %v4332
        %4350 = vst [vmem:[#allocation2] sm:$0xff] %v4334
        %4351 = vst [vmem:[#allocation2 + $0x8] sm:$0xff] %v4335
        %4352 = vst [vmem:[#allocation2 + $0x10] sm:$0xff] %v4336
        %4353 = vst [vmem:[#allocation2 + $0x18] sm:$0xff] %v4337
        %4354 = vst [vmem:[#allocation2 + $0x20] sm:$0xff] %v4338
        %4355 = vst [vmem:[#allocation2 + $0x28] sm:$0xff] %v4339
        %4356 = vst [vmem:[#allocation2 + $0x30] sm:$0xff] %v4340
        %4357 = vst [vmem:[#allocation2 + $0x38] sm:$0xff] %v4341
        %4358 = vst [vmem:[#allocation2 + $0x40] sm:$0xff] %v4342
        %4359 = vst [vmem:[#allocation2 + $0x48] sm:$0xff] %v4343
        %4360 = vst [vmem:[#allocation2 + $0x50] sm:$0xff] %v4344
        %4361 = vst [vmem:[#allocation2 + $0x58] sm:$0xff] %v4345
        %4362 = vst [vmem:[#allocation2 + $0x60] sm:$0xff] %v4346
        %4363 = vst [vmem:[#allocation2 + $0x68] sm:$0xff] %v4347
        %4364 = vst [vmem:[#allocation2 + $0x70] sm:$0xff] %v4348
        %4365 = vst [vmem:[#allocation2 + $0x78] sm:$0xff] %v4349
        %p4366 = scmp.eq.s32.totalorder %s27, 2
        // Predicated region
        $region116: #{fcnet_forward.1} parent=74 // pred_check
          %p4367 = pneg %p4366
        $region117: #{fcnet_forward.1} parent=74 // pred_check_branch
          %4369 = sbr.rel (%p4367) target = $region119
        $region118: #{fcnet_forward.1} parent=74 // pred_region
          %v4370 = vld [vmem:[#allocation2] sm:$0xff]
          %v4371 = vld [vmem:[#allocation2 + $0x8] sm:$0xff]
          %v4372 = vld [vmem:[#allocation2 + $0x10] sm:$0xff]
          %v4373 = vld [vmem:[#allocation2 + $0x18] sm:$0xff]
          %v4374 = vld [vmem:[#allocation2 + $0x20] sm:$0xff]
          %v4375 = vld [vmem:[#allocation2 + $0x28] sm:$0xff]
          %v4376 = vld [vmem:[#allocation2 + $0x30] sm:$0xff]
          %v4377 = vld [vmem:[#allocation2 + $0x38] sm:$0xff]
          %v4378 = vld [vmem:[#allocation2 + $0x40] sm:$0xff]
          %v4379 = vld [vmem:[#allocation2 + $0x48] sm:$0xff]
          %v4380 = vld [vmem:[#allocation2 + $0x50] sm:$0xff]
          %v4381 = vld [vmem:[#allocation2 + $0x58] sm:$0xff]
          %v4382 = vld [vmem:[#allocation2 + $0x60] sm:$0xff]
          %v4383 = vld [vmem:[#allocation2 + $0x68] sm:$0xff]
          %v4384 = vld [vmem:[#allocation2 + $0x70] sm:$0xff]
          %v4385 = vld [vmem:[#allocation2 + $0x78] sm:$0xff]
          %v4386 = vld [vmem:[#allocation6] sm:$0xff]
          %v4388 = vlaneseq
          %v4389 = vshrl.u32 %v4388, 7
          %v4390 = vsub.s32 0, %v4389
          %v4391 = vrot.slane %v4386, %v4390
          %v4392 = vlaneseq
          %v4393 = vshrl.u32 %v4392, 7
          %v4394 = vsub.s32 1, %v4393
          %v4395 = vrot.slane %v4386, %v4394
          %v4396 = vlaneseq
          %v4397 = vshrl.u32 %v4396, 7
          %v4398 = vsub.s32 2, %v4397
          %v4399 = vrot.slane %v4386, %v4398
          %v4400 = vlaneseq
          %v4401 = vshrl.u32 %v4400, 7
          %v4402 = vsub.s32 3, %v4401
          %v4403 = vrot.slane %v4386, %v4402
          %v4404 = vlaneseq
          %v4405 = vshrl.u32 %v4404, 7
          %v4406 = vsub.s32 4, %v4405
          %v4407 = vrot.slane %v4386, %v4406
          %v4408 = vlaneseq
          %v4409 = vshrl.u32 %v4408, 7
          %v4410 = vsub.s32 5, %v4409
          %v4411 = vrot.slane %v4386, %v4410
          %v4412 = vlaneseq
          %v4413 = vshrl.u32 %v4412, 7
          %v4414 = vsub.s32 6, %v4413
          %v4415 = vrot.slane %v4386, %v4414
          %v4416 = vlaneseq
          %v4417 = vshrl.u32 %v4416, 7
          %v4418 = vsub.s32 7, %v4417
          %v4419 = vrot.slane %v4386, %v4418
          %v4428 = vadd.f32 %v4370, %v4391
          %v4429 = vadd.f32 %v4371, %v4395
          %v4430 = vadd.f32 %v4372, %v4399
          %v4431 = vadd.f32 %v4373, %v4403
          %v4432 = vadd.f32 %v4374, %v4407
          %v4433 = vadd.f32 %v4375, %v4411
          %v4434 = vadd.f32 %v4376, %v4415
          %v4435 = vadd.f32 %v4377, %v4419
          %v4436 = vadd.f32 %v4378, %v4391
          %v4437 = vadd.f32 %v4379, %v4395
          %v4438 = vadd.f32 %v4380, %v4399
          %v4439 = vadd.f32 %v4381, %v4403
          %v4440 = vadd.f32 %v4382, %v4407
          %v4441 = vadd.f32 %v4383, %v4411
          %v4442 = vadd.f32 %v4384, %v4415
          %v4443 = vadd.f32 %v4385, %v4419
          %v4444 = vmax.f32 %v4428, 0.0
          %v4445 = vmax.f32 %v4429, 0.0
          %v4446 = vmax.f32 %v4430, 0.0
          %v4447 = vmax.f32 %v4431, 0.0
          %v4448 = vmax.f32 %v4432, 0.0
          %v4449 = vmax.f32 %v4433, 0.0
          %v4450 = vmax.f32 %v4434, 0.0
          %v4451 = vmax.f32 %v4435, 0.0
          %v4452 = vmax.f32 %v4436, 0.0
          %v4453 = vmax.f32 %v4437, 0.0
          %v4454 = vmax.f32 %v4438, 0.0
          %v4455 = vmax.f32 %v4439, 0.0
          %v4456 = vmax.f32 %v4440, 0.0
          %v4457 = vmax.f32 %v4441, 0.0
          %v4458 = vmax.f32 %v4442, 0.0
          %v4459 = vmax.f32 %v4443, 0.0
          %v4460 = vpack.c.bf16 %v4452, %v4444
          %v4461 = vpack.c.bf16 %v4453, %v4445
          %v4462 = vpack.c.bf16 %v4454, %v4446
          %v4463 = vpack.c.bf16 %v4455, %v4447
          %v4464 = vpack.c.bf16 %v4456, %v4448
          %v4465 = vpack.c.bf16 %v4457, %v4449
          %v4466 = vpack.c.bf16 %v4458, %v4450
          %v4467 = vpack.c.bf16 %v4459, %v4451
          %v4468 = vld [vmem:[#allocation8] sm:$0xff]
          %v4469 = vld [vmem:[#allocation8 + $0x8] sm:$0xff]
          %v4470 = vld [vmem:[#allocation8 + $0x10] sm:$0xf]
          %v4471 = vld [vmem:[#allocation8 + $0x14] sm:$0xff]
          %v4472 = vld [vmem:[#allocation8 + $0x1c] sm:$0xff]
          %v4473 = vld [vmem:[#allocation8 + $0x24] sm:$0xf]
          %v4474 = vld [vmem:[#allocation8 + $0x28] sm:$0xff]
          %v4475 = vld [vmem:[#allocation8 + $0x30] sm:$0xff]
          %v4476 = vld [vmem:[#allocation8 + $0x38] sm:$0xf]
          %v4477 = vld [vmem:[#allocation8 + $0x3c] sm:$0xff]
          %v4478 = vld [vmem:[#allocation8 + $0x44] sm:$0xff]
          %v4479 = vld [vmem:[#allocation8 + $0x4c] sm:$0xf]
          %v4480 = vld [vmem:[#allocation8 + $0x50] sm:$0xff]
          %v4481 = vld [vmem:[#allocation8 + $0x58] sm:$0xff]
          %v4482 = vld [vmem:[#allocation8 + $0x60] sm:$0xf]
          %v4483 = vld [vmem:[#allocation8 + $0x64] sm:$0xff]
          %v4484 = vld [vmem:[#allocation8 + $0x6c] sm:$0xff]
          %v4485 = vld [vmem:[#allocation8 + $0x74] sm:$0xf]
          %v4486 = vld [vmem:[#allocation8 + $0x78] sm:$0xff]
          %v4487 = vld [vmem:[#allocation8 + $0x80] sm:$0xff]
          %v4488 = vld [vmem:[#allocation8 + $0x88] sm:$0xf]
          %v4489 = vld [vmem:[#allocation8 + $0x8c] sm:$0xff]
          %v4490 = vld [vmem:[#allocation8 + $0x94] sm:$0xff]
          %v4491 = vld [vmem:[#allocation8 + $0x9c] sm:$0xf]
          %v4492 = vld [vmem:[#allocation8 + $0xa0] sm:$0xff]
          %v4493 = vld [vmem:[#allocation8 + $0xa8] sm:$0xff]
          %v4494 = vld [vmem:[#allocation8 + $0xb0] sm:$0xf]
          %v4495 = vld [vmem:[#allocation8 + $0xb4] sm:$0xff]
          %v4496 = vld [vmem:[#allocation8 + $0xbc] sm:$0xff]
          %v4497 = vld [vmem:[#allocation8 + $0xc4] sm:$0xf]
          %v4498 = vld [vmem:[#allocation8 + $0xc8] sm:$0xff]
          %v4499 = vld [vmem:[#allocation8 + $0xd0] sm:$0xff]
          %v4500 = vld [vmem:[#allocation8 + $0xd8] sm:$0xf]
          %v4501 = vld [vmem:[#allocation8 + $0xdc] sm:$0xff]
          %v4502 = vld [vmem:[#allocation8 + $0xe4] sm:$0xff]
          %v4503 = vld [vmem:[#allocation8 + $0xec] sm:$0xf]
          %v4504 = vld [vmem:[#allocation8 + $0xf0] sm:$0xff]
          %v4505 = vld [vmem:[#allocation8 + $0xf8] sm:$0xff]
          %v4506 = vld [vmem:[#allocation8 + $0x100] sm:$0xf]
          %v4507 = vld [vmem:[#allocation8 + $0x104] sm:$0xff]
          %v4508 = vld [vmem:[#allocation8 + $0x10c] sm:$0xff]
          %v4509 = vld [vmem:[#allocation8 + $0x114] sm:$0xf]
          %v4510 = vld [vmem:[#allocation8 + $0x118] sm:$0xff]
          %v4511 = vld [vmem:[#allocation8 + $0x120] sm:$0xff]
          %v4512 = vld [vmem:[#allocation8 + $0x128] sm:$0xf]
          %v4513 = vld [vmem:[#allocation8 + $0x12c] sm:$0xff]
          %v4514 = vld [vmem:[#allocation8 + $0x134] sm:$0xff]
          %v4515 = vld [vmem:[#allocation8 + $0x13c] sm:$0xf]
          %v4516 = vld [vmem:[#allocation8 + $0x140] sm:$0xff]
          %v4517 = vld [vmem:[#allocation8 + $0x148] sm:$0xff]
          %v4518 = vld [vmem:[#allocation8 + $0x150] sm:$0xf]
          %v4519 = vld [vmem:[#allocation8 + $0x154] sm:$0xff]
          %v4520 = vld [vmem:[#allocation8 + $0x15c] sm:$0xff]
          %v4521 = vld [vmem:[#allocation8 + $0x164] sm:$0xf]
          %v4522 = vld [vmem:[#allocation8 + $0x168] sm:$0xff]
          %v4523 = vld [vmem:[#allocation8 + $0x170] sm:$0xff]
          %v4524 = vld [vmem:[#allocation8 + $0x178] sm:$0xf]
          %v4525 = vld [vmem:[#allocation8 + $0x17c] sm:$0xff]
          %v4526 = vld [vmem:[#allocation8 + $0x184] sm:$0xff]
          %v4527 = vld [vmem:[#allocation8 + $0x18c] sm:$0xf]
          %v4528 = vld [vmem:[#allocation8 + $0x190] sm:$0xff]
          %v4529 = vld [vmem:[#allocation8 + $0x198] sm:$0xff]
          %v4530 = vld [vmem:[#allocation8 + $0x1a0] sm:$0xf]
          %v4531 = vld [vmem:[#allocation8 + $0x1a4] sm:$0xff]
          %v4532 = vld [vmem:[#allocation8 + $0x1ac] sm:$0xff]
          %v4533 = vld [vmem:[#allocation8 + $0x1b4] sm:$0xf]
          %v4534 = vld [vmem:[#allocation8 + $0x1b8] sm:$0xff]
          %v4535 = vld [vmem:[#allocation8 + $0x1c0] sm:$0xff]
          %v4536 = vld [vmem:[#allocation8 + $0x1c8] sm:$0xf]
          %v4537 = vld [vmem:[#allocation8 + $0x1cc] sm:$0xff]
          %v4538 = vld [vmem:[#allocation8 + $0x1d4] sm:$0xff]
          %v4539 = vld [vmem:[#allocation8 + $0x1dc] sm:$0xf]
          %v4540 = vld [vmem:[#allocation8 + $0x1e0] sm:$0xff]
          %v4541 = vld [vmem:[#allocation8 + $0x1e8] sm:$0xff]
          %v4542 = vld [vmem:[#allocation8 + $0x1f0] sm:$0xf]
          %v4543 = vld [vmem:[#allocation8 + $0x1f4] sm:$0xff]
          %v4544 = vld [vmem:[#allocation8 + $0x1fc] sm:$0xff]
          %v4545 = vld [vmem:[#allocation8 + $0x204] sm:$0xf]
          %v4546 = vld [vmem:[#allocation8 + $0x208] sm:$0xff]
          %v4547 = vld [vmem:[#allocation8 + $0x210] sm:$0xff]
          %v4548 = vld [vmem:[#allocation8 + $0x218] sm:$0xf]
          %v4549 = vld [vmem:[#allocation8 + $0x21c] sm:$0xff]
          %v4550 = vld [vmem:[#allocation8 + $0x224] sm:$0xff]
          %v4551 = vld [vmem:[#allocation8 + $0x22c] sm:$0xf]
          %v4552 = vld [vmem:[#allocation8 + $0x230] sm:$0xff]
          %v4553 = vld [vmem:[#allocation8 + $0x238] sm:$0xff]
          %v4554 = vld [vmem:[#allocation8 + $0x240] sm:$0xf]
          %v4555 = vld [vmem:[#allocation8 + $0x244] sm:$0xff]
          %v4556 = vld [vmem:[#allocation8 + $0x24c] sm:$0xff]
          %v4557 = vld [vmem:[#allocation8 + $0x254] sm:$0xf]
          %v4558 = vld [vmem:[#allocation8 + $0x258] sm:$0xff]
          %v4559 = vld [vmem:[#allocation8 + $0x260] sm:$0xff]
          %v4560 = vld [vmem:[#allocation8 + $0x268] sm:$0xf]
          %v4561 = vld [vmem:[#allocation8 + $0x26c] sm:$0xff]
          %v4562 = vld [vmem:[#allocation8 + $0x274] sm:$0xff]
          %v4563 = vld [vmem:[#allocation8 + $0x27c] sm:$0xf]
          %v4564 = vld [vmem:[#allocation8 + $0x280] sm:$0xff]
          %v4565 = vld [vmem:[#allocation8 + $0x288] sm:$0xff]
          %v4566 = vld [vmem:[#allocation8 + $0x290] sm:$0xf]
          %v4567 = vld [vmem:[#allocation8 + $0x294] sm:$0xff]
          %v4568 = vld [vmem:[#allocation8 + $0x29c] sm:$0xff]
          %v4569 = vld [vmem:[#allocation8 + $0x2a4] sm:$0xf]
          %v4570 = vld [vmem:[#allocation8 + $0x2a8] sm:$0xff]
          %v4571 = vld [vmem:[#allocation8 + $0x2b0] sm:$0xff]
          %v4572 = vld [vmem:[#allocation8 + $0x2b8] sm:$0xf]
          %v4573 = vld [vmem:[#allocation8 + $0x2bc] sm:$0xff]
          %v4574 = vld [vmem:[#allocation8 + $0x2c4] sm:$0xff]
          %v4575 = vld [vmem:[#allocation8 + $0x2cc] sm:$0xf]
          %v4576 = vld [vmem:[#allocation8 + $0x2d0] sm:$0xff]
          %v4577 = vld [vmem:[#allocation8 + $0x2d8] sm:$0xff]
          %v4578 = vld [vmem:[#allocation8 + $0x2e0] sm:$0xf]
          %v4579 = vld [vmem:[#allocation8 + $0x2e4] sm:$0xff]
          %v4580 = vld [vmem:[#allocation8 + $0x2ec] sm:$0xff]
          %v4581 = vld [vmem:[#allocation8 + $0x2f4] sm:$0xf]
          %v4582 = vld [vmem:[#allocation8 + $0x2f8] sm:$0xff]
          %v4583 = vld [vmem:[#allocation8 + $0x300] sm:$0xff]
          %v4584 = vld [vmem:[#allocation8 + $0x308] sm:$0xf]
          %v4585 = vld [vmem:[#allocation8 + $0x30c] sm:$0xff]
          %v4586 = vld [vmem:[#allocation8 + $0x314] sm:$0xff]
          %v4587 = vld [vmem:[#allocation8 + $0x31c] sm:$0xf]
          %v4588 = vld [vmem:[#allocation8 + $0x320] sm:$0xff]
          %v4589 = vld [vmem:[#allocation8 + $0x328] sm:$0xff]
          %v4590 = vld [vmem:[#allocation8 + $0x330] sm:$0xf]
          %v4591 = vld [vmem:[#allocation8 + $0x334] sm:$0xff]
          %v4592 = vld [vmem:[#allocation8 + $0x33c] sm:$0xff]
          %v4593 = vld [vmem:[#allocation8 + $0x344] sm:$0xf]
          %v4594 = vld [vmem:[#allocation8 + $0x348] sm:$0xff]
          %v4595 = vld [vmem:[#allocation8 + $0x350] sm:$0xff]
          %v4596 = vld [vmem:[#allocation8 + $0x358] sm:$0xf]
          %v4597 = vld [vmem:[#allocation8 + $0x35c] sm:$0xff]
          %v4598 = vld [vmem:[#allocation8 + $0x364] sm:$0xff]
          %v4599 = vld [vmem:[#allocation8 + $0x36c] sm:$0xf]
          %v4600 = vld [vmem:[#allocation8 + $0x370] sm:$0xff]
          %v4601 = vld [vmem:[#allocation8 + $0x378] sm:$0xff]
          %v4602 = vld [vmem:[#allocation8 + $0x380] sm:$0xf]
          %v4603 = vld [vmem:[#allocation8 + $0x384] sm:$0xff]
          %v4604 = vld [vmem:[#allocation8 + $0x38c] sm:$0xff]
          %v4605 = vld [vmem:[#allocation8 + $0x394] sm:$0xf]
          %v4606 = vld [vmem:[#allocation8 + $0x398] sm:$0xff]
          %v4607 = vld [vmem:[#allocation8 + $0x3a0] sm:$0xff]
          %v4608 = vld [vmem:[#allocation8 + $0x3a8] sm:$0xf]
          %v4609 = vld [vmem:[#allocation8 + $0x3ac] sm:$0xff]
          %v4610 = vld [vmem:[#allocation8 + $0x3b4] sm:$0xff]
          %v4611 = vld [vmem:[#allocation8 + $0x3bc] sm:$0xf]
          %v4612 = vld [vmem:[#allocation8 + $0x3c0] sm:$0xff]
          %v4613 = vld [vmem:[#allocation8 + $0x3c8] sm:$0xff]
          %v4614 = vld [vmem:[#allocation8 + $0x3d0] sm:$0xf]
          %v4615 = vld [vmem:[#allocation8 + $0x3d4] sm:$0xff]
          %v4616 = vld [vmem:[#allocation8 + $0x3dc] sm:$0xff]
          %v4617 = vld [vmem:[#allocation8 + $0x3e4] sm:$0xf]
          %v4618 = vld [vmem:[#allocation8 + $0x3e8] sm:$0xff]
          %v4619 = vld [vmem:[#allocation8 + $0x3f0] sm:$0xff]
          %v4620 = vld [vmem:[#allocation8 + $0x3f8] sm:$0xf]
          %v4621 = vld [vmem:[#allocation8 + $0x3fc] sm:$0xff]
          %v4622 = vld [vmem:[#allocation8 + $0x404] sm:$0xff]
          %v4623 = vld [vmem:[#allocation8 + $0x40c] sm:$0xf]
          %v4624 = vld [vmem:[#allocation8 + $0x410] sm:$0xff]
          %v4625 = vld [vmem:[#allocation8 + $0x418] sm:$0xff]
          %v4626 = vld [vmem:[#allocation8 + $0x420] sm:$0xf]
          %v4627 = vld [vmem:[#allocation8 + $0x424] sm:$0xff]
          %v4628 = vld [vmem:[#allocation8 + $0x42c] sm:$0xff]
          %v4629 = vld [vmem:[#allocation8 + $0x434] sm:$0xf]
          %v4630 = vld [vmem:[#allocation8 + $0x438] sm:$0xff]
          %v4631 = vld [vmem:[#allocation8 + $0x440] sm:$0xff]
          %v4632 = vld [vmem:[#allocation8 + $0x448] sm:$0xf]
          %v4633 = vld [vmem:[#allocation8 + $0x44c] sm:$0xff]
          %v4634 = vld [vmem:[#allocation8 + $0x454] sm:$0xff]
          %v4635 = vld [vmem:[#allocation8 + $0x45c] sm:$0xf]
          %v4636 = vld [vmem:[#allocation8 + $0x460] sm:$0xff]
          %v4637 = vld [vmem:[#allocation8 + $0x468] sm:$0xff]
          %v4638 = vld [vmem:[#allocation8 + $0x470] sm:$0xf]
          %v4639 = vld [vmem:[#allocation8 + $0x474] sm:$0xff]
          %v4640 = vld [vmem:[#allocation8 + $0x47c] sm:$0xff]
          %v4641 = vld [vmem:[#allocation8 + $0x484] sm:$0xf]
          %v4642 = vld [vmem:[#allocation8 + $0x488] sm:$0xff]
          %v4643 = vld [vmem:[#allocation8 + $0x490] sm:$0xff]
          %v4644 = vld [vmem:[#allocation8 + $0x498] sm:$0xf]
          %v4645 = vld [vmem:[#allocation8 + $0x49c] sm:$0xff]
          %v4646 = vld [vmem:[#allocation8 + $0x4a4] sm:$0xff]
          %v4647 = vld [vmem:[#allocation8 + $0x4ac] sm:$0xf]
          %v4648 = vld [vmem:[#allocation8 + $0x4b0] sm:$0xff]
          %v4649 = vld [vmem:[#allocation8 + $0x4b8] sm:$0xff]
          %v4650 = vld [vmem:[#allocation8 + $0x4c0] sm:$0xf]
          %v4651 = vld [vmem:[#allocation8 + $0x4c4] sm:$0xff]
          %v4652 = vld [vmem:[#allocation8 + $0x4cc] sm:$0xff]
          %v4653 = vld [vmem:[#allocation8 + $0x4d4] sm:$0xf]
          %v4654 = vld [vmem:[#allocation8 + $0x4d8] sm:$0xff]
          %v4655 = vld [vmem:[#allocation8 + $0x4e0] sm:$0xff]
          %v4656 = vld [vmem:[#allocation8 + $0x4e8] sm:$0xf]
          %v4657 = vld [vmem:[#allocation8 + $0x4ec] sm:$0xff]
          %v4658 = vld [vmem:[#allocation8 + $0x4f4] sm:$0xff]
          %v4659 = vld [vmem:[#allocation8 + $0x4fc] sm:$0xf]
          %v4660 = vld [vmem:[#allocation8 + $0x500] sm:$0xff]
          %v4661 = vld [vmem:[#allocation8 + $0x508] sm:$0xff]
          %v4662 = vld [vmem:[#allocation8 + $0x510] sm:$0xf]
          %v4663 = vld [vmem:[#allocation8 + $0x514] sm:$0xff]
          %v4664 = vld [vmem:[#allocation8 + $0x51c] sm:$0xff]
          %v4665 = vld [vmem:[#allocation8 + $0x524] sm:$0xf]
          %v4666 = vld [vmem:[#allocation8 + $0x528] sm:$0xff]
          %v4667 = vld [vmem:[#allocation8 + $0x530] sm:$0xff]
          %v4668 = vld [vmem:[#allocation8 + $0x538] sm:$0xf]
          %v4669 = vld [vmem:[#allocation8 + $0x53c] sm:$0xff]
          %v4670 = vld [vmem:[#allocation8 + $0x544] sm:$0xff]
          %v4671 = vld [vmem:[#allocation8 + $0x54c] sm:$0xf]
          %v4672 = vld [vmem:[#allocation8 + $0x550] sm:$0xff]
          %v4673 = vld [vmem:[#allocation8 + $0x558] sm:$0xff]
          %v4674 = vld [vmem:[#allocation8 + $0x560] sm:$0xf]
          %v4675 = vld [vmem:[#allocation8 + $0x564] sm:$0xff]
          %v4676 = vld [vmem:[#allocation8 + $0x56c] sm:$0xff]
          %v4677 = vld [vmem:[#allocation8 + $0x574] sm:$0xf]
          %v4678 = vld [vmem:[#allocation8 + $0x578] sm:$0xff]
          %v4679 = vld [vmem:[#allocation8 + $0x580] sm:$0xff]
          %v4680 = vld [vmem:[#allocation8 + $0x588] sm:$0xf]
          %v4681 = vld [vmem:[#allocation8 + $0x58c] sm:$0xff]
          %v4682 = vld [vmem:[#allocation8 + $0x594] sm:$0xff]
          %v4683 = vld [vmem:[#allocation8 + $0x59c] sm:$0xf]
          %v4684 = vld [vmem:[#allocation8 + $0x5a0] sm:$0xff]
          %v4685 = vld [vmem:[#allocation8 + $0x5a8] sm:$0xff]
          %v4686 = vld [vmem:[#allocation8 + $0x5b0] sm:$0xf]
          %v4687 = vld [vmem:[#allocation8 + $0x5b4] sm:$0xff]
          %v4688 = vld [vmem:[#allocation8 + $0x5bc] sm:$0xff]
          %v4689 = vld [vmem:[#allocation8 + $0x5c4] sm:$0xf]
          %v4690 = vld [vmem:[#allocation8 + $0x5c8] sm:$0xff]
          %v4691 = vld [vmem:[#allocation8 + $0x5d0] sm:$0xff]
          %v4692 = vld [vmem:[#allocation8 + $0x5d8] sm:$0xf]
          %v4693 = vld [vmem:[#allocation8 + $0x5dc] sm:$0xff]
          %v4694 = vld [vmem:[#allocation8 + $0x5e4] sm:$0xff]
          %v4695 = vld [vmem:[#allocation8 + $0x5ec] sm:$0xf]
          %v4696 = vld [vmem:[#allocation8 + $0x5f0] sm:$0xff]
          %v4697 = vld [vmem:[#allocation8 + $0x5f8] sm:$0xff]
          %v4698 = vld [vmem:[#allocation8 + $0x600] sm:$0xf]
          %v4699 = vld [vmem:[#allocation8 + $0x604] sm:$0xff]
          %v4700 = vld [vmem:[#allocation8 + $0x60c] sm:$0xff]
          %v4701 = vld [vmem:[#allocation8 + $0x614] sm:$0xf]
          %v4702 = vld [vmem:[#allocation8 + $0x618] sm:$0xff]
          %v4703 = vld [vmem:[#allocation8 + $0x620] sm:$0xff]
          %v4704 = vld [vmem:[#allocation8 + $0x628] sm:$0xf]
          %v4705 = vld [vmem:[#allocation8 + $0x62c] sm:$0xff]
          %v4706 = vld [vmem:[#allocation8 + $0x634] sm:$0xff]
          %v4707 = vld [vmem:[#allocation8 + $0x63c] sm:$0xf]
          %v4708 = vld [vmem:[#allocation8 + $0x640] sm:$0xff]
          %v4709 = vld [vmem:[#allocation8 + $0x648] sm:$0xff]
          %v4710 = vld [vmem:[#allocation8 + $0x650] sm:$0xf]
          %v4711 = vld [vmem:[#allocation8 + $0x654] sm:$0xff]
          %v4712 = vld [vmem:[#allocation8 + $0x65c] sm:$0xff]
          %v4713 = vld [vmem:[#allocation8 + $0x664] sm:$0xf]
          %v4714 = vld [vmem:[#allocation8 + $0x668] sm:$0xff]
          %v4715 = vld [vmem:[#allocation8 + $0x670] sm:$0xff]
          %v4716 = vld [vmem:[#allocation8 + $0x678] sm:$0xf]
          %v4717 = vld [vmem:[#allocation8 + $0x67c] sm:$0xff]
          %v4718 = vld [vmem:[#allocation8 + $0x684] sm:$0xff]
          %v4719 = vld [vmem:[#allocation8 + $0x68c] sm:$0xf]
          %v4720 = vld [vmem:[#allocation8 + $0x690] sm:$0xff]
          %v4721 = vld [vmem:[#allocation8 + $0x698] sm:$0xff]
          %v4722 = vld [vmem:[#allocation8 + $0x6a0] sm:$0xf]
          %v4723 = vld [vmem:[#allocation8 + $0x6a4] sm:$0xff]
          %v4724 = vld [vmem:[#allocation8 + $0x6ac] sm:$0xff]
          %v4725 = vld [vmem:[#allocation8 + $0x6b4] sm:$0xf]
          %v4726 = vld [vmem:[#allocation8 + $0x6b8] sm:$0xff]
          %v4727 = vld [vmem:[#allocation8 + $0x6c0] sm:$0xff]
          %v4728 = vld [vmem:[#allocation8 + $0x6c8] sm:$0xf]
          %v4729 = vld [vmem:[#allocation8 + $0x6cc] sm:$0xff]
          %v4730 = vld [vmem:[#allocation8 + $0x6d4] sm:$0xff]
          %v4731 = vld [vmem:[#allocation8 + $0x6dc] sm:$0xf]
          %v4732 = vld [vmem:[#allocation8 + $0x6e0] sm:$0xff]
          %v4733 = vld [vmem:[#allocation8 + $0x6e8] sm:$0xff]
          %v4734 = vld [vmem:[#allocation8 + $0x6f0] sm:$0xf]
          %v4735 = vld [vmem:[#allocation8 + $0x6f4] sm:$0xff]
          %v4736 = vld [vmem:[#allocation8 + $0x6fc] sm:$0xff]
          %v4737 = vld [vmem:[#allocation8 + $0x704] sm:$0xf]
          %v4738 = vld [vmem:[#allocation8 + $0x708] sm:$0xff]
          %v4739 = vld [vmem:[#allocation8 + $0x710] sm:$0xff]
          %v4740 = vld [vmem:[#allocation8 + $0x718] sm:$0xf]
          %v4741 = vld [vmem:[#allocation8 + $0x71c] sm:$0xff]
          %v4742 = vld [vmem:[#allocation8 + $0x724] sm:$0xff]
          %v4743 = vld [vmem:[#allocation8 + $0x72c] sm:$0xf]
          %v4744 = vld [vmem:[#allocation8 + $0x730] sm:$0xff]
          %v4745 = vld [vmem:[#allocation8 + $0x738] sm:$0xff]
          %v4746 = vld [vmem:[#allocation8 + $0x740] sm:$0xf]
          %v4747 = vld [vmem:[#allocation8 + $0x744] sm:$0xff]
          %v4748 = vld [vmem:[#allocation8 + $0x74c] sm:$0xff]
          %v4749 = vld [vmem:[#allocation8 + $0x754] sm:$0xf]
          %v4750 = vld [vmem:[#allocation8 + $0x758] sm:$0xff]
          %v4751 = vld [vmem:[#allocation8 + $0x760] sm:$0xff]
          %v4752 = vld [vmem:[#allocation8 + $0x768] sm:$0xf]
          %v4753 = vld [vmem:[#allocation8 + $0x76c] sm:$0xff]
          %v4754 = vld [vmem:[#allocation8 + $0x774] sm:$0xff]
          %v4755 = vld [vmem:[#allocation8 + $0x77c] sm:$0xf]
          %v4756 = vld [vmem:[#allocation8 + $0x780] sm:$0xff]
          %v4757 = vld [vmem:[#allocation8 + $0x788] sm:$0xff]
          %v4758 = vld [vmem:[#allocation8 + $0x790] sm:$0xf]
          %v4759 = vld [vmem:[#allocation8 + $0x794] sm:$0xff]
          %v4760 = vld [vmem:[#allocation8 + $0x79c] sm:$0xff]
          %v4761 = vld [vmem:[#allocation8 + $0x7a4] sm:$0xf]
          %v4762 = vld [vmem:[#allocation8 + $0x7a8] sm:$0xff]
          %v4763 = vld [vmem:[#allocation8 + $0x7b0] sm:$0xff]
          %v4764 = vld [vmem:[#allocation8 + $0x7b8] sm:$0xf]
          %v4765 = vld [vmem:[#allocation8 + $0x7bc] sm:$0xff]
          %v4766 = vld [vmem:[#allocation8 + $0x7c4] sm:$0xff]
          %v4767 = vld [vmem:[#allocation8 + $0x7cc] sm:$0xf]
          %v4768 = vld [vmem:[#allocation8 + $0x7d0] sm:$0xff]
          %v4769 = vld [vmem:[#allocation8 + $0x7d8] sm:$0xff]
          %v4770 = vld [vmem:[#allocation8 + $0x7e0] sm:$0xf]
          %v4771 = vld [vmem:[#allocation8 + $0x7e4] sm:$0xff]
          %v4772 = vld [vmem:[#allocation8 + $0x7ec] sm:$0xff]
          %v4773 = vld [vmem:[#allocation8 + $0x7f4] sm:$0xf]
          %v4774 = vld [vmem:[#allocation8 + $0x7f8] sm:$0xff]
          %v4775 = vld [vmem:[#allocation8 + $0x800] sm:$0xff]
          %v4776 = vld [vmem:[#allocation8 + $0x808] sm:$0xf]
          %v4777 = vld [vmem:[#allocation8 + $0x80c] sm:$0xff]
          %v4778 = vld [vmem:[#allocation8 + $0x814] sm:$0xff]
          %v4779 = vld [vmem:[#allocation8 + $0x81c] sm:$0xf]
          %v4780 = vld [vmem:[#allocation8 + $0x820] sm:$0xff]
          %v4781 = vld [vmem:[#allocation8 + $0x828] sm:$0xff]
          %v4782 = vld [vmem:[#allocation8 + $0x830] sm:$0xf]
          %v4783 = vld [vmem:[#allocation8 + $0x834] sm:$0xff]
          %v4784 = vld [vmem:[#allocation8 + $0x83c] sm:$0xff]
          %v4785 = vld [vmem:[#allocation8 + $0x844] sm:$0xf]
          %v4786 = vld [vmem:[#allocation8 + $0x848] sm:$0xff]
          %v4787 = vld [vmem:[#allocation8 + $0x850] sm:$0xff]
          %v4788 = vld [vmem:[#allocation8 + $0x858] sm:$0xf]
          %v4789 = vld [vmem:[#allocation8 + $0x85c] sm:$0xff]
          %v4790 = vld [vmem:[#allocation8 + $0x864] sm:$0xff]
          %v4791 = vld [vmem:[#allocation8 + $0x86c] sm:$0xf]
          %v4792 = vld [vmem:[#allocation8 + $0x870] sm:$0xff]
          %v4793 = vld [vmem:[#allocation8 + $0x878] sm:$0xff]
          %v4794 = vld [vmem:[#allocation8 + $0x880] sm:$0xf]
          %v4795 = vld [vmem:[#allocation8 + $0x884] sm:$0xff]
          %v4796 = vld [vmem:[#allocation8 + $0x88c] sm:$0xff]
          %v4797 = vld [vmem:[#allocation8 + $0x894] sm:$0xf]
          %v4798 = vld [vmem:[#allocation8 + $0x898] sm:$0xff]
          %v4799 = vld [vmem:[#allocation8 + $0x8a0] sm:$0xff]
          %v4800 = vld [vmem:[#allocation8 + $0x8a8] sm:$0xf]
          %v4801 = vld [vmem:[#allocation8 + $0x8ac] sm:$0xff]
          %v4802 = vld [vmem:[#allocation8 + $0x8b4] sm:$0xff]
          %v4803 = vld [vmem:[#allocation8 + $0x8bc] sm:$0xf]
          %v4804 = vld [vmem:[#allocation8 + $0x8c0] sm:$0xff]
          %v4805 = vld [vmem:[#allocation8 + $0x8c8] sm:$0xff]
          %v4806 = vld [vmem:[#allocation8 + $0x8d0] sm:$0xf]
          %v4807 = vld [vmem:[#allocation8 + $0x8d4] sm:$0xff]
          %v4808 = vld [vmem:[#allocation8 + $0x8dc] sm:$0xff]
          %v4809 = vld [vmem:[#allocation8 + $0x8e4] sm:$0xf]
          %v4810 = vld [vmem:[#allocation8 + $0x8e8] sm:$0xff]
          %v4811 = vld [vmem:[#allocation8 + $0x8f0] sm:$0xff]
          %v4812 = vld [vmem:[#allocation8 + $0x8f8] sm:$0xf]
          %v4813 = vld [vmem:[#allocation8 + $0x8fc] sm:$0xff]
          %v4814 = vld [vmem:[#allocation8 + $0x904] sm:$0xff]
          %v4815 = vld [vmem:[#allocation8 + $0x90c] sm:$0xf]
          %v4816 = vld [vmem:[#allocation8 + $0x910] sm:$0xff]
          %v4817 = vld [vmem:[#allocation8 + $0x918] sm:$0xff]
          %v4818 = vld [vmem:[#allocation8 + $0x920] sm:$0xf]
          %v4819 = vld [vmem:[#allocation8 + $0x924] sm:$0xff]
          %v4820 = vld [vmem:[#allocation8 + $0x92c] sm:$0xff]
          %v4821 = vld [vmem:[#allocation8 + $0x934] sm:$0xf]
          %v4822 = vld [vmem:[#allocation8 + $0x938] sm:$0xff]
          %v4823 = vld [vmem:[#allocation8 + $0x940] sm:$0xff]
          %v4824 = vld [vmem:[#allocation8 + $0x948] sm:$0xf]
          %v4825 = vld [vmem:[#allocation8 + $0x94c] sm:$0xff]
          %v4826 = vld [vmem:[#allocation8 + $0x954] sm:$0xff]
          %v4827 = vld [vmem:[#allocation8 + $0x95c] sm:$0xf]
          %v4828 = vld [vmem:[#allocation8 + $0x960] sm:$0xff]
          %v4829 = vld [vmem:[#allocation8 + $0x968] sm:$0xff]
          %v4830 = vld [vmem:[#allocation8 + $0x970] sm:$0xf]
          %v4831 = vld [vmem:[#allocation8 + $0x974] sm:$0xff]
          %v4832 = vld [vmem:[#allocation8 + $0x97c] sm:$0xff]
          %v4833 = vld [vmem:[#allocation8 + $0x984] sm:$0xf]
          %v4834 = vld [vmem:[#allocation8 + $0x988] sm:$0xff]
          %v4835 = vld [vmem:[#allocation8 + $0x990] sm:$0xff]
          %v4836 = vld [vmem:[#allocation8 + $0x998] sm:$0xf]
          %v4837 = vld [vmem:[#allocation8 + $0x99c] sm:$0xff]
          %v4838 = vld [vmem:[#allocation8 + $0x9a4] sm:$0xff]
          %v4839 = vld [vmem:[#allocation8 + $0x9ac] sm:$0xf]
          %v4840 = vld [vmem:[#allocation8 + $0x9b0] sm:$0xff]
          %v4841 = vld [vmem:[#allocation8 + $0x9b8] sm:$0xff]
          %v4842 = vld [vmem:[#allocation8 + $0x9c0] sm:$0xf]
          %v4843 = vld [vmem:[#allocation8 + $0x9c4] sm:$0xff]
          %v4844 = vld [vmem:[#allocation8 + $0x9cc] sm:$0xff]
          %v4845 = vld [vmem:[#allocation8 + $0x9d4] sm:$0xf]
          %v4846 = vld [vmem:[#allocation8 + $0x9d8] sm:$0xff]
          %v4847 = vld [vmem:[#allocation8 + $0x9e0] sm:$0xff]
          %v4848 = vld [vmem:[#allocation8 + $0x9e8] sm:$0xf]
          %v4849 = vld [vmem:[#allocation8 + $0x9ec] sm:$0xff]
          %v4850 = vld [vmem:[#allocation8 + $0x9f4] sm:$0xff]
          %v4851 = vld [vmem:[#allocation8 + $0x9fc] sm:$0xf]
          %v4852 = vld [vmem:[#allocation9] sm:$0x1f]
          %v4854 = vlaneseq
          %v4855 = vshrl.u32 %v4854, 7
          %v4856 = vsub.s32 0, %v4855
          %v4857 = vrot.slane %v4852, %v4856
          %v4858 = vlaneseq
          %v4859 = vshrl.u32 %v4858, 7
          %v4860 = vsub.s32 1, %v4859
          %v4861 = vrot.slane %v4852, %v4860
          %v4862 = vlaneseq
          %v4863 = vshrl.u32 %v4862, 7
          %v4864 = vsub.s32 2, %v4863
          %v4865 = vrot.slane %v4852, %v4864
          %v4866 = vlaneseq
          %v4867 = vshrl.u32 %v4866, 7
          %v4868 = vsub.s32 3, %v4867
          %v4869 = vrot.slane %v4852, %v4868
          %v4870 = vlaneseq
          %v4871 = vshrl.u32 %v4870, 7
          %v4872 = vsub.s32 4, %v4871
          %v4873 = vrot.slane %v4852, %v4872
          %v5263 = vunpack.c.l.b16 %v4468
          %v5264 = vunpack.c.h.b16 %v4468
          %v5265 = vunpack.c.l.b16 %v4469
          %v5266 = vunpack.c.h.b16 %v4469
          %v5267 = vunpack.c.l.b16 %v4470
          %v5268 = vunpack.c.l.b16 %v4471
          %v5269 = vunpack.c.h.b16 %v4471
          %v5270 = vunpack.c.l.b16 %v4472
          %v5271 = vunpack.c.h.b16 %v4472
          %v5272 = vunpack.c.l.b16 %v4473
          %v5273 = vunpack.c.l.b16 %v4474
          %v5274 = vunpack.c.h.b16 %v4474
          %v5275 = vunpack.c.l.b16 %v4475
          %v5276 = vunpack.c.h.b16 %v4475
          %v5277 = vunpack.c.l.b16 %v4476
          %v5278 = vunpack.c.l.b16 %v4477
          %v5279 = vunpack.c.h.b16 %v4477
          %v5280 = vunpack.c.l.b16 %v4478
          %v5281 = vunpack.c.h.b16 %v4478
          %v5282 = vunpack.c.l.b16 %v4479
          %v5283 = vunpack.c.l.b16 %v4480
          %v5284 = vunpack.c.h.b16 %v4480
          %v5285 = vunpack.c.l.b16 %v4481
          %v5286 = vunpack.c.h.b16 %v4481
          %v5287 = vunpack.c.l.b16 %v4482
          %v5288 = vunpack.c.l.b16 %v4483
          %v5289 = vunpack.c.h.b16 %v4483
          %v5290 = vunpack.c.l.b16 %v4484
          %v5291 = vunpack.c.h.b16 %v4484
          %v5292 = vunpack.c.l.b16 %v4485
          %v5293 = vunpack.c.l.b16 %v4486
          %v5294 = vunpack.c.h.b16 %v4486
          %v5295 = vunpack.c.l.b16 %v4487
          %v5296 = vunpack.c.h.b16 %v4487
          %v5297 = vunpack.c.l.b16 %v4488
          %v5298 = vunpack.c.l.b16 %v4489
          %v5299 = vunpack.c.h.b16 %v4489
          %v5300 = vunpack.c.l.b16 %v4490
          %v5301 = vunpack.c.h.b16 %v4490
          %v5302 = vunpack.c.l.b16 %v4491
          %v5303 = vunpack.c.l.b16 %v4492
          %v5304 = vunpack.c.h.b16 %v4492
          %v5305 = vunpack.c.l.b16 %v4493
          %v5306 = vunpack.c.h.b16 %v4493
          %v5307 = vunpack.c.l.b16 %v4494
          %v5308 = vunpack.c.l.b16 %v4495
          %v5309 = vunpack.c.h.b16 %v4495
          %v5310 = vunpack.c.l.b16 %v4496
          %v5311 = vunpack.c.h.b16 %v4496
          %v5312 = vunpack.c.l.b16 %v4497
          %v5313 = vunpack.c.l.b16 %v4498
          %v5314 = vunpack.c.h.b16 %v4498
          %v5315 = vunpack.c.l.b16 %v4499
          %v5316 = vunpack.c.h.b16 %v4499
          %v5317 = vunpack.c.l.b16 %v4500
          %v5318 = vunpack.c.l.b16 %v4501
          %v5319 = vunpack.c.h.b16 %v4501
          %v5320 = vunpack.c.l.b16 %v4502
          %v5321 = vunpack.c.h.b16 %v4502
          %v5322 = vunpack.c.l.b16 %v4503
          %v5323 = vunpack.c.l.b16 %v4504
          %v5324 = vunpack.c.h.b16 %v4504
          %v5325 = vunpack.c.l.b16 %v4505
          %v5326 = vunpack.c.h.b16 %v4505
          %v5327 = vunpack.c.l.b16 %v4506
          %v5328 = vunpack.c.l.b16 %v4507
          %v5329 = vunpack.c.h.b16 %v4507
          %v5330 = vunpack.c.l.b16 %v4508
          %v5331 = vunpack.c.h.b16 %v4508
          %v5332 = vunpack.c.l.b16 %v4509
          %v5333 = vunpack.c.l.b16 %v4510
          %v5334 = vunpack.c.h.b16 %v4510
          %v5335 = vunpack.c.l.b16 %v4511
          %v5336 = vunpack.c.h.b16 %v4511
          %v5337 = vunpack.c.l.b16 %v4512
          %v5338 = vunpack.c.l.b16 %v4513
          %v5339 = vunpack.c.h.b16 %v4513
          %v5340 = vunpack.c.l.b16 %v4514
          %v5341 = vunpack.c.h.b16 %v4514
          %v5342 = vunpack.c.l.b16 %v4515
          %v5343 = vunpack.c.l.b16 %v4516
          %v5344 = vunpack.c.h.b16 %v4516
          %v5345 = vunpack.c.l.b16 %v4517
          %v5346 = vunpack.c.h.b16 %v4517
          %v5347 = vunpack.c.l.b16 %v4518
          %v5348 = vunpack.c.l.b16 %v4519
          %v5349 = vunpack.c.h.b16 %v4519
          %v5350 = vunpack.c.l.b16 %v4520
          %v5351 = vunpack.c.h.b16 %v4520
          %v5352 = vunpack.c.l.b16 %v4521
          %v5353 = vunpack.c.l.b16 %v4522
          %v5354 = vunpack.c.h.b16 %v4522
          %v5355 = vunpack.c.l.b16 %v4523
          %v5356 = vunpack.c.h.b16 %v4523
          %v5357 = vunpack.c.l.b16 %v4524
          %v5358 = vunpack.c.l.b16 %v4525
          %v5359 = vunpack.c.h.b16 %v4525
          %v5360 = vunpack.c.l.b16 %v4526
          %v5361 = vunpack.c.h.b16 %v4526
          %v5362 = vunpack.c.l.b16 %v4527
          %v5363 = vunpack.c.l.b16 %v4528
          %v5364 = vunpack.c.h.b16 %v4528
          %v5365 = vunpack.c.l.b16 %v4529
          %v5366 = vunpack.c.h.b16 %v4529
          %v5367 = vunpack.c.l.b16 %v4530
          %v5368 = vunpack.c.l.b16 %v4531
          %v5369 = vunpack.c.h.b16 %v4531
          %v5370 = vunpack.c.l.b16 %v4532
          %v5371 = vunpack.c.h.b16 %v4532
          %v5372 = vunpack.c.l.b16 %v4533
          %v5373 = vunpack.c.l.b16 %v4534
          %v5374 = vunpack.c.h.b16 %v4534
          %v5375 = vunpack.c.l.b16 %v4535
          %v5376 = vunpack.c.h.b16 %v4535
          %v5377 = vunpack.c.l.b16 %v4536
          %v5378 = vunpack.c.l.b16 %v4537
          %v5379 = vunpack.c.h.b16 %v4537
          %v5380 = vunpack.c.l.b16 %v4538
          %v5381 = vunpack.c.h.b16 %v4538
          %v5382 = vunpack.c.l.b16 %v4539
          %v5383 = vunpack.c.l.b16 %v4540
          %v5384 = vunpack.c.h.b16 %v4540
          %v5385 = vunpack.c.l.b16 %v4541
          %v5386 = vunpack.c.h.b16 %v4541
          %v5387 = vunpack.c.l.b16 %v4542
          %v5388 = vunpack.c.l.b16 %v4543
          %v5389 = vunpack.c.h.b16 %v4543
          %v5390 = vunpack.c.l.b16 %v4544
          %v5391 = vunpack.c.h.b16 %v4544
          %v5392 = vunpack.c.l.b16 %v4545
          %v5393 = vunpack.c.l.b16 %v4546
          %v5394 = vunpack.c.h.b16 %v4546
          %v5395 = vunpack.c.l.b16 %v4547
          %v5396 = vunpack.c.h.b16 %v4547
          %v5397 = vunpack.c.l.b16 %v4548
          %v5398 = vunpack.c.l.b16 %v4549
          %v5399 = vunpack.c.h.b16 %v4549
          %v5400 = vunpack.c.l.b16 %v4550
          %v5401 = vunpack.c.h.b16 %v4550
          %v5402 = vunpack.c.l.b16 %v4551
          %v5403 = vunpack.c.l.b16 %v4552
          %v5404 = vunpack.c.h.b16 %v4552
          %v5405 = vunpack.c.l.b16 %v4553
          %v5406 = vunpack.c.h.b16 %v4553
          %v5407 = vunpack.c.l.b16 %v4554
          %v5408 = vunpack.c.l.b16 %v4555
          %v5409 = vunpack.c.h.b16 %v4555
          %v5410 = vunpack.c.l.b16 %v4556
          %v5411 = vunpack.c.h.b16 %v4556
          %v5412 = vunpack.c.l.b16 %v4557
          %v5413 = vunpack.c.l.b16 %v4558
          %v5414 = vunpack.c.h.b16 %v4558
          %v5415 = vunpack.c.l.b16 %v4559
          %v5416 = vunpack.c.h.b16 %v4559
          %v5417 = vunpack.c.l.b16 %v4560
          %v5418 = vunpack.c.l.b16 %v4561
          %v5419 = vunpack.c.h.b16 %v4561
          %v5420 = vunpack.c.l.b16 %v4562
          %v5421 = vunpack.c.h.b16 %v4562
          %v5422 = vunpack.c.l.b16 %v4563
          %v5423 = vunpack.c.l.b16 %v4564
          %v5424 = vunpack.c.h.b16 %v4564
          %v5425 = vunpack.c.l.b16 %v4565
          %v5426 = vunpack.c.h.b16 %v4565
          %v5427 = vunpack.c.l.b16 %v4566
          %v5428 = vunpack.c.l.b16 %v4567
          %v5429 = vunpack.c.h.b16 %v4567
          %v5430 = vunpack.c.l.b16 %v4568
          %v5431 = vunpack.c.h.b16 %v4568
          %v5432 = vunpack.c.l.b16 %v4569
          %v5433 = vunpack.c.l.b16 %v4570
          %v5434 = vunpack.c.h.b16 %v4570
          %v5435 = vunpack.c.l.b16 %v4571
          %v5436 = vunpack.c.h.b16 %v4571
          %v5437 = vunpack.c.l.b16 %v4572
          %v5438 = vunpack.c.l.b16 %v4573
          %v5439 = vunpack.c.h.b16 %v4573
          %v5440 = vunpack.c.l.b16 %v4574
          %v5441 = vunpack.c.h.b16 %v4574
          %v5442 = vunpack.c.l.b16 %v4575
          %v5443 = vunpack.c.l.b16 %v4576
          %v5444 = vunpack.c.h.b16 %v4576
          %v5445 = vunpack.c.l.b16 %v4577
          %v5446 = vunpack.c.h.b16 %v4577
          %v5447 = vunpack.c.l.b16 %v4578
          %v5448 = vunpack.c.l.b16 %v4579
          %v5449 = vunpack.c.h.b16 %v4579
          %v5450 = vunpack.c.l.b16 %v4580
          %v5451 = vunpack.c.h.b16 %v4580
          %v5452 = vunpack.c.l.b16 %v4581
          %v5453 = vunpack.c.l.b16 %v4582
          %v5454 = vunpack.c.h.b16 %v4582
          %v5455 = vunpack.c.l.b16 %v4583
          %v5456 = vunpack.c.h.b16 %v4583
          %v5457 = vunpack.c.l.b16 %v4584
          %v5458 = vunpack.c.l.b16 %v4585
          %v5459 = vunpack.c.h.b16 %v4585
          %v5460 = vunpack.c.l.b16 %v4586
          %v5461 = vunpack.c.h.b16 %v4586
          %v5462 = vunpack.c.l.b16 %v4587
          %v5463 = vunpack.c.l.b16 %v4588
          %v5464 = vunpack.c.h.b16 %v4588
          %v5465 = vunpack.c.l.b16 %v4589
          %v5466 = vunpack.c.h.b16 %v4589
          %v5467 = vunpack.c.l.b16 %v4590
          %v5468 = vunpack.c.l.b16 %v4591
          %v5469 = vunpack.c.h.b16 %v4591
          %v5470 = vunpack.c.l.b16 %v4592
          %v5471 = vunpack.c.h.b16 %v4592
          %v5472 = vunpack.c.l.b16 %v4593
          %v5473 = vunpack.c.l.b16 %v4594
          %v5474 = vunpack.c.h.b16 %v4594
          %v5475 = vunpack.c.l.b16 %v4595
          %v5476 = vunpack.c.h.b16 %v4595
          %v5477 = vunpack.c.l.b16 %v4596
          %v5478 = vunpack.c.l.b16 %v4597
          %v5479 = vunpack.c.h.b16 %v4597
          %v5480 = vunpack.c.l.b16 %v4598
          %v5481 = vunpack.c.h.b16 %v4598
          %v5482 = vunpack.c.l.b16 %v4599
          %v5483 = vunpack.c.l.b16 %v4600
          %v5484 = vunpack.c.h.b16 %v4600
          %v5485 = vunpack.c.l.b16 %v4601
          %v5486 = vunpack.c.h.b16 %v4601
          %v5487 = vunpack.c.l.b16 %v4602
          %v5488 = vunpack.c.l.b16 %v4603
          %v5489 = vunpack.c.h.b16 %v4603
          %v5490 = vunpack.c.l.b16 %v4604
          %v5491 = vunpack.c.h.b16 %v4604
          %v5492 = vunpack.c.l.b16 %v4605
          %v5493 = vunpack.c.l.b16 %v4606
          %v5494 = vunpack.c.h.b16 %v4606
          %v5495 = vunpack.c.l.b16 %v4607
          %v5496 = vunpack.c.h.b16 %v4607
          %v5497 = vunpack.c.l.b16 %v4608
          %v5498 = vunpack.c.l.b16 %v4609
          %v5499 = vunpack.c.h.b16 %v4609
          %v5500 = vunpack.c.l.b16 %v4610
          %v5501 = vunpack.c.h.b16 %v4610
          %v5502 = vunpack.c.l.b16 %v4611
          %v5503 = vunpack.c.l.b16 %v4612
          %v5504 = vunpack.c.h.b16 %v4612
          %v5505 = vunpack.c.l.b16 %v4613
          %v5506 = vunpack.c.h.b16 %v4613
          %v5507 = vunpack.c.l.b16 %v4614
          %v5508 = vunpack.c.l.b16 %v4615
          %v5509 = vunpack.c.h.b16 %v4615
          %v5510 = vunpack.c.l.b16 %v4616
          %v5511 = vunpack.c.h.b16 %v4616
          %v5512 = vunpack.c.l.b16 %v4617
          %v5513 = vunpack.c.l.b16 %v4618
          %v5514 = vunpack.c.h.b16 %v4618
          %v5515 = vunpack.c.l.b16 %v4619
          %v5516 = vunpack.c.h.b16 %v4619
          %v5517 = vunpack.c.l.b16 %v4620
          %v5518 = vunpack.c.l.b16 %v4621
          %v5519 = vunpack.c.h.b16 %v4621
          %v5520 = vunpack.c.l.b16 %v4622
          %v5521 = vunpack.c.h.b16 %v4622
          %v5522 = vunpack.c.l.b16 %v4623
          %v5523 = vunpack.c.l.b16 %v4624
          %v5524 = vunpack.c.h.b16 %v4624
          %v5525 = vunpack.c.l.b16 %v4625
          %v5526 = vunpack.c.h.b16 %v4625
          %v5527 = vunpack.c.l.b16 %v4626
          %v5528 = vunpack.c.l.b16 %v4627
          %v5529 = vunpack.c.h.b16 %v4627
          %v5530 = vunpack.c.l.b16 %v4628
          %v5531 = vunpack.c.h.b16 %v4628
          %v5532 = vunpack.c.l.b16 %v4629
          %v5533 = vunpack.c.l.b16 %v4630
          %v5534 = vunpack.c.h.b16 %v4630
          %v5535 = vunpack.c.l.b16 %v4631
          %v5536 = vunpack.c.h.b16 %v4631
          %v5537 = vunpack.c.l.b16 %v4632
          %v5538 = vunpack.c.l.b16 %v4633
          %v5539 = vunpack.c.h.b16 %v4633
          %v5540 = vunpack.c.l.b16 %v4634
          %v5541 = vunpack.c.h.b16 %v4634
          %v5542 = vunpack.c.l.b16 %v4635
          %v5543 = vunpack.c.l.b16 %v4636
          %v5544 = vunpack.c.h.b16 %v4636
          %v5545 = vunpack.c.l.b16 %v4637
          %v5546 = vunpack.c.h.b16 %v4637
          %v5547 = vunpack.c.l.b16 %v4638
          %v5548 = vunpack.c.l.b16 %v4639
          %v5549 = vunpack.c.h.b16 %v4639
          %v5550 = vunpack.c.l.b16 %v4640
          %v5551 = vunpack.c.h.b16 %v4640
          %v5552 = vunpack.c.l.b16 %v4641
          %v5553 = vunpack.c.l.b16 %v4642
          %v5554 = vunpack.c.h.b16 %v4642
          %v5555 = vunpack.c.l.b16 %v4643
          %v5556 = vunpack.c.h.b16 %v4643
          %v5557 = vunpack.c.l.b16 %v4644
          %v5558 = vunpack.c.l.b16 %v4645
          %v5559 = vunpack.c.h.b16 %v4645
          %v5560 = vunpack.c.l.b16 %v4646
          %v5561 = vunpack.c.h.b16 %v4646
          %v5562 = vunpack.c.l.b16 %v4647
          %v5563 = vunpack.c.l.b16 %v4648
          %v5564 = vunpack.c.h.b16 %v4648
          %v5565 = vunpack.c.l.b16 %v4649
          %v5566 = vunpack.c.h.b16 %v4649
          %v5567 = vunpack.c.l.b16 %v4650
          %v5568 = vunpack.c.l.b16 %v4651
          %v5569 = vunpack.c.h.b16 %v4651
          %v5570 = vunpack.c.l.b16 %v4652
          %v5571 = vunpack.c.h.b16 %v4652
          %v5572 = vunpack.c.l.b16 %v4653
          %v5573 = vunpack.c.l.b16 %v4654
          %v5574 = vunpack.c.h.b16 %v4654
          %v5575 = vunpack.c.l.b16 %v4655
          %v5576 = vunpack.c.h.b16 %v4655
          %v5577 = vunpack.c.l.b16 %v4656
          %v5578 = vunpack.c.l.b16 %v4657
          %v5579 = vunpack.c.h.b16 %v4657
          %v5580 = vunpack.c.l.b16 %v4658
          %v5581 = vunpack.c.h.b16 %v4658
          %v5582 = vunpack.c.l.b16 %v4659
          %v5583 = vunpack.c.l.b16 %v4660
          %v5584 = vunpack.c.h.b16 %v4660
          %v5585 = vunpack.c.l.b16 %v4661
          %v5586 = vunpack.c.h.b16 %v4661
          %v5587 = vunpack.c.l.b16 %v4662
          %v5588 = vunpack.c.l.b16 %v4663
          %v5589 = vunpack.c.h.b16 %v4663
          %v5590 = vunpack.c.l.b16 %v4664
          %v5591 = vunpack.c.h.b16 %v4664
          %v5592 = vunpack.c.l.b16 %v4665
          %v5593 = vunpack.c.l.b16 %v4666
          %v5594 = vunpack.c.h.b16 %v4666
          %v5595 = vunpack.c.l.b16 %v4667
          %v5596 = vunpack.c.h.b16 %v4667
          %v5597 = vunpack.c.l.b16 %v4668
          %v5598 = vunpack.c.l.b16 %v4669
          %v5599 = vunpack.c.h.b16 %v4669
          %v5600 = vunpack.c.l.b16 %v4670
          %v5601 = vunpack.c.h.b16 %v4670
          %v5602 = vunpack.c.l.b16 %v4671
          %v5603 = vunpack.c.l.b16 %v4672
          %v5604 = vunpack.c.h.b16 %v4672
          %v5605 = vunpack.c.l.b16 %v4673
          %v5606 = vunpack.c.h.b16 %v4673
          %v5607 = vunpack.c.l.b16 %v4674
          %v5608 = vunpack.c.l.b16 %v4675
          %v5609 = vunpack.c.h.b16 %v4675
          %v5610 = vunpack.c.l.b16 %v4676
          %v5611 = vunpack.c.h.b16 %v4676
          %v5612 = vunpack.c.l.b16 %v4677
          %v5613 = vunpack.c.l.b16 %v4678
          %v5614 = vunpack.c.h.b16 %v4678
          %v5615 = vunpack.c.l.b16 %v4679
          %v5616 = vunpack.c.h.b16 %v4679
          %v5617 = vunpack.c.l.b16 %v4680
          %v5618 = vunpack.c.l.b16 %v4681
          %v5619 = vunpack.c.h.b16 %v4681
          %v5620 = vunpack.c.l.b16 %v4682
          %v5621 = vunpack.c.h.b16 %v4682
          %v5622 = vunpack.c.l.b16 %v4683
          %v5623 = vunpack.c.l.b16 %v4684
          %v5624 = vunpack.c.h.b16 %v4684
          %v5625 = vunpack.c.l.b16 %v4685
          %v5626 = vunpack.c.h.b16 %v4685
          %v5627 = vunpack.c.l.b16 %v4686
          %v5628 = vunpack.c.l.b16 %v4687
          %v5629 = vunpack.c.h.b16 %v4687
          %v5630 = vunpack.c.l.b16 %v4688
          %v5631 = vunpack.c.h.b16 %v4688
          %v5632 = vunpack.c.l.b16 %v4689
          %v5633 = vunpack.c.l.b16 %v4690
          %v5634 = vunpack.c.h.b16 %v4690
          %v5635 = vunpack.c.l.b16 %v4691
          %v5636 = vunpack.c.h.b16 %v4691
          %v5637 = vunpack.c.l.b16 %v4692
          %v5638 = vunpack.c.l.b16 %v4693
          %v5639 = vunpack.c.h.b16 %v4693
          %v5640 = vunpack.c.l.b16 %v4694
          %v5641 = vunpack.c.h.b16 %v4694
          %v5642 = vunpack.c.l.b16 %v4695
          %v5643 = vunpack.c.l.b16 %v4696
          %v5644 = vunpack.c.h.b16 %v4696
          %v5645 = vunpack.c.l.b16 %v4697
          %v5646 = vunpack.c.h.b16 %v4697
          %v5647 = vunpack.c.l.b16 %v4698
          %v5648 = vunpack.c.l.b16 %v4699
          %v5649 = vunpack.c.h.b16 %v4699
          %v5650 = vunpack.c.l.b16 %v4700
          %v5651 = vunpack.c.h.b16 %v4700
          %v5652 = vunpack.c.l.b16 %v4701
          %v5653 = vunpack.c.l.b16 %v4702
          %v5654 = vunpack.c.h.b16 %v4702
          %v5655 = vunpack.c.l.b16 %v4703
          %v5656 = vunpack.c.h.b16 %v4703
          %v5657 = vunpack.c.l.b16 %v4704
          %v5658 = vunpack.c.l.b16 %v4705
          %v5659 = vunpack.c.h.b16 %v4705
          %v5660 = vunpack.c.l.b16 %v4706
          %v5661 = vunpack.c.h.b16 %v4706
          %v5662 = vunpack.c.l.b16 %v4707
          %v5663 = vunpack.c.l.b16 %v4708
          %v5664 = vunpack.c.h.b16 %v4708
          %v5665 = vunpack.c.l.b16 %v4709
          %v5666 = vunpack.c.h.b16 %v4709
          %v5667 = vunpack.c.l.b16 %v4710
          %v5668 = vunpack.c.l.b16 %v4711
          %v5669 = vunpack.c.h.b16 %v4711
          %v5670 = vunpack.c.l.b16 %v4712
          %v5671 = vunpack.c.h.b16 %v4712
          %v5672 = vunpack.c.l.b16 %v4713
          %v5673 = vunpack.c.l.b16 %v4714
          %v5674 = vunpack.c.h.b16 %v4714
          %v5675 = vunpack.c.l.b16 %v4715
          %v5676 = vunpack.c.h.b16 %v4715
          %v5677 = vunpack.c.l.b16 %v4716
          %v5678 = vunpack.c.l.b16 %v4717
          %v5679 = vunpack.c.h.b16 %v4717
          %v5680 = vunpack.c.l.b16 %v4718
          %v5681 = vunpack.c.h.b16 %v4718
          %v5682 = vunpack.c.l.b16 %v4719
          %v5683 = vunpack.c.l.b16 %v4720
          %v5684 = vunpack.c.h.b16 %v4720
          %v5685 = vunpack.c.l.b16 %v4721
          %v5686 = vunpack.c.h.b16 %v4721
          %v5687 = vunpack.c.l.b16 %v4722
          %v5688 = vunpack.c.l.b16 %v4723
          %v5689 = vunpack.c.h.b16 %v4723
          %v5690 = vunpack.c.l.b16 %v4724
          %v5691 = vunpack.c.h.b16 %v4724
          %v5692 = vunpack.c.l.b16 %v4725
          %v5693 = vunpack.c.l.b16 %v4726
          %v5694 = vunpack.c.h.b16 %v4726
          %v5695 = vunpack.c.l.b16 %v4727
          %v5696 = vunpack.c.h.b16 %v4727
          %v5697 = vunpack.c.l.b16 %v4728
          %v5698 = vunpack.c.l.b16 %v4729
          %v5699 = vunpack.c.h.b16 %v4729
          %v5700 = vunpack.c.l.b16 %v4730
          %v5701 = vunpack.c.h.b16 %v4730
          %v5702 = vunpack.c.l.b16 %v4731
          %v5703 = vunpack.c.l.b16 %v4732
          %v5704 = vunpack.c.h.b16 %v4732
          %v5705 = vunpack.c.l.b16 %v4733
          %v5706 = vunpack.c.h.b16 %v4733
          %v5707 = vunpack.c.l.b16 %v4734
          %v5708 = vunpack.c.l.b16 %v4735
          %v5709 = vunpack.c.h.b16 %v4735
          %v5710 = vunpack.c.l.b16 %v4736
          %v5711 = vunpack.c.h.b16 %v4736
          %v5712 = vunpack.c.l.b16 %v4737
          %v5713 = vunpack.c.l.b16 %v4738
          %v5714 = vunpack.c.h.b16 %v4738
          %v5715 = vunpack.c.l.b16 %v4739
          %v5716 = vunpack.c.h.b16 %v4739
          %v5717 = vunpack.c.l.b16 %v4740
          %v5718 = vunpack.c.l.b16 %v4741
          %v5719 = vunpack.c.h.b16 %v4741
          %v5720 = vunpack.c.l.b16 %v4742
          %v5721 = vunpack.c.h.b16 %v4742
          %v5722 = vunpack.c.l.b16 %v4743
          %v5723 = vunpack.c.l.b16 %v4744
          %v5724 = vunpack.c.h.b16 %v4744
          %v5725 = vunpack.c.l.b16 %v4745
          %v5726 = vunpack.c.h.b16 %v4745
          %v5727 = vunpack.c.l.b16 %v4746
          %v5728 = vunpack.c.l.b16 %v4747
          %v5729 = vunpack.c.h.b16 %v4747
          %v5730 = vunpack.c.l.b16 %v4748
          %v5731 = vunpack.c.h.b16 %v4748
          %v5732 = vunpack.c.l.b16 %v4749
          %v5733 = vunpack.c.l.b16 %v4750
          %v5734 = vunpack.c.h.b16 %v4750
          %v5735 = vunpack.c.l.b16 %v4751
          %v5736 = vunpack.c.h.b16 %v4751
          %v5737 = vunpack.c.l.b16 %v4752
          %v5738 = vunpack.c.l.b16 %v4753
          %v5739 = vunpack.c.h.b16 %v4753
          %v5740 = vunpack.c.l.b16 %v4754
          %v5741 = vunpack.c.h.b16 %v4754
          %v5742 = vunpack.c.l.b16 %v4755
          %v5743 = vunpack.c.l.b16 %v4756
          %v5744 = vunpack.c.h.b16 %v4756
          %v5745 = vunpack.c.l.b16 %v4757
          %v5746 = vunpack.c.h.b16 %v4757
          %v5747 = vunpack.c.l.b16 %v4758
          %v5748 = vunpack.c.l.b16 %v4759
          %v5749 = vunpack.c.h.b16 %v4759
          %v5750 = vunpack.c.l.b16 %v4760
          %v5751 = vunpack.c.h.b16 %v4760
          %v5752 = vunpack.c.l.b16 %v4761
          %v5753 = vunpack.c.l.b16 %v4762
          %v5754 = vunpack.c.h.b16 %v4762
          %v5755 = vunpack.c.l.b16 %v4763
          %v5756 = vunpack.c.h.b16 %v4763
          %v5757 = vunpack.c.l.b16 %v4764
          %v5758 = vunpack.c.l.b16 %v4765
          %v5759 = vunpack.c.h.b16 %v4765
          %v5760 = vunpack.c.l.b16 %v4766
          %v5761 = vunpack.c.h.b16 %v4766
          %v5762 = vunpack.c.l.b16 %v4767
          %v5763 = vunpack.c.l.b16 %v4768
          %v5764 = vunpack.c.h.b16 %v4768
          %v5765 = vunpack.c.l.b16 %v4769
          %v5766 = vunpack.c.h.b16 %v4769
          %v5767 = vunpack.c.l.b16 %v4770
          %v5768 = vunpack.c.l.b16 %v4771
          %v5769 = vunpack.c.h.b16 %v4771
          %v5770 = vunpack.c.l.b16 %v4772
          %v5771 = vunpack.c.h.b16 %v4772
          %v5772 = vunpack.c.l.b16 %v4773
          %v5773 = vunpack.c.l.b16 %v4774
          %v5774 = vunpack.c.h.b16 %v4774
          %v5775 = vunpack.c.l.b16 %v4775
          %v5776 = vunpack.c.h.b16 %v4775
          %v5777 = vunpack.c.l.b16 %v4776
          %v5778 = vunpack.c.l.b16 %v4777
          %v5779 = vunpack.c.h.b16 %v4777
          %v5780 = vunpack.c.l.b16 %v4778
          %v5781 = vunpack.c.h.b16 %v4778
          %v5782 = vunpack.c.l.b16 %v4779
          %v5783 = vunpack.c.l.b16 %v4780
          %v5784 = vunpack.c.h.b16 %v4780
          %v5785 = vunpack.c.l.b16 %v4781
          %v5786 = vunpack.c.h.b16 %v4781
          %v5787 = vunpack.c.l.b16 %v4782
          %v5788 = vunpack.c.l.b16 %v4783
          %v5789 = vunpack.c.h.b16 %v4783
          %v5790 = vunpack.c.l.b16 %v4784
          %v5791 = vunpack.c.h.b16 %v4784
          %v5792 = vunpack.c.l.b16 %v4785
          %v5793 = vunpack.c.l.b16 %v4786
          %v5794 = vunpack.c.h.b16 %v4786
          %v5795 = vunpack.c.l.b16 %v4787
          %v5796 = vunpack.c.h.b16 %v4787
          %v5797 = vunpack.c.l.b16 %v4788
          %v5798 = vunpack.c.l.b16 %v4789
          %v5799 = vunpack.c.h.b16 %v4789
          %v5800 = vunpack.c.l.b16 %v4790
          %v5801 = vunpack.c.h.b16 %v4790
          %v5802 = vunpack.c.l.b16 %v4791
          %v5803 = vunpack.c.l.b16 %v4792
          %v5804 = vunpack.c.h.b16 %v4792
          %v5805 = vunpack.c.l.b16 %v4793
          %v5806 = vunpack.c.h.b16 %v4793
          %v5807 = vunpack.c.l.b16 %v4794
          %v5808 = vunpack.c.l.b16 %v4795
          %v5809 = vunpack.c.h.b16 %v4795
          %v5810 = vunpack.c.l.b16 %v4796
          %v5811 = vunpack.c.h.b16 %v4796
          %v5812 = vunpack.c.l.b16 %v4797
          %v5813 = vunpack.c.l.b16 %v4798
          %v5814 = vunpack.c.h.b16 %v4798
          %v5815 = vunpack.c.l.b16 %v4799
          %v5816 = vunpack.c.h.b16 %v4799
          %v5817 = vunpack.c.l.b16 %v4800
          %v5818 = vunpack.c.l.b16 %v4801
          %v5819 = vunpack.c.h.b16 %v4801
          %v5820 = vunpack.c.l.b16 %v4802
          %v5821 = vunpack.c.h.b16 %v4802
          %v5822 = vunpack.c.l.b16 %v4803
          %v5823 = vunpack.c.l.b16 %v4804
          %v5824 = vunpack.c.h.b16 %v4804
          %v5825 = vunpack.c.l.b16 %v4805
          %v5826 = vunpack.c.h.b16 %v4805
          %v5827 = vunpack.c.l.b16 %v4806
          %v5828 = vunpack.c.l.b16 %v4807
          %v5829 = vunpack.c.h.b16 %v4807
          %v5830 = vunpack.c.l.b16 %v4808
          %v5831 = vunpack.c.h.b16 %v4808
          %v5832 = vunpack.c.l.b16 %v4809
          %v5833 = vunpack.c.l.b16 %v4810
          %v5834 = vunpack.c.h.b16 %v4810
          %v5835 = vunpack.c.l.b16 %v4811
          %v5836 = vunpack.c.h.b16 %v4811
          %v5837 = vunpack.c.l.b16 %v4812
          %v5838 = vunpack.c.l.b16 %v4813
          %v5839 = vunpack.c.h.b16 %v4813
          %v5840 = vunpack.c.l.b16 %v4814
          %v5841 = vunpack.c.h.b16 %v4814
          %v5842 = vunpack.c.l.b16 %v4815
          %v5843 = vunpack.c.l.b16 %v4816
          %v5844 = vunpack.c.h.b16 %v4816
          %v5845 = vunpack.c.l.b16 %v4817
          %v5846 = vunpack.c.h.b16 %v4817
          %v5847 = vunpack.c.l.b16 %v4818
          %v5848 = vunpack.c.l.b16 %v4819
          %v5849 = vunpack.c.h.b16 %v4819
          %v5850 = vunpack.c.l.b16 %v4820
          %v5851 = vunpack.c.h.b16 %v4820
          %v5852 = vunpack.c.l.b16 %v4821
          %v5853 = vunpack.c.l.b16 %v4822
          %v5854 = vunpack.c.h.b16 %v4822
          %v5855 = vunpack.c.l.b16 %v4823
          %v5856 = vunpack.c.h.b16 %v4823
          %v5857 = vunpack.c.l.b16 %v4824
          %v5858 = vunpack.c.l.b16 %v4825
          %v5859 = vunpack.c.h.b16 %v4825
          %v5860 = vunpack.c.l.b16 %v4826
          %v5861 = vunpack.c.h.b16 %v4826
          %v5862 = vunpack.c.l.b16 %v4827
          %v5863 = vunpack.c.l.b16 %v4828
          %v5864 = vunpack.c.h.b16 %v4828
          %v5865 = vunpack.c.l.b16 %v4829
          %v5866 = vunpack.c.h.b16 %v4829
          %v5867 = vunpack.c.l.b16 %v4830
          %v5868 = vunpack.c.l.b16 %v4831
          %v5869 = vunpack.c.h.b16 %v4831
          %v5870 = vunpack.c.l.b16 %v4832
          %v5871 = vunpack.c.h.b16 %v4832
          %v5872 = vunpack.c.l.b16 %v4833
          %v5873 = vunpack.c.l.b16 %v4834
          %v5874 = vunpack.c.h.b16 %v4834
          %v5875 = vunpack.c.l.b16 %v4835
          %v5876 = vunpack.c.h.b16 %v4835
          %v5877 = vunpack.c.l.b16 %v4836
          %v5878 = vunpack.c.l.b16 %v4837
          %v5879 = vunpack.c.h.b16 %v4837
          %v5880 = vunpack.c.l.b16 %v4838
          %v5881 = vunpack.c.h.b16 %v4838
          %v5882 = vunpack.c.l.b16 %v4839
          %v5883 = vunpack.c.l.b16 %v4840
          %v5884 = vunpack.c.h.b16 %v4840
          %v5885 = vunpack.c.l.b16 %v4841
          %v5886 = vunpack.c.h.b16 %v4841
          %v5887 = vunpack.c.l.b16 %v4842
          %v5888 = vunpack.c.l.b16 %v4843
          %v5889 = vunpack.c.h.b16 %v4843
          %v5890 = vunpack.c.l.b16 %v4844
          %v5891 = vunpack.c.h.b16 %v4844
          %v5892 = vunpack.c.l.b16 %v4845
          %v5893 = vunpack.c.l.b16 %v4846
          %v5894 = vunpack.c.h.b16 %v4846
          %v5895 = vunpack.c.l.b16 %v4847
          %v5896 = vunpack.c.h.b16 %v4847
          %v5897 = vunpack.c.l.b16 %v4848
          %v5898 = vunpack.c.l.b16 %v4849
          %v5899 = vunpack.c.h.b16 %v4849
          %v5900 = vunpack.c.l.b16 %v4850
          %v5901 = vunpack.c.h.b16 %v4850
          %v5902 = vunpack.c.l.b16 %v4851
          %v5903 = vpack.c.b16 %v5268, %v5263
          %v5904 = vpack.c.b16 %v5269, %v5264
          %v5905 = vpack.c.b16 %v5270, %v5265
          %v5906 = vpack.c.b16 %v5271, %v5266
          %v5907 = vpack.c.b16 %v5272, %v5267
          %v5908 = vpack.c.b16 %v5278, %v5273
          %v5909 = vpack.c.b16 %v5279, %v5274
          %v5910 = vpack.c.b16 %v5280, %v5275
          %v5911 = vpack.c.b16 %v5281, %v5276
          %v5912 = vpack.c.b16 %v5282, %v5277
          %v5913 = vpack.c.b16 %v5288, %v5283
          %v5914 = vpack.c.b16 %v5289, %v5284
          %v5915 = vpack.c.b16 %v5290, %v5285
          %v5916 = vpack.c.b16 %v5291, %v5286
          %v5917 = vpack.c.b16 %v5292, %v5287
          %v5918 = vpack.c.b16 %v5298, %v5293
          %v5919 = vpack.c.b16 %v5299, %v5294
          %v5920 = vpack.c.b16 %v5300, %v5295
          %v5921 = vpack.c.b16 %v5301, %v5296
          %v5922 = vpack.c.b16 %v5302, %v5297
          %v5923 = vpack.c.b16 %v5308, %v5303
          %v5924 = vpack.c.b16 %v5309, %v5304
          %v5925 = vpack.c.b16 %v5310, %v5305
          %v5926 = vpack.c.b16 %v5311, %v5306
          %v5927 = vpack.c.b16 %v5312, %v5307
          %v5928 = vpack.c.b16 %v5318, %v5313
          %v5929 = vpack.c.b16 %v5319, %v5314
          %v5930 = vpack.c.b16 %v5320, %v5315
          %v5931 = vpack.c.b16 %v5321, %v5316
          %v5932 = vpack.c.b16 %v5322, %v5317
          %v5933 = vpack.c.b16 %v5328, %v5323
          %v5934 = vpack.c.b16 %v5329, %v5324
          %v5935 = vpack.c.b16 %v5330, %v5325
          %v5936 = vpack.c.b16 %v5331, %v5326
          %v5937 = vpack.c.b16 %v5332, %v5327
          %v5938 = vpack.c.b16 %v5338, %v5333
          %v5939 = vpack.c.b16 %v5339, %v5334
          %v5940 = vpack.c.b16 %v5340, %v5335
          %v5941 = vpack.c.b16 %v5341, %v5336
          %v5942 = vpack.c.b16 %v5342, %v5337
          %v5943 = vpack.c.b16 %v5348, %v5343
          %v5944 = vpack.c.b16 %v5349, %v5344
          %v5945 = vpack.c.b16 %v5350, %v5345
          %v5946 = vpack.c.b16 %v5351, %v5346
          %v5947 = vpack.c.b16 %v5352, %v5347
          %v5948 = vpack.c.b16 %v5358, %v5353
          %v5949 = vpack.c.b16 %v5359, %v5354
          %v5950 = vpack.c.b16 %v5360, %v5355
          %v5951 = vpack.c.b16 %v5361, %v5356
          %v5952 = vpack.c.b16 %v5362, %v5357
          %v5953 = vpack.c.b16 %v5368, %v5363
          %v5954 = vpack.c.b16 %v5369, %v5364
          %v5955 = vpack.c.b16 %v5370, %v5365
          %v5956 = vpack.c.b16 %v5371, %v5366
          %v5957 = vpack.c.b16 %v5372, %v5367
          %v5958 = vpack.c.b16 %v5378, %v5373
          %v5959 = vpack.c.b16 %v5379, %v5374
          %v5960 = vpack.c.b16 %v5380, %v5375
          %v5961 = vpack.c.b16 %v5381, %v5376
          %v5962 = vpack.c.b16 %v5382, %v5377
          %v5963 = vpack.c.b16 %v5388, %v5383
          %v5964 = vpack.c.b16 %v5389, %v5384
          %v5965 = vpack.c.b16 %v5390, %v5385
          %v5966 = vpack.c.b16 %v5391, %v5386
          %v5967 = vpack.c.b16 %v5392, %v5387
          %v5968 = vpack.c.b16 %v5398, %v5393
          %v5969 = vpack.c.b16 %v5399, %v5394
          %v5970 = vpack.c.b16 %v5400, %v5395
          %v5971 = vpack.c.b16 %v5401, %v5396
          %v5972 = vpack.c.b16 %v5402, %v5397
          %v5973 = vpack.c.b16 %v5408, %v5403
          %v5974 = vpack.c.b16 %v5409, %v5404
          %v5975 = vpack.c.b16 %v5410, %v5405
          %v5976 = vpack.c.b16 %v5411, %v5406
          %v5977 = vpack.c.b16 %v5412, %v5407
          %v5978 = vpack.c.b16 %v5418, %v5413
          %v5979 = vpack.c.b16 %v5419, %v5414
          %v5980 = vpack.c.b16 %v5420, %v5415
          %v5981 = vpack.c.b16 %v5421, %v5416
          %v5982 = vpack.c.b16 %v5422, %v5417
          %v5983 = vpack.c.b16 %v5428, %v5423
          %v5984 = vpack.c.b16 %v5429, %v5424
          %v5985 = vpack.c.b16 %v5430, %v5425
          %v5986 = vpack.c.b16 %v5431, %v5426
          %v5987 = vpack.c.b16 %v5432, %v5427
          %v5988 = vpack.c.b16 %v5438, %v5433
          %v5989 = vpack.c.b16 %v5439, %v5434
          %v5990 = vpack.c.b16 %v5440, %v5435
          %v5991 = vpack.c.b16 %v5441, %v5436
          %v5992 = vpack.c.b16 %v5442, %v5437
          %v5993 = vpack.c.b16 %v5448, %v5443
          %v5994 = vpack.c.b16 %v5449, %v5444
          %v5995 = vpack.c.b16 %v5450, %v5445
          %v5996 = vpack.c.b16 %v5451, %v5446
          %v5997 = vpack.c.b16 %v5452, %v5447
          %v5998 = vpack.c.b16 %v5458, %v5453
          %v5999 = vpack.c.b16 %v5459, %v5454
          %v6000 = vpack.c.b16 %v5460, %v5455
          %v6001 = vpack.c.b16 %v5461, %v5456
          %v6002 = vpack.c.b16 %v5462, %v5457
          %v6003 = vpack.c.b16 %v5468, %v5463
          %v6004 = vpack.c.b16 %v5469, %v5464
          %v6005 = vpack.c.b16 %v5470, %v5465
          %v6006 = vpack.c.b16 %v5471, %v5466
          %v6007 = vpack.c.b16 %v5472, %v5467
          %v6008 = vpack.c.b16 %v5478, %v5473
          %v6009 = vpack.c.b16 %v5479, %v5474
          %v6010 = vpack.c.b16 %v5480, %v5475
          %v6011 = vpack.c.b16 %v5481, %v5476
          %v6012 = vpack.c.b16 %v5482, %v5477
          %v6013 = vpack.c.b16 %v5488, %v5483
          %v6014 = vpack.c.b16 %v5489, %v5484
          %v6015 = vpack.c.b16 %v5490, %v5485
          %v6016 = vpack.c.b16 %v5491, %v5486
          %v6017 = vpack.c.b16 %v5492, %v5487
          %v6018 = vpack.c.b16 %v5498, %v5493
          %v6019 = vpack.c.b16 %v5499, %v5494
          %v6020 = vpack.c.b16 %v5500, %v5495
          %v6021 = vpack.c.b16 %v5501, %v5496
          %v6022 = vpack.c.b16 %v5502, %v5497
          %v6023 = vpack.c.b16 %v5508, %v5503
          %v6024 = vpack.c.b16 %v5509, %v5504
          %v6025 = vpack.c.b16 %v5510, %v5505
          %v6026 = vpack.c.b16 %v5511, %v5506
          %v6027 = vpack.c.b16 %v5512, %v5507
          %v6028 = vpack.c.b16 %v5518, %v5513
          %v6029 = vpack.c.b16 %v5519, %v5514
          %v6030 = vpack.c.b16 %v5520, %v5515
          %v6031 = vpack.c.b16 %v5521, %v5516
          %v6032 = vpack.c.b16 %v5522, %v5517
          %v6033 = vpack.c.b16 %v5528, %v5523
          %v6034 = vpack.c.b16 %v5529, %v5524
          %v6035 = vpack.c.b16 %v5530, %v5525
          %v6036 = vpack.c.b16 %v5531, %v5526
          %v6037 = vpack.c.b16 %v5532, %v5527
          %v6038 = vpack.c.b16 %v5538, %v5533
          %v6039 = vpack.c.b16 %v5539, %v5534
          %v6040 = vpack.c.b16 %v5540, %v5535
          %v6041 = vpack.c.b16 %v5541, %v5536
          %v6042 = vpack.c.b16 %v5542, %v5537
          %v6043 = vpack.c.b16 %v5548, %v5543
          %v6044 = vpack.c.b16 %v5549, %v5544
          %v6045 = vpack.c.b16 %v5550, %v5545
          %v6046 = vpack.c.b16 %v5551, %v5546
          %v6047 = vpack.c.b16 %v5552, %v5547
          %v6048 = vpack.c.b16 %v5558, %v5553
          %v6049 = vpack.c.b16 %v5559, %v5554
          %v6050 = vpack.c.b16 %v5560, %v5555
          %v6051 = vpack.c.b16 %v5561, %v5556
          %v6052 = vpack.c.b16 %v5562, %v5557
          %v6053 = vpack.c.b16 %v5568, %v5563
          %v6054 = vpack.c.b16 %v5569, %v5564
          %v6055 = vpack.c.b16 %v5570, %v5565
          %v6056 = vpack.c.b16 %v5571, %v5566
          %v6057 = vpack.c.b16 %v5572, %v5567
          %v6058 = vpack.c.b16 %v5578, %v5573
          %v6059 = vpack.c.b16 %v5579, %v5574
          %v6060 = vpack.c.b16 %v5580, %v5575
          %v6061 = vpack.c.b16 %v5581, %v5576
          %v6062 = vpack.c.b16 %v5582, %v5577
          %v6063 = vpack.c.b16 %v5588, %v5583
          %v6064 = vpack.c.b16 %v5589, %v5584
          %v6065 = vpack.c.b16 %v5590, %v5585
          %v6066 = vpack.c.b16 %v5591, %v5586
          %v6067 = vpack.c.b16 %v5592, %v5587
          %v6068 = vpack.c.b16 %v5598, %v5593
          %v6069 = vpack.c.b16 %v5599, %v5594
          %v6070 = vpack.c.b16 %v5600, %v5595
          %v6071 = vpack.c.b16 %v5601, %v5596
          %v6072 = vpack.c.b16 %v5602, %v5597
          %v6073 = vpack.c.b16 %v5608, %v5603
          %v6074 = vpack.c.b16 %v5609, %v5604
          %v6075 = vpack.c.b16 %v5610, %v5605
          %v6076 = vpack.c.b16 %v5611, %v5606
          %v6077 = vpack.c.b16 %v5612, %v5607
          %v6078 = vpack.c.b16 %v5618, %v5613
          %v6079 = vpack.c.b16 %v5619, %v5614
          %v6080 = vpack.c.b16 %v5620, %v5615
          %v6081 = vpack.c.b16 %v5621, %v5616
          %v6082 = vpack.c.b16 %v5622, %v5617
          %v6083 = vpack.c.b16 %v5628, %v5623
          %v6084 = vpack.c.b16 %v5629, %v5624
          %v6085 = vpack.c.b16 %v5630, %v5625
          %v6086 = vpack.c.b16 %v5631, %v5626
          %v6087 = vpack.c.b16 %v5632, %v5627
          %v6088 = vpack.c.b16 %v5638, %v5633
          %v6089 = vpack.c.b16 %v5639, %v5634
          %v6090 = vpack.c.b16 %v5640, %v5635
          %v6091 = vpack.c.b16 %v5641, %v5636
          %v6092 = vpack.c.b16 %v5642, %v5637
          %v6093 = vpack.c.b16 %v5648, %v5643
          %v6094 = vpack.c.b16 %v5649, %v5644
          %v6095 = vpack.c.b16 %v5650, %v5645
          %v6096 = vpack.c.b16 %v5651, %v5646
          %v6097 = vpack.c.b16 %v5652, %v5647
          %v6098 = vpack.c.b16 %v5658, %v5653
          %v6099 = vpack.c.b16 %v5659, %v5654
          %v6100 = vpack.c.b16 %v5660, %v5655
          %v6101 = vpack.c.b16 %v5661, %v5656
          %v6102 = vpack.c.b16 %v5662, %v5657
          %v6103 = vpack.c.b16 %v5668, %v5663
          %v6104 = vpack.c.b16 %v5669, %v5664
          %v6105 = vpack.c.b16 %v5670, %v5665
          %v6106 = vpack.c.b16 %v5671, %v5666
          %v6107 = vpack.c.b16 %v5672, %v5667
          %v6108 = vpack.c.b16 %v5678, %v5673
          %v6109 = vpack.c.b16 %v5679, %v5674
          %v6110 = vpack.c.b16 %v5680, %v5675
          %v6111 = vpack.c.b16 %v5681, %v5676
          %v6112 = vpack.c.b16 %v5682, %v5677
          %v6113 = vpack.c.b16 %v5688, %v5683
          %v6114 = vpack.c.b16 %v5689, %v5684
          %v6115 = vpack.c.b16 %v5690, %v5685
          %v6116 = vpack.c.b16 %v5691, %v5686
          %v6117 = vpack.c.b16 %v5692, %v5687
          %v6118 = vpack.c.b16 %v5698, %v5693
          %v6119 = vpack.c.b16 %v5699, %v5694
          %v6120 = vpack.c.b16 %v5700, %v5695
          %v6121 = vpack.c.b16 %v5701, %v5696
          %v6122 = vpack.c.b16 %v5702, %v5697
          %v6123 = vpack.c.b16 %v5708, %v5703
          %v6124 = vpack.c.b16 %v5709, %v5704
          %v6125 = vpack.c.b16 %v5710, %v5705
          %v6126 = vpack.c.b16 %v5711, %v5706
          %v6127 = vpack.c.b16 %v5712, %v5707
          %v6128 = vpack.c.b16 %v5718, %v5713
          %v6129 = vpack.c.b16 %v5719, %v5714
          %v6130 = vpack.c.b16 %v5720, %v5715
          %v6131 = vpack.c.b16 %v5721, %v5716
          %v6132 = vpack.c.b16 %v5722, %v5717
          %v6133 = vpack.c.b16 %v5728, %v5723
          %v6134 = vpack.c.b16 %v5729, %v5724
          %v6135 = vpack.c.b16 %v5730, %v5725
          %v6136 = vpack.c.b16 %v5731, %v5726
          %v6137 = vpack.c.b16 %v5732, %v5727
          %v6138 = vpack.c.b16 %v5738, %v5733
          %v6139 = vpack.c.b16 %v5739, %v5734
          %v6140 = vpack.c.b16 %v5740, %v5735
          %v6141 = vpack.c.b16 %v5741, %v5736
          %v6142 = vpack.c.b16 %v5742, %v5737
          %v6143 = vpack.c.b16 %v5748, %v5743
          %v6144 = vpack.c.b16 %v5749, %v5744
          %v6145 = vpack.c.b16 %v5750, %v5745
          %v6146 = vpack.c.b16 %v5751, %v5746
          %v6147 = vpack.c.b16 %v5752, %v5747
          %v6148 = vpack.c.b16 %v5758, %v5753
          %v6149 = vpack.c.b16 %v5759, %v5754
          %v6150 = vpack.c.b16 %v5760, %v5755
          %v6151 = vpack.c.b16 %v5761, %v5756
          %v6152 = vpack.c.b16 %v5762, %v5757
          %v6153 = vpack.c.b16 %v5768, %v5763
          %v6154 = vpack.c.b16 %v5769, %v5764
          %v6155 = vpack.c.b16 %v5770, %v5765
          %v6156 = vpack.c.b16 %v5771, %v5766
          %v6157 = vpack.c.b16 %v5772, %v5767
          %v6158 = vpack.c.b16 %v5778, %v5773
          %v6159 = vpack.c.b16 %v5779, %v5774
          %v6160 = vpack.c.b16 %v5780, %v5775
          %v6161 = vpack.c.b16 %v5781, %v5776
          %v6162 = vpack.c.b16 %v5782, %v5777
          %v6163 = vpack.c.b16 %v5788, %v5783
          %v6164 = vpack.c.b16 %v5789, %v5784
          %v6165 = vpack.c.b16 %v5790, %v5785
          %v6166 = vpack.c.b16 %v5791, %v5786
          %v6167 = vpack.c.b16 %v5792, %v5787
          %v6168 = vpack.c.b16 %v5798, %v5793
          %v6169 = vpack.c.b16 %v5799, %v5794
          %v6170 = vpack.c.b16 %v5800, %v5795
          %v6171 = vpack.c.b16 %v5801, %v5796
          %v6172 = vpack.c.b16 %v5802, %v5797
          %v6173 = vpack.c.b16 %v5808, %v5803
          %v6174 = vpack.c.b16 %v5809, %v5804
          %v6175 = vpack.c.b16 %v5810, %v5805
          %v6176 = vpack.c.b16 %v5811, %v5806
          %v6177 = vpack.c.b16 %v5812, %v5807
          %v6178 = vpack.c.b16 %v5818, %v5813
          %v6179 = vpack.c.b16 %v5819, %v5814
          %v6180 = vpack.c.b16 %v5820, %v5815
          %v6181 = vpack.c.b16 %v5821, %v5816
          %v6182 = vpack.c.b16 %v5822, %v5817
          %v6183 = vpack.c.b16 %v5828, %v5823
          %v6184 = vpack.c.b16 %v5829, %v5824
          %v6185 = vpack.c.b16 %v5830, %v5825
          %v6186 = vpack.c.b16 %v5831, %v5826
          %v6187 = vpack.c.b16 %v5832, %v5827
          %v6188 = vpack.c.b16 %v5838, %v5833
          %v6189 = vpack.c.b16 %v5839, %v5834
          %v6190 = vpack.c.b16 %v5840, %v5835
          %v6191 = vpack.c.b16 %v5841, %v5836
          %v6192 = vpack.c.b16 %v5842, %v5837
          %v6193 = vpack.c.b16 %v5848, %v5843
          %v6194 = vpack.c.b16 %v5849, %v5844
          %v6195 = vpack.c.b16 %v5850, %v5845
          %v6196 = vpack.c.b16 %v5851, %v5846
          %v6197 = vpack.c.b16 %v5852, %v5847
          %v6198 = vpack.c.b16 %v5858, %v5853
          %v6199 = vpack.c.b16 %v5859, %v5854
          %v6200 = vpack.c.b16 %v5860, %v5855
          %v6201 = vpack.c.b16 %v5861, %v5856
          %v6202 = vpack.c.b16 %v5862, %v5857
          %v6203 = vpack.c.b16 %v5868, %v5863
          %v6204 = vpack.c.b16 %v5869, %v5864
          %v6205 = vpack.c.b16 %v5870, %v5865
          %v6206 = vpack.c.b16 %v5871, %v5866
          %v6207 = vpack.c.b16 %v5872, %v5867
          %v6208 = vpack.c.b16 %v5878, %v5873
          %v6209 = vpack.c.b16 %v5879, %v5874
          %v6210 = vpack.c.b16 %v5880, %v5875
          %v6211 = vpack.c.b16 %v5881, %v5876
          %v6212 = vpack.c.b16 %v5882, %v5877
          %v6213 = vpack.c.b16 %v5888, %v5883
          %v6214 = vpack.c.b16 %v5889, %v5884
          %v6215 = vpack.c.b16 %v5890, %v5885
          %v6216 = vpack.c.b16 %v5891, %v5886
          %v6217 = vpack.c.b16 %v5892, %v5887
          %v6218 = vpack.c.b16 %v5898, %v5893
          %v6219 = vpack.c.b16 %v5899, %v5894
          %v6220 = vpack.c.b16 %v5900, %v5895
          %v6221 = vpack.c.b16 %v5901, %v5896
          %v6222 = vpack.c.b16 %v5902, %v5897
          %6543 = vmatprep.subr.bf16.mxu0 %v5904
          %6544 = vmatpush1.bf16.msra.mxu0 %v5903
          %6545 = vmatprep.subr.bf16.mxu0 %v5909
          %6546 = vmatpush1.bf16.msra.mxu0 %v5908
          %6547 = vmatprep.subr.bf16.mxu0 %v5914
          %6548 = vmatpush1.bf16.msra.mxu0 %v5913
          %6549 = vmatprep.subr.bf16.mxu0 %v5919
          %6550 = vmatpush1.bf16.msra.mxu0 %v5918
          %6551 = vmatprep.subr.bf16.mxu0 %v5924
          %6552 = vmatpush1.bf16.msra.mxu0 %v5923
          %6553 = vmatprep.subr.bf16.mxu0 %v5929
          %6554 = vmatpush1.bf16.msra.mxu0 %v5928
          %6555 = vmatprep.subr.bf16.mxu0 %v5934
          %6556 = vmatpush1.bf16.msra.mxu0 %v5933
          %6557 = vmatprep.subr.bf16.mxu0 %v5939
          %6558 = vmatpush1.bf16.msra.mxu0 %v5938
          %6559 = vmatprep.subr.bf16.mxu0 %v5944
          %6560 = vmatpush1.bf16.msra.mxu0 %v5943
          %6561 = vmatprep.subr.bf16.mxu0 %v5949
          %6562 = vmatpush1.bf16.msra.mxu0 %v5948
          %6563 = vmatprep.subr.bf16.mxu0 %v5954
          %6564 = vmatpush1.bf16.msra.mxu0 %v5953
          %6565 = vmatprep.subr.bf16.mxu0 %v5959
          %6566 = vmatpush1.bf16.msra.mxu0 %v5958
          %6567 = vmatprep.subr.bf16.mxu0 %v5964
          %6568 = vmatpush1.bf16.msra.mxu0 %v5963
          %6569 = vmatprep.subr.bf16.mxu0 %v5969
          %6570 = vmatpush1.bf16.msra.mxu0 %v5968
          %6571 = vmatprep.subr.bf16.mxu0 %v5974
          %6572 = vmatpush1.bf16.msra.mxu0 %v5973
          %6573 = vmatprep.subr.bf16.mxu0 %v5979
          %6574 = vmatpush1.bf16.msra.mxu0 %v5978
          %6575 = vmatprep.mubr.bf16.mxu0 %v4461
          %6576 = vmatmul.mubr.bf16.gmra.mrb[0].mxu0 %v4460
          %v6577 = vpop.f32.mrb[0].mxu0
          %v6578 = vadd.f32 %v4857, %v6577
          %v6579 = vpop.f32.mrb[0].mxu0
          %v6580 = vadd.f32 %v4861, %v6579
          %v6581 = vpop.f32.mrb[0].mxu0
          %v6582 = vadd.f32 %v4857, %v6581
          %v6583 = vpop.f32.mrb[0].mxu0
          %v6584 = vadd.f32 %v4861, %v6583
          %6585 = vdwg.mxu0
          %6586 = vmatprep.subr.bf16.mxu0 %v5984
          %6587 = vmatpush1.bf16.msra.mxu0 %v5983
          %6588 = vmatprep.subr.bf16.mxu0 %v5989
          %6589 = vmatpush1.bf16.msra.mxu0 %v5988
          %6590 = vmatprep.subr.bf16.mxu0 %v5994
          %6591 = vmatpush1.bf16.msra.mxu0 %v5993
          %6592 = vmatprep.subr.bf16.mxu0 %v5999
          %6593 = vmatpush1.bf16.msra.mxu0 %v5998
          %6594 = vmatprep.subr.bf16.mxu0 %v6004
          %6595 = vmatpush1.bf16.msra.mxu0 %v6003
          %6596 = vmatprep.subr.bf16.mxu0 %v6009
          %6597 = vmatpush1.bf16.msra.mxu0 %v6008
          %6598 = vmatprep.subr.bf16.mxu0 %v6014
          %6599 = vmatpush1.bf16.msra.mxu0 %v6013
          %6600 = vmatprep.subr.bf16.mxu0 %v6019
          %6601 = vmatpush1.bf16.msra.mxu0 %v6018
          %6602 = vmatprep.subr.bf16.mxu0 %v6024
          %6603 = vmatpush1.bf16.msra.mxu0 %v6023
          %6604 = vmatprep.subr.bf16.mxu0 %v6029
          %6605 = vmatpush1.bf16.msra.mxu0 %v6028
          %6606 = vmatprep.subr.bf16.mxu0 %v6034
          %6607 = vmatpush1.bf16.msra.mxu0 %v6033
          %6608 = vmatprep.subr.bf16.mxu0 %v6039
          %6609 = vmatpush1.bf16.msra.mxu0 %v6038
          %6610 = vmatprep.subr.bf16.mxu0 %v6044
          %6611 = vmatpush1.bf16.msra.mxu0 %v6043
          %6612 = vmatprep.subr.bf16.mxu0 %v6049
          %6613 = vmatpush1.bf16.msra.mxu0 %v6048
          %6614 = vmatprep.subr.bf16.mxu0 %v6054
          %6615 = vmatpush1.bf16.msra.mxu0 %v6053
          %6616 = vmatprep.subr.bf16.mxu0 %v6059
          %6617 = vmatpush1.bf16.msra.mxu0 %v6058
          %6618 = vmatprep.mubr.bf16.mxu0 %v4463
          %6619 = vmatmul.mubr.bf16.gmra.mrb[0].mxu0 %v4462
          %v6620 = vpop.f32.mrb[0].mxu0
          %v6621 = vadd.f32 %v6578, %v6620
          %v6622 = vpop.f32.mrb[0].mxu0
          %v6623 = vadd.f32 %v6580, %v6622
          %v6624 = vpop.f32.mrb[0].mxu0
          %v6625 = vadd.f32 %v6582, %v6624
          %v6626 = vpop.f32.mrb[0].mxu0
          %v6627 = vadd.f32 %v6584, %v6626
          %6628 = vdwg.mxu0
          %6629 = vmatprep.subr.bf16.mxu0 %v6064
          %6630 = vmatpush1.bf16.msra.mxu0 %v6063
          %6631 = vmatprep.subr.bf16.mxu0 %v6069
          %6632 = vmatpush1.bf16.msra.mxu0 %v6068
          %6633 = vmatprep.subr.bf16.mxu0 %v6074
          %6634 = vmatpush1.bf16.msra.mxu0 %v6073
          %6635 = vmatprep.subr.bf16.mxu0 %v6079
          %6636 = vmatpush1.bf16.msra.mxu0 %v6078
          %6637 = vmatprep.subr.bf16.mxu0 %v6084
          %6638 = vmatpush1.bf16.msra.mxu0 %v6083
          %6639 = vmatprep.subr.bf16.mxu0 %v6089
          %6640 = vmatpush1.bf16.msra.mxu0 %v6088
          %6641 = vmatprep.subr.bf16.mxu0 %v6094
          %6642 = vmatpush1.bf16.msra.mxu0 %v6093
          %6643 = vmatprep.subr.bf16.mxu0 %v6099
          %6644 = vmatpush1.bf16.msra.mxu0 %v6098
          %6645 = vmatprep.subr.bf16.mxu0 %v6104
          %6646 = vmatpush1.bf16.msra.mxu0 %v6103
          %6647 = vmatprep.subr.bf16.mxu0 %v6109
          %6648 = vmatpush1.bf16.msra.mxu0 %v6108
          %6649 = vmatprep.subr.bf16.mxu0 %v6114
          %6650 = vmatpush1.bf16.msra.mxu0 %v6113
          %6651 = vmatprep.subr.bf16.mxu0 %v6119
          %6652 = vmatpush1.bf16.msra.mxu0 %v6118
          %6653 = vmatprep.subr.bf16.mxu0 %v6124
          %6654 = vmatpush1.bf16.msra.mxu0 %v6123
          %6655 = vmatprep.subr.bf16.mxu0 %v6129
          %6656 = vmatpush1.bf16.msra.mxu0 %v6128
          %6657 = vmatprep.subr.bf16.mxu0 %v6134
          %6658 = vmatpush1.bf16.msra.mxu0 %v6133
          %6659 = vmatprep.subr.bf16.mxu0 %v6139
          %6660 = vmatpush1.bf16.msra.mxu0 %v6138
          %6661 = vmatprep.mubr.bf16.mxu0 %v4465
          %6662 = vmatmul.mubr.bf16.gmra.mrb[0].mxu0 %v4464
          %v6663 = vpop.f32.mrb[0].mxu0
          %v6664 = vadd.f32 %v6621, %v6663
          %v6665 = vpop.f32.mrb[0].mxu0
          %v6666 = vadd.f32 %v6623, %v6665
          %v6667 = vpop.f32.mrb[0].mxu0
          %v6668 = vadd.f32 %v6625, %v6667
          %v6669 = vpop.f32.mrb[0].mxu0
          %v6670 = vadd.f32 %v6627, %v6669
          %6671 = vdwg.mxu0
          %6672 = vmatprep.subr.bf16.mxu0 %v6144
          %6673 = vmatpush1.bf16.msra.mxu0 %v6143
          %6674 = vmatprep.subr.bf16.mxu0 %v6149
          %6675 = vmatpush1.bf16.msra.mxu0 %v6148
          %6676 = vmatprep.subr.bf16.mxu0 %v6154
          %6677 = vmatpush1.bf16.msra.mxu0 %v6153
          %6678 = vmatprep.subr.bf16.mxu0 %v6159
          %6679 = vmatpush1.bf16.msra.mxu0 %v6158
          %6680 = vmatprep.subr.bf16.mxu0 %v6164
          %6681 = vmatpush1.bf16.msra.mxu0 %v6163
          %6682 = vmatprep.subr.bf16.mxu0 %v6169
          %6683 = vmatpush1.bf16.msra.mxu0 %v6168
          %6684 = vmatprep.subr.bf16.mxu0 %v6174
          %6685 = vmatpush1.bf16.msra.mxu0 %v6173
          %6686 = vmatprep.subr.bf16.mxu0 %v6179
          %6687 = vmatpush1.bf16.msra.mxu0 %v6178
          %6688 = vmatprep.subr.bf16.mxu0 %v6184
          %6689 = vmatpush1.bf16.msra.mxu0 %v6183
          %6690 = vmatprep.subr.bf16.mxu0 %v6189
          %6691 = vmatpush1.bf16.msra.mxu0 %v6188
          %6692 = vmatprep.subr.bf16.mxu0 %v6194
          %6693 = vmatpush1.bf16.msra.mxu0 %v6193
          %6694 = vmatprep.subr.bf16.mxu0 %v6199
          %6695 = vmatpush1.bf16.msra.mxu0 %v6198
          %6696 = vmatprep.subr.bf16.mxu0 %v6204
          %6697 = vmatpush1.bf16.msra.mxu0 %v6203
          %6698 = vmatprep.subr.bf16.mxu0 %v6209
          %6699 = vmatpush1.bf16.msra.mxu0 %v6208
          %6700 = vmatprep.subr.bf16.mxu0 %v6214
          %6701 = vmatpush1.bf16.msra.mxu0 %v6213
          %6702 = vmatprep.subr.bf16.mxu0 %v6219
          %6703 = vmatpush1.bf16.msra.mxu0 %v6218
          %6704 = vmatprep.mubr.bf16.mxu0 %v4467
          %6705 = vmatmul.mubr.bf16.gmra.mrb[0].mxu0 %v4466
          %v6706 = vpop.f32.mrb[0].mxu0
          %v6707 = vadd.f32 %v6664, %v6706
          %v6708 = vpop.f32.mrb[0].mxu0
          %v6709 = vadd.f32 %v6666, %v6708
          %v6710 = vpop.f32.mrb[0].mxu0
          %v6711 = vadd.f32 %v6668, %v6710
          %v6712 = vpop.f32.mrb[0].mxu0
          %v6713 = vadd.f32 %v6670, %v6712
          %6714 = vdwg.mxu0
          %6715 = vmatprep.subr.bf16.mxu0 %v5906
          %6716 = vmatpush1.bf16.msra.mxu0 %v5905
          %6717 = vmatprep.subr.bf16.mxu0 %v5911
          %6718 = vmatpush1.bf16.msra.mxu0 %v5910
          %6719 = vmatprep.subr.bf16.mxu0 %v5916
          %6720 = vmatpush1.bf16.msra.mxu0 %v5915
          %6721 = vmatprep.subr.bf16.mxu0 %v5921
          %6722 = vmatpush1.bf16.msra.mxu0 %v5920
          %6723 = vmatprep.subr.bf16.mxu0 %v5926
          %6724 = vmatpush1.bf16.msra.mxu0 %v5925
          %6725 = vmatprep.subr.bf16.mxu0 %v5931
          %6726 = vmatpush1.bf16.msra.mxu0 %v5930
          %6727 = vmatprep.subr.bf16.mxu0 %v5936
          %6728 = vmatpush1.bf16.msra.mxu0 %v5935
          %6729 = vmatprep.subr.bf16.mxu0 %v5941
          %6730 = vmatpush1.bf16.msra.mxu0 %v5940
          %6731 = vmatprep.subr.bf16.mxu0 %v5946
          %6732 = vmatpush1.bf16.msra.mxu0 %v5945
          %6733 = vmatprep.subr.bf16.mxu0 %v5951
          %6734 = vmatpush1.bf16.msra.mxu0 %v5950
          %6735 = vmatprep.subr.bf16.mxu0 %v5956
          %6736 = vmatpush1.bf16.msra.mxu0 %v5955
          %6737 = vmatprep.subr.bf16.mxu0 %v5961
          %6738 = vmatpush1.bf16.msra.mxu0 %v5960
          %6739 = vmatprep.subr.bf16.mxu0 %v5966
          %6740 = vmatpush1.bf16.msra.mxu0 %v5965
          %6741 = vmatprep.subr.bf16.mxu0 %v5971
          %6742 = vmatpush1.bf16.msra.mxu0 %v5970
          %6743 = vmatprep.subr.bf16.mxu0 %v5976
          %6744 = vmatpush1.bf16.msra.mxu0 %v5975
          %6745 = vmatprep.subr.bf16.mxu0 %v5981
          %6746 = vmatpush1.bf16.msra.mxu0 %v5980
          %6747 = vmatprep.mubr.bf16.mxu0 %v4461
          %6748 = vmatmul.mubr.bf16.gmra.mrb[0].mxu0 %v4460
          %v6749 = vpop.f32.mrb[0].mxu0
          %v6750 = vadd.f32 %v4865, %v6749
          %v6751 = vpop.f32.mrb[0].mxu0
          %v6752 = vadd.f32 %v4869, %v6751
          %v6753 = vpop.f32.mrb[0].mxu0
          %v6754 = vadd.f32 %v4865, %v6753
          %v6755 = vpop.f32.mrb[0].mxu0
          %v6756 = vadd.f32 %v4869, %v6755
          %6757 = vdwg.mxu0
          %6758 = vmatprep.subr.bf16.mxu0 %v5986
          %6759 = vmatpush1.bf16.msra.mxu0 %v5985
          %6760 = vmatprep.subr.bf16.mxu0 %v5991
          %6761 = vmatpush1.bf16.msra.mxu0 %v5990
          %6762 = vmatprep.subr.bf16.mxu0 %v5996
          %6763 = vmatpush1.bf16.msra.mxu0 %v5995
          %6764 = vmatprep.subr.bf16.mxu0 %v6001
          %6765 = vmatpush1.bf16.msra.mxu0 %v6000
          %6766 = vmatprep.subr.bf16.mxu0 %v6006
          %6767 = vmatpush1.bf16.msra.mxu0 %v6005
          %6768 = vmatprep.subr.bf16.mxu0 %v6011
          %6769 = vmatpush1.bf16.msra.mxu0 %v6010
          %6770 = vmatprep.subr.bf16.mxu0 %v6016
          %6771 = vmatpush1.bf16.msra.mxu0 %v6015
          %6772 = vmatprep.subr.bf16.mxu0 %v6021
          %6773 = vmatpush1.bf16.msra.mxu0 %v6020
          %6774 = vmatprep.subr.bf16.mxu0 %v6026
          %6775 = vmatpush1.bf16.msra.mxu0 %v6025
          %6776 = vmatprep.subr.bf16.mxu0 %v6031
          %6777 = vmatpush1.bf16.msra.mxu0 %v6030
          %6778 = vmatprep.subr.bf16.mxu0 %v6036
          %6779 = vmatpush1.bf16.msra.mxu0 %v6035
          %6780 = vmatprep.subr.bf16.mxu0 %v6041
          %6781 = vmatpush1.bf16.msra.mxu0 %v6040
          %6782 = vmatprep.subr.bf16.mxu0 %v6046
          %6783 = vmatpush1.bf16.msra.mxu0 %v6045
          %6784 = vmatprep.subr.bf16.mxu0 %v6051
          %6785 = vmatpush1.bf16.msra.mxu0 %v6050
          %6786 = vmatprep.subr.bf16.mxu0 %v6056
          %6787 = vmatpush1.bf16.msra.mxu0 %v6055
          %6788 = vmatprep.subr.bf16.mxu0 %v6061
          %6789 = vmatpush1.bf16.msra.mxu0 %v6060
          %6790 = vmatprep.mubr.bf16.mxu0 %v4463
          %6791 = vmatmul.mubr.bf16.gmra.mrb[0].mxu0 %v4462
          %v6792 = vpop.f32.mrb[0].mxu0
          %v6793 = vadd.f32 %v6750, %v6792
          %v6794 = vpop.f32.mrb[0].mxu0
          %v6795 = vadd.f32 %v6752, %v6794
          %v6796 = vpop.f32.mrb[0].mxu0
          %v6797 = vadd.f32 %v6754, %v6796
          %v6798 = vpop.f32.mrb[0].mxu0
          %v6799 = vadd.f32 %v6756, %v6798
          %6800 = vdwg.mxu0
          %6801 = vmatprep.subr.bf16.mxu0 %v6066
          %6802 = vmatpush1.bf16.msra.mxu0 %v6065
          %6803 = vmatprep.subr.bf16.mxu0 %v6071
          %6804 = vmatpush1.bf16.msra.mxu0 %v6070
          %6805 = vmatprep.subr.bf16.mxu0 %v6076
          %6806 = vmatpush1.bf16.msra.mxu0 %v6075
          %6807 = vmatprep.subr.bf16.mxu0 %v6081
          %6808 = vmatpush1.bf16.msra.mxu0 %v6080
          %6809 = vmatprep.subr.bf16.mxu0 %v6086
          %6810 = vmatpush1.bf16.msra.mxu0 %v6085
          %6811 = vmatprep.subr.bf16.mxu0 %v6091
          %6812 = vmatpush1.bf16.msra.mxu0 %v6090
          %6813 = vmatprep.subr.bf16.mxu0 %v6096
          %6814 = vmatpush1.bf16.msra.mxu0 %v6095
          %6815 = vmatprep.subr.bf16.mxu0 %v6101
          %6816 = vmatpush1.bf16.msra.mxu0 %v6100
          %6817 = vmatprep.subr.bf16.mxu0 %v6106
          %6818 = vmatpush1.bf16.msra.mxu0 %v6105
          %6819 = vmatprep.subr.bf16.mxu0 %v6111
          %6820 = vmatpush1.bf16.msra.mxu0 %v6110
          %6821 = vmatprep.subr.bf16.mxu0 %v6116
          %6822 = vmatpush1.bf16.msra.mxu0 %v6115
          %6823 = vmatprep.subr.bf16.mxu0 %v6121
          %6824 = vmatpush1.bf16.msra.mxu0 %v6120
          %6825 = vmatprep.subr.bf16.mxu0 %v6126
          %6826 = vmatpush1.bf16.msra.mxu0 %v6125
          %6827 = vmatprep.subr.bf16.mxu0 %v6131
          %6828 = vmatpush1.bf16.msra.mxu0 %v6130
          %6829 = vmatprep.subr.bf16.mxu0 %v6136
          %6830 = vmatpush1.bf16.msra.mxu0 %v6135
          %6831 = vmatprep.subr.bf16.mxu0 %v6141
          %6832 = vmatpush1.bf16.msra.mxu0 %v6140
          %6833 = vmatprep.mubr.bf16.mxu0 %v4465
          %6834 = vmatmul.mubr.bf16.gmra.mrb[0].mxu0 %v4464
          %v6835 = vpop.f32.mrb[0].mxu0
          %v6836 = vadd.f32 %v6793, %v6835
          %v6837 = vpop.f32.mrb[0].mxu0
          %v6838 = vadd.f32 %v6795, %v6837
          %v6839 = vpop.f32.mrb[0].mxu0
          %v6840 = vadd.f32 %v6797, %v6839
          %v6841 = vpop.f32.mrb[0].mxu0
          %v6842 = vadd.f32 %v6799, %v6841
          %6843 = vdwg.mxu0
          %6844 = vmatprep.subr.bf16.mxu0 %v6146
          %6845 = vmatpush1.bf16.msra.mxu0 %v6145
          %6846 = vmatprep.subr.bf16.mxu0 %v6151
          %6847 = vmatpush1.bf16.msra.mxu0 %v6150
          %6848 = vmatprep.subr.bf16.mxu0 %v6156
          %6849 = vmatpush1.bf16.msra.mxu0 %v6155
          %6850 = vmatprep.subr.bf16.mxu0 %v6161
          %6851 = vmatpush1.bf16.msra.mxu0 %v6160
          %6852 = vmatprep.subr.bf16.mxu0 %v6166
          %6853 = vmatpush1.bf16.msra.mxu0 %v6165
          %6854 = vmatprep.subr.bf16.mxu0 %v6171
          %6855 = vmatpush1.bf16.msra.mxu0 %v6170
          %6856 = vmatprep.subr.bf16.mxu0 %v6176
          %6857 = vmatpush1.bf16.msra.mxu0 %v6175
          %6858 = vmatprep.subr.bf16.mxu0 %v6181
          %6859 = vmatpush1.bf16.msra.mxu0 %v6180
          %6860 = vmatprep.subr.bf16.mxu0 %v6186
          %6861 = vmatpush1.bf16.msra.mxu0 %v6185
          %6862 = vmatprep.subr.bf16.mxu0 %v6191
          %6863 = vmatpush1.bf16.msra.mxu0 %v6190
          %6864 = vmatprep.subr.bf16.mxu0 %v6196
          %6865 = vmatpush1.bf16.msra.mxu0 %v6195
          %6866 = vmatprep.subr.bf16.mxu0 %v6201
          %6867 = vmatpush1.bf16.msra.mxu0 %v6200
          %6868 = vmatprep.subr.bf16.mxu0 %v6206
          %6869 = vmatpush1.bf16.msra.mxu0 %v6205
          %6870 = vmatprep.subr.bf16.mxu0 %v6211
          %6871 = vmatpush1.bf16.msra.mxu0 %v6210
          %6872 = vmatprep.subr.bf16.mxu0 %v6216
          %6873 = vmatpush1.bf16.msra.mxu0 %v6215
          %6874 = vmatprep.subr.bf16.mxu0 %v6221
          %6875 = vmatpush1.bf16.msra.mxu0 %v6220
          %6876 = vmatprep.mubr.bf16.mxu0 %v4467
          %6877 = vmatmul.mubr.bf16.gmra.mrb[0].mxu0 %v4466
          %v6878 = vpop.f32.mrb[0].mxu0
          %v6879 = vadd.f32 %v6836, %v6878
          %v6880 = vpop.f32.mrb[0].mxu0
          %v6881 = vadd.f32 %v6838, %v6880
          %v6882 = vpop.f32.mrb[0].mxu0
          %v6883 = vadd.f32 %v6840, %v6882
          %v6884 = vpop.f32.mrb[0].mxu0
          %v6885 = vadd.f32 %v6842, %v6884
          %6886 = vdwg.mxu0
          %6887 = vmatprep.subr.bf16.mxu0 0
          %6888 = vmatpush1.bf16.msra.mxu0 %v5907
          %6889 = vmatprep.subr.bf16.mxu0 0
          %6890 = vmatpush1.bf16.msra.mxu0 %v5912
          %6891 = vmatprep.subr.bf16.mxu0 0
          %6892 = vmatpush1.bf16.msra.mxu0 %v5917
          %6893 = vmatprep.subr.bf16.mxu0 0
          %6894 = vmatpush1.bf16.msra.mxu0 %v5922
          %6895 = vmatprep.subr.bf16.mxu0 0
          %6896 = vmatpush1.bf16.msra.mxu0 %v5927
          %6897 = vmatprep.subr.bf16.mxu0 0
          %6898 = vmatpush1.bf16.msra.mxu0 %v5932
          %6899 = vmatprep.subr.bf16.mxu0 0
          %6900 = vmatpush1.bf16.msra.mxu0 %v5937
          %6901 = vmatprep.subr.bf16.mxu0 0
          %6902 = vmatpush1.bf16.msra.mxu0 %v5942
          %6903 = vmatprep.subr.bf16.mxu0 0
          %6904 = vmatpush1.bf16.msra.mxu0 %v5947
          %6905 = vmatprep.subr.bf16.mxu0 0
          %6906 = vmatpush1.bf16.msra.mxu0 %v5952
          %6907 = vmatprep.subr.bf16.mxu0 0
          %6908 = vmatpush1.bf16.msra.mxu0 %v5957
          %6909 = vmatprep.subr.bf16.mxu0 0
          %6910 = vmatpush1.bf16.msra.mxu0 %v5962
          %6911 = vmatprep.subr.bf16.mxu0 0
          %6912 = vmatpush1.bf16.msra.mxu0 %v5967
          %6913 = vmatprep.subr.bf16.mxu0 0
          %6914 = vmatpush1.bf16.msra.mxu0 %v5972
          %6915 = vmatprep.subr.bf16.mxu0 0
          %6916 = vmatpush1.bf16.msra.mxu0 %v5977
          %6917 = vmatprep.subr.bf16.mxu0 0
          %6918 = vmatpush1.bf16.msra.mxu0 %v5982
          %6919 = vmatprep.mubr.bf16.mxu0 %v4461
          %6920 = vmatmul.mubr.bf16.gmra.mrb[0].mxu0 %v4460
          %v6921 = vpop.f32.mrb[0].mxu0
          %v6922 = vadd.f32 %v4873, %v6921
          %v6923 = vpop.f32.mrb[0].mxu0
          %v6924 = vpop.f32.mrb[0].mxu0
          %v6925 = vadd.f32 %v4873, %v6924
          %v6926 = vpop.f32.mrb[0].mxu0
          %6927 = vdwg.mxu0
          %6928 = vmatprep.subr.bf16.mxu0 0
          %6929 = vmatpush1.bf16.msra.mxu0 %v5987
          %6930 = vmatprep.subr.bf16.mxu0 0
          %6931 = vmatpush1.bf16.msra.mxu0 %v5992
          %6932 = vmatprep.subr.bf16.mxu0 0
          %6933 = vmatpush1.bf16.msra.mxu0 %v5997
          %6934 = vmatprep.subr.bf16.mxu0 0
          %6935 = vmatpush1.bf16.msra.mxu0 %v6002
          %6936 = vmatprep.subr.bf16.mxu0 0
          %6937 = vmatpush1.bf16.msra.mxu0 %v6007
          %6938 = vmatprep.subr.bf16.mxu0 0
          %6939 = vmatpush1.bf16.msra.mxu0 %v6012
          %6940 = vmatprep.subr.bf16.mxu0 0
          %6941 = vmatpush1.bf16.msra.mxu0 %v6017
          %6942 = vmatprep.subr.bf16.mxu0 0
          %6943 = vmatpush1.bf16.msra.mxu0 %v6022
          %6944 = vmatprep.subr.bf16.mxu0 0
          %6945 = vmatpush1.bf16.msra.mxu0 %v6027
          %6946 = vmatprep.subr.bf16.mxu0 0
          %6947 = vmatpush1.bf16.msra.mxu0 %v6032
          %6948 = vmatprep.subr.bf16.mxu0 0
          %6949 = vmatpush1.bf16.msra.mxu0 %v6037
          %6950 = vmatprep.subr.bf16.mxu0 0
          %6951 = vmatpush1.bf16.msra.mxu0 %v6042
          %6952 = vmatprep.subr.bf16.mxu0 0
          %6953 = vmatpush1.bf16.msra.mxu0 %v6047
          %6954 = vmatprep.subr.bf16.mxu0 0
          %6955 = vmatpush1.bf16.msra.mxu0 %v6052
          %6956 = vmatprep.subr.bf16.mxu0 0
          %6957 = vmatpush1.bf16.msra.mxu0 %v6057
          %6958 = vmatprep.subr.bf16.mxu0 0
          %6959 = vmatpush1.bf16.msra.mxu0 %v6062
          %6960 = vmatprep.mubr.bf16.mxu0 %v4463
          %6961 = vmatmul.mubr.bf16.gmra.mrb[0].mxu0 %v4462
          %v6962 = vpop.f32.mrb[0].mxu0
          %v6963 = vadd.f32 %v6922, %v6962
          %v6964 = vpop.f32.mrb[0].mxu0
          %v6965 = vpop.f32.mrb[0].mxu0
          %v6966 = vadd.f32 %v6925, %v6965
          %v6967 = vpop.f32.mrb[0].mxu0
          %6968 = vdwg.mxu0
          %6969 = vmatprep.subr.bf16.mxu0 0
          %6970 = vmatpush1.bf16.msra.mxu0 %v6067
          %6971 = vmatprep.subr.bf16.mxu0 0
          %6972 = vmatpush1.bf16.msra.mxu0 %v6072
          %6973 = vmatprep.subr.bf16.mxu0 0
          %6974 = vmatpush1.bf16.msra.mxu0 %v6077
          %6975 = vmatprep.subr.bf16.mxu0 0
          %6976 = vmatpush1.bf16.msra.mxu0 %v6082
          %6977 = vmatprep.subr.bf16.mxu0 0
          %6978 = vmatpush1.bf16.msra.mxu0 %v6087
          %6979 = vmatprep.subr.bf16.mxu0 0
          %6980 = vmatpush1.bf16.msra.mxu0 %v6092
          %6981 = vmatprep.subr.bf16.mxu0 0
          %6982 = vmatpush1.bf16.msra.mxu0 %v6097
          %6983 = vmatprep.subr.bf16.mxu0 0
          %6984 = vmatpush1.bf16.msra.mxu0 %v6102
          %6985 = vmatprep.subr.bf16.mxu0 0
          %6986 = vmatpush1.bf16.msra.mxu0 %v6107
          %6987 = vmatprep.subr.bf16.mxu0 0
          %6988 = vmatpush1.bf16.msra.mxu0 %v6112
          %6989 = vmatprep.subr.bf16.mxu0 0
          %6990 = vmatpush1.bf16.msra.mxu0 %v6117
          %6991 = vmatprep.subr.bf16.mxu0 0
          %6992 = vmatpush1.bf16.msra.mxu0 %v6122
          %6993 = vmatprep.subr.bf16.mxu0 0
          %6994 = vmatpush1.bf16.msra.mxu0 %v6127
          %6995 = vmatprep.subr.bf16.mxu0 0
          %6996 = vmatpush1.bf16.msra.mxu0 %v6132
          %6997 = vmatprep.subr.bf16.mxu0 0
          %6998 = vmatpush1.bf16.msra.mxu0 %v6137
          %6999 = vmatprep.subr.bf16.mxu0 0
          %7000 = vmatpush1.bf16.msra.mxu0 %v6142
          %7001 = vmatprep.mubr.bf16.mxu0 %v4465
          %7002 = vmatmul.mubr.bf16.gmra.mrb[0].mxu0 %v4464
          %v7003 = vpop.f32.mrb[0].mxu0
          %v7004 = vadd.f32 %v6963, %v7003
          %v7005 = vpop.f32.mrb[0].mxu0
          %v7006 = vpop.f32.mrb[0].mxu0
          %v7007 = vadd.f32 %v6966, %v7006
          %v7008 = vpop.f32.mrb[0].mxu0
          %7009 = vdwg.mxu0
          %7010 = vmatprep.subr.bf16.mxu0 0
          %7011 = vmatpush1.bf16.msra.mxu0 %v6147
          %7012 = vmatprep.subr.bf16.mxu0 0
          %7013 = vmatpush1.bf16.msra.mxu0 %v6152
          %7014 = vmatprep.subr.bf16.mxu0 0
          %7015 = vmatpush1.bf16.msra.mxu0 %v6157
          %7016 = vmatprep.subr.bf16.mxu0 0
          %7017 = vmatpush1.bf16.msra.mxu0 %v6162
          %7018 = vmatprep.subr.bf16.mxu0 0
          %7019 = vmatpush1.bf16.msra.mxu0 %v6167
          %7020 = vmatprep.subr.bf16.mxu0 0
          %7021 = vmatpush1.bf16.msra.mxu0 %v6172
          %7022 = vmatprep.subr.bf16.mxu0 0
          %7023 = vmatpush1.bf16.msra.mxu0 %v6177
          %7024 = vmatprep.subr.bf16.mxu0 0
          %7025 = vmatpush1.bf16.msra.mxu0 %v6182
          %7026 = vmatprep.subr.bf16.mxu0 0
          %7027 = vmatpush1.bf16.msra.mxu0 %v6187
          %7028 = vmatprep.subr.bf16.mxu0 0
          %7029 = vmatpush1.bf16.msra.mxu0 %v6192
          %7030 = vmatprep.subr.bf16.mxu0 0
          %7031 = vmatpush1.bf16.msra.mxu0 %v6197
          %7032 = vmatprep.subr.bf16.mxu0 0
          %7033 = vmatpush1.bf16.msra.mxu0 %v6202
          %7034 = vmatprep.subr.bf16.mxu0 0
          %7035 = vmatpush1.bf16.msra.mxu0 %v6207
          %7036 = vmatprep.subr.bf16.mxu0 0
          %7037 = vmatpush1.bf16.msra.mxu0 %v6212
          %7038 = vmatprep.subr.bf16.mxu0 0
          %7039 = vmatpush1.bf16.msra.mxu0 %v6217
          %7040 = vmatprep.subr.bf16.mxu0 0
          %7041 = vmatpush1.bf16.msra.mxu0 %v6222
          %7042 = vmatprep.mubr.bf16.mxu0 %v4467
          %7043 = vmatmul.mubr.bf16.gmra.mrb[0].mxu0 %v4466
          %v7044 = vpop.f32.mrb[0].mxu0
          %v7045 = vadd.f32 %v7004, %v7044
          %v7046 = vpop.f32.mrb[0].mxu0
          %v7047 = vpop.f32.mrb[0].mxu0
          %v7048 = vadd.f32 %v7007, %v7047
          %v7049 = vpop.f32.mrb[0].mxu0
          %7050 = vdwg.mxu0
          %v7051 = vmax.f32 %v6707, 0.0
          %v7052 = vmax.f32 %v6709, 0.0
          %v7053 = vmax.f32 %v6879, 0.0
          %v7054 = vmax.f32 %v6881, 0.0
          %v7055 = vmax.f32 %v7045, 0.0
          %v7056 = vmax.f32 %v6711, 0.0
          %v7057 = vmax.f32 %v6713, 0.0
          %v7058 = vmax.f32 %v6883, 0.0
          %v7059 = vmax.f32 %v6885, 0.0
          %v7060 = vmax.f32 %v7048, 0.0
          %v7061 = vpack.c.bf16 %v7056, %v7051
          %v7062 = vpack.c.bf16 %v7057, %v7052
          %v7063 = vpack.c.bf16 %v7058, %v7053
          %v7064 = vpack.c.bf16 %v7059, %v7054
          %v7065 = vpack.c.bf16 %v7060, %v7055
          %v7066 = vld [vmem:[#allocation11] sm:$0xff]
          %v7067 = vld [vmem:[#allocation11 + $0x8] sm:$0xff]
          %v7068 = vld [vmem:[#allocation11 + $0x10] sm:$0xff]
          %v7069 = vld [vmem:[#allocation11 + $0x18] sm:$0xff]
          %v7070 = vld [vmem:[#allocation11 + $0x20] sm:$0xff]
          %v7071 = vld [vmem:[#allocation11 + $0x28] sm:$0xff]
          %v7072 = vld [vmem:[#allocation11 + $0x30] sm:$0xff]
          %v7073 = vld [vmem:[#allocation11 + $0x38] sm:$0xff]
          %v7074 = vld [vmem:[#allocation11 + $0x40] sm:$0xff]
          %v7075 = vld [vmem:[#allocation11 + $0x48] sm:$0xff]
          %v7076 = vld [vmem:[#allocation11 + $0x50] sm:$0xff]
          %v7077 = vld [vmem:[#allocation11 + $0x58] sm:$0xff]
          %v7078 = vld [vmem:[#allocation11 + $0x60] sm:$0xff]
          %v7079 = vld [vmem:[#allocation11 + $0x68] sm:$0xff]
          %v7080 = vld [vmem:[#allocation11 + $0x70] sm:$0xff]
          %v7081 = vld [vmem:[#allocation11 + $0x78] sm:$0xff]
          %v7082 = vld [vmem:[#allocation11 + $0x80] sm:$0xff]
          %v7083 = vld [vmem:[#allocation11 + $0x88] sm:$0xff]
          %v7084 = vld [vmem:[#allocation11 + $0x90] sm:$0xff]
          %v7085 = vld [vmem:[#allocation11 + $0x98] sm:$0xff]
          %v7086 = vld [vmem:[#allocation11 + $0xa0] sm:$0xff]
          %v7087 = vld [vmem:[#allocation11 + $0xa8] sm:$0xff]
          %v7088 = vld [vmem:[#allocation11 + $0xb0] sm:$0xff]
          %v7089 = vld [vmem:[#allocation11 + $0xb8] sm:$0xff]
          %v7090 = vld [vmem:[#allocation11 + $0xc0] sm:$0xff]
          %v7091 = vld [vmem:[#allocation11 + $0xc8] sm:$0xff]
          %v7092 = vld [vmem:[#allocation11 + $0xd0] sm:$0xff]
          %v7093 = vld [vmem:[#allocation11 + $0xd8] sm:$0xff]
          %v7094 = vld [vmem:[#allocation11 + $0xe0] sm:$0xff]
          %v7095 = vld [vmem:[#allocation11 + $0xe8] sm:$0xff]
          %v7096 = vld [vmem:[#allocation11 + $0xf0] sm:$0xff]
          %v7097 = vld [vmem:[#allocation11 + $0xf8] sm:$0xff]
          %v7098 = vld [vmem:[#allocation11 + $0x100] sm:$0xff]
          %v7099 = vld [vmem:[#allocation11 + $0x108] sm:$0xff]
          %v7100 = vld [vmem:[#allocation11 + $0x110] sm:$0xff]
          %v7101 = vld [vmem:[#allocation11 + $0x118] sm:$0xff]
          %v7102 = vld [vmem:[#allocation11 + $0x120] sm:$0xff]
          %v7103 = vld [vmem:[#allocation11 + $0x128] sm:$0xff]
          %v7104 = vld [vmem:[#allocation11 + $0x130] sm:$0xff]
          %v7105 = vld [vmem:[#allocation11 + $0x138] sm:$0xff]
          %v7106 = vld [vmem:[#allocation11 + $0x140] sm:$0xff]
          %v7107 = vld [vmem:[#allocation11 + $0x148] sm:$0xff]
          %v7108 = vld [vmem:[#allocation11 + $0x150] sm:$0xff]
          %v7109 = vld [vmem:[#allocation11 + $0x158] sm:$0xff]
          %v7110 = vld [vmem:[#allocation11 + $0x160] sm:$0xff]
          %v7111 = vld [vmem:[#allocation11 + $0x168] sm:$0xff]
          %v7112 = vld [vmem:[#allocation11 + $0x170] sm:$0xff]
          %v7113 = vld [vmem:[#allocation11 + $0x178] sm:$0xff]
          %v7114 = vld [vmem:[#allocation11 + $0x180] sm:$0xff]
          %v7115 = vld [vmem:[#allocation11 + $0x188] sm:$0xff]
          %v7116 = vld [vmem:[#allocation11 + $0x190] sm:$0xff]
          %v7117 = vld [vmem:[#allocation11 + $0x198] sm:$0xff]
          %v7118 = vld [vmem:[#allocation11 + $0x1a0] sm:$0xff]
          %v7119 = vld [vmem:[#allocation11 + $0x1a8] sm:$0xff]
          %v7120 = vld [vmem:[#allocation11 + $0x1b0] sm:$0xff]
          %v7121 = vld [vmem:[#allocation11 + $0x1b8] sm:$0xff]
          %v7122 = vld [vmem:[#allocation11 + $0x1c0] sm:$0xff]
          %v7123 = vld [vmem:[#allocation11 + $0x1c8] sm:$0xff]
          %v7124 = vld [vmem:[#allocation11 + $0x1d0] sm:$0xff]
          %v7125 = vld [vmem:[#allocation11 + $0x1d8] sm:$0xff]
          %v7126 = vld [vmem:[#allocation11 + $0x1e0] sm:$0xff]
          %v7127 = vld [vmem:[#allocation11 + $0x1e8] sm:$0xff]
          %v7128 = vld [vmem:[#allocation11 + $0x1f0] sm:$0xff]
          %v7129 = vld [vmem:[#allocation11 + $0x1f8] sm:$0xff]
          %v7130 = vld [vmem:[#allocation11 + $0x200] sm:$0xff]
          %v7131 = vld [vmem:[#allocation11 + $0x208] sm:$0xff]
          %v7132 = vld [vmem:[#allocation11 + $0x210] sm:$0xff]
          %v7133 = vld [vmem:[#allocation11 + $0x218] sm:$0xff]
          %v7134 = vld [vmem:[#allocation11 + $0x220] sm:$0xff]
          %v7135 = vld [vmem:[#allocation11 + $0x228] sm:$0xff]
          %v7136 = vld [vmem:[#allocation11 + $0x230] sm:$0xff]
          %v7137 = vld [vmem:[#allocation11 + $0x238] sm:$0xff]
          %v7138 = vld [vmem:[#allocation11 + $0x240] sm:$0xff]
          %v7139 = vld [vmem:[#allocation11 + $0x248] sm:$0xff]
          %v7140 = vld [vmem:[#allocation11 + $0x250] sm:$0xff]
          %v7141 = vld [vmem:[#allocation11 + $0x258] sm:$0xff]
          %v7142 = vld [vmem:[#allocation11 + $0x260] sm:$0xff]
          %v7143 = vld [vmem:[#allocation11 + $0x268] sm:$0xff]
          %v7144 = vld [vmem:[#allocation11 + $0x270] sm:$0xff]
          %v7145 = vld [vmem:[#allocation11 + $0x278] sm:$0xff]
          %v7146 = vld [vmem:[#allocation12] sm:$0x3]
          %v7148 = vlaneseq
          %v7149 = vshrl.u32 %v7148, 7
          %v7150 = vsub.s32 0, %v7149
          %v7151 = vrot.slane %v7146, %v7150
          %v7152 = vlaneseq
          %v7153 = vshrl.u32 %v7152, 7
          %v7154 = vsub.s32 1, %v7153
          %v7155 = vrot.slane %v7146, %v7154
          %v7238 = vunpack.c.l.b16 %v7066
          %v7239 = vunpack.c.h.b16 %v7066
          %v7240 = vunpack.c.l.b16 %v7067
          %v7241 = vunpack.c.h.b16 %v7067
          %v7242 = vunpack.c.l.b16 %v7068
          %v7243 = vunpack.c.h.b16 %v7068
          %v7244 = vunpack.c.l.b16 %v7069
          %v7245 = vunpack.c.h.b16 %v7069
          %v7246 = vunpack.c.l.b16 %v7070
          %v7247 = vunpack.c.h.b16 %v7070
          %v7248 = vunpack.c.l.b16 %v7071
          %v7249 = vunpack.c.h.b16 %v7071
          %v7250 = vunpack.c.l.b16 %v7072
          %v7251 = vunpack.c.h.b16 %v7072
          %v7252 = vunpack.c.l.b16 %v7073
          %v7253 = vunpack.c.h.b16 %v7073
          %v7254 = vunpack.c.l.b16 %v7074
          %v7255 = vunpack.c.h.b16 %v7074
          %v7256 = vunpack.c.l.b16 %v7075
          %v7257 = vunpack.c.h.b16 %v7075
          %v7258 = vunpack.c.l.b16 %v7076
          %v7259 = vunpack.c.h.b16 %v7076
          %v7260 = vunpack.c.l.b16 %v7077
          %v7261 = vunpack.c.h.b16 %v7077
          %v7262 = vunpack.c.l.b16 %v7078
          %v7263 = vunpack.c.h.b16 %v7078
          %v7264 = vunpack.c.l.b16 %v7079
          %v7265 = vunpack.c.h.b16 %v7079
          %v7266 = vunpack.c.l.b16 %v7080
          %v7267 = vunpack.c.h.b16 %v7080
          %v7268 = vunpack.c.l.b16 %v7081
          %v7269 = vunpack.c.h.b16 %v7081
          %v7270 = vunpack.c.l.b16 %v7082
          %v7271 = vunpack.c.h.b16 %v7082
          %v7272 = vunpack.c.l.b16 %v7083
          %v7273 = vunpack.c.h.b16 %v7083
          %v7274 = vunpack.c.l.b16 %v7084
          %v7275 = vunpack.c.h.b16 %v7084
          %v7276 = vunpack.c.l.b16 %v7085
          %v7277 = vunpack.c.h.b16 %v7085
          %v7278 = vunpack.c.l.b16 %v7086
          %v7279 = vunpack.c.h.b16 %v7086
          %v7280 = vunpack.c.l.b16 %v7087
          %v7281 = vunpack.c.h.b16 %v7087
          %v7282 = vunpack.c.l.b16 %v7088
          %v7283 = vunpack.c.h.b16 %v7088
          %v7284 = vunpack.c.l.b16 %v7089
          %v7285 = vunpack.c.h.b16 %v7089
          %v7286 = vunpack.c.l.b16 %v7090
          %v7287 = vunpack.c.h.b16 %v7090
          %v7288 = vunpack.c.l.b16 %v7091
          %v7289 = vunpack.c.h.b16 %v7091
          %v7290 = vunpack.c.l.b16 %v7092
          %v7291 = vunpack.c.h.b16 %v7092
          %v7292 = vunpack.c.l.b16 %v7093
          %v7293 = vunpack.c.h.b16 %v7093
          %v7294 = vunpack.c.l.b16 %v7094
          %v7295 = vunpack.c.h.b16 %v7094
          %v7296 = vunpack.c.l.b16 %v7095
          %v7297 = vunpack.c.h.b16 %v7095
          %v7298 = vunpack.c.l.b16 %v7096
          %v7299 = vunpack.c.h.b16 %v7096
          %v7300 = vunpack.c.l.b16 %v7097
          %v7301 = vunpack.c.h.b16 %v7097
          %v7302 = vunpack.c.l.b16 %v7098
          %v7303 = vunpack.c.h.b16 %v7098
          %v7304 = vunpack.c.l.b16 %v7099
          %v7305 = vunpack.c.h.b16 %v7099
          %v7306 = vunpack.c.l.b16 %v7100
          %v7307 = vunpack.c.h.b16 %v7100
          %v7308 = vunpack.c.l.b16 %v7101
          %v7309 = vunpack.c.h.b16 %v7101
          %v7310 = vunpack.c.l.b16 %v7102
          %v7311 = vunpack.c.h.b16 %v7102
          %v7312 = vunpack.c.l.b16 %v7103
          %v7313 = vunpack.c.h.b16 %v7103
          %v7314 = vunpack.c.l.b16 %v7104
          %v7315 = vunpack.c.h.b16 %v7104
          %v7316 = vunpack.c.l.b16 %v7105
          %v7317 = vunpack.c.h.b16 %v7105
          %v7318 = vunpack.c.l.b16 %v7106
          %v7319 = vunpack.c.h.b16 %v7106
          %v7320 = vunpack.c.l.b16 %v7107
          %v7321 = vunpack.c.h.b16 %v7107
          %v7322 = vunpack.c.l.b16 %v7108
          %v7323 = vunpack.c.h.b16 %v7108
          %v7324 = vunpack.c.l.b16 %v7109
          %v7325 = vunpack.c.h.b16 %v7109
          %v7326 = vunpack.c.l.b16 %v7110
          %v7327 = vunpack.c.h.b16 %v7110
          %v7328 = vunpack.c.l.b16 %v7111
          %v7329 = vunpack.c.h.b16 %v7111
          %v7330 = vunpack.c.l.b16 %v7112
          %v7331 = vunpack.c.h.b16 %v7112
          %v7332 = vunpack.c.l.b16 %v7113
          %v7333 = vunpack.c.h.b16 %v7113
          %v7334 = vunpack.c.l.b16 %v7114
          %v7335 = vunpack.c.h.b16 %v7114
          %v7336 = vunpack.c.l.b16 %v7115
          %v7337 = vunpack.c.h.b16 %v7115
          %v7338 = vunpack.c.l.b16 %v7116
          %v7339 = vunpack.c.h.b16 %v7116
          %v7340 = vunpack.c.l.b16 %v7117
          %v7341 = vunpack.c.h.b16 %v7117
          %v7342 = vunpack.c.l.b16 %v7118
          %v7343 = vunpack.c.h.b16 %v7118
          %v7344 = vunpack.c.l.b16 %v7119
          %v7345 = vunpack.c.h.b16 %v7119
          %v7346 = vunpack.c.l.b16 %v7120
          %v7347 = vunpack.c.h.b16 %v7120
          %v7348 = vunpack.c.l.b16 %v7121
          %v7349 = vunpack.c.h.b16 %v7121
          %v7350 = vunpack.c.l.b16 %v7122
          %v7351 = vunpack.c.h.b16 %v7122
          %v7352 = vunpack.c.l.b16 %v7123
          %v7353 = vunpack.c.h.b16 %v7123
          %v7354 = vunpack.c.l.b16 %v7124
          %v7355 = vunpack.c.h.b16 %v7124
          %v7356 = vunpack.c.l.b16 %v7125
          %v7357 = vunpack.c.h.b16 %v7125
          %v7358 = vunpack.c.l.b16 %v7126
          %v7359 = vunpack.c.h.b16 %v7126
          %v7360 = vunpack.c.l.b16 %v7127
          %v7361 = vunpack.c.h.b16 %v7127
          %v7362 = vunpack.c.l.b16 %v7128
          %v7363 = vunpack.c.h.b16 %v7128
          %v7364 = vunpack.c.l.b16 %v7129
          %v7365 = vunpack.c.h.b16 %v7129
          %v7366 = vunpack.c.l.b16 %v7130
          %v7367 = vunpack.c.h.b16 %v7130
          %v7368 = vunpack.c.l.b16 %v7131
          %v7369 = vunpack.c.h.b16 %v7131
          %v7370 = vunpack.c.l.b16 %v7132
          %v7371 = vunpack.c.h.b16 %v7132
          %v7372 = vunpack.c.l.b16 %v7133
          %v7373 = vunpack.c.h.b16 %v7133
          %v7374 = vunpack.c.l.b16 %v7134
          %v7375 = vunpack.c.h.b16 %v7134
          %v7376 = vunpack.c.l.b16 %v7135
          %v7377 = vunpack.c.h.b16 %v7135
          %v7378 = vunpack.c.l.b16 %v7136
          %v7379 = vunpack.c.h.b16 %v7136
          %v7380 = vunpack.c.l.b16 %v7137
          %v7381 = vunpack.c.h.b16 %v7137
          %v7382 = vunpack.c.l.b16 %v7138
          %v7383 = vunpack.c.h.b16 %v7138
          %v7384 = vunpack.c.l.b16 %v7139
          %v7385 = vunpack.c.h.b16 %v7139
          %v7386 = vunpack.c.l.b16 %v7140
          %v7387 = vunpack.c.h.b16 %v7140
          %v7388 = vunpack.c.l.b16 %v7141
          %v7389 = vunpack.c.h.b16 %v7141
          %v7390 = vunpack.c.l.b16 %v7142
          %v7391 = vunpack.c.h.b16 %v7142
          %v7392 = vunpack.c.l.b16 %v7143
          %v7393 = vunpack.c.h.b16 %v7143
          %v7394 = vunpack.c.l.b16 %v7144
          %v7395 = vunpack.c.h.b16 %v7144
          %v7396 = vunpack.c.l.b16 %v7145
          %v7397 = vunpack.c.h.b16 %v7145
          %v7398 = vpack.c.b16 %v7240, %v7238
          %v7399 = vpack.c.b16 %v7241, %v7239
          %v7400 = vpack.c.b16 %v7244, %v7242
          %v7401 = vpack.c.b16 %v7245, %v7243
          %v7402 = vpack.c.b16 %v7248, %v7246
          %v7403 = vpack.c.b16 %v7249, %v7247
          %v7404 = vpack.c.b16 %v7252, %v7250
          %v7405 = vpack.c.b16 %v7253, %v7251
          %v7406 = vpack.c.b16 %v7256, %v7254
          %v7407 = vpack.c.b16 %v7257, %v7255
          %v7408 = vpack.c.b16 %v7260, %v7258
          %v7409 = vpack.c.b16 %v7261, %v7259
          %v7410 = vpack.c.b16 %v7264, %v7262
          %v7411 = vpack.c.b16 %v7265, %v7263
          %v7412 = vpack.c.b16 %v7268, %v7266
          %v7413 = vpack.c.b16 %v7269, %v7267
          %v7414 = vpack.c.b16 %v7272, %v7270
          %v7415 = vpack.c.b16 %v7273, %v7271
          %v7416 = vpack.c.b16 %v7276, %v7274
          %v7417 = vpack.c.b16 %v7277, %v7275
          %v7418 = vpack.c.b16 %v7280, %v7278
          %v7419 = vpack.c.b16 %v7281, %v7279
          %v7420 = vpack.c.b16 %v7284, %v7282
          %v7421 = vpack.c.b16 %v7285, %v7283
          %v7422 = vpack.c.b16 %v7288, %v7286
          %v7423 = vpack.c.b16 %v7289, %v7287
          %v7424 = vpack.c.b16 %v7292, %v7290
          %v7425 = vpack.c.b16 %v7293, %v7291
          %v7426 = vpack.c.b16 %v7296, %v7294
          %v7427 = vpack.c.b16 %v7297, %v7295
          %v7428 = vpack.c.b16 %v7300, %v7298
          %v7429 = vpack.c.b16 %v7301, %v7299
          %v7430 = vpack.c.b16 %v7304, %v7302
          %v7431 = vpack.c.b16 %v7305, %v7303
          %v7432 = vpack.c.b16 %v7308, %v7306
          %v7433 = vpack.c.b16 %v7309, %v7307
          %v7434 = vpack.c.b16 %v7312, %v7310
          %v7435 = vpack.c.b16 %v7313, %v7311
          %v7436 = vpack.c.b16 %v7316, %v7314
          %v7437 = vpack.c.b16 %v7317, %v7315
          %v7438 = vpack.c.b16 %v7320, %v7318
          %v7439 = vpack.c.b16 %v7321, %v7319
          %v7440 = vpack.c.b16 %v7324, %v7322
          %v7441 = vpack.c.b16 %v7325, %v7323
          %v7442 = vpack.c.b16 %v7328, %v7326
          %v7443 = vpack.c.b16 %v7329, %v7327
          %v7444 = vpack.c.b16 %v7332, %v7330
          %v7445 = vpack.c.b16 %v7333, %v7331
          %v7446 = vpack.c.b16 %v7336, %v7334
          %v7447 = vpack.c.b16 %v7337, %v7335
          %v7448 = vpack.c.b16 %v7340, %v7338
          %v7449 = vpack.c.b16 %v7341, %v7339
          %v7450 = vpack.c.b16 %v7344, %v7342
          %v7451 = vpack.c.b16 %v7345, %v7343
          %v7452 = vpack.c.b16 %v7348, %v7346
          %v7453 = vpack.c.b16 %v7349, %v7347
          %v7454 = vpack.c.b16 %v7352, %v7350
          %v7455 = vpack.c.b16 %v7353, %v7351
          %v7456 = vpack.c.b16 %v7356, %v7354
          %v7457 = vpack.c.b16 %v7357, %v7355
          %v7458 = vpack.c.b16 %v7360, %v7358
          %v7459 = vpack.c.b16 %v7361, %v7359
          %v7460 = vpack.c.b16 %v7364, %v7362
          %v7461 = vpack.c.b16 %v7365, %v7363
          %v7462 = vpack.c.b16 %v7368, %v7366
          %v7463 = vpack.c.b16 %v7369, %v7367
          %v7464 = vpack.c.b16 %v7372, %v7370
          %v7465 = vpack.c.b16 %v7373, %v7371
          %v7466 = vpack.c.b16 %v7376, %v7374
          %v7467 = vpack.c.b16 %v7377, %v7375
          %v7468 = vpack.c.b16 %v7380, %v7378
          %v7469 = vpack.c.b16 %v7381, %v7379
          %v7470 = vpack.c.b16 %v7384, %v7382
          %v7471 = vpack.c.b16 %v7385, %v7383
          %v7472 = vpack.c.b16 %v7388, %v7386
          %v7473 = vpack.c.b16 %v7389, %v7387
          %v7474 = vpack.c.b16 %v7392, %v7390
          %v7475 = vpack.c.b16 %v7393, %v7391
          %v7476 = vpack.c.b16 %v7396, %v7394
          %v7477 = vpack.c.b16 %v7397, %v7395
          %7558 = vmatprep.subr.bf16.mxu0 %v7399
          %7559 = vmatpush1.bf16.msra.mxu0 %v7398
          %7560 = vmatprep.subr.bf16.mxu0 %v7401
          %7561 = vmatpush1.bf16.msra.mxu0 %v7400
          %7562 = vmatprep.subr.bf16.mxu0 %v7403
          %7563 = vmatpush1.bf16.msra.mxu0 %v7402
          %7564 = vmatprep.subr.bf16.mxu0 %v7405
          %7565 = vmatpush1.bf16.msra.mxu0 %v7404
          %7566 = vmatprep.subr.bf16.mxu0 %v7407
          %7567 = vmatpush1.bf16.msra.mxu0 %v7406
          %7568 = vmatprep.subr.bf16.mxu0 %v7409
          %7569 = vmatpush1.bf16.msra.mxu0 %v7408
          %7570 = vmatprep.subr.bf16.mxu0 %v7411
          %7571 = vmatpush1.bf16.msra.mxu0 %v7410
          %7572 = vmatprep.subr.bf16.mxu0 %v7413
          %7573 = vmatpush1.bf16.msra.mxu0 %v7412
          %7574 = vmatprep.subr.bf16.mxu0 %v7415
          %7575 = vmatpush1.bf16.msra.mxu0 %v7414
          %7576 = vmatprep.subr.bf16.mxu0 %v7417
          %7577 = vmatpush1.bf16.msra.mxu0 %v7416
          %7578 = vmatprep.subr.bf16.mxu0 %v7419
          %7579 = vmatpush1.bf16.msra.mxu0 %v7418
          %7580 = vmatprep.subr.bf16.mxu0 %v7421
          %7581 = vmatpush1.bf16.msra.mxu0 %v7420
          %7582 = vmatprep.subr.bf16.mxu0 %v7423
          %7583 = vmatpush1.bf16.msra.mxu0 %v7422
          %7584 = vmatprep.subr.bf16.mxu0 %v7425
          %7585 = vmatpush1.bf16.msra.mxu0 %v7424
          %7586 = vmatprep.subr.bf16.mxu0 %v7427
          %7587 = vmatpush1.bf16.msra.mxu0 %v7426
          %7588 = vmatprep.subr.bf16.mxu0 %v7429
          %7589 = vmatpush1.bf16.msra.mxu0 %v7428
          %7590 = vmatprep.mubr.bf16.mxu0 %v7062
          %7591 = vmatmul.mubr.bf16.gmra.mrb[0].mxu0 %v7061
          %v7592 = vpop.f32.mrb[0].mxu0
          %v7593 = vadd.f32 %v7151, %v7592
          %v7594 = vpop.f32.mrb[0].mxu0
          %v7595 = vadd.f32 %v7155, %v7594
          %v7596 = vpop.f32.mrb[0].mxu0
          %v7597 = vadd.f32 %v7151, %v7596
          %v7598 = vpop.f32.mrb[0].mxu0
          %v7599 = vadd.f32 %v7155, %v7598
          %7600 = vdwg.mxu0
          %7601 = vmatprep.subr.bf16.mxu0 %v7431
          %7602 = vmatpush1.bf16.msra.mxu0 %v7430
          %7603 = vmatprep.subr.bf16.mxu0 %v7433
          %7604 = vmatpush1.bf16.msra.mxu0 %v7432
          %7605 = vmatprep.subr.bf16.mxu0 %v7435
          %7606 = vmatpush1.bf16.msra.mxu0 %v7434
          %7607 = vmatprep.subr.bf16.mxu0 %v7437
          %7608 = vmatpush1.bf16.msra.mxu0 %v7436
          %7609 = vmatprep.subr.bf16.mxu0 %v7439
          %7610 = vmatpush1.bf16.msra.mxu0 %v7438
          %7611 = vmatprep.subr.bf16.mxu0 %v7441
          %7612 = vmatpush1.bf16.msra.mxu0 %v7440
          %7613 = vmatprep.subr.bf16.mxu0 %v7443
          %7614 = vmatpush1.bf16.msra.mxu0 %v7442
          %7615 = vmatprep.subr.bf16.mxu0 %v7445
          %7616 = vmatpush1.bf16.msra.mxu0 %v7444
          %7617 = vmatprep.subr.bf16.mxu0 %v7447
          %7618 = vmatpush1.bf16.msra.mxu0 %v7446
          %7619 = vmatprep.subr.bf16.mxu0 %v7449
          %7620 = vmatpush1.bf16.msra.mxu0 %v7448
          %7621 = vmatprep.subr.bf16.mxu0 %v7451
          %7622 = vmatpush1.bf16.msra.mxu0 %v7450
          %7623 = vmatprep.subr.bf16.mxu0 %v7453
          %7624 = vmatpush1.bf16.msra.mxu0 %v7452
          %7625 = vmatprep.subr.bf16.mxu0 %v7455
          %7626 = vmatpush1.bf16.msra.mxu0 %v7454
          %7627 = vmatprep.subr.bf16.mxu0 %v7457
          %7628 = vmatpush1.bf16.msra.mxu0 %v7456
          %7629 = vmatprep.subr.bf16.mxu0 %v7459
          %7630 = vmatpush1.bf16.msra.mxu0 %v7458
          %7631 = vmatprep.subr.bf16.mxu0 %v7461
          %7632 = vmatpush1.bf16.msra.mxu0 %v7460
          %7633 = vmatprep.mubr.bf16.mxu0 %v7064
          %7634 = vmatmul.mubr.bf16.gmra.mrb[0].mxu0 %v7063
          %v7635 = vpop.f32.mrb[0].mxu0
          %v7636 = vadd.f32 %v7593, %v7635
          %v7637 = vpop.f32.mrb[0].mxu0
          %v7638 = vadd.f32 %v7595, %v7637
          %v7639 = vpop.f32.mrb[0].mxu0
          %v7640 = vadd.f32 %v7597, %v7639
          %v7641 = vpop.f32.mrb[0].mxu0
          %v7642 = vadd.f32 %v7599, %v7641
          %7643 = vdwg.mxu0
          %7644 = vmatprep.subr.bf16.mxu0 %v7463
          %7645 = vmatpush1.bf16.msra.mxu0 %v7462
          %7646 = vmatprep.subr.bf16.mxu0 %v7465
          %7647 = vmatpush1.bf16.msra.mxu0 %v7464
          %7648 = vmatprep.subr.bf16.mxu0 %v7467
          %7649 = vmatpush1.bf16.msra.mxu0 %v7466
          %7650 = vmatprep.subr.bf16.mxu0 %v7469
          %7651 = vmatpush1.bf16.msra.mxu0 %v7468
          %7652 = vmatprep.subr.bf16.mxu0 %v7471
          %7653 = vmatpush1.bf16.msra.mxu0 %v7470
          %7654 = vmatprep.subr.bf16.mxu0 %v7473
          %7655 = vmatpush1.bf16.msra.mxu0 %v7472
          %7656 = vmatprep.subr.bf16.mxu0 %v7475
          %7657 = vmatpush1.bf16.msra.mxu0 %v7474
          %7658 = vmatprep.subr.bf16.mxu0 %v7477
          %7659 = vmatpush1.bf16.msra.mxu0 %v7476
          %7660 = vmatprep.subr.bf16.mxu0 0
          %7661 = vmatpush1.bf16.msra.mxu0 0
          %7662 = vmatprep.subr.bf16.mxu0 0
          %7663 = vmatpush1.bf16.msra.mxu0 0
          %7664 = vmatprep.subr.bf16.mxu0 0
          %7665 = vmatpush1.bf16.msra.mxu0 0
          %7666 = vmatprep.subr.bf16.mxu0 0
          %7667 = vmatpush1.bf16.msra.mxu0 0
          %7668 = vmatprep.subr.bf16.mxu0 0
          %7669 = vmatpush1.bf16.msra.mxu0 0
          %7670 = vmatprep.subr.bf16.mxu0 0
          %7671 = vmatpush1.bf16.msra.mxu0 0
          %7672 = vmatprep.subr.bf16.mxu0 0
          %7673 = vmatpush1.bf16.msra.mxu0 0
          %7674 = vmatprep.subr.bf16.mxu0 0
          %7675 = vmatpush1.bf16.msra.mxu0 0
          %7676 = vmatprep.mubr.bf16.mxu0 0
          %7677 = vmatmul.mubr.bf16.gmra.mrb[0].mxu0 %v7065
          %v7678 = vpop.f32.mrb[0].mxu0
          %v7679 = vadd.f32 %v7636, %v7678
          %v7680 = vpop.f32.mrb[0].mxu0
          %v7681 = vadd.f32 %v7638, %v7680
          %v7682 = vpop.f32.mrb[0].mxu0
          %v7683 = vadd.f32 %v7640, %v7682
          %v7684 = vpop.f32.mrb[0].mxu0
          %v7685 = vadd.f32 %v7642, %v7684
          %7686 = vdwg.mxu0
          %v7687 = vmax.f32 %v7679, 0.0
          %v7688 = vmax.f32 %v7681, 0.0
          %v7689 = vmax.f32 %v7683, 0.0
          %v7690 = vmax.f32 %v7685, 0.0
          %v7691 = vpack.c.bf16 %v7689, %v7687
          %v7692 = vpack.c.bf16 %v7690, %v7688
          %v7693 = vld [vmem:[#allocation14] sm:$0xf]
          %v7694 = vld [vmem:[#allocation14 + $0x4] sm:$0xf]
          %v7695 = vld [vmem:[#allocation14 + $0x8] sm:$0xf]
          %v7696 = vld [vmem:[#allocation14 + $0xc] sm:$0xf]
          %v7697 = vld [vmem:[#allocation14 + $0x10] sm:$0xf]
          %v7698 = vld [vmem:[#allocation14 + $0x14] sm:$0xf]
          %v7699 = vld [vmem:[#allocation14 + $0x18] sm:$0xf]
          %v7700 = vld [vmem:[#allocation14 + $0x1c] sm:$0xf]
          %v7701 = vld [vmem:[#allocation14 + $0x20] sm:$0xf]
          %v7702 = vld [vmem:[#allocation14 + $0x24] sm:$0xf]
          %v7703 = vld [vmem:[#allocation14 + $0x28] sm:$0xf]
          %v7704 = vld [vmem:[#allocation14 + $0x2c] sm:$0xf]
          %v7705 = vld [vmem:[#allocation14 + $0x30] sm:$0xf]
          %v7706 = vld [vmem:[#allocation14 + $0x34] sm:$0xf]
          %v7707 = vld [vmem:[#allocation14 + $0x38] sm:$0xf]
          %v7708 = vld [vmem:[#allocation14 + $0x3c] sm:$0xf]
          %v7709 = vld [vmem:[#allocation14 + $0x40] sm:$0xf]
          %v7710 = vld [vmem:[#allocation14 + $0x44] sm:$0xf]
          %v7711 = vld [vmem:[#allocation14 + $0x48] sm:$0xf]
          %v7712 = vld [vmem:[#allocation14 + $0x4c] sm:$0xf]
          %v7713 = vld [vmem:[#allocation14 + $0x50] sm:$0xf]
          %v7714 = vld [vmem:[#allocation14 + $0x54] sm:$0xf]
          %v7715 = vld [vmem:[#allocation14 + $0x58] sm:$0xf]
          %v7716 = vld [vmem:[#allocation14 + $0x5c] sm:$0xf]
          %v7717 = vld [vmem:[#allocation14 + $0x60] sm:$0xf]
          %v7718 = vld [vmem:[#allocation14 + $0x64] sm:$0xf]
          %v7719 = vld [vmem:[#allocation14 + $0x68] sm:$0xf]
          %v7720 = vld [vmem:[#allocation14 + $0x6c] sm:$0xf]
          %v7721 = vld [vmem:[#allocation14 + $0x70] sm:$0xf]
          %v7722 = vld [vmem:[#allocation14 + $0x74] sm:$0xf]
          %v7723 = vld [vmem:[#allocation14 + $0x78] sm:$0xf]
          %v7724 = vld [vmem:[#allocation14 + $0x7c] sm:$0xf]
          %v7725 = vld [vmem:[#allocation15] sm:$0x1]
          %v7727 = vlaneseq
          %v7728 = vshrl.u32 %v7727, 7
          %v7729 = vsub.s32 0, %v7728
          %v7730 = vrot.slane %v7725, %v7729
          %v7764 = vunpack.c.l.b16 %v7693
          %v7765 = vunpack.c.l.b16 %v7694
          %v7766 = vunpack.c.l.b16 %v7695
          %v7767 = vunpack.c.l.b16 %v7696
          %v7768 = vunpack.c.l.b16 %v7697
          %v7769 = vunpack.c.l.b16 %v7698
          %v7770 = vunpack.c.l.b16 %v7699
          %v7771 = vunpack.c.l.b16 %v7700
          %v7772 = vunpack.c.l.b16 %v7701
          %v7773 = vunpack.c.l.b16 %v7702
          %v7774 = vunpack.c.l.b16 %v7703
          %v7775 = vunpack.c.l.b16 %v7704
          %v7776 = vunpack.c.l.b16 %v7705
          %v7777 = vunpack.c.l.b16 %v7706
          %v7778 = vunpack.c.l.b16 %v7707
          %v7779 = vunpack.c.l.b16 %v7708
          %v7780 = vunpack.c.l.b16 %v7709
          %v7781 = vunpack.c.l.b16 %v7710
          %v7782 = vunpack.c.l.b16 %v7711
          %v7783 = vunpack.c.l.b16 %v7712
          %v7784 = vunpack.c.l.b16 %v7713
          %v7785 = vunpack.c.l.b16 %v7714
          %v7786 = vunpack.c.l.b16 %v7715
          %v7787 = vunpack.c.l.b16 %v7716
          %v7788 = vunpack.c.l.b16 %v7717
          %v7789 = vunpack.c.l.b16 %v7718
          %v7790 = vunpack.c.l.b16 %v7719
          %v7791 = vunpack.c.l.b16 %v7720
          %v7792 = vunpack.c.l.b16 %v7721
          %v7793 = vunpack.c.l.b16 %v7722
          %v7794 = vunpack.c.l.b16 %v7723
          %v7795 = vunpack.c.l.b16 %v7724
          %v7796 = vpack.c.b16 %v7765, %v7764
          %v7797 = vpack.c.b16 %v7767, %v7766
          %v7798 = vpack.c.b16 %v7769, %v7768
          %v7799 = vpack.c.b16 %v7771, %v7770
          %v7800 = vpack.c.b16 %v7773, %v7772
          %v7801 = vpack.c.b16 %v7775, %v7774
          %v7802 = vpack.c.b16 %v7777, %v7776
          %v7803 = vpack.c.b16 %v7779, %v7778
          %v7804 = vpack.c.b16 %v7781, %v7780
          %v7805 = vpack.c.b16 %v7783, %v7782
          %v7806 = vpack.c.b16 %v7785, %v7784
          %v7807 = vpack.c.b16 %v7787, %v7786
          %v7808 = vpack.c.b16 %v7789, %v7788
          %v7809 = vpack.c.b16 %v7791, %v7790
          %v7810 = vpack.c.b16 %v7793, %v7792
          %v7811 = vpack.c.b16 %v7795, %v7794
          %7828 = vmatprep.subr.bf16.mxu0 0
          %7829 = vmatpush1.bf16.msra.mxu0 %v7796
          %7830 = vmatprep.subr.bf16.mxu0 0
          %7831 = vmatpush1.bf16.msra.mxu0 %v7797
          %7832 = vmatprep.subr.bf16.mxu0 0
          %7833 = vmatpush1.bf16.msra.mxu0 %v7798
          %7834 = vmatprep.subr.bf16.mxu0 0
          %7835 = vmatpush1.bf16.msra.mxu0 %v7799
          %7836 = vmatprep.subr.bf16.mxu0 0
          %7837 = vmatpush1.bf16.msra.mxu0 %v7800
          %7838 = vmatprep.subr.bf16.mxu0 0
          %7839 = vmatpush1.bf16.msra.mxu0 %v7801
          %7840 = vmatprep.subr.bf16.mxu0 0
          %7841 = vmatpush1.bf16.msra.mxu0 %v7802
          %7842 = vmatprep.subr.bf16.mxu0 0
          %7843 = vmatpush1.bf16.msra.mxu0 %v7803
          %7844 = vmatprep.subr.bf16.mxu0 0
          %7845 = vmatpush1.bf16.msra.mxu0 %v7804
          %7846 = vmatprep.subr.bf16.mxu0 0
          %7847 = vmatpush1.bf16.msra.mxu0 %v7805
          %7848 = vmatprep.subr.bf16.mxu0 0
          %7849 = vmatpush1.bf16.msra.mxu0 %v7806
          %7850 = vmatprep.subr.bf16.mxu0 0
          %7851 = vmatpush1.bf16.msra.mxu0 %v7807
          %7852 = vmatprep.subr.bf16.mxu0 0
          %7853 = vmatpush1.bf16.msra.mxu0 %v7808
          %7854 = vmatprep.subr.bf16.mxu0 0
          %7855 = vmatpush1.bf16.msra.mxu0 %v7809
          %7856 = vmatprep.subr.bf16.mxu0 0
          %7857 = vmatpush1.bf16.msra.mxu0 %v7810
          %7858 = vmatprep.subr.bf16.mxu0 0
          %7859 = vmatpush1.bf16.msra.mxu0 %v7811
          %7860 = vmatprep.mubr.bf16.mxu0 %v7692
          %7861 = vmatmul.mubr.bf16.gmra.mrb[0].mxu0 %v7691
          %v7862 = vpop.f32.mrb[0].mxu0
          %v7863 = vadd.f32 %v7730, %v7862
          %v7864 = vpop.f32.mrb[0].mxu0
          %v7865 = vpop.f32.mrb[0].mxu0
          %v7866 = vadd.f32 %v7730, %v7865
          %v7867 = vpop.f32.mrb[0].mxu0
          %7868 = vdwg.mxu0
          %v7869 = vxor.u32 %v7863, 2147483648
          %v7870 = vxor.u32 %v7866, 2147483648
          %v7871 = vmul.f32 %v7869, 1.442695
          %v7872 = vpow.pop %v7871
          %v7873 = vmul.f32 %v7870, 1.442695
          %v7874 = vpow.pop %v7873
          %v7875 = vadd.f32 %v7872, 1.0
          %v7876 = vadd.f32 %v7874, 1.0
          %v7877 = vrcp.pop %v7875
          %v7878 = vmul.f32 1.0, %v7877
          %v7879 = vrcp.pop %v7876
          %v7880 = vmul.f32 1.0, %v7879
          %7881 = vst [vmem:[%s9] sm:$0xff] %v7878
          %7882 = vst [vmem:[%s9 + $0x8] sm:$0xff] %v7880
        $region119: #{fcnet_forward.1} parent=74 // pred_fallthru
          _
        // Predicated region
        $region120: #{fcnet_forward.1} parent=74 // pred_check
          %p7883 = pneg %p239
        $region121: #{fcnet_forward.1} parent=74 // pred_check_branch
          %7885 = sbr.rel (%p7883) target = $region123
        $region122: #{fcnet_forward.1} parent=74 // pred_region
          _
        $region123: #{fcnet_forward.1} parent=74 // pred_fallthru
          _
        // Predicated region
        $region124: #{fcnet_forward.1} parent=74 // pred_check
          %p7886 = pneg %p239
        $region125: #{fcnet_forward.1} parent=74 // pred_check_branch
          %7888 = sbr.rel (%p7886) target = $region127
        $region126: #{fcnet_forward.1} parent=74 // pred_region
          _
        $region127: #{fcnet_forward.1} parent=74 // pred_fallthru
          _
      $region75: #{fcnet_forward.1} parent=5 // pred_fallthru
        _
      %p7889 = scmp.le.s32.totalorder 2, %s22
      // Predicated region
      $region128: #{fcnet_forward.1} parent=5 // pred_check
        %p7890 = pneg %p7889
      $region129: #{fcnet_forward.1} parent=5 // pred_check_branch
        %7892 = sbr.rel (%p7890) target = $region131
      $region130: #{fcnet_forward.1} parent=5 // pred_region
        %s7893 = ssub.s32 %s22, 2
      $region131: #{fcnet_forward.1} parent=5 // pred_fallthru
        _
    $region6: #{fcnet_forward.1} parent=1 // loop_footer
      %s26 = sadd.s32 1, %s22
    $region7: #{fcnet_forward.1} parent=1 // loop_footer_branch
      %21 = sbr.rel target = $region3
    $region8: #{fcnet_forward.1} parent=1 // loop_exit
      _
    %7894 = vsyncpa [#allocation5], 1
    %s7895 = scalar_lea.sflag [#allocation5], 1
    %7896 = vsyncpa %s7895, 1
    %7897 = vsyncpa [#allocation7], 1
    %7898 = vsyncpa [#allocation10], 1
    %7899 = vsyncpa [#allocation13], 1
    %7900 = vsyncpa [#allocation16], 1

</llo_original>
